<compile_context>
chip_gen: v7x
topology: tpu7x:2x2x1
jax: 0.10.0
libtpu: 0.0.40
codegen_flags: <defaults>
</compile_context>

<pallas_src>
import jax
import jax.numpy as jnp
from jax.experimental import pallas as pl
from jax.experimental.pallas import tpu as pltpu

# Model dimensions (fixed by the PyTorch module).
H = W = 28
KH = KW = 3
OH = OW = 26                 # valid conv output spatial size
PH = PW = 13                 # after 2x2 max pool
CIN, COUT = 1, 16
FC_IN, FC_OUT = COUT * PH * PW, 10     # 2704, 10

BT = 128                     # batch tile = lane width (batch lives on lanes)
JPAD = 16                    # pooled-column padding 13 -> 16 (tile aligned)
NCLS = 16                    # class padding 10 -> 16 (tile aligned)
WPAD = 24                    # half-width (W//2=14) padded to 24 sublanes
KCH = COUT * JPAD            # 256: per-pooled-row contraction chunk
NEG = -1e30                  # finite mask for padded logit rows


# ------------------------------ fused kernel --------------------------------

def _net_kernel(cw_ref, cb_ref, xw_ref, wfc_ref, fb_ref, o_ref, feat_ref):
    """Whole network for one batch tile of BT=128 samples (batch on lanes).

    cw_ref  : SMEM [16, 9]             conv weights, (c, kh*3 + kw)
    cb_ref  : SMEM [16]                conv bias
    xw_ref  : VMEM [2, 28, WPAD, BT]   xw[p, h, wp, b] = x[b, h, 2*wp + p]
    wfc_ref : VMEM [13, 16, 256]       FC weights, [i, class, c*16 + j]
    fb_ref  : VMEM [16, BT]            FC bias rows (NEG on padded classes)
    o_ref   : VMEM [16, BT]            log_softmax(logits); rows >= 10 padding
    feat_ref: VMEM [13, 256, BT]       pooled-feature scratch
    """

    def row_body(i, carry):
        # ---- load the 16 distinct tap slices for pooled row i exactly once --
        # tap[d][t][j, b] = x[b, 2i + d, 2j + t]   (d = r + kh, t = s + kw)
        taps = []
        for d in range(4):
            h = 2 * i + d
            row = []
            for t in range(4):
                p, a = t & 1, t >> 1
                row.append(xw_ref[p, h, a:a + JPAD, :])      # [16, BT]
            taps.append(row)

        # ---- 16 channels: conv candidates -> 2x2 max -> bias -> relu --------
        for c in range(COUT):
            cand = []
            for r in (0, 1):
                for s in (0, 1):
                    acc = None
                    for kh in range(KH):
                        for kw in range(KW):
                            term = cw_ref[c, kh * KW + kw] * taps[r + kh][s + kw]
                            acc = term if acc is None else acc + term
                    cand.append(acc)                          # [16, BT]
            z = jnp.maximum(jnp.maximum(cand[0], cand[1]),
                            jnp.maximum(cand[2], cand[3]))    # [16, BT]
            pooled = jnp.maximum(z + cb_ref[c], 0.0)          # rows >= 13: junk
            # Junk rows (j >= 13) hit zero FC weights, so no masking needed.
            feat_ref[i, c * JPAD:(c + 1) * JPAD, :] = pooled
        return carry

    jax.lax.fori_loop(0, PH, row_body, 0)

    # ---- FC: 13 static [16,256] x [256,BT] MXU matmuls, accumulated ---------
    logits = fb_ref[...]                                      # [16, BT]
    for i in range(PH):
        logits = logits + jnp.dot(wfc_ref[i], feat_ref[i],
                                  preferred_element_type=jnp.float32)

    # ---- log_softmax over the class (sublane) axis ---------------------------
    m = jnp.max(logits, axis=0, keepdims=True)                # [1, BT]
    shifted = logits - m
    lse = jnp.log(jnp.sum(jnp.exp(shifted), axis=0, keepdims=True))
    o_ref[...] = shifted - lse


# --------------------------------- wrapper ----------------------------------

def _prep_fc(fc_w, fc_b):
    """Permute / zero-pad FC params so the kernel consumes pooled features in
    its natural (pooled row i, channel c, padded col j) order with 16 padded
    classes; padded classes get a NEG bias so log_softmax ignores them."""
    w = fc_w.astype(jnp.float32).reshape(FC_OUT, COUT, PH, PW)       # (n,c,i,j)
    w = jnp.pad(w, ((0, NCLS - FC_OUT), (0, 0), (0, 0), (0, JPAD - PW)))
    w = jnp.transpose(w, (2, 0, 1, 3))                               # (i,n,c,j)
    wfc = w.reshape(PH, NCLS, KCH)                                   # [13,16,256]
    fbvec = jnp.concatenate([fc_b.astype(jnp.float32),
                             jnp.full((NCLS - FC_OUT,), NEG, jnp.float32)])
    fb = jnp.tile(fbvec[:, None], (1, BT))                           # [16, BT]
    return wfc, fb


def net_forward(x_nchw, params):
    """Forward pass of Net. x_nchw: [B, 1, 28, 28] float32 -> [B, 10]."""
    conv_w, conv_b, fc_w, fc_b = params
    B = x_nchw.shape[0]
    x = x_nchw[:, 0, :, :].astype(jnp.float32)                       # [B, 28, 28]

    b_pad = pl.cdiv(B, BT) * BT
    if b_pad != B:
        x = jnp.pad(x, ((0, b_pad - B), (0, 0), (0, 0)))

    # Column-parity split with batch moved onto the lane (minor) axis.
    xw = x.reshape(b_pad, H, W // 2, 2)
    xw = jnp.transpose(xw, (3, 1, 2, 0))                             # [2,28,14,Bp]
    xw = jnp.pad(xw, ((0, 0), (0, 0), (0, WPAD - W // 2), (0, 0)))   # [2,28,24,Bp]

    cw = conv_w.reshape(COUT, KH * KW).astype(jnp.float32)           # [16, 9]
    cb = conv_b.astype(jnp.float32)                                  # [16]
    wfc, fb = _prep_fc(fc_w, fc_b)

    # dropout1 / dropout2 are identity at inference (eval mode).
    # TODO(synk): training-mode dropout (RNG masking) intentionally not implemented.

    out = pl.pallas_call(
        _net_kernel,
        grid=(b_pad // BT,),
        in_specs=[
            pl.BlockSpec(memory_space=pltpu.MemorySpace.SMEM),           # conv W
            pl.BlockSpec(memory_space=pltpu.MemorySpace.SMEM),           # conv b
            pl.BlockSpec((2, H, WPAD, BT), lambda g: (0, 0, 0, g)),      # input
            pl.BlockSpec((PH, NCLS, KCH), lambda g: (0, 0, 0)),          # FC W (resident)
            pl.BlockSpec((NCLS, BT), lambda g: (0, 0)),                  # FC bias
        ],
        out_specs=pl.BlockSpec((NCLS, BT), lambda g: (0, g)),
        out_shape=jax.ShapeDtypeStruct((NCLS, b_pad), jnp.float32),
        scratch_shapes=[pltpu.VMEM((PH, KCH, BT), jnp.float32)],
        compiler_params=pltpu.CompilerParams(
            dimension_semantics=("parallel",)),
    )(cw, cb, xw, wfc, fb)

    return out[:FC_OUT, :B].T                                        # [B, 10]


# --------------------------- reference (pure JAX) ----------------------------

def ref_forward(x_nchw, params):
    conv_w, conv_b, fc_w, fc_b = params
    y = jax.lax.conv_general_dilated(
        x_nchw, conv_w, window_strides=(1, 1), padding='VALID',
        dimension_numbers=('NCHW', 'OIHW', 'NCHW'))
    y = y + conv_b[None, :, None, None]
    y = jnp.maximum(y, 0.0)
    y = jax.lax.reduce_window(y, -jnp.inf, jax.lax.max,
                              (1, 1, 2, 2), (1, 1, 2, 2), 'VALID')
    y = y.reshape(x_nchw.shape[0], -1)              # torch.flatten(x, 1), NCHW order
    logits = y @ fc_w.T + fc_b
    return jax.nn.log_softmax(logits, axis=1)


# --------------------------------- main --------------------------------------

def init_params(key):
    k1, k2, k3, k4 = jax.random.split(key, 4)
    kc = 1.0 / (CIN * KH * KW) ** 0.5
    kf = 1.0 / FC_IN ** 0.5
    conv_w = jax.random.uniform(k1, (COUT, CIN, KH, KW), jnp.float32, -kc, kc)
    conv_b = jax.random.uniform(k2, (COUT,), jnp.float32, -kc, kc)
    fc_w = jax.random.uniform(k3, (FC_OUT, FC_IN), jnp.float32, -kf, kf)
    fc_b = jax.random.uniform(k4, (FC_OUT,), jnp.float32, -kf, kf)
    return conv_w, conv_b, fc_w, fc_b


if __name__ == "__main__":
    key = jax.random.PRNGKey(0)
    kx, kp = jax.random.split(key)
    B = 2
    x = jax.random.normal(kx, (B, CIN, H, W), jnp.float32)   # [2, 1, 28, 28]
    params = init_params(kp)

    fwd = jax.jit(net_forward)
    out = jax.block_until_ready(fwd(x, params))

    ref = jax.block_until_ready(ref_forward(x, params))
    assert out.shape == (B, FC_OUT)
    assert jnp.allclose(out, ref, atol=5e-3, rtol=5e-3), (out, ref)
    print("KERNEL_OK")
</pallas_src>

<mosaic_0001>
module attributes {stable_mosaic.version = 11 : i64} {
  func.func @_net_kernel(%arg0: i32, %arg1: memref<16x9xf32, #tpu.memory_space<smem>>, %arg2: memref<16xf32, #tpu.memory_space<smem>>, %arg3: memref<2x28x24x128xf32, #tpu.memory_space<vmem>>, %arg4: memref<13x16x256xf32, #tpu.memory_space<vmem>>, %arg5: memref<16x128xf32, #tpu.memory_space<vmem>>, %arg6: memref<16x128xf32, #tpu.memory_space<vmem>>, %arg7: memref<13x256x128xf32, #tpu.memory_space<vmem>>) attributes {dimension_semantics = [#tpu.dimension_semantics<parallel>], iteration_bounds = array<i64: 1>, scalar_prefetch = 0 : i64, scratch_operands = 1 : i64, tpu.core_type = #tpu.core_type<tc>, window_params = [{transform_indices = @transform_0, window_bounds = array<i64: 16, 9>}, {transform_indices = @transform_1, window_bounds = array<i64: 16>}, {transform_indices = @transform_2, window_bounds = array<i64: 2, 28, 24, 128>}, {pipeline_mode = #tpu.pipeline_mode<synchronous>, transform_indices = @transform_3, window_bounds = array<i64: 13, 16, 256>}, {pipeline_mode = #tpu.pipeline_mode<synchronous>, transform_indices = @transform_4, window_bounds = array<i64: 16, 128>}, {transform_indices = @transform_5, window_bounds = array<i64: 16, 128>}]} {
    %c0_i32 = arith.constant 0 : i32
    %c13_i32 = arith.constant 13 : i32
    %0 = arith.addi %c0_i32, %c13_i32 : i32
    %c1_i32 = arith.constant 1 : i32
    scf.for %arg8 = %c0_i32 to %0 step %c1_i32  : i32 {
      %c2_i32 = arith.constant 2 : i32
      %91 = arith.muli %c2_i32, %arg8 : i32
      %c0_i32_84 = arith.constant 0 : i32
      %92 = arith.addi %91, %c0_i32_84 : i32
      %c0_85 = arith.constant 0 : index
      %93 = arith.index_cast %92 : i32 to index
      %c0_86 = arith.constant 0 : index
      %c0_87 = arith.constant 0 : index
      %94 = vector.load %arg3[%c0_85, %93, %c0_86, %c0_87] : memref<2x28x24x128xf32, #tpu.memory_space<vmem>>, vector<1x1x16x128xf32>
      %95 = vector.shape_cast %94 : vector<1x1x16x128xf32> to vector<16x128xf32>
      %c1_88 = arith.constant 1 : index
      %96 = arith.index_cast %92 : i32 to index
      %c0_89 = arith.constant 0 : index
      %c0_90 = arith.constant 0 : index
      %97 = vector.load %arg3[%c1_88, %96, %c0_89, %c0_90] : memref<2x28x24x128xf32, #tpu.memory_space<vmem>>, vector<1x1x16x128xf32>
      %98 = vector.shape_cast %97 : vector<1x1x16x128xf32> to vector<16x128xf32>
      %c0_91 = arith.constant 0 : index
      %99 = arith.index_cast %92 : i32 to index
      %c1_92 = arith.constant 1 : index
      %c0_93 = arith.constant 0 : index
      %100 = vector.load %arg3[%c0_91, %99, %c1_92, %c0_93] : memref<2x28x24x128xf32, #tpu.memory_space<vmem>>, vector<1x1x16x128xf32>
      %101 = vector.shape_cast %100 : vector<1x1x16x128xf32> to vector<16x128xf32>
      %c1_94 = arith.constant 1 : index
      %102 = arith.index_cast %92 : i32 to index
      %c1_95 = arith.constant 1 : index
      %c0_96 = arith.constant 0 : index
      %103 = vector.load %arg3[%c1_94, %102, %c1_95, %c0_96] : memref<2x28x24x128xf32, #tpu.memory_space<vmem>>, vector<1x1x16x128xf32>
      %104 = vector.shape_cast %103 : vector<1x1x16x128xf32> to vector<16x128xf32>
      %c2_i32_97 = arith.constant 2 : i32
      %105 = arith.muli %c2_i32_97, %arg8 : i32
      %c1_i32_98 = arith.constant 1 : i32
      %106 = arith.addi %105, %c1_i32_98 : i32
      %c0_99 = arith.constant 0 : index
      %107 = arith.index_cast %106 : i32 to index
      %c0_100 = arith.constant 0 : index
      %c0_101 = arith.constant 0 : index
      %108 = vector.load %arg3[%c0_99, %107, %c0_100, %c0_101] : memref<2x28x24x128xf32, #tpu.memory_space<vmem>>, vector<1x1x16x128xf32>
      %109 = vector.shape_cast %108 : vector<1x1x16x128xf32> to vector<16x128xf32>
      %c1_102 = arith.constant 1 : index
      %110 = arith.index_cast %106 : i32 to index
      %c0_103 = arith.constant 0 : index
      %c0_104 = arith.constant 0 : index
      %111 = vector.load %arg3[%c1_102, %110, %c0_103, %c0_104] : memref<2x28x24x128xf32, #tpu.memory_space<vmem>>, vector<1x1x16x128xf32>
      %112 = vector.shape_cast %111 : vector<1x1x16x128xf32> to vector<16x128xf32>
      %c0_105 = arith.constant 0 : index
      %113 = arith.index_cast %106 : i32 to index
      %c1_106 = arith.constant 1 : index
      %c0_107 = arith.constant 0 : index
      %114 = vector.load %arg3[%c0_105, %113, %c1_106, %c0_107] : memref<2x28x24x128xf32, #tpu.memory_space<vmem>>, vector<1x1x16x128xf32>
      %115 = vector.shape_cast %114 : vector<1x1x16x128xf32> to vector<16x128xf32>
      %c1_108 = arith.constant 1 : index
      %116 = arith.index_cast %106 : i32 to index
      %c1_109 = arith.constant 1 : index
      %c0_110 = arith.constant 0 : index
      %117 = vector.load %arg3[%c1_108, %116, %c1_109, %c0_110] : memref<2x28x24x128xf32, #tpu.memory_space<vmem>>, vector<1x1x16x128xf32>
      %118 = vector.shape_cast %117 : vector<1x1x16x128xf32> to vector<16x128xf32>
      %c2_i32_111 = arith.constant 2 : i32
      %119 = arith.muli %c2_i32_111, %arg8 : i32
      %c2_i32_112 = arith.constant 2 : i32
      %120 = arith.addi %119, %c2_i32_112 : i32
      %c0_113 = arith.constant 0 : index
      %121 = arith.index_cast %120 : i32 to index
      %c0_114 = arith.constant 0 : index
      %c0_115 = arith.constant 0 : index
      %122 = vector.load %arg3[%c0_113, %121, %c0_114, %c0_115] : memref<2x28x24x128xf32, #tpu.memory_space<vmem>>, vector<1x1x16x128xf32>
      %123 = vector.shape_cast %122 : vector<1x1x16x128xf32> to vector<16x128xf32>
      %c1_116 = arith.constant 1 : index
      %124 = arith.index_cast %120 : i32 to index
      %c0_117 = arith.constant 0 : index
      %c0_118 = arith.constant 0 : index
      %125 = vector.load %arg3[%c1_116, %124, %c0_117, %c0_118] : memref<2x28x24x128xf32, #tpu.memory_space<vmem>>, vector<1x1x16x128xf32>
      %126 = vector.shape_cast %125 : vector<1x1x16x128xf32> to vector<16x128xf32>
      %c0_119 = arith.constant 0 : index
      %127 = arith.index_cast %120 : i32 to index
      %c1_120 = arith.constant 1 : index
      %c0_121 = arith.constant 0 : index
      %128 = vector.load %arg3[%c0_119, %127, %c1_120, %c0_121] : memref<2x28x24x128xf32, #tpu.memory_space<vmem>>, vector<1x1x16x128xf32>
      %129 = vector.shape_cast %128 : vector<1x1x16x128xf32> to vector<16x128xf32>
      %c1_122 = arith.constant 1 : index
      %130 = arith.index_cast %120 : i32 to index
      %c1_123 = arith.constant 1 : index
      %c0_124 = arith.constant 0 : index
      %131 = vector.load %arg3[%c1_122, %130, %c1_123, %c0_124] : memref<2x28x24x128xf32, #tpu.memory_space<vmem>>, vector<1x1x16x128xf32>
      %132 = vector.shape_cast %131 : vector<1x1x16x128xf32> to vector<16x128xf32>
      %c2_i32_125 = arith.constant 2 : i32
      %133 = arith.muli %c2_i32_125, %arg8 : i32
      %c3_i32 = arith.constant 3 : i32
      %134 = arith.addi %133, %c3_i32 : i32
      %c0_126 = arith.constant 0 : index
      %135 = arith.index_cast %134 : i32 to index
      %c0_127 = arith.constant 0 : index
      %c0_128 = arith.constant 0 : index
      %136 = vector.load %arg3[%c0_126, %135, %c0_127, %c0_128] : memref<2x28x24x128xf32, #tpu.memory_space<vmem>>, vector<1x1x16x128xf32>
      %137 = vector.shape_cast %136 : vector<1x1x16x128xf32> to vector<16x128xf32>
      %c1_129 = arith.constant 1 : index
      %138 = arith.index_cast %134 : i32 to index
      %c0_130 = arith.constant 0 : index
      %c0_131 = arith.constant 0 : index
      %139 = vector.load %arg3[%c1_129, %138, %c0_130, %c0_131] : memref<2x28x24x128xf32, #tpu.memory_space<vmem>>, vector<1x1x16x128xf32>
      %140 = vector.shape_cast %139 : vector<1x1x16x128xf32> to vector<16x128xf32>
      %c0_132 = arith.constant 0 : index
      %141 = arith.index_cast %134 : i32 to index
      %c1_133 = arith.constant 1 : index
      %c0_134 = arith.constant 0 : index
      %142 = vector.load %arg3[%c0_132, %141, %c1_133, %c0_134] : memref<2x28x24x128xf32, #tpu.memory_space<vmem>>, vector<1x1x16x128xf32>
      %143 = vector.shape_cast %142 : vector<1x1x16x128xf32> to vector<16x128xf32>
      %c1_135 = arith.constant 1 : index
      %144 = arith.index_cast %134 : i32 to index
      %c1_136 = arith.constant 1 : index
      %c0_137 = arith.constant 0 : index
      %145 = vector.load %arg3[%c1_135, %144, %c1_136, %c0_137] : memref<2x28x24x128xf32, #tpu.memory_space<vmem>>, vector<1x1x16x128xf32>
      %146 = vector.shape_cast %145 : vector<1x1x16x128xf32> to vector<16x128xf32>
      %c0_138 = arith.constant 0 : index
      %c0_139 = arith.constant 0 : index
      %147 = memref.load %arg1[%c0_138, %c0_139] : memref<16x9xf32, #tpu.memory_space<smem>>
      %148 = vector.broadcast %147 : f32 to vector<16x128xf32>
      %149 = arith.mulf %148, %95 : vector<16x128xf32>
      %c0_140 = arith.constant 0 : index
      %c1_141 = arith.constant 1 : index
      %150 = memref.load %arg1[%c0_140, %c1_141] : memref<16x9xf32, #tpu.memory_space<smem>>
      %151 = vector.broadcast %150 : f32 to vector<16x128xf32>
      %152 = arith.mulf %151, %98 : vector<16x128xf32>
      %153 = arith.addf %149, %152 : vector<16x128xf32>
      %c0_142 = arith.constant 0 : index
      %c2_143 = arith.constant 2 : index
      %154 = memref.load %arg1[%c0_142, %c2_143] : memref<16x9xf32, #tpu.memory_space<smem>>
      %155 = vector.broadcast %154 : f32 to vector<16x128xf32>
      %156 = arith.mulf %155, %101 : vector<16x128xf32>
      %157 = arith.addf %153, %156 : vector<16x128xf32>
      %c0_144 = arith.constant 0 : index
      %c3_145 = arith.constant 3 : index
      %158 = memref.load %arg1[%c0_144, %c3_145] : memref<16x9xf32, #tpu.memory_space<smem>>
      %159 = vector.broadcast %158 : f32 to vector<16x128xf32>
      %160 = arith.mulf %159, %109 : vector<16x128xf32>
      %161 = arith.addf %157, %160 : vector<16x128xf32>
      %c0_146 = arith.constant 0 : index
      %c4_147 = arith.constant 4 : index
      %162 = memref.load %arg1[%c0_146, %c4_147] : memref<16x9xf32, #tpu.memory_space<smem>>
      %163 = vector.broadcast %162 : f32 to vector<16x128xf32>
      %164 = arith.mulf %163, %112 : vector<16x128xf32>
      %165 = arith.addf %161, %164 : vector<16x128xf32>
      %c0_148 = arith.constant 0 : index
      %c5_149 = arith.constant 5 : index
      %166 = memref.load %arg1[%c0_148, %c5_149] : memref<16x9xf32, #tpu.memory_space<smem>>
      %167 = vector.broadcast %166 : f32 to vector<16x128xf32>
      %168 = arith.mulf %167, %115 : vector<16x128xf32>
      %169 = arith.addf %165, %168 : vector<16x128xf32>
      %c0_150 = arith.constant 0 : index
      %c6_151 = arith.constant 6 : index
      %170 = memref.load %arg1[%c0_150, %c6_151] : memref<16x9xf32, #tpu.memory_space<smem>>
      %171 = vector.broadcast %170 : f32 to vector<16x128xf32>
      %172 = arith.mulf %171, %123 : vector<16x128xf32>
      %173 = arith.addf %169, %172 : vector<16x128xf32>
      %c0_152 = arith.constant 0 : index
      %c7_153 = arith.constant 7 : index
      %174 = memref.load %arg1[%c0_152, %c7_153] : memref<16x9xf32, #tpu.memory_space<smem>>
      %175 = vector.broadcast %174 : f32 to vector<16x128xf32>
      %176 = arith.mulf %175, %126 : vector<16x128xf32>
      %177 = arith.addf %173, %176 : vector<16x128xf32>
      %c0_154 = arith.constant 0 : index
      %c8_155 = arith.constant 8 : index
      %178 = memref.load %arg1[%c0_154, %c8_155] : memref<16x9xf32, #tpu.memory_space<smem>>
      %179 = vector.broadcast %178 : f32 to vector<16x128xf32>
      %180 = arith.mulf %179, %129 : vector<16x128xf32>
      %181 = arith.addf %177, %180 : vector<16x128xf32>
      %c0_156 = arith.constant 0 : index
      %c0_157 = arith.constant 0 : index
      %182 = memref.load %arg1[%c0_156, %c0_157] : memref<16x9xf32, #tpu.memory_space<smem>>
      %183 = vector.broadcast %182 : f32 to vector<16x128xf32>
      %184 = arith.mulf %183, %98 : vector<16x128xf32>
      %c0_158 = arith.constant 0 : index
      %c1_159 = arith.constant 1 : index
      %185 = memref.load %arg1[%c0_158, %c1_159] : memref<16x9xf32, #tpu.memory_space<smem>>
      %186 = vector.broadcast %185 : f32 to vector<16x128xf32>
      %187 = arith.mulf %186, %101 : vector<16x128xf32>
      %188 = arith.addf %184, %187 : vector<16x128xf32>
      %c0_160 = arith.constant 0 : index
      %c2_161 = arith.constant 2 : index
      %189 = memref.load %arg1[%c0_160, %c2_161] : memref<16x9xf32, #tpu.memory_space<smem>>
      %190 = vector.broadcast %189 : f32 to vector<16x128xf32>
      %191 = arith.mulf %190, %104 : vector<16x128xf32>
      %192 = arith.addf %188, %191 : vector<16x128xf32>
      %c0_162 = arith.constant 0 : index
      %c3_163 = arith.constant 3 : index
      %193 = memref.load %arg1[%c0_162, %c3_163] : memref<16x9xf32, #tpu.memory_space<smem>>
      %194 = vector.broadcast %193 : f32 to vector<16x128xf32>
      %195 = arith.mulf %194, %112 : vector<16x128xf32>
      %196 = arith.addf %192, %195 : vector<16x128xf32>
      %c0_164 = arith.constant 0 : index
      %c4_165 = arith.constant 4 : index
      %197 = memref.load %arg1[%c0_164, %c4_165] : memref<16x9xf32, #tpu.memory_space<smem>>
      %198 = vector.broadcast %197 : f32 to vector<16x128xf32>
      %199 = arith.mulf %198, %115 : vector<16x128xf32>
      %200 = arith.addf %196, %199 : vector<16x128xf32>
      %c0_166 = arith.constant 0 : index
      %c5_167 = arith.constant 5 : index
      %201 = memref.load %arg1[%c0_166, %c5_167] : memref<16x9xf32, #tpu.memory_space<smem>>
      %202 = vector.broadcast %201 : f32 to vector<16x128xf32>
      %203 = arith.mulf %202, %118 : vector<16x128xf32>
      %204 = arith.addf %200, %203 : vector<16x128xf32>
      %c0_168 = arith.constant 0 : index
      %c6_169 = arith.constant 6 : index
      %205 = memref.load %arg1[%c0_168, %c6_169] : memref<16x9xf32, #tpu.memory_space<smem>>
      %206 = vector.broadcast %205 : f32 to vector<16x128xf32>
      %207 = arith.mulf %206, %126 : vector<16x128xf32>
      %208 = arith.addf %204, %207 : vector<16x128xf32>
      %c0_170 = arith.constant 0 : index
      %c7_171 = arith.constant 7 : index
      %209 = memref.load %arg1[%c0_170, %c7_171] : memref<16x9xf32, #tpu.memory_space<smem>>
      %210 = vector.broadcast %209 : f32 to vector<16x128xf32>
      %211 = arith.mulf %210, %129 : vector<16x128xf32>
      %212 = arith.addf %208, %211 : vector<16x128xf32>
      %c0_172 = arith.constant 0 : index
      %c8_173 = arith.constant 8 : index
      %213 = memref.load %arg1[%c0_172, %c8_173] : memref<16x9xf32, #tpu.memory_space<smem>>
      %214 = vector.broadcast %213 : f32 to vector<16x128xf32>
      %215 = arith.mulf %214, %132 : vector<16x128xf32>
      %216 = arith.addf %212, %215 : vector<16x128xf32>
      %c0_174 = arith.constant 0 : index
      %c0_175 = arith.constant 0 : index
      %217 = memref.load %arg1[%c0_174, %c0_175] : memref<16x9xf32, #tpu.memory_space<smem>>
      %218 = vector.broadcast %217 : f32 to vector<16x128xf32>
      %219 = arith.mulf %218, %109 : vector<16x128xf32>
      %c0_176 = arith.constant 0 : index
      %c1_177 = arith.constant 1 : index
      %220 = memref.load %arg1[%c0_176, %c1_177] : memref<16x9xf32, #tpu.memory_space<smem>>
      %221 = vector.broadcast %220 : f32 to vector<16x128xf32>
      %222 = arith.mulf %221, %112 : vector<16x128xf32>
      %223 = arith.addf %219, %222 : vector<16x128xf32>
      %c0_178 = arith.constant 0 : index
      %c2_179 = arith.constant 2 : index
      %224 = memref.load %arg1[%c0_178, %c2_179] : memref<16x9xf32, #tpu.memory_space<smem>>
      %225 = vector.broadcast %224 : f32 to vector<16x128xf32>
      %226 = arith.mulf %225, %115 : vector<16x128xf32>
      %227 = arith.addf %223, %226 : vector<16x128xf32>
      %c0_180 = arith.constant 0 : index
      %c3_181 = arith.constant 3 : index
      %228 = memref.load %arg1[%c0_180, %c3_181] : memref<16x9xf32, #tpu.memory_space<smem>>
      %229 = vector.broadcast %228 : f32 to vector<16x128xf32>
      %230 = arith.mulf %229, %123 : vector<16x128xf32>
      %231 = arith.addf %227, %230 : vector<16x128xf32>
      %c0_182 = arith.constant 0 : index
      %c4_183 = arith.constant 4 : index
      %232 = memref.load %arg1[%c0_182, %c4_183] : memref<16x9xf32, #tpu.memory_space<smem>>
      %233 = vector.broadcast %232 : f32 to vector<16x128xf32>
      %234 = arith.mulf %233, %126 : vector<16x128xf32>
      %235 = arith.addf %231, %234 : vector<16x128xf32>
      %c0_184 = arith.constant 0 : index
      %c5_185 = arith.constant 5 : index
      %236 = memref.load %arg1[%c0_184, %c5_185] : memref<16x9xf32, #tpu.memory_space<smem>>
      %237 = vector.broadcast %236 : f32 to vector<16x128xf32>
      %238 = arith.mulf %237, %129 : vector<16x128xf32>
      %239 = arith.addf %235, %238 : vector<16x128xf32>
      %c0_186 = arith.constant 0 : index
      %c6_187 = arith.constant 6 : index
      %240 = memref.load %arg1[%c0_186, %c6_187] : memref<16x9xf32, #tpu.memory_space<smem>>
      %241 = vector.broadcast %240 : f32 to vector<16x128xf32>
      %242 = arith.mulf %241, %137 : vector<16x128xf32>
      %243 = arith.addf %239, %242 : vector<16x128xf32>
      %c0_188 = arith.constant 0 : index
      %c7_189 = arith.constant 7 : index
      %244 = memref.load %arg1[%c0_188, %c7_189] : memref<16x9xf32, #tpu.memory_space<smem>>
      %245 = vector.broadcast %244 : f32 to vector<16x128xf32>
      %246 = arith.mulf %245, %140 : vector<16x128xf32>
      %247 = arith.addf %243, %246 : vector<16x128xf32>
      %c0_190 = arith.constant 0 : index
      %c8_191 = arith.constant 8 : index
      %248 = memref.load %arg1[%c0_190, %c8_191] : memref<16x9xf32, #tpu.memory_space<smem>>
      %249 = vector.broadcast %248 : f32 to vector<16x128xf32>
      %250 = arith.mulf %249, %143 : vector<16x128xf32>
      %251 = arith.addf %247, %250 : vector<16x128xf32>
      %c0_192 = arith.constant 0 : index
      %c0_193 = arith.constant 0 : index
      %252 = memref.load %arg1[%c0_192, %c0_193] : memref<16x9xf32, #tpu.memory_space<smem>>
      %253 = vector.broadcast %252 : f32 to vector<16x128xf32>
      %254 = arith.mulf %253, %112 : vector<16x128xf32>
      %c0_194 = arith.constant 0 : index
      %c1_195 = arith.constant 1 : index
      %255 = memref.load %arg1[%c0_194, %c1_195] : memref<16x9xf32, #tpu.memory_space<smem>>
      %256 = vector.broadcast %255 : f32 to vector<16x128xf32>
      %257 = arith.mulf %256, %115 : vector<16x128xf32>
      %258 = arith.addf %254, %257 : vector<16x128xf32>
      %c0_196 = arith.constant 0 : index
      %c2_197 = arith.constant 2 : index
      %259 = memref.load %arg1[%c0_196, %c2_197] : memref<16x9xf32, #tpu.memory_space<smem>>
      %260 = vector.broadcast %259 : f32 to vector<16x128xf32>
      %261 = arith.mulf %260, %118 : vector<16x128xf32>
      %262 = arith.addf %258, %261 : vector<16x128xf32>
      %c0_198 = arith.constant 0 : index
      %c3_199 = arith.constant 3 : index
      %263 = memref.load %arg1[%c0_198, %c3_199] : memref<16x9xf32, #tpu.memory_space<smem>>
      %264 = vector.broadcast %263 : f32 to vector<16x128xf32>
      %265 = arith.mulf %264, %126 : vector<16x128xf32>
      %266 = arith.addf %262, %265 : vector<16x128xf32>
      %c0_200 = arith.constant 0 : index
      %c4_201 = arith.constant 4 : index
      %267 = memref.load %arg1[%c0_200, %c4_201] : memref<16x9xf32, #tpu.memory_space<smem>>
      %268 = vector.broadcast %267 : f32 to vector<16x128xf32>
      %269 = arith.mulf %268, %129 : vector<16x128xf32>
      %270 = arith.addf %266, %269 : vector<16x128xf32>
      %c0_202 = arith.constant 0 : index
      %c5_203 = arith.constant 5 : index
      %271 = memref.load %arg1[%c0_202, %c5_203] : memref<16x9xf32, #tpu.memory_space<smem>>
      %272 = vector.broadcast %271 : f32 to vector<16x128xf32>
      %273 = arith.mulf %272, %132 : vector<16x128xf32>
      %274 = arith.addf %270, %273 : vector<16x128xf32>
      %c0_204 = arith.constant 0 : index
      %c6_205 = arith.constant 6 : index
      %275 = memref.load %arg1[%c0_204, %c6_205] : memref<16x9xf32, #tpu.memory_space<smem>>
      %276 = vector.broadcast %275 : f32 to vector<16x128xf32>
      %277 = arith.mulf %276, %140 : vector<16x128xf32>
      %278 = arith.addf %274, %277 : vector<16x128xf32>
      %c0_206 = arith.constant 0 : index
      %c7_207 = arith.constant 7 : index
      %279 = memref.load %arg1[%c0_206, %c7_207] : memref<16x9xf32, #tpu.memory_space<smem>>
      %280 = vector.broadcast %279 : f32 to vector<16x128xf32>
      %281 = arith.mulf %280, %143 : vector<16x128xf32>
      %282 = arith.addf %278, %281 : vector<16x128xf32>
      %c0_208 = arith.constant 0 : index
      %c8_209 = arith.constant 8 : index
      %283 = memref.load %arg1[%c0_208, %c8_209] : memref<16x9xf32, #tpu.memory_space<smem>>
      %284 = vector.broadcast %283 : f32 to vector<16x128xf32>
      %285 = arith.mulf %284, %146 : vector<16x128xf32>
      %286 = arith.addf %282, %285 : vector<16x128xf32>
      %287 = arith.maximumf %181, %216 : vector<16x128xf32>
      %288 = arith.maximumf %251, %286 : vector<16x128xf32>
      %289 = arith.maximumf %287, %288 : vector<16x128xf32>
      %c0_210 = arith.constant 0 : index
      %290 = memref.load %arg2[%c0_210] : memref<16xf32, #tpu.memory_space<smem>>
      %291 = vector.broadcast %290 : f32 to vector<16x128xf32>
      %292 = arith.addf %289, %291 : vector<16x128xf32>
      %cst_211 = arith.constant 0.000000e+00 : f32
      %293 = vector.broadcast %cst_211 : f32 to vector<16x128xf32>
      %294 = arith.maximumf %292, %293 : vector<16x128xf32>
      %295 = arith.index_cast %arg8 : i32 to index
      %c0_212 = arith.constant 0 : index
      %c0_213 = arith.constant 0 : index
      %296 = vector.load %arg7[%295, %c0_212, %c0_213] : memref<13x256x128xf32, #tpu.memory_space<vmem>>, vector<1x16x128xf32>
      %297 = vector.shape_cast %296 : vector<1x16x128xf32> to vector<16x128xf32>
      %298 = vector.shape_cast %294 : vector<16x128xf32> to vector<1x16x128xf32>
      tpu.vector_store %arg7[%295, %c0_212, %c0_213], %298 {strides = array<i32>} : memref<13x256x128xf32, #tpu.memory_space<vmem>>, vector<1x16x128xf32>,
      %c1_214 = arith.constant 1 : index
      %c0_215 = arith.constant 0 : index
      %299 = memref.load %arg1[%c1_214, %c0_215] : memref<16x9xf32, #tpu.memory_space<smem>>
      %300 = vector.broadcast %299 : f32 to vector<16x128xf32>
      %301 = arith.mulf %300, %95 : vector<16x128xf32>
      %c1_216 = arith.constant 1 : index
      %c1_217 = arith.constant 1 : index
      %302 = memref.load %arg1[%c1_216, %c1_217] : memref<16x9xf32, #tpu.memory_space<smem>>
      %303 = vector.broadcast %302 : f32 to vector<16x128xf32>
      %304 = arith.mulf %303, %98 : vector<16x128xf32>
      %305 = arith.addf %301, %304 : vector<16x128xf32>
      %c1_218 = arith.constant 1 : index
      %c2_219 = arith.constant 2 : index
      %306 = memref.load %arg1[%c1_218, %c2_219] : memref<16x9xf32, #tpu.memory_space<smem>>
      %307 = vector.broadcast %306 : f32 to vector<16x128xf32>
      %308 = arith.mulf %307, %101 : vector<16x128xf32>
      %309 = arith.addf %305, %308 : vector<16x128xf32>
      %c1_220 = arith.constant 1 : index
      %c3_221 = arith.constant 3 : index
      %310 = memref.load %arg1[%c1_220, %c3_221] : memref<16x9xf32, #tpu.memory_space<smem>>
      %311 = vector.broadcast %310 : f32 to vector<16x128xf32>
      %312 = arith.mulf %311, %109 : vector<16x128xf32>
      %313 = arith.addf %309, %312 : vector<16x128xf32>
      %c1_222 = arith.constant 1 : index
      %c4_223 = arith.constant 4 : index
      %314 = memref.load %arg1[%c1_222, %c4_223] : memref<16x9xf32, #tpu.memory_space<smem>>
      %315 = vector.broadcast %314 : f32 to vector<16x128xf32>
      %316 = arith.mulf %315, %112 : vector<16x128xf32>
      %317 = arith.addf %313, %316 : vector<16x128xf32>
      %c1_224 = arith.constant 1 : index
      %c5_225 = arith.constant 5 : index
      %318 = memref.load %arg1[%c1_224, %c5_225] : memref<16x9xf32, #tpu.memory_space<smem>>
      %319 = vector.broadcast %318 : f32 to vector<16x128xf32>
      %320 = arith.mulf %319, %115 : vector<16x128xf32>
      %321 = arith.addf %317, %320 : vector<16x128xf32>
      %c1_226 = arith.constant 1 : index
      %c6_227 = arith.constant 6 : index
      %322 = memref.load %arg1[%c1_226, %c6_227] : memref<16x9xf32, #tpu.memory_space<smem>>
      %323 = vector.broadcast %322 : f32 to vector<16x128xf32>
      %324 = arith.mulf %323, %123 : vector<16x128xf32>
      %325 = arith.addf %321, %324 : vector<16x128xf32>
      %c1_228 = arith.constant 1 : index
      %c7_229 = arith.constant 7 : index
      %326 = memref.load %arg1[%c1_228, %c7_229] : memref<16x9xf32, #tpu.memory_space<smem>>
      %327 = vector.broadcast %326 : f32 to vector<16x128xf32>
      %328 = arith.mulf %327, %126 : vector<16x128xf32>
      %329 = arith.addf %325, %328 : vector<16x128xf32>
      %c1_230 = arith.constant 1 : index
      %c8_231 = arith.constant 8 : index
      %330 = memref.load %arg1[%c1_230, %c8_231] : memref<16x9xf32, #tpu.memory_space<smem>>
      %331 = vector.broadcast %330 : f32 to vector<16x128xf32>
      %332 = arith.mulf %331, %129 : vector<16x128xf32>
      %333 = arith.addf %329, %332 : vector<16x128xf32>
      %c1_232 = arith.constant 1 : index
      %c0_233 = arith.constant 0 : index
      %334 = memref.load %arg1[%c1_232, %c0_233] : memref<16x9xf32, #tpu.memory_space<smem>>
      %335 = vector.broadcast %334 : f32 to vector<16x128xf32>
      %336 = arith.mulf %335, %98 : vector<16x128xf32>
      %c1_234 = arith.constant 1 : index
      %c1_235 = arith.constant 1 : index
      %337 = memref.load %arg1[%c1_234, %c1_235] : memref<16x9xf32, #tpu.memory_space<smem>>
      %338 = vector.broadcast %337 : f32 to vector<16x128xf32>
      %339 = arith.mulf %338, %101 : vector<16x128xf32>
      %340 = arith.addf %336, %339 : vector<16x128xf32>
      %c1_236 = arith.constant 1 : index
      %c2_237 = arith.constant 2 : index
      %341 = memref.load %arg1[%c1_236, %c2_237] : memref<16x9xf32, #tpu.memory_space<smem>>
      %342 = vector.broadcast %341 : f32 to vector<16x128xf32>
      %343 = arith.mulf %342, %104 : vector<16x128xf32>
      %344 = arith.addf %340, %343 : vector<16x128xf32>
      %c1_238 = arith.constant 1 : index
      %c3_239 = arith.constant 3 : index
      %345 = memref.load %arg1[%c1_238, %c3_239] : memref<16x9xf32, #tpu.memory_space<smem>>
      %346 = vector.broadcast %345 : f32 to vector<16x128xf32>
      %347 = arith.mulf %346, %112 : vector<16x128xf32>
      %348 = arith.addf %344, %347 : vector<16x128xf32>
      %c1_240 = arith.constant 1 : index
      %c4_241 = arith.constant 4 : index
      %349 = memref.load %arg1[%c1_240, %c4_241] : memref<16x9xf32, #tpu.memory_space<smem>>
      %350 = vector.broadcast %349 : f32 to vector<16x128xf32>
      %351 = arith.mulf %350, %115 : vector<16x128xf32>
      %352 = arith.addf %348, %351 : vector<16x128xf32>
      %c1_242 = arith.constant 1 : index
      %c5_243 = arith.constant 5 : index
      %353 = memref.load %arg1[%c1_242, %c5_243] : memref<16x9xf32, #tpu.memory_space<smem>>
      %354 = vector.broadcast %353 : f32 to vector<16x128xf32>
      %355 = arith.mulf %354, %118 : vector<16x128xf32>
      %356 = arith.addf %352, %355 : vector<16x128xf32>
      %c1_244 = arith.constant 1 : index
      %c6_245 = arith.constant 6 : index
      %357 = memref.load %arg1[%c1_244, %c6_245] : memref<16x9xf32, #tpu.memory_space<smem>>
      %358 = vector.broadcast %357 : f32 to vector<16x128xf32>
      %359 = arith.mulf %358, %126 : vector<16x128xf32>
      %360 = arith.addf %356, %359 : vector<16x128xf32>
      %c1_246 = arith.constant 1 : index
      %c7_247 = arith.constant 7 : index
      %361 = memref.load %arg1[%c1_246, %c7_247] : memref<16x9xf32, #tpu.memory_space<smem>>
      %362 = vector.broadcast %361 : f32 to vector<16x128xf32>
      %363 = arith.mulf %362, %129 : vector<16x128xf32>
      %364 = arith.addf %360, %363 : vector<16x128xf32>
      %c1_248 = arith.constant 1 : index
      %c8_249 = arith.constant 8 : index
      %365 = memref.load %arg1[%c1_248, %c8_249] : memref<16x9xf32, #tpu.memory_space<smem>>
      %366 = vector.broadcast %365 : f32 to vector<16x128xf32>
      %367 = arith.mulf %366, %132 : vector<16x128xf32>
      %368 = arith.addf %364, %367 : vector<16x128xf32>
      %c1_250 = arith.constant 1 : index
      %c0_251 = arith.constant 0 : index
      %369 = memref.load %arg1[%c1_250, %c0_251] : memref<16x9xf32, #tpu.memory_space<smem>>
      %370 = vector.broadcast %369 : f32 to vector<16x128xf32>
      %371 = arith.mulf %370, %109 : vector<16x128xf32>
      %c1_252 = arith.constant 1 : index
      %c1_253 = arith.constant 1 : index
      %372 = memref.load %arg1[%c1_252, %c1_253] : memref<16x9xf32, #tpu.memory_space<smem>>
      %373 = vector.broadcast %372 : f32 to vector<16x128xf32>
      %374 = arith.mulf %373, %112 : vector<16x128xf32>
      %375 = arith.addf %371, %374 : vector<16x128xf32>
      %c1_254 = arith.constant 1 : index
      %c2_255 = arith.constant 2 : index
      %376 = memref.load %arg1[%c1_254, %c2_255] : memref<16x9xf32, #tpu.memory_space<smem>>
      %377 = vector.broadcast %376 : f32 to vector<16x128xf32>
      %378 = arith.mulf %377, %115 : vector<16x128xf32>
      %379 = arith.addf %375, %378 : vector<16x128xf32>
      %c1_256 = arith.constant 1 : index
      %c3_257 = arith.constant 3 : index
      %380 = memref.load %arg1[%c1_256, %c3_257] : memref<16x9xf32, #tpu.memory_space<smem>>
      %381 = vector.broadcast %380 : f32 to vector<16x128xf32>
      %382 = arith.mulf %381, %123 : vector<16x128xf32>
      %383 = arith.addf %379, %382 : vector<16x128xf32>
      %c1_258 = arith.constant 1 : index
      %c4_259 = arith.constant 4 : index
      %384 = memref.load %arg1[%c1_258, %c4_259] : memref<16x9xf32, #tpu.memory_space<smem>>
      %385 = vector.broadcast %384 : f32 to vector<16x128xf32>
      %386 = arith.mulf %385, %126 : vector<16x128xf32>
      %387 = arith.addf %383, %386 : vector<16x128xf32>
      %c1_260 = arith.constant 1 : index
      %c5_261 = arith.constant 5 : index
      %388 = memref.load %arg1[%c1_260, %c5_261] : memref<16x9xf32, #tpu.memory_space<smem>>
      %389 = vector.broadcast %388 : f32 to vector<16x128xf32>
      %390 = arith.mulf %389, %129 : vector<16x128xf32>
      %391 = arith.addf %387, %390 : vector<16x128xf32>
      %c1_262 = arith.constant 1 : index
      %c6_263 = arith.constant 6 : index
      %392 = memref.load %arg1[%c1_262, %c6_263] : memref<16x9xf32, #tpu.memory_space<smem>>
      %393 = vector.broadcast %392 : f32 to vector<16x128xf32>
      %394 = arith.mulf %393, %137 : vector<16x128xf32>
      %395 = arith.addf %391, %394 : vector<16x128xf32>
      %c1_264 = arith.constant 1 : index
      %c7_265 = arith.constant 7 : index
      %396 = memref.load %arg1[%c1_264, %c7_265] : memref<16x9xf32, #tpu.memory_space<smem>>
      %397 = vector.broadcast %396 : f32 to vector<16x128xf32>
      %398 = arith.mulf %397, %140 : vector<16x128xf32>
      %399 = arith.addf %395, %398 : vector<16x128xf32>
      %c1_266 = arith.constant 1 : index
      %c8_267 = arith.constant 8 : index
      %400 = memref.load %arg1[%c1_266, %c8_267] : memref<16x9xf32, #tpu.memory_space<smem>>
      %401 = vector.broadcast %400 : f32 to vector<16x128xf32>
      %402 = arith.mulf %401, %143 : vector<16x128xf32>
      %403 = arith.addf %399, %402 : vector<16x128xf32>
      %c1_268 = arith.constant 1 : index
      %c0_269 = arith.constant 0 : index
      %404 = memref.load %arg1[%c1_268, %c0_269] : memref<16x9xf32, #tpu.memory_space<smem>>
      %405 = vector.broadcast %404 : f32 to vector<16x128xf32>
      %406 = arith.mulf %405, %112 : vector<16x128xf32>
      %c1_270 = arith.constant 1 : index
      %c1_271 = arith.constant 1 : index
      %407 = memref.load %arg1[%c1_270, %c1_271] : memref<16x9xf32, #tpu.memory_space<smem>>
      %408 = vector.broadcast %407 : f32 to vector<16x128xf32>
      %409 = arith.mulf %408, %115 : vector<16x128xf32>
      %410 = arith.addf %406, %409 : vector<16x128xf32>
      %c1_272 = arith.constant 1 : index
      %c2_273 = arith.constant 2 : index
      %411 = memref.load %arg1[%c1_272, %c2_273] : memref<16x9xf32, #tpu.memory_space<smem>>
      %412 = vector.broadcast %411 : f32 to vector<16x128xf32>
      %413 = arith.mulf %412, %118 : vector<16x128xf32>
      %414 = arith.addf %410, %413 : vector<16x128xf32>
      %c1_274 = arith.constant 1 : index
      %c3_275 = arith.constant 3 : index
      %415 = memref.load %arg1[%c1_274, %c3_275] : memref<16x9xf32, #tpu.memory_space<smem>>
      %416 = vector.broadcast %415 : f32 to vector<16x128xf32>
      %417 = arith.mulf %416, %126 : vector<16x128xf32>
      %418 = arith.addf %414, %417 : vector<16x128xf32>
      %c1_276 = arith.constant 1 : index
      %c4_277 = arith.constant 4 : index
      %419 = memref.load %arg1[%c1_276, %c4_277] : memref<16x9xf32, #tpu.memory_space<smem>>
      %420 = vector.broadcast %419 : f32 to vector<16x128xf32>
      %421 = arith.mulf %420, %129 : vector<16x128xf32>
      %422 = arith.addf %418, %421 : vector<16x128xf32>
      %c1_278 = arith.constant 1 : index
      %c5_279 = arith.constant 5 : index
      %423 = memref.load %arg1[%c1_278, %c5_279] : memref<16x9xf32, #tpu.memory_space<smem>>
      %424 = vector.broadcast %423 : f32 to vector<16x128xf32>
      %425 = arith.mulf %424, %132 : vector<16x128xf32>
      %426 = arith.addf %422, %425 : vector<16x128xf32>
      %c1_280 = arith.constant 1 : index
      %c6_281 = arith.constant 6 : index
      %427 = memref.load %arg1[%c1_280, %c6_281] : memref<16x9xf32, #tpu.memory_space<smem>>
      %428 = vector.broadcast %427 : f32 to vector<16x128xf32>
      %429 = arith.mulf %428, %140 : vector<16x128xf32>
      %430 = arith.addf %426, %429 : vector<16x128xf32>
      %c1_282 = arith.constant 1 : index
      %c7_283 = arith.constant 7 : index
      %431 = memref.load %arg1[%c1_282, %c7_283] : memref<16x9xf32, #tpu.memory_space<smem>>
      %432 = vector.broadcast %431 : f32 to vector<16x128xf32>
      %433 = arith.mulf %432, %143 : vector<16x128xf32>
      %434 = arith.addf %430, %433 : vector<16x128xf32>
      %c1_284 = arith.constant 1 : index
      %c8_285 = arith.constant 8 : index
      %435 = memref.load %arg1[%c1_284, %c8_285] : memref<16x9xf32, #tpu.memory_space<smem>>
      %436 = vector.broadcast %435 : f32 to vector<16x128xf32>
      %437 = arith.mulf %436, %146 : vector<16x128xf32>
      %438 = arith.addf %434, %437 : vector<16x128xf32>
      %439 = arith.maximumf %333, %368 : vector<16x128xf32>
      %440 = arith.maximumf %403, %438 : vector<16x128xf32>
      %441 = arith.maximumf %439, %440 : vector<16x128xf32>
      %c1_286 = arith.constant 1 : index
      %442 = memref.load %arg2[%c1_286] : memref<16xf32, #tpu.memory_space<smem>>
      %443 = vector.broadcast %442 : f32 to vector<16x128xf32>
      %444 = arith.addf %441, %443 : vector<16x128xf32>
      %cst_287 = arith.constant 0.000000e+00 : f32
      %445 = vector.broadcast %cst_287 : f32 to vector<16x128xf32>
      %446 = arith.maximumf %444, %445 : vector<16x128xf32>
      %447 = arith.index_cast %arg8 : i32 to index
      %c16 = arith.constant 16 : index
      %c0_288 = arith.constant 0 : index
      %448 = vector.load %arg7[%447, %c16, %c0_288] : memref<13x256x128xf32, #tpu.memory_space<vmem>>, vector<1x16x128xf32>
      %449 = vector.shape_cast %448 : vector<1x16x128xf32> to vector<16x128xf32>
      %450 = vector.shape_cast %446 : vector<16x128xf32> to vector<1x16x128xf32>
      tpu.vector_store %arg7[%447, %c16, %c0_288], %450 {strides = array<i32>} : memref<13x256x128xf32, #tpu.memory_space<vmem>>, vector<1x16x128xf32>,
      %c2_289 = arith.constant 2 : index
      %c0_290 = arith.constant 0 : index
      %451 = memref.load %arg1[%c2_289, %c0_290] : memref<16x9xf32, #tpu.memory_space<smem>>
      %452 = vector.broadcast %451 : f32 to vector<16x128xf32>
      %453 = arith.mulf %452, %95 : vector<16x128xf32>
      %c2_291 = arith.constant 2 : index
      %c1_292 = arith.constant 1 : index
      %454 = memref.load %arg1[%c2_291, %c1_292] : memref<16x9xf32, #tpu.memory_space<smem>>
      %455 = vector.broadcast %454 : f32 to vector<16x128xf32>
      %456 = arith.mulf %455, %98 : vector<16x128xf32>
      %457 = arith.addf %453, %456 : vector<16x128xf32>
      %c2_293 = arith.constant 2 : index
      %c2_294 = arith.constant 2 : index
      %458 = memref.load %arg1[%c2_293, %c2_294] : memref<16x9xf32, #tpu.memory_space<smem>>
      %459 = vector.broadcast %458 : f32 to vector<16x128xf32>
      %460 = arith.mulf %459, %101 : vector<16x128xf32>
      %461 = arith.addf %457, %460 : vector<16x128xf32>
      %c2_295 = arith.constant 2 : index
      %c3_296 = arith.constant 3 : index
      %462 = memref.load %arg1[%c2_295, %c3_296] : memref<16x9xf32, #tpu.memory_space<smem>>
      %463 = vector.broadcast %462 : f32 to vector<16x128xf32>
      %464 = arith.mulf %463, %109 : vector<16x128xf32>
      %465 = arith.addf %461, %464 : vector<16x128xf32>
      %c2_297 = arith.constant 2 : index
      %c4_298 = arith.constant 4 : index
      %466 = memref.load %arg1[%c2_297, %c4_298] : memref<16x9xf32, #tpu.memory_space<smem>>
      %467 = vector.broadcast %466 : f32 to vector<16x128xf32>
      %468 = arith.mulf %467, %112 : vector<16x128xf32>
      %469 = arith.addf %465, %468 : vector<16x128xf32>
      %c2_299 = arith.constant 2 : index
      %c5_300 = arith.constant 5 : index
      %470 = memref.load %arg1[%c2_299, %c5_300] : memref<16x9xf32, #tpu.memory_space<smem>>
      %471 = vector.broadcast %470 : f32 to vector<16x128xf32>
      %472 = arith.mulf %471, %115 : vector<16x128xf32>
      %473 = arith.addf %469, %472 : vector<16x128xf32>
      %c2_301 = arith.constant 2 : index
      %c6_302 = arith.constant 6 : index
      %474 = memref.load %arg1[%c2_301, %c6_302] : memref<16x9xf32, #tpu.memory_space<smem>>
      %475 = vector.broadcast %474 : f32 to vector<16x128xf32>
      %476 = arith.mulf %475, %123 : vector<16x128xf32>
      %477 = arith.addf %473, %476 : vector<16x128xf32>
      %c2_303 = arith.constant 2 : index
      %c7_304 = arith.constant 7 : index
      %478 = memref.load %arg1[%c2_303, %c7_304] : memref<16x9xf32, #tpu.memory_space<smem>>
      %479 = vector.broadcast %478 : f32 to vector<16x128xf32>
      %480 = arith.mulf %479, %126 : vector<16x128xf32>
      %481 = arith.addf %477, %480 : vector<16x128xf32>
      %c2_305 = arith.constant 2 : index
      %c8_306 = arith.constant 8 : index
      %482 = memref.load %arg1[%c2_305, %c8_306] : memref<16x9xf32, #tpu.memory_space<smem>>
      %483 = vector.broadcast %482 : f32 to vector<16x128xf32>
      %484 = arith.mulf %483, %129 : vector<16x128xf32>
      %485 = arith.addf %481, %484 : vector<16x128xf32>
      %c2_307 = arith.constant 2 : index
      %c0_308 = arith.constant 0 : index
      %486 = memref.load %arg1[%c2_307, %c0_308] : memref<16x9xf32, #tpu.memory_space<smem>>
      %487 = vector.broadcast %486 : f32 to vector<16x128xf32>
      %488 = arith.mulf %487, %98 : vector<16x128xf32>
      %c2_309 = arith.constant 2 : index
      %c1_310 = arith.constant 1 : index
      %489 = memref.load %arg1[%c2_309, %c1_310] : memref<16x9xf32, #tpu.memory_space<smem>>
      %490 = vector.broadcast %489 : f32 to vector<16x128xf32>
      %491 = arith.mulf %490, %101 : vector<16x128xf32>
      %492 = arith.addf %488, %491 : vector<16x128xf32>
      %c2_311 = arith.constant 2 : index
      %c2_312 = arith.constant 2 : index
      %493 = memref.load %arg1[%c2_311, %c2_312] : memref<16x9xf32, #tpu.memory_space<smem>>
      %494 = vector.broadcast %493 : f32 to vector<16x128xf32>
      %495 = arith.mulf %494, %104 : vector<16x128xf32>
      %496 = arith.addf %492, %495 : vector<16x128xf32>
      %c2_313 = arith.constant 2 : index
      %c3_314 = arith.constant 3 : index
      %497 = memref.load %arg1[%c2_313, %c3_314] : memref<16x9xf32, #tpu.memory_space<smem>>
      %498 = vector.broadcast %497 : f32 to vector<16x128xf32>
      %499 = arith.mulf %498, %112 : vector<16x128xf32>
      %500 = arith.addf %496, %499 : vector<16x128xf32>
      %c2_315 = arith.constant 2 : index
      %c4_316 = arith.constant 4 : index
      %501 = memref.load %arg1[%c2_315, %c4_316] : memref<16x9xf32, #tpu.memory_space<smem>>
      %502 = vector.broadcast %501 : f32 to vector<16x128xf32>
      %503 = arith.mulf %502, %115 : vector<16x128xf32>
      %504 = arith.addf %500, %503 : vector<16x128xf32>
      %c2_317 = arith.constant 2 : index
      %c5_318 = arith.constant 5 : index
      %505 = memref.load %arg1[%c2_317, %c5_318] : memref<16x9xf32, #tpu.memory_space<smem>>
      %506 = vector.broadcast %505 : f32 to vector<16x128xf32>
      %507 = arith.mulf %506, %118 : vector<16x128xf32>
      %508 = arith.addf %504, %507 : vector<16x128xf32>
      %c2_319 = arith.constant 2 : index
      %c6_320 = arith.constant 6 : index
      %509 = memref.load %arg1[%c2_319, %c6_320] : memref<16x9xf32, #tpu.memory_space<smem>>
      %510 = vector.broadcast %509 : f32 to vector<16x128xf32>
      %511 = arith.mulf %510, %126 : vector<16x128xf32>
      %512 = arith.addf %508, %511 : vector<16x128xf32>
      %c2_321 = arith.constant 2 : index
      %c7_322 = arith.constant 7 : index
      %513 = memref.load %arg1[%c2_321, %c7_322] : memref<16x9xf32, #tpu.memory_space<smem>>
      %514 = vector.broadcast %513 : f32 to vector<16x128xf32>
      %515 = arith.mulf %514, %129 : vector<16x128xf32>
      %516 = arith.addf %512, %515 : vector<16x128xf32>
      %c2_323 = arith.constant 2 : index
      %c8_324 = arith.constant 8 : index
      %517 = memref.load %arg1[%c2_323, %c8_324] : memref<16x9xf32, #tpu.memory_space<smem>>
      %518 = vector.broadcast %517 : f32 to vector<16x128xf32>
      %519 = arith.mulf %518, %132 : vector<16x128xf32>
      %520 = arith.addf %516, %519 : vector<16x128xf32>
      %c2_325 = arith.constant 2 : index
      %c0_326 = arith.constant 0 : index
      %521 = memref.load %arg1[%c2_325, %c0_326] : memref<16x9xf32, #tpu.memory_space<smem>>
      %522 = vector.broadcast %521 : f32 to vector<16x128xf32>
      %523 = arith.mulf %522, %109 : vector<16x128xf32>
      %c2_327 = arith.constant 2 : index
      %c1_328 = arith.constant 1 : index
      %524 = memref.load %arg1[%c2_327, %c1_328] : memref<16x9xf32, #tpu.memory_space<smem>>
      %525 = vector.broadcast %524 : f32 to vector<16x128xf32>
      %526 = arith.mulf %525, %112 : vector<16x128xf32>
      %527 = arith.addf %523, %526 : vector<16x128xf32>
      %c2_329 = arith.constant 2 : index
      %c2_330 = arith.constant 2 : index
      %528 = memref.load %arg1[%c2_329, %c2_330] : memref<16x9xf32, #tpu.memory_space<smem>>
      %529 = vector.broadcast %528 : f32 to vector<16x128xf32>
      %530 = arith.mulf %529, %115 : vector<16x128xf32>
      %531 = arith.addf %527, %530 : vector<16x128xf32>
      %c2_331 = arith.constant 2 : index
      %c3_332 = arith.constant 3 : index
      %532 = memref.load %arg1[%c2_331, %c3_332] : memref<16x9xf32, #tpu.memory_space<smem>>
      %533 = vector.broadcast %532 : f32 to vector<16x128xf32>
      %534 = arith.mulf %533, %123 : vector<16x128xf32>
      %535 = arith.addf %531, %534 : vector<16x128xf32>
      %c2_333 = arith.constant 2 : index
      %c4_334 = arith.constant 4 : index
      %536 = memref.load %arg1[%c2_333, %c4_334] : memref<16x9xf32, #tpu.memory_space<smem>>
      %537 = vector.broadcast %536 : f32 to vector<16x128xf32>
      %538 = arith.mulf %537, %126 : vector<16x128xf32>
      %539 = arith.addf %535, %538 : vector<16x128xf32>
      %c2_335 = arith.constant 2 : index
      %c5_336 = arith.constant 5 : index
      %540 = memref.load %arg1[%c2_335, %c5_336] : memref<16x9xf32, #tpu.memory_space<smem>>
      %541 = vector.broadcast %540 : f32 to vector<16x128xf32>
      %542 = arith.mulf %541, %129 : vector<16x128xf32>
      %543 = arith.addf %539, %542 : vector<16x128xf32>
      %c2_337 = arith.constant 2 : index
      %c6_338 = arith.constant 6 : index
      %544 = memref.load %arg1[%c2_337, %c6_338] : memref<16x9xf32, #tpu.memory_space<smem>>
      %545 = vector.broadcast %544 : f32 to vector<16x128xf32>
      %546 = arith.mulf %545, %137 : vector<16x128xf32>
      %547 = arith.addf %543, %546 : vector<16x128xf32>
      %c2_339 = arith.constant 2 : index
      %c7_340 = arith.constant 7 : index
      %548 = memref.load %arg1[%c2_339, %c7_340] : memref<16x9xf32, #tpu.memory_space<smem>>
      %549 = vector.broadcast %548 : f32 to vector<16x128xf32>
      %550 = arith.mulf %549, %140 : vector<16x128xf32>
      %551 = arith.addf %547, %550 : vector<16x128xf32>
      %c2_341 = arith.constant 2 : index
      %c8_342 = arith.constant 8 : index
      %552 = memref.load %arg1[%c2_341, %c8_342] : memref<16x9xf32, #tpu.memory_space<smem>>
      %553 = vector.broadcast %552 : f32 to vector<16x128xf32>
      %554 = arith.mulf %553, %143 : vector<16x128xf32>
      %555 = arith.addf %551, %554 : vector<16x128xf32>
      %c2_343 = arith.constant 2 : index
      %c0_344 = arith.constant 0 : index
      %556 = memref.load %arg1[%c2_343, %c0_344] : memref<16x9xf32, #tpu.memory_space<smem>>
      %557 = vector.broadcast %556 : f32 to vector<16x128xf32>
      %558 = arith.mulf %557, %112 : vector<16x128xf32>
      %c2_345 = arith.constant 2 : index
      %c1_346 = arith.constant 1 : index
      %559 = memref.load %arg1[%c2_345, %c1_346] : memref<16x9xf32, #tpu.memory_space<smem>>
      %560 = vector.broadcast %559 : f32 to vector<16x128xf32>
      %561 = arith.mulf %560, %115 : vector<16x128xf32>
      %562 = arith.addf %558, %561 : vector<16x128xf32>
      %c2_347 = arith.constant 2 : index
      %c2_348 = arith.constant 2 : index
      %563 = memref.load %arg1[%c2_347, %c2_348] : memref<16x9xf32, #tpu.memory_space<smem>>
      %564 = vector.broadcast %563 : f32 to vector<16x128xf32>
      %565 = arith.mulf %564, %118 : vector<16x128xf32>
      %566 = arith.addf %562, %565 : vector<16x128xf32>
      %c2_349 = arith.constant 2 : index
      %c3_350 = arith.constant 3 : index
      %567 = memref.load %arg1[%c2_349, %c3_350] : memref<16x9xf32, #tpu.memory_space<smem>>
      %568 = vector.broadcast %567 : f32 to vector<16x128xf32>
      %569 = arith.mulf %568, %126 : vector<16x128xf32>
      %570 = arith.addf %566, %569 : vector<16x128xf32>
      %c2_351 = arith.constant 2 : index
      %c4_352 = arith.constant 4 : index
      %571 = memref.load %arg1[%c2_351, %c4_352] : memref<16x9xf32, #tpu.memory_space<smem>>
      %572 = vector.broadcast %571 : f32 to vector<16x128xf32>
      %573 = arith.mulf %572, %129 : vector<16x128xf32>
      %574 = arith.addf %570, %573 : vector<16x128xf32>
      %c2_353 = arith.constant 2 : index
      %c5_354 = arith.constant 5 : index
      %575 = memref.load %arg1[%c2_353, %c5_354] : memref<16x9xf32, #tpu.memory_space<smem>>
      %576 = vector.broadcast %575 : f32 to vector<16x128xf32>
      %577 = arith.mulf %576, %132 : vector<16x128xf32>
      %578 = arith.addf %574, %577 : vector<16x128xf32>
      %c2_355 = arith.constant 2 : index
      %c6_356 = arith.constant 6 : index
      %579 = memref.load %arg1[%c2_355, %c6_356] : memref<16x9xf32, #tpu.memory_space<smem>>
      %580 = vector.broadcast %579 : f32 to vector<16x128xf32>
      %581 = arith.mulf %580, %140 : vector<16x128xf32>
      %582 = arith.addf %578, %581 : vector<16x128xf32>
      %c2_357 = arith.constant 2 : index
      %c7_358 = arith.constant 7 : index
      %583 = memref.load %arg1[%c2_357, %c7_358] : memref<16x9xf32, #tpu.memory_space<smem>>
      %584 = vector.broadcast %583 : f32 to vector<16x128xf32>
      %585 = arith.mulf %584, %143 : vector<16x128xf32>
      %586 = arith.addf %582, %585 : vector<16x128xf32>
      %c2_359 = arith.constant 2 : index
      %c8_360 = arith.constant 8 : index
      %587 = memref.load %arg1[%c2_359, %c8_360] : memref<16x9xf32, #tpu.memory_space<smem>>
      %588 = vector.broadcast %587 : f32 to vector<16x128xf32>
      %589 = arith.mulf %588, %146 : vector<16x128xf32>
      %590 = arith.addf %586, %589 : vector<16x128xf32>
      %591 = arith.maximumf %485, %520 : vector<16x128xf32>
      %592 = arith.maximumf %555, %590 : vector<16x128xf32>
      %593 = arith.maximumf %591, %592 : vector<16x128xf32>
      %c2_361 = arith.constant 2 : index
      %594 = memref.load %arg2[%c2_361] : memref<16xf32, #tpu.memory_space<smem>>
      %595 = vector.broadcast %594 : f32 to vector<16x128xf32>
      %596 = arith.addf %593, %595 : vector<16x128xf32>
      %cst_362 = arith.constant 0.000000e+00 : f32
      %597 = vector.broadcast %cst_362 : f32 to vector<16x128xf32>
      %598 = arith.maximumf %596, %597 : vector<16x128xf32>
      %599 = arith.index_cast %arg8 : i32 to index
      %c32 = arith.constant 32 : index
      %c0_363 = arith.constant 0 : index
      %600 = vector.load %arg7[%599, %c32, %c0_363] : memref<13x256x128xf32, #tpu.memory_space<vmem>>, vector<1x16x128xf32>
      %601 = vector.shape_cast %600 : vector<1x16x128xf32> to vector<16x128xf32>
      %602 = vector.shape_cast %598 : vector<16x128xf32> to vector<1x16x128xf32>
      tpu.vector_store %arg7[%599, %c32, %c0_363], %602 {strides = array<i32>} : memref<13x256x128xf32, #tpu.memory_space<vmem>>, vector<1x16x128xf32>,
      %c3_364 = arith.constant 3 : index
      %c0_365 = arith.constant 0 : index
      %603 = memref.load %arg1[%c3_364, %c0_365] : memref<16x9xf32, #tpu.memory_space<smem>>
      %604 = vector.broadcast %603 : f32 to vector<16x128xf32>
      %605 = arith.mulf %604, %95 : vector<16x128xf32>
      %c3_366 = arith.constant 3 : index
      %c1_367 = arith.constant 1 : index
      %606 = memref.load %arg1[%c3_366, %c1_367] : memref<16x9xf32, #tpu.memory_space<smem>>
      %607 = vector.broadcast %606 : f32 to vector<16x128xf32>
      %608 = arith.mulf %607, %98 : vector<16x128xf32>
      %609 = arith.addf %605, %608 : vector<16x128xf32>
      %c3_368 = arith.constant 3 : index
      %c2_369 = arith.constant 2 : index
      %610 = memref.load %arg1[%c3_368, %c2_369] : memref<16x9xf32, #tpu.memory_space<smem>>
      %611 = vector.broadcast %610 : f32 to vector<16x128xf32>
      %612 = arith.mulf %611, %101 : vector<16x128xf32>
      %613 = arith.addf %609, %612 : vector<16x128xf32>
      %c3_370 = arith.constant 3 : index
      %c3_371 = arith.constant 3 : index
      %614 = memref.load %arg1[%c3_370, %c3_371] : memref<16x9xf32, #tpu.memory_space<smem>>
      %615 = vector.broadcast %614 : f32 to vector<16x128xf32>
      %616 = arith.mulf %615, %109 : vector<16x128xf32>
      %617 = arith.addf %613, %616 : vector<16x128xf32>
      %c3_372 = arith.constant 3 : index
      %c4_373 = arith.constant 4 : index
      %618 = memref.load %arg1[%c3_372, %c4_373] : memref<16x9xf32, #tpu.memory_space<smem>>
      %619 = vector.broadcast %618 : f32 to vector<16x128xf32>
      %620 = arith.mulf %619, %112 : vector<16x128xf32>
      %621 = arith.addf %617, %620 : vector<16x128xf32>
      %c3_374 = arith.constant 3 : index
      %c5_375 = arith.constant 5 : index
      %622 = memref.load %arg1[%c3_374, %c5_375] : memref<16x9xf32, #tpu.memory_space<smem>>
      %623 = vector.broadcast %622 : f32 to vector<16x128xf32>
      %624 = arith.mulf %623, %115 : vector<16x128xf32>
      %625 = arith.addf %621, %624 : vector<16x128xf32>
      %c3_376 = arith.constant 3 : index
      %c6_377 = arith.constant 6 : index
      %626 = memref.load %arg1[%c3_376, %c6_377] : memref<16x9xf32, #tpu.memory_space<smem>>
      %627 = vector.broadcast %626 : f32 to vector<16x128xf32>
      %628 = arith.mulf %627, %123 : vector<16x128xf32>
      %629 = arith.addf %625, %628 : vector<16x128xf32>
      %c3_378 = arith.constant 3 : index
      %c7_379 = arith.constant 7 : index
      %630 = memref.load %arg1[%c3_378, %c7_379] : memref<16x9xf32, #tpu.memory_space<smem>>
      %631 = vector.broadcast %630 : f32 to vector<16x128xf32>
      %632 = arith.mulf %631, %126 : vector<16x128xf32>
      %633 = arith.addf %629, %632 : vector<16x128xf32>
      %c3_380 = arith.constant 3 : index
      %c8_381 = arith.constant 8 : index
      %634 = memref.load %arg1[%c3_380, %c8_381] : memref<16x9xf32, #tpu.memory_space<smem>>
      %635 = vector.broadcast %634 : f32 to vector<16x128xf32>
      %636 = arith.mulf %635, %129 : vector<16x128xf32>
      %637 = arith.addf %633, %636 : vector<16x128xf32>
      %c3_382 = arith.constant 3 : index
      %c0_383 = arith.constant 0 : index
      %638 = memref.load %arg1[%c3_382, %c0_383] : memref<16x9xf32, #tpu.memory_space<smem>>
      %639 = vector.broadcast %638 : f32 to vector<16x128xf32>
      %640 = arith.mulf %639, %98 : vector<16x128xf32>
      %c3_384 = arith.constant 3 : index
      %c1_385 = arith.constant 1 : index
      %641 = memref.load %arg1[%c3_384, %c1_385] : memref<16x9xf32, #tpu.memory_space<smem>>
      %642 = vector.broadcast %641 : f32 to vector<16x128xf32>
      %643 = arith.mulf %642, %101 : vector<16x128xf32>
      %644 = arith.addf %640, %643 : vector<16x128xf32>
      %c3_386 = arith.constant 3 : index
      %c2_387 = arith.constant 2 : index
      %645 = memref.load %arg1[%c3_386, %c2_387] : memref<16x9xf32, #tpu.memory_space<smem>>
      %646 = vector.broadcast %645 : f32 to vector<16x128xf32>
      %647 = arith.mulf %646, %104 : vector<16x128xf32>
      %648 = arith.addf %644, %647 : vector<16x128xf32>
      %c3_388 = arith.constant 3 : index
      %c3_389 = arith.constant 3 : index
      %649 = memref.load %arg1[%c3_388, %c3_389] : memref<16x9xf32, #tpu.memory_space<smem>>
      %650 = vector.broadcast %649 : f32 to vector<16x128xf32>
      %651 = arith.mulf %650, %112 : vector<16x128xf32>
      %652 = arith.addf %648, %651 : vector<16x128xf32>
      %c3_390 = arith.constant 3 : index
      %c4_391 = arith.constant 4 : index
      %653 = memref.load %arg1[%c3_390, %c4_391] : memref<16x9xf32, #tpu.memory_space<smem>>
      %654 = vector.broadcast %653 : f32 to vector<16x128xf32>
      %655 = arith.mulf %654, %115 : vector<16x128xf32>
      %656 = arith.addf %652, %655 : vector<16x128xf32>
      %c3_392 = arith.constant 3 : index
      %c5_393 = arith.constant 5 : index
      %657 = memref.load %arg1[%c3_392, %c5_393] : memref<16x9xf32, #tpu.memory_space<smem>>
      %658 = vector.broadcast %657 : f32 to vector<16x128xf32>
      %659 = arith.mulf %658, %118 : vector<16x128xf32>
      %660 = arith.addf %656, %659 : vector<16x128xf32>
      %c3_394 = arith.constant 3 : index
      %c6_395 = arith.constant 6 : index
      %661 = memref.load %arg1[%c3_394, %c6_395] : memref<16x9xf32, #tpu.memory_space<smem>>
      %662 = vector.broadcast %661 : f32 to vector<16x128xf32>
      %663 = arith.mulf %662, %126 : vector<16x128xf32>
      %664 = arith.addf %660, %663 : vector<16x128xf32>
      %c3_396 = arith.constant 3 : index
      %c7_397 = arith.constant 7 : index
      %665 = memref.load %arg1[%c3_396, %c7_397] : memref<16x9xf32, #tpu.memory_space<smem>>
      %666 = vector.broadcast %665 : f32 to vector<16x128xf32>
      %667 = arith.mulf %666, %129 : vector<16x128xf32>
      %668 = arith.addf %664, %667 : vector<16x128xf32>
      %c3_398 = arith.constant 3 : index
      %c8_399 = arith.constant 8 : index
      %669 = memref.load %arg1[%c3_398, %c8_399] : memref<16x9xf32, #tpu.memory_space<smem>>
      %670 = vector.broadcast %669 : f32 to vector<16x128xf32>
      %671 = arith.mulf %670, %132 : vector<16x128xf32>
      %672 = arith.addf %668, %671 : vector<16x128xf32>
      %c3_400 = arith.constant 3 : index
      %c0_401 = arith.constant 0 : index
      %673 = memref.load %arg1[%c3_400, %c0_401] : memref<16x9xf32, #tpu.memory_space<smem>>
      %674 = vector.broadcast %673 : f32 to vector<16x128xf32>
      %675 = arith.mulf %674, %109 : vector<16x128xf32>
      %c3_402 = arith.constant 3 : index
      %c1_403 = arith.constant 1 : index
      %676 = memref.load %arg1[%c3_402, %c1_403] : memref<16x9xf32, #tpu.memory_space<smem>>
      %677 = vector.broadcast %676 : f32 to vector<16x128xf32>
      %678 = arith.mulf %677, %112 : vector<16x128xf32>
      %679 = arith.addf %675, %678 : vector<16x128xf32>
      %c3_404 = arith.constant 3 : index
      %c2_405 = arith.constant 2 : index
      %680 = memref.load %arg1[%c3_404, %c2_405] : memref<16x9xf32, #tpu.memory_space<smem>>
      %681 = vector.broadcast %680 : f32 to vector<16x128xf32>
      %682 = arith.mulf %681, %115 : vector<16x128xf32>
      %683 = arith.addf %679, %682 : vector<16x128xf32>
      %c3_406 = arith.constant 3 : index
      %c3_407 = arith.constant 3 : index
      %684 = memref.load %arg1[%c3_406, %c3_407] : memref<16x9xf32, #tpu.memory_space<smem>>
      %685 = vector.broadcast %684 : f32 to vector<16x128xf32>
      %686 = arith.mulf %685, %123 : vector<16x128xf32>
      %687 = arith.addf %683, %686 : vector<16x128xf32>
      %c3_408 = arith.constant 3 : index
      %c4_409 = arith.constant 4 : index
      %688 = memref.load %arg1[%c3_408, %c4_409] : memref<16x9xf32, #tpu.memory_space<smem>>
      %689 = vector.broadcast %688 : f32 to vector<16x128xf32>
      %690 = arith.mulf %689, %126 : vector<16x128xf32>
      %691 = arith.addf %687, %690 : vector<16x128xf32>
      %c3_410 = arith.constant 3 : index
      %c5_411 = arith.constant 5 : index
      %692 = memref.load %arg1[%c3_410, %c5_411] : memref<16x9xf32, #tpu.memory_space<smem>>
      %693 = vector.broadcast %692 : f32 to vector<16x128xf32>
      %694 = arith.mulf %693, %129 : vector<16x128xf32>
      %695 = arith.addf %691, %694 : vector<16x128xf32>
      %c3_412 = arith.constant 3 : index
      %c6_413 = arith.constant 6 : index
      %696 = memref.load %arg1[%c3_412, %c6_413] : memref<16x9xf32, #tpu.memory_space<smem>>
      %697 = vector.broadcast %696 : f32 to vector<16x128xf32>
      %698 = arith.mulf %697, %137 : vector<16x128xf32>
      %699 = arith.addf %695, %698 : vector<16x128xf32>
      %c3_414 = arith.constant 3 : index
      %c7_415 = arith.constant 7 : index
      %700 = memref.load %arg1[%c3_414, %c7_415] : memref<16x9xf32, #tpu.memory_space<smem>>
      %701 = vector.broadcast %700 : f32 to vector<16x128xf32>
      %702 = arith.mulf %701, %140 : vector<16x128xf32>
      %703 = arith.addf %699, %702 : vector<16x128xf32>
      %c3_416 = arith.constant 3 : index
      %c8_417 = arith.constant 8 : index
      %704 = memref.load %arg1[%c3_416, %c8_417] : memref<16x9xf32, #tpu.memory_space<smem>>
      %705 = vector.broadcast %704 : f32 to vector<16x128xf32>
      %706 = arith.mulf %705, %143 : vector<16x128xf32>
      %707 = arith.addf %703, %706 : vector<16x128xf32>
      %c3_418 = arith.constant 3 : index
      %c0_419 = arith.constant 0 : index
      %708 = memref.load %arg1[%c3_418, %c0_419] : memref<16x9xf32, #tpu.memory_space<smem>>
      %709 = vector.broadcast %708 : f32 to vector<16x128xf32>
      %710 = arith.mulf %709, %112 : vector<16x128xf32>
      %c3_420 = arith.constant 3 : index
      %c1_421 = arith.constant 1 : index
      %711 = memref.load %arg1[%c3_420, %c1_421] : memref<16x9xf32, #tpu.memory_space<smem>>
      %712 = vector.broadcast %711 : f32 to vector<16x128xf32>
      %713 = arith.mulf %712, %115 : vector<16x128xf32>
      %714 = arith.addf %710, %713 : vector<16x128xf32>
      %c3_422 = arith.constant 3 : index
      %c2_423 = arith.constant 2 : index
      %715 = memref.load %arg1[%c3_422, %c2_423] : memref<16x9xf32, #tpu.memory_space<smem>>
      %716 = vector.broadcast %715 : f32 to vector<16x128xf32>
      %717 = arith.mulf %716, %118 : vector<16x128xf32>
      %718 = arith.addf %714, %717 : vector<16x128xf32>
      %c3_424 = arith.constant 3 : index
      %c3_425 = arith.constant 3 : index
      %719 = memref.load %arg1[%c3_424, %c3_425] : memref<16x9xf32, #tpu.memory_space<smem>>
      %720 = vector.broadcast %719 : f32 to vector<16x128xf32>
      %721 = arith.mulf %720, %126 : vector<16x128xf32>
      %722 = arith.addf %718, %721 : vector<16x128xf32>
      %c3_426 = arith.constant 3 : index
      %c4_427 = arith.constant 4 : index
      %723 = memref.load %arg1[%c3_426, %c4_427] : memref<16x9xf32, #tpu.memory_space<smem>>
      %724 = vector.broadcast %723 : f32 to vector<16x128xf32>
      %725 = arith.mulf %724, %129 : vector<16x128xf32>
      %726 = arith.addf %722, %725 : vector<16x128xf32>
      %c3_428 = arith.constant 3 : index
      %c5_429 = arith.constant 5 : index
      %727 = memref.load %arg1[%c3_428, %c5_429] : memref<16x9xf32, #tpu.memory_space<smem>>
      %728 = vector.broadcast %727 : f32 to vector<16x128xf32>
      %729 = arith.mulf %728, %132 : vector<16x128xf32>
      %730 = arith.addf %726, %729 : vector<16x128xf32>
      %c3_430 = arith.constant 3 : index
      %c6_431 = arith.constant 6 : index
      %731 = memref.load %arg1[%c3_430, %c6_431] : memref<16x9xf32, #tpu.memory_space<smem>>
      %732 = vector.broadcast %731 : f32 to vector<16x128xf32>
      %733 = arith.mulf %732, %140 : vector<16x128xf32>
      %734 = arith.addf %730, %733 : vector<16x128xf32>
      %c3_432 = arith.constant 3 : index
      %c7_433 = arith.constant 7 : index
      %735 = memref.load %arg1[%c3_432, %c7_433] : memref<16x9xf32, #tpu.memory_space<smem>>
      %736 = vector.broadcast %735 : f32 to vector<16x128xf32>
      %737 = arith.mulf %736, %143 : vector<16x128xf32>
      %738 = arith.addf %734, %737 : vector<16x128xf32>
      %c3_434 = arith.constant 3 : index
      %c8_435 = arith.constant 8 : index
      %739 = memref.load %arg1[%c3_434, %c8_435] : memref<16x9xf32, #tpu.memory_space<smem>>
      %740 = vector.broadcast %739 : f32 to vector<16x128xf32>
      %741 = arith.mulf %740, %146 : vector<16x128xf32>
      %742 = arith.addf %738, %741 : vector<16x128xf32>
      %743 = arith.maximumf %637, %672 : vector<16x128xf32>
      %744 = arith.maximumf %707, %742 : vector<16x128xf32>
      %745 = arith.maximumf %743, %744 : vector<16x128xf32>
      %c3_436 = arith.constant 3 : index
      %746 = memref.load %arg2[%c3_436] : memref<16xf32, #tpu.memory_space<smem>>
      %747 = vector.broadcast %746 : f32 to vector<16x128xf32>
      %748 = arith.addf %745, %747 : vector<16x128xf32>
      %cst_437 = arith.constant 0.000000e+00 : f32
      %749 = vector.broadcast %cst_437 : f32 to vector<16x128xf32>
      %750 = arith.maximumf %748, %749 : vector<16x128xf32>
      %751 = arith.index_cast %arg8 : i32 to index
      %c48 = arith.constant 48 : index
      %c0_438 = arith.constant 0 : index
      %752 = vector.load %arg7[%751, %c48, %c0_438] : memref<13x256x128xf32, #tpu.memory_space<vmem>>, vector<1x16x128xf32>
      %753 = vector.shape_cast %752 : vector<1x16x128xf32> to vector<16x128xf32>
      %754 = vector.shape_cast %750 : vector<16x128xf32> to vector<1x16x128xf32>
      tpu.vector_store %arg7[%751, %c48, %c0_438], %754 {strides = array<i32>} : memref<13x256x128xf32, #tpu.memory_space<vmem>>, vector<1x16x128xf32>,
      %c4_439 = arith.constant 4 : index
      %c0_440 = arith.constant 0 : index
      %755 = memref.load %arg1[%c4_439, %c0_440] : memref<16x9xf32, #tpu.memory_space<smem>>
      %756 = vector.broadcast %755 : f32 to vector<16x128xf32>
      %757 = arith.mulf %756, %95 : vector<16x128xf32>
      %c4_441 = arith.constant 4 : index
      %c1_442 = arith.constant 1 : index
      %758 = memref.load %arg1[%c4_441, %c1_442] : memref<16x9xf32, #tpu.memory_space<smem>>
      %759 = vector.broadcast %758 : f32 to vector<16x128xf32>
      %760 = arith.mulf %759, %98 : vector<16x128xf32>
      %761 = arith.addf %757, %760 : vector<16x128xf32>
      %c4_443 = arith.constant 4 : index
      %c2_444 = arith.constant 2 : index
      %762 = memref.load %arg1[%c4_443, %c2_444] : memref<16x9xf32, #tpu.memory_space<smem>>
      %763 = vector.broadcast %762 : f32 to vector<16x128xf32>
      %764 = arith.mulf %763, %101 : vector<16x128xf32>
      %765 = arith.addf %761, %764 : vector<16x128xf32>
      %c4_445 = arith.constant 4 : index
      %c3_446 = arith.constant 3 : index
      %766 = memref.load %arg1[%c4_445, %c3_446] : memref<16x9xf32, #tpu.memory_space<smem>>
      %767 = vector.broadcast %766 : f32 to vector<16x128xf32>
      %768 = arith.mulf %767, %109 : vector<16x128xf32>
      %769 = arith.addf %765, %768 : vector<16x128xf32>
      %c4_447 = arith.constant 4 : index
      %c4_448 = arith.constant 4 : index
      %770 = memref.load %arg1[%c4_447, %c4_448] : memref<16x9xf32, #tpu.memory_space<smem>>
      %771 = vector.broadcast %770 : f32 to vector<16x128xf32>
      %772 = arith.mulf %771, %112 : vector<16x128xf32>
      %773 = arith.addf %769, %772 : vector<16x128xf32>
      %c4_449 = arith.constant 4 : index
      %c5_450 = arith.constant 5 : index
      %774 = memref.load %arg1[%c4_449, %c5_450] : memref<16x9xf32, #tpu.memory_space<smem>>
      %775 = vector.broadcast %774 : f32 to vector<16x128xf32>
      %776 = arith.mulf %775, %115 : vector<16x128xf32>
      %777 = arith.addf %773, %776 : vector<16x128xf32>
      %c4_451 = arith.constant 4 : index
      %c6_452 = arith.constant 6 : index
      %778 = memref.load %arg1[%c4_451, %c6_452] : memref<16x9xf32, #tpu.memory_space<smem>>
      %779 = vector.broadcast %778 : f32 to vector<16x128xf32>
      %780 = arith.mulf %779, %123 : vector<16x128xf32>
      %781 = arith.addf %777, %780 : vector<16x128xf32>
      %c4_453 = arith.constant 4 : index
      %c7_454 = arith.constant 7 : index
      %782 = memref.load %arg1[%c4_453, %c7_454] : memref<16x9xf32, #tpu.memory_space<smem>>
      %783 = vector.broadcast %782 : f32 to vector<16x128xf32>
      %784 = arith.mulf %783, %126 : vector<16x128xf32>
      %785 = arith.addf %781, %784 : vector<16x128xf32>
      %c4_455 = arith.constant 4 : index
      %c8_456 = arith.constant 8 : index
      %786 = memref.load %arg1[%c4_455, %c8_456] : memref<16x9xf32, #tpu.memory_space<smem>>
      %787 = vector.broadcast %786 : f32 to vector<16x128xf32>
      %788 = arith.mulf %787, %129 : vector<16x128xf32>
      %789 = arith.addf %785, %788 : vector<16x128xf32>
      %c4_457 = arith.constant 4 : index
      %c0_458 = arith.constant 0 : index
      %790 = memref.load %arg1[%c4_457, %c0_458] : memref<16x9xf32, #tpu.memory_space<smem>>
      %791 = vector.broadcast %790 : f32 to vector<16x128xf32>
      %792 = arith.mulf %791, %98 : vector<16x128xf32>
      %c4_459 = arith.constant 4 : index
      %c1_460 = arith.constant 1 : index
      %793 = memref.load %arg1[%c4_459, %c1_460] : memref<16x9xf32, #tpu.memory_space<smem>>
      %794 = vector.broadcast %793 : f32 to vector<16x128xf32>
      %795 = arith.mulf %794, %101 : vector<16x128xf32>
      %796 = arith.addf %792, %795 : vector<16x128xf32>
      %c4_461 = arith.constant 4 : index
      %c2_462 = arith.constant 2 : index
      %797 = memref.load %arg1[%c4_461, %c2_462] : memref<16x9xf32, #tpu.memory_space<smem>>
      %798 = vector.broadcast %797 : f32 to vector<16x128xf32>
      %799 = arith.mulf %798, %104 : vector<16x128xf32>
      %800 = arith.addf %796, %799 : vector<16x128xf32>
      %c4_463 = arith.constant 4 : index
      %c3_464 = arith.constant 3 : index
      %801 = memref.load %arg1[%c4_463, %c3_464] : memref<16x9xf32, #tpu.memory_space<smem>>
      %802 = vector.broadcast %801 : f32 to vector<16x128xf32>
      %803 = arith.mulf %802, %112 : vector<16x128xf32>
      %804 = arith.addf %800, %803 : vector<16x128xf32>
      %c4_465 = arith.constant 4 : index
      %c4_466 = arith.constant 4 : index
      %805 = memref.load %arg1[%c4_465, %c4_466] : memref<16x9xf32, #tpu.memory_space<smem>>
      %806 = vector.broadcast %805 : f32 to vector<16x128xf32>
      %807 = arith.mulf %806, %115 : vector<16x128xf32>
      %808 = arith.addf %804, %807 : vector<16x128xf32>
      %c4_467 = arith.constant 4 : index
      %c5_468 = arith.constant 5 : index
      %809 = memref.load %arg1[%c4_467, %c5_468] : memref<16x9xf32, #tpu.memory_space<smem>>
      %810 = vector.broadcast %809 : f32 to vector<16x128xf32>
      %811 = arith.mulf %810, %118 : vector<16x128xf32>
      %812 = arith.addf %808, %811 : vector<16x128xf32>
      %c4_469 = arith.constant 4 : index
      %c6_470 = arith.constant 6 : index
      %813 = memref.load %arg1[%c4_469, %c6_470] : memref<16x9xf32, #tpu.memory_space<smem>>
      %814 = vector.broadcast %813 : f32 to vector<16x128xf32>
      %815 = arith.mulf %814, %126 : vector<16x128xf32>
      %816 = arith.addf %812, %815 : vector<16x128xf32>
      %c4_471 = arith.constant 4 : index
      %c7_472 = arith.constant 7 : index
      %817 = memref.load %arg1[%c4_471, %c7_472] : memref<16x9xf32, #tpu.memory_space<smem>>
      %818 = vector.broadcast %817 : f32 to vector<16x128xf32>
      %819 = arith.mulf %818, %129 : vector<16x128xf32>
      %820 = arith.addf %816, %819 : vector<16x128xf32>
      %c4_473 = arith.constant 4 : index
      %c8_474 = arith.constant 8 : index
      %821 = memref.load %arg1[%c4_473, %c8_474] : memref<16x9xf32, #tpu.memory_space<smem>>
      %822 = vector.broadcast %821 : f32 to vector<16x128xf32>
      %823 = arith.mulf %822, %132 : vector<16x128xf32>
      %824 = arith.addf %820, %823 : vector<16x128xf32>
      %c4_475 = arith.constant 4 : index
      %c0_476 = arith.constant 0 : index
      %825 = memref.load %arg1[%c4_475, %c0_476] : memref<16x9xf32, #tpu.memory_space<smem>>
      %826 = vector.broadcast %825 : f32 to vector<16x128xf32>
      %827 = arith.mulf %826, %109 : vector<16x128xf32>
      %c4_477 = arith.constant 4 : index
      %c1_478 = arith.constant 1 : index
      %828 = memref.load %arg1[%c4_477, %c1_478] : memref<16x9xf32, #tpu.memory_space<smem>>
      %829 = vector.broadcast %828 : f32 to vector<16x128xf32>
      %830 = arith.mulf %829, %112 : vector<16x128xf32>
      %831 = arith.addf %827, %830 : vector<16x128xf32>
      %c4_479 = arith.constant 4 : index
      %c2_480 = arith.constant 2 : index
      %832 = memref.load %arg1[%c4_479, %c2_480] : memref<16x9xf32, #tpu.memory_space<smem>>
      %833 = vector.broadcast %832 : f32 to vector<16x128xf32>
      %834 = arith.mulf %833, %115 : vector<16x128xf32>
      %835 = arith.addf %831, %834 : vector<16x128xf32>
      %c4_481 = arith.constant 4 : index
      %c3_482 = arith.constant 3 : index
      %836 = memref.load %arg1[%c4_481, %c3_482] : memref<16x9xf32, #tpu.memory_space<smem>>
      %837 = vector.broadcast %836 : f32 to vector<16x128xf32>
      %838 = arith.mulf %837, %123 : vector<16x128xf32>
      %839 = arith.addf %835, %838 : vector<16x128xf32>
      %c4_483 = arith.constant 4 : index
      %c4_484 = arith.constant 4 : index
      %840 = memref.load %arg1[%c4_483, %c4_484] : memref<16x9xf32, #tpu.memory_space<smem>>
      %841 = vector.broadcast %840 : f32 to vector<16x128xf32>
      %842 = arith.mulf %841, %126 : vector<16x128xf32>
      %843 = arith.addf %839, %842 : vector<16x128xf32>
      %c4_485 = arith.constant 4 : index
      %c5_486 = arith.constant 5 : index
      %844 = memref.load %arg1[%c4_485, %c5_486] : memref<16x9xf32, #tpu.memory_space<smem>>
      %845 = vector.broadcast %844 : f32 to vector<16x128xf32>
      %846 = arith.mulf %845, %129 : vector<16x128xf32>
      %847 = arith.addf %843, %846 : vector<16x128xf32>
      %c4_487 = arith.constant 4 : index
      %c6_488 = arith.constant 6 : index
      %848 = memref.load %arg1[%c4_487, %c6_488] : memref<16x9xf32, #tpu.memory_space<smem>>
      %849 = vector.broadcast %848 : f32 to vector<16x128xf32>
      %850 = arith.mulf %849, %137 : vector<16x128xf32>
      %851 = arith.addf %847, %850 : vector<16x128xf32>
      %c4_489 = arith.constant 4 : index
      %c7_490 = arith.constant 7 : index
      %852 = memref.load %arg1[%c4_489, %c7_490] : memref<16x9xf32, #tpu.memory_space<smem>>
      %853 = vector.broadcast %852 : f32 to vector<16x128xf32>
      %854 = arith.mulf %853, %140 : vector<16x128xf32>
      %855 = arith.addf %851, %854 : vector<16x128xf32>
      %c4_491 = arith.constant 4 : index
      %c8_492 = arith.constant 8 : index
      %856 = memref.load %arg1[%c4_491, %c8_492] : memref<16x9xf32, #tpu.memory_space<smem>>
      %857 = vector.broadcast %856 : f32 to vector<16x128xf32>
      %858 = arith.mulf %857, %143 : vector<16x128xf32>
      %859 = arith.addf %855, %858 : vector<16x128xf32>
      %c4_493 = arith.constant 4 : index
      %c0_494 = arith.constant 0 : index
      %860 = memref.load %arg1[%c4_493, %c0_494] : memref<16x9xf32, #tpu.memory_space<smem>>
      %861 = vector.broadcast %860 : f32 to vector<16x128xf32>
      %862 = arith.mulf %861, %112 : vector<16x128xf32>
      %c4_495 = arith.constant 4 : index
      %c1_496 = arith.constant 1 : index
      %863 = memref.load %arg1[%c4_495, %c1_496] : memref<16x9xf32, #tpu.memory_space<smem>>
      %864 = vector.broadcast %863 : f32 to vector<16x128xf32>
      %865 = arith.mulf %864, %115 : vector<16x128xf32>
      %866 = arith.addf %862, %865 : vector<16x128xf32>
      %c4_497 = arith.constant 4 : index
      %c2_498 = arith.constant 2 : index
      %867 = memref.load %arg1[%c4_497, %c2_498] : memref<16x9xf32, #tpu.memory_space<smem>>
      %868 = vector.broadcast %867 : f32 to vector<16x128xf32>
      %869 = arith.mulf %868, %118 : vector<16x128xf32>
      %870 = arith.addf %866, %869 : vector<16x128xf32>
      %c4_499 = arith.constant 4 : index
      %c3_500 = arith.constant 3 : index
      %871 = memref.load %arg1[%c4_499, %c3_500] : memref<16x9xf32, #tpu.memory_space<smem>>
      %872 = vector.broadcast %871 : f32 to vector<16x128xf32>
      %873 = arith.mulf %872, %126 : vector<16x128xf32>
      %874 = arith.addf %870, %873 : vector<16x128xf32>
      %c4_501 = arith.constant 4 : index
      %c4_502 = arith.constant 4 : index
      %875 = memref.load %arg1[%c4_501, %c4_502] : memref<16x9xf32, #tpu.memory_space<smem>>
      %876 = vector.broadcast %875 : f32 to vector<16x128xf32>
      %877 = arith.mulf %876, %129 : vector<16x128xf32>
      %878 = arith.addf %874, %877 : vector<16x128xf32>
      %c4_503 = arith.constant 4 : index
      %c5_504 = arith.constant 5 : index
      %879 = memref.load %arg1[%c4_503, %c5_504] : memref<16x9xf32, #tpu.memory_space<smem>>
      %880 = vector.broadcast %879 : f32 to vector<16x128xf32>
      %881 = arith.mulf %880, %132 : vector<16x128xf32>
      %882 = arith.addf %878, %881 : vector<16x128xf32>
      %c4_505 = arith.constant 4 : index
      %c6_506 = arith.constant 6 : index
      %883 = memref.load %arg1[%c4_505, %c6_506] : memref<16x9xf32, #tpu.memory_space<smem>>
      %884 = vector.broadcast %883 : f32 to vector<16x128xf32>
      %885 = arith.mulf %884, %140 : vector<16x128xf32>
      %886 = arith.addf %882, %885 : vector<16x128xf32>
      %c4_507 = arith.constant 4 : index
      %c7_508 = arith.constant 7 : index
      %887 = memref.load %arg1[%c4_507, %c7_508] : memref<16x9xf32, #tpu.memory_space<smem>>
      %888 = vector.broadcast %887 : f32 to vector<16x128xf32>
      %889 = arith.mulf %888, %143 : vector<16x128xf32>
      %890 = arith.addf %886, %889 : vector<16x128xf32>
      %c4_509 = arith.constant 4 : index
      %c8_510 = arith.constant 8 : index
      %891 = memref.load %arg1[%c4_509, %c8_510] : memref<16x9xf32, #tpu.memory_space<smem>>
      %892 = vector.broadcast %891 : f32 to vector<16x128xf32>
      %893 = arith.mulf %892, %146 : vector<16x128xf32>
      %894 = arith.addf %890, %893 : vector<16x128xf32>
      %895 = arith.maximumf %789, %824 : vector<16x128xf32>
      %896 = arith.maximumf %859, %894 : vector<16x128xf32>
      %897 = arith.maximumf %895, %896 : vector<16x128xf32>
      %c4_511 = arith.constant 4 : index
      %898 = memref.load %arg2[%c4_511] : memref<16xf32, #tpu.memory_space<smem>>
      %899 = vector.broadcast %898 : f32 to vector<16x128xf32>
      %900 = arith.addf %897, %899 : vector<16x128xf32>
      %cst_512 = arith.constant 0.000000e+00 : f32
      %901 = vector.broadcast %cst_512 : f32 to vector<16x128xf32>
      %902 = arith.maximumf %900, %901 : vector<16x128xf32>
      %903 = arith.index_cast %arg8 : i32 to index
      %c64 = arith.constant 64 : index
      %c0_513 = arith.constant 0 : index
      %904 = vector.load %arg7[%903, %c64, %c0_513] : memref<13x256x128xf32, #tpu.memory_space<vmem>>, vector<1x16x128xf32>
      %905 = vector.shape_cast %904 : vector<1x16x128xf32> to vector<16x128xf32>
      %906 = vector.shape_cast %902 : vector<16x128xf32> to vector<1x16x128xf32>
      tpu.vector_store %arg7[%903, %c64, %c0_513], %906 {strides = array<i32>} : memref<13x256x128xf32, #tpu.memory_space<vmem>>, vector<1x16x128xf32>,
      %c5_514 = arith.constant 5 : index
      %c0_515 = arith.constant 0 : index
      %907 = memref.load %arg1[%c5_514, %c0_515] : memref<16x9xf32, #tpu.memory_space<smem>>
      %908 = vector.broadcast %907 : f32 to vector<16x128xf32>
      %909 = arith.mulf %908, %95 : vector<16x128xf32>
      %c5_516 = arith.constant 5 : index
      %c1_517 = arith.constant 1 : index
      %910 = memref.load %arg1[%c5_516, %c1_517] : memref<16x9xf32, #tpu.memory_space<smem>>
      %911 = vector.broadcast %910 : f32 to vector<16x128xf32>
      %912 = arith.mulf %911, %98 : vector<16x128xf32>
      %913 = arith.addf %909, %912 : vector<16x128xf32>
      %c5_518 = arith.constant 5 : index
      %c2_519 = arith.constant 2 : index
      %914 = memref.load %arg1[%c5_518, %c2_519] : memref<16x9xf32, #tpu.memory_space<smem>>
      %915 = vector.broadcast %914 : f32 to vector<16x128xf32>
      %916 = arith.mulf %915, %101 : vector<16x128xf32>
      %917 = arith.addf %913, %916 : vector<16x128xf32>
      %c5_520 = arith.constant 5 : index
      %c3_521 = arith.constant 3 : index
      %918 = memref.load %arg1[%c5_520, %c3_521] : memref<16x9xf32, #tpu.memory_space<smem>>
      %919 = vector.broadcast %918 : f32 to vector<16x128xf32>
      %920 = arith.mulf %919, %109 : vector<16x128xf32>
      %921 = arith.addf %917, %920 : vector<16x128xf32>
      %c5_522 = arith.constant 5 : index
      %c4_523 = arith.constant 4 : index
      %922 = memref.load %arg1[%c5_522, %c4_523] : memref<16x9xf32, #tpu.memory_space<smem>>
      %923 = vector.broadcast %922 : f32 to vector<16x128xf32>
      %924 = arith.mulf %923, %112 : vector<16x128xf32>
      %925 = arith.addf %921, %924 : vector<16x128xf32>
      %c5_524 = arith.constant 5 : index
      %c5_525 = arith.constant 5 : index
      %926 = memref.load %arg1[%c5_524, %c5_525] : memref<16x9xf32, #tpu.memory_space<smem>>
      %927 = vector.broadcast %926 : f32 to vector<16x128xf32>
      %928 = arith.mulf %927, %115 : vector<16x128xf32>
      %929 = arith.addf %925, %928 : vector<16x128xf32>
      %c5_526 = arith.constant 5 : index
      %c6_527 = arith.constant 6 : index
      %930 = memref.load %arg1[%c5_526, %c6_527] : memref<16x9xf32, #tpu.memory_space<smem>>
      %931 = vector.broadcast %930 : f32 to vector<16x128xf32>
      %932 = arith.mulf %931, %123 : vector<16x128xf32>
      %933 = arith.addf %929, %932 : vector<16x128xf32>
      %c5_528 = arith.constant 5 : index
      %c7_529 = arith.constant 7 : index
      %934 = memref.load %arg1[%c5_528, %c7_529] : memref<16x9xf32, #tpu.memory_space<smem>>
      %935 = vector.broadcast %934 : f32 to vector<16x128xf32>
      %936 = arith.mulf %935, %126 : vector<16x128xf32>
      %937 = arith.addf %933, %936 : vector<16x128xf32>
      %c5_530 = arith.constant 5 : index
      %c8_531 = arith.constant 8 : index
      %938 = memref.load %arg1[%c5_530, %c8_531] : memref<16x9xf32, #tpu.memory_space<smem>>
      %939 = vector.broadcast %938 : f32 to vector<16x128xf32>
      %940 = arith.mulf %939, %129 : vector<16x128xf32>
      %941 = arith.addf %937, %940 : vector<16x128xf32>
      %c5_532 = arith.constant 5 : index
      %c0_533 = arith.constant 0 : index
      %942 = memref.load %arg1[%c5_532, %c0_533] : memref<16x9xf32, #tpu.memory_space<smem>>
      %943 = vector.broadcast %942 : f32 to vector<16x128xf32>
      %944 = arith.mulf %943, %98 : vector<16x128xf32>
      %c5_534 = arith.constant 5 : index
      %c1_535 = arith.constant 1 : index
      %945 = memref.load %arg1[%c5_534, %c1_535] : memref<16x9xf32, #tpu.memory_space<smem>>
      %946 = vector.broadcast %945 : f32 to vector<16x128xf32>
      %947 = arith.mulf %946, %101 : vector<16x128xf32>
      %948 = arith.addf %944, %947 : vector<16x128xf32>
      %c5_536 = arith.constant 5 : index
      %c2_537 = arith.constant 2 : index
      %949 = memref.load %arg1[%c5_536, %c2_537] : memref<16x9xf32, #tpu.memory_space<smem>>
      %950 = vector.broadcast %949 : f32 to vector<16x128xf32>
      %951 = arith.mulf %950, %104 : vector<16x128xf32>
      %952 = arith.addf %948, %951 : vector<16x128xf32>
      %c5_538 = arith.constant 5 : index
      %c3_539 = arith.constant 3 : index
      %953 = memref.load %arg1[%c5_538, %c3_539] : memref<16x9xf32, #tpu.memory_space<smem>>
      %954 = vector.broadcast %953 : f32 to vector<16x128xf32>
      %955 = arith.mulf %954, %112 : vector<16x128xf32>
      %956 = arith.addf %952, %955 : vector<16x128xf32>
      %c5_540 = arith.constant 5 : index
      %c4_541 = arith.constant 4 : index
      %957 = memref.load %arg1[%c5_540, %c4_541] : memref<16x9xf32, #tpu.memory_space<smem>>
      %958 = vector.broadcast %957 : f32 to vector<16x128xf32>
      %959 = arith.mulf %958, %115 : vector<16x128xf32>
      %960 = arith.addf %956, %959 : vector<16x128xf32>
      %c5_542 = arith.constant 5 : index
      %c5_543 = arith.constant 5 : index
      %961 = memref.load %arg1[%c5_542, %c5_543] : memref<16x9xf32, #tpu.memory_space<smem>>
      %962 = vector.broadcast %961 : f32 to vector<16x128xf32>
      %963 = arith.mulf %962, %118 : vector<16x128xf32>
      %964 = arith.addf %960, %963 : vector<16x128xf32>
      %c5_544 = arith.constant 5 : index
      %c6_545 = arith.constant 6 : index
      %965 = memref.load %arg1[%c5_544, %c6_545] : memref<16x9xf32, #tpu.memory_space<smem>>
      %966 = vector.broadcast %965 : f32 to vector<16x128xf32>
      %967 = arith.mulf %966, %126 : vector<16x128xf32>
      %968 = arith.addf %964, %967 : vector<16x128xf32>
      %c5_546 = arith.constant 5 : index
      %c7_547 = arith.constant 7 : index
      %969 = memref.load %arg1[%c5_546, %c7_547] : memref<16x9xf32, #tpu.memory_space<smem>>
      %970 = vector.broadcast %969 : f32 to vector<16x128xf32>
      %971 = arith.mulf %970, %129 : vector<16x128xf32>
      %972 = arith.addf %968, %971 : vector<16x128xf32>
      %c5_548 = arith.constant 5 : index
      %c8_549 = arith.constant 8 : index
      %973 = memref.load %arg1[%c5_548, %c8_549] : memref<16x9xf32, #tpu.memory_space<smem>>
      %974 = vector.broadcast %973 : f32 to vector<16x128xf32>
      %975 = arith.mulf %974, %132 : vector<16x128xf32>
      %976 = arith.addf %972, %975 : vector<16x128xf32>
      %c5_550 = arith.constant 5 : index
      %c0_551 = arith.constant 0 : index
      %977 = memref.load %arg1[%c5_550, %c0_551] : memref<16x9xf32, #tpu.memory_space<smem>>
      %978 = vector.broadcast %977 : f32 to vector<16x128xf32>
      %979 = arith.mulf %978, %109 : vector<16x128xf32>
      %c5_552 = arith.constant 5 : index
      %c1_553 = arith.constant 1 : index
      %980 = memref.load %arg1[%c5_552, %c1_553] : memref<16x9xf32, #tpu.memory_space<smem>>
      %981 = vector.broadcast %980 : f32 to vector<16x128xf32>
      %982 = arith.mulf %981, %112 : vector<16x128xf32>
      %983 = arith.addf %979, %982 : vector<16x128xf32>
      %c5_554 = arith.constant 5 : index
      %c2_555 = arith.constant 2 : index
      %984 = memref.load %arg1[%c5_554, %c2_555] : memref<16x9xf32, #tpu.memory_space<smem>>
      %985 = vector.broadcast %984 : f32 to vector<16x128xf32>
      %986 = arith.mulf %985, %115 : vector<16x128xf32>
      %987 = arith.addf %983, %986 : vector<16x128xf32>
      %c5_556 = arith.constant 5 : index
      %c3_557 = arith.constant 3 : index
      %988 = memref.load %arg1[%c5_556, %c3_557] : memref<16x9xf32, #tpu.memory_space<smem>>
      %989 = vector.broadcast %988 : f32 to vector<16x128xf32>
      %990 = arith.mulf %989, %123 : vector<16x128xf32>
      %991 = arith.addf %987, %990 : vector<16x128xf32>
      %c5_558 = arith.constant 5 : index
      %c4_559 = arith.constant 4 : index
      %992 = memref.load %arg1[%c5_558, %c4_559] : memref<16x9xf32, #tpu.memory_space<smem>>
      %993 = vector.broadcast %992 : f32 to vector<16x128xf32>
      %994 = arith.mulf %993, %126 : vector<16x128xf32>
      %995 = arith.addf %991, %994 : vector<16x128xf32>
      %c5_560 = arith.constant 5 : index
      %c5_561 = arith.constant 5 : index
      %996 = memref.load %arg1[%c5_560, %c5_561] : memref<16x9xf32, #tpu.memory_space<smem>>
      %997 = vector.broadcast %996 : f32 to vector<16x128xf32>
      %998 = arith.mulf %997, %129 : vector<16x128xf32>
      %999 = arith.addf %995, %998 : vector<16x128xf32>
      %c5_562 = arith.constant 5 : index
      %c6_563 = arith.constant 6 : index
      %1000 = memref.load %arg1[%c5_562, %c6_563] : memref<16x9xf32, #tpu.memory_space<smem>>
      %1001 = vector.broadcast %1000 : f32 to vector<16x128xf32>
      %1002 = arith.mulf %1001, %137 : vector<16x128xf32>
      %1003 = arith.addf %999, %1002 : vector<16x128xf32>
      %c5_564 = arith.constant 5 : index
      %c7_565 = arith.constant 7 : index
      %1004 = memref.load %arg1[%c5_564, %c7_565] : memref<16x9xf32, #tpu.memory_space<smem>>
      %1005 = vector.broadcast %1004 : f32 to vector<16x128xf32>
      %1006 = arith.mulf %1005, %140 : vector<16x128xf32>
      %1007 = arith.addf %1003, %1006 : vector<16x128xf32>
      %c5_566 = arith.constant 5 : index
      %c8_567 = arith.constant 8 : index
      %1008 = memref.load %arg1[%c5_566, %c8_567] : memref<16x9xf32, #tpu.memory_space<smem>>
      %1009 = vector.broadcast %1008 : f32 to vector<16x128xf32>
      %1010 = arith.mulf %1009, %143 : vector<16x128xf32>
      %1011 = arith.addf %1007, %1010 : vector<16x128xf32>
      %c5_568 = arith.constant 5 : index
      %c0_569 = arith.constant 0 : index
      %1012 = memref.load %arg1[%c5_568, %c0_569] : memref<16x9xf32, #tpu.memory_space<smem>>
      %1013 = vector.broadcast %1012 : f32 to vector<16x128xf32>
      %1014 = arith.mulf %1013, %112 : vector<16x128xf32>
      %c5_570 = arith.constant 5 : index
      %c1_571 = arith.constant 1 : index
      %1015 = memref.load %arg1[%c5_570, %c1_571] : memref<16x9xf32, #tpu.memory_space<smem>>
      %1016 = vector.broadcast %1015 : f32 to vector<16x128xf32>
      %1017 = arith.mulf %1016, %115 : vector<16x128xf32>
      %1018 = arith.addf %1014, %1017 : vector<16x128xf32>
      %c5_572 = arith.constant 5 : index
      %c2_573 = arith.constant 2 : index
      %1019 = memref.load %arg1[%c5_572, %c2_573] : memref<16x9xf32, #tpu.memory_space<smem>>
      %1020 = vector.broadcast %1019 : f32 to vector<16x128xf32>
      %1021 = arith.mulf %1020, %118 : vector<16x128xf32>
      %1022 = arith.addf %1018, %1021 : vector<16x128xf32>
      %c5_574 = arith.constant 5 : index
      %c3_575 = arith.constant 3 : index
      %1023 = memref.load %arg1[%c5_574, %c3_575] : memref<16x9xf32, #tpu.memory_space<smem>>
      %1024 = vector.broadcast %1023 : f32 to vector<16x128xf32>
      %1025 = arith.mulf %1024, %126 : vector<16x128xf32>
      %1026 = arith.addf %1022, %1025 : vector<16x128xf32>
      %c5_576 = arith.constant 5 : index
      %c4_577 = arith.constant 4 : index
      %1027 = memref.load %arg1[%c5_576, %c4_577] : memref<16x9xf32, #tpu.memory_space<smem>>
      %1028 = vector.broadcast %1027 : f32 to vector<16x128xf32>
      %1029 = arith.mulf %1028, %129 : vector<16x128xf32>
      %1030 = arith.addf %1026, %1029 : vector<16x128xf32>
      %c5_578 = arith.constant 5 : index
      %c5_579 = arith.constant 5 : index
      %1031 = memref.load %arg1[%c5_578, %c5_579] : memref<16x9xf32, #tpu.memory_space<smem>>
      %1032 = vector.broadcast %1031 : f32 to vector<16x128xf32>
      %1033 = arith.mulf %1032, %132 : vector<16x128xf32>
      %1034 = arith.addf %1030, %1033 : vector<16x128xf32>
      %c5_580 = arith.constant 5 : index
      %c6_581 = arith.constant 6 : index
      %1035 = memref.load %arg1[%c5_580, %c6_581] : memref<16x9xf32, #tpu.memory_space<smem>>
      %1036 = vector.broadcast %1035 : f32 to vector<16x128xf32>
      %1037 = arith.mulf %1036, %140 : vector<16x128xf32>
      %1038 = arith.addf %1034, %1037 : vector<16x128xf32>
      %c5_582 = arith.constant 5 : index
      %c7_583 = arith.constant 7 : index
      %1039 = memref.load %arg1[%c5_582, %c7_583] : memref<16x9xf32, #tpu.memory_space<smem>>
      %1040 = vector.broadcast %1039 : f32 to vector<16x128xf32>
      %1041 = arith.mulf %1040, %143 : vector<16x128xf32>
      %1042 = arith.addf %1038, %1041 : vector<16x128xf32>
      %c5_584 = arith.constant 5 : index
      %c8_585 = arith.constant 8 : index
      %1043 = memref.load %arg1[%c5_584, %c8_585] : memref<16x9xf32, #tpu.memory_space<smem>>
      %1044 = vector.broadcast %1043 : f32 to vector<16x128xf32>
      %1045 = arith.mulf %1044, %146 : vector<16x128xf32>
      %1046 = arith.addf %1042, %1045 : vector<16x128xf32>
      %1047 = arith.maximumf %941, %976 : vector<16x128xf32>
      %1048 = arith.maximumf %1011, %1046 : vector<16x128xf32>
      %1049 = arith.maximumf %1047, %1048 : vector<16x128xf32>
      %c5_586 = arith.constant 5 : index
      %1050 = memref.load %arg2[%c5_586] : memref<16xf32, #tpu.memory_space<smem>>
      %1051 = vector.broadcast %1050 : f32 to vector<16x128xf32>
      %1052 = arith.addf %1049, %1051 : vector<16x128xf32>
      %cst_587 = arith.constant 0.000000e+00 : f32
      %1053 = vector.broadcast %cst_587 : f32 to vector<16x128xf32>
      %1054 = arith.maximumf %1052, %1053 : vector<16x128xf32>
      %1055 = arith.index_cast %arg8 : i32 to index
      %c80 = arith.constant 80 : index
      %c0_588 = arith.constant 0 : index
      %1056 = vector.load %arg7[%1055, %c80, %c0_588] : memref<13x256x128xf32, #tpu.memory_space<vmem>>, vector<1x16x128xf32>
      %1057 = vector.shape_cast %1056 : vector<1x16x128xf32> to vector<16x128xf32>
      %1058 = vector.shape_cast %1054 : vector<16x128xf32> to vector<1x16x128xf32>
      tpu.vector_store %arg7[%1055, %c80, %c0_588], %1058 {strides = array<i32>} : memref<13x256x128xf32, #tpu.memory_space<vmem>>, vector<1x16x128xf32>,
      %c6_589 = arith.constant 6 : index
      %c0_590 = arith.constant 0 : index
      %1059 = memref.load %arg1[%c6_589, %c0_590] : memref<16x9xf32, #tpu.memory_space<smem>>
      %1060 = vector.broadcast %1059 : f32 to vector<16x128xf32>
      %1061 = arith.mulf %1060, %95 : vector<16x128xf32>
      %c6_591 = arith.constant 6 : index
      %c1_592 = arith.constant 1 : index
      %1062 = memref.load %arg1[%c6_591, %c1_592] : memref<16x9xf32, #tpu.memory_space<smem>>
      %1063 = vector.broadcast %1062 : f32 to vector<16x128xf32>
      %1064 = arith.mulf %1063, %98 : vector<16x128xf32>
      %1065 = arith.addf %1061, %1064 : vector<16x128xf32>
      %c6_593 = arith.constant 6 : index
      %c2_594 = arith.constant 2 : index
      %1066 = memref.load %arg1[%c6_593, %c2_594] : memref<16x9xf32, #tpu.memory_space<smem>>
      %1067 = vector.broadcast %1066 : f32 to vector<16x128xf32>
      %1068 = arith.mulf %1067, %101 : vector<16x128xf32>
      %1069 = arith.addf %1065, %1068 : vector<16x128xf32>
      %c6_595 = arith.constant 6 : index
      %c3_596 = arith.constant 3 : index
      %1070 = memref.load %arg1[%c6_595, %c3_596] : memref<16x9xf32, #tpu.memory_space<smem>>
      %1071 = vector.broadcast %1070 : f32 to vector<16x128xf32>
      %1072 = arith.mulf %1071, %109 : vector<16x128xf32>
      %1073 = arith.addf %1069, %1072 : vector<16x128xf32>
      %c6_597 = arith.constant 6 : index
      %c4_598 = arith.constant 4 : index
      %1074 = memref.load %arg1[%c6_597, %c4_598] : memref<16x9xf32, #tpu.memory_space<smem>>
      %1075 = vector.broadcast %1074 : f32 to vector<16x128xf32>
      %1076 = arith.mulf %1075, %112 : vector<16x128xf32>
      %1077 = arith.addf %1073, %1076 : vector<16x128xf32>
      %c6_599 = arith.constant 6 : index
      %c5_600 = arith.constant 5 : index
      %1078 = memref.load %arg1[%c6_599, %c5_600] : memref<16x9xf32, #tpu.memory_space<smem>>
      %1079 = vector.broadcast %1078 : f32 to vector<16x128xf32>
      %1080 = arith.mulf %1079, %115 : vector<16x128xf32>
      %1081 = arith.addf %1077, %1080 : vector<16x128xf32>
      %c6_601 = arith.constant 6 : index
      %c6_602 = arith.constant 6 : index
      %1082 = memref.load %arg1[%c6_601, %c6_602] : memref<16x9xf32, #tpu.memory_space<smem>>
      %1083 = vector.broadcast %1082 : f32 to vector<16x128xf32>
      %1084 = arith.mulf %1083, %123 : vector<16x128xf32>
      %1085 = arith.addf %1081, %1084 : vector<16x128xf32>
      %c6_603 = arith.constant 6 : index
      %c7_604 = arith.constant 7 : index
      %1086 = memref.load %arg1[%c6_603, %c7_604] : memref<16x9xf32, #tpu.memory_space<smem>>
      %1087 = vector.broadcast %1086 : f32 to vector<16x128xf32>
      %1088 = arith.mulf %1087, %126 : vector<16x128xf32>
      %1089 = arith.addf %1085, %1088 : vector<16x128xf32>
      %c6_605 = arith.constant 6 : index
      %c8_606 = arith.constant 8 : index
      %1090 = memref.load %arg1[%c6_605, %c8_606] : memref<16x9xf32, #tpu.memory_space<smem>>
      %1091 = vector.broadcast %1090 : f32 to vector<16x128xf32>
      %1092 = arith.mulf %1091, %129 : vector<16x128xf32>
      %1093 = arith.addf %1089, %1092 : vector<16x128xf32>
      %c6_607 = arith.constant 6 : index
      %c0_608 = arith.constant 0 : index
      %1094 = memref.load %arg1[%c6_607, %c0_608] : memref<16x9xf32, #tpu.memory_space<smem>>
      %1095 = vector.broadcast %1094 : f32 to vector<16x128xf32>
      %1096 = arith.mulf %1095, %98 : vector<16x128xf32>
      %c6_609 = arith.constant 6 : index
      %c1_610 = arith.constant 1 : index
      %1097 = memref.load %arg1[%c6_609, %c1_610] : memref<16x9xf32, #tpu.memory_space<smem>>
      %1098 = vector.broadcast %1097 : f32 to vector<16x128xf32>
      %1099 = arith.mulf %1098, %101 : vector<16x128xf32>
      %1100 = arith.addf %1096, %1099 : vector<16x128xf32>
      %c6_611 = arith.constant 6 : index
      %c2_612 = arith.constant 2 : index
      %1101 = memref.load %arg1[%c6_611, %c2_612] : memref<16x9xf32, #tpu.memory_space<smem>>
      %1102 = vector.broadcast %1101 : f32 to vector<16x128xf32>
      %1103 = arith.mulf %1102, %104 : vector<16x128xf32>
      %1104 = arith.addf %1100, %1103 : vector<16x128xf32>
      %c6_613 = arith.constant 6 : index
      %c3_614 = arith.constant 3 : index
      %1105 = memref.load %arg1[%c6_613, %c3_614] : memref<16x9xf32, #tpu.memory_space<smem>>
      %1106 = vector.broadcast %1105 : f32 to vector<16x128xf32>
      %1107 = arith.mulf %1106, %112 : vector<16x128xf32>
      %1108 = arith.addf %1104, %1107 : vector<16x128xf32>
      %c6_615 = arith.constant 6 : index
      %c4_616 = arith.constant 4 : index
      %1109 = memref.load %arg1[%c6_615, %c4_616] : memref<16x9xf32, #tpu.memory_space<smem>>
      %1110 = vector.broadcast %1109 : f32 to vector<16x128xf32>
      %1111 = arith.mulf %1110, %115 : vector<16x128xf32>
      %1112 = arith.addf %1108, %1111 : vector<16x128xf32>
      %c6_617 = arith.constant 6 : index
      %c5_618 = arith.constant 5 : index
      %1113 = memref.load %arg1[%c6_617, %c5_618] : memref<16x9xf32, #tpu.memory_space<smem>>
      %1114 = vector.broadcast %1113 : f32 to vector<16x128xf32>
      %1115 = arith.mulf %1114, %118 : vector<16x128xf32>
      %1116 = arith.addf %1112, %1115 : vector<16x128xf32>
      %c6_619 = arith.constant 6 : index
      %c6_620 = arith.constant 6 : index
      %1117 = memref.load %arg1[%c6_619, %c6_620] : memref<16x9xf32, #tpu.memory_space<smem>>
      %1118 = vector.broadcast %1117 : f32 to vector<16x128xf32>
      %1119 = arith.mulf %1118, %126 : vector<16x128xf32>
      %1120 = arith.addf %1116, %1119 : vector<16x128xf32>
      %c6_621 = arith.constant 6 : index
      %c7_622 = arith.constant 7 : index
      %1121 = memref.load %arg1[%c6_621, %c7_622] : memref<16x9xf32, #tpu.memory_space<smem>>
      %1122 = vector.broadcast %1121 : f32 to vector<16x128xf32>
      %1123 = arith.mulf %1122, %129 : vector<16x128xf32>
      %1124 = arith.addf %1120, %1123 : vector<16x128xf32>
      %c6_623 = arith.constant 6 : index
      %c8_624 = arith.constant 8 : index
      %1125 = memref.load %arg1[%c6_623, %c8_624] : memref<16x9xf32, #tpu.memory_space<smem>>
      %1126 = vector.broadcast %1125 : f32 to vector<16x128xf32>
      %1127 = arith.mulf %1126, %132 : vector<16x128xf32>
      %1128 = arith.addf %1124, %1127 : vector<16x128xf32>
      %c6_625 = arith.constant 6 : index
      %c0_626 = arith.constant 0 : index
      %1129 = memref.load %arg1[%c6_625, %c0_626] : memref<16x9xf32, #tpu.memory_space<smem>>
      %1130 = vector.broadcast %1129 : f32 to vector<16x128xf32>
      %1131 = arith.mulf %1130, %109 : vector<16x128xf32>
      %c6_627 = arith.constant 6 : index
      %c1_628 = arith.constant 1 : index
      %1132 = memref.load %arg1[%c6_627, %c1_628] : memref<16x9xf32, #tpu.memory_space<smem>>
      %1133 = vector.broadcast %1132 : f32 to vector<16x128xf32>
      %1134 = arith.mulf %1133, %112 : vector<16x128xf32>
      %1135 = arith.addf %1131, %1134 : vector<16x128xf32>
      %c6_629 = arith.constant 6 : index
      %c2_630 = arith.constant 2 : index
      %1136 = memref.load %arg1[%c6_629, %c2_630] : memref<16x9xf32, #tpu.memory_space<smem>>
      %1137 = vector.broadcast %1136 : f32 to vector<16x128xf32>
      %1138 = arith.mulf %1137, %115 : vector<16x128xf32>
      %1139 = arith.addf %1135, %1138 : vector<16x128xf32>
      %c6_631 = arith.constant 6 : index
      %c3_632 = arith.constant 3 : index
      %1140 = memref.load %arg1[%c6_631, %c3_632] : memref<16x9xf32, #tpu.memory_space<smem>>
      %1141 = vector.broadcast %1140 : f32 to vector<16x128xf32>
      %1142 = arith.mulf %1141, %123 : vector<16x128xf32>
      %1143 = arith.addf %1139, %1142 : vector<16x128xf32>
      %c6_633 = arith.constant 6 : index
      %c4_634 = arith.constant 4 : index
      %1144 = memref.load %arg1[%c6_633, %c4_634] : memref<16x9xf32, #tpu.memory_space<smem>>
      %1145 = vector.broadcast %1144 : f32 to vector<16x128xf32>
      %1146 = arith.mulf %1145, %126 : vector<16x128xf32>
      %1147 = arith.addf %1143, %1146 : vector<16x128xf32>
      %c6_635 = arith.constant 6 : index
      %c5_636 = arith.constant 5 : index
      %1148 = memref.load %arg1[%c6_635, %c5_636] : memref<16x9xf32, #tpu.memory_space<smem>>
      %1149 = vector.broadcast %1148 : f32 to vector<16x128xf32>
      %1150 = arith.mulf %1149, %129 : vector<16x128xf32>
      %1151 = arith.addf %1147, %1150 : vector<16x128xf32>
      %c6_637 = arith.constant 6 : index
      %c6_638 = arith.constant 6 : index
      %1152 = memref.load %arg1[%c6_637, %c6_638] : memref<16x9xf32, #tpu.memory_space<smem>>
      %1153 = vector.broadcast %1152 : f32 to vector<16x128xf32>
      %1154 = arith.mulf %1153, %137 : vector<16x128xf32>
      %1155 = arith.addf %1151, %1154 : vector<16x128xf32>
      %c6_639 = arith.constant 6 : index
      %c7_640 = arith.constant 7 : index
      %1156 = memref.load %arg1[%c6_639, %c7_640] : memref<16x9xf32, #tpu.memory_space<smem>>
      %1157 = vector.broadcast %1156 : f32 to vector<16x128xf32>
      %1158 = arith.mulf %1157, %140 : vector<16x128xf32>
      %1159 = arith.addf %1155, %1158 : vector<16x128xf32>
      %c6_641 = arith.constant 6 : index
      %c8_642 = arith.constant 8 : index
      %1160 = memref.load %arg1[%c6_641, %c8_642] : memref<16x9xf32, #tpu.memory_space<smem>>
      %1161 = vector.broadcast %1160 : f32 to vector<16x128xf32>
      %1162 = arith.mulf %1161, %143 : vector<16x128xf32>
      %1163 = arith.addf %1159, %1162 : vector<16x128xf32>
      %c6_643 = arith.constant 6 : index
      %c0_644 = arith.constant 0 : index
      %1164 = memref.load %arg1[%c6_643, %c0_644] : memref<16x9xf32, #tpu.memory_space<smem>>
      %1165 = vector.broadcast %1164 : f32 to vector<16x128xf32>
      %1166 = arith.mulf %1165, %112 : vector<16x128xf32>
      %c6_645 = arith.constant 6 : index
      %c1_646 = arith.constant 1 : index
      %1167 = memref.load %arg1[%c6_645, %c1_646] : memref<16x9xf32, #tpu.memory_space<smem>>
      %1168 = vector.broadcast %1167 : f32 to vector<16x128xf32>
      %1169 = arith.mulf %1168, %115 : vector<16x128xf32>
      %1170 = arith.addf %1166, %1169 : vector<16x128xf32>
      %c6_647 = arith.constant 6 : index
      %c2_648 = arith.constant 2 : index
      %1171 = memref.load %arg1[%c6_647, %c2_648] : memref<16x9xf32, #tpu.memory_space<smem>>
      %1172 = vector.broadcast %1171 : f32 to vector<16x128xf32>
      %1173 = arith.mulf %1172, %118 : vector<16x128xf32>
      %1174 = arith.addf %1170, %1173 : vector<16x128xf32>
      %c6_649 = arith.constant 6 : index
      %c3_650 = arith.constant 3 : index
      %1175 = memref.load %arg1[%c6_649, %c3_650] : memref<16x9xf32, #tpu.memory_space<smem>>
      %1176 = vector.broadcast %1175 : f32 to vector<16x128xf32>
      %1177 = arith.mulf %1176, %126 : vector<16x128xf32>
      %1178 = arith.addf %1174, %1177 : vector<16x128xf32>
      %c6_651 = arith.constant 6 : index
      %c4_652 = arith.constant 4 : index
      %1179 = memref.load %arg1[%c6_651, %c4_652] : memref<16x9xf32, #tpu.memory_space<smem>>
      %1180 = vector.broadcast %1179 : f32 to vector<16x128xf32>
      %1181 = arith.mulf %1180, %129 : vector<16x128xf32>
      %1182 = arith.addf %1178, %1181 : vector<16x128xf32>
      %c6_653 = arith.constant 6 : index
      %c5_654 = arith.constant 5 : index
      %1183 = memref.load %arg1[%c6_653, %c5_654] : memref<16x9xf32, #tpu.memory_space<smem>>
      %1184 = vector.broadcast %1183 : f32 to vector<16x128xf32>
      %1185 = arith.mulf %1184, %132 : vector<16x128xf32>
      %1186 = arith.addf %1182, %1185 : vector<16x128xf32>
      %c6_655 = arith.constant 6 : index
      %c6_656 = arith.constant 6 : index
      %1187 = memref.load %arg1[%c6_655, %c6_656] : memref<16x9xf32, #tpu.memory_space<smem>>
      %1188 = vector.broadcast %1187 : f32 to vector<16x128xf32>
      %1189 = arith.mulf %1188, %140 : vector<16x128xf32>
      %1190 = arith.addf %1186, %1189 : vector<16x128xf32>
      %c6_657 = arith.constant 6 : index
      %c7_658 = arith.constant 7 : index
      %1191 = memref.load %arg1[%c6_657, %c7_658] : memref<16x9xf32, #tpu.memory_space<smem>>
      %1192 = vector.broadcast %1191 : f32 to vector<16x128xf32>
      %1193 = arith.mulf %1192, %143 : vector<16x128xf32>
      %1194 = arith.addf %1190, %1193 : vector<16x128xf32>
      %c6_659 = arith.constant 6 : index
      %c8_660 = arith.constant 8 : index
      %1195 = memref.load %arg1[%c6_659, %c8_660] : memref<16x9xf32, #tpu.memory_space<smem>>
      %1196 = vector.broadcast %1195 : f32 to vector<16x128xf32>
      %1197 = arith.mulf %1196, %146 : vector<16x128xf32>
      %1198 = arith.addf %1194, %1197 : vector<16x128xf32>
      %1199 = arith.maximumf %1093, %1128 : vector<16x128xf32>
      %1200 = arith.maximumf %1163, %1198 : vector<16x128xf32>
      %1201 = arith.maximumf %1199, %1200 : vector<16x128xf32>
      %c6_661 = arith.constant 6 : index
      %1202 = memref.load %arg2[%c6_661] : memref<16xf32, #tpu.memory_space<smem>>
      %1203 = vector.broadcast %1202 : f32 to vector<16x128xf32>
      %1204 = arith.addf %1201, %1203 : vector<16x128xf32>
      %cst_662 = arith.constant 0.000000e+00 : f32
      %1205 = vector.broadcast %cst_662 : f32 to vector<16x128xf32>
      %1206 = arith.maximumf %1204, %1205 : vector<16x128xf32>
      %1207 = arith.index_cast %arg8 : i32 to index
      %c96 = arith.constant 96 : index
      %c0_663 = arith.constant 0 : index
      %1208 = vector.load %arg7[%1207, %c96, %c0_663] : memref<13x256x128xf32, #tpu.memory_space<vmem>>, vector<1x16x128xf32>
      %1209 = vector.shape_cast %1208 : vector<1x16x128xf32> to vector<16x128xf32>
      %1210 = vector.shape_cast %1206 : vector<16x128xf32> to vector<1x16x128xf32>
      tpu.vector_store %arg7[%1207, %c96, %c0_663], %1210 {strides = array<i32>} : memref<13x256x128xf32, #tpu.memory_space<vmem>>, vector<1x16x128xf32>,
      %c7_664 = arith.constant 7 : index
      %c0_665 = arith.constant 0 : index
      %1211 = memref.load %arg1[%c7_664, %c0_665] : memref<16x9xf32, #tpu.memory_space<smem>>
      %1212 = vector.broadcast %1211 : f32 to vector<16x128xf32>
      %1213 = arith.mulf %1212, %95 : vector<16x128xf32>
      %c7_666 = arith.constant 7 : index
      %c1_667 = arith.constant 1 : index
      %1214 = memref.load %arg1[%c7_666, %c1_667] : memref<16x9xf32, #tpu.memory_space<smem>>
      %1215 = vector.broadcast %1214 : f32 to vector<16x128xf32>
      %1216 = arith.mulf %1215, %98 : vector<16x128xf32>
      %1217 = arith.addf %1213, %1216 : vector<16x128xf32>
      %c7_668 = arith.constant 7 : index
      %c2_669 = arith.constant 2 : index
      %1218 = memref.load %arg1[%c7_668, %c2_669] : memref<16x9xf32, #tpu.memory_space<smem>>
      %1219 = vector.broadcast %1218 : f32 to vector<16x128xf32>
      %1220 = arith.mulf %1219, %101 : vector<16x128xf32>
      %1221 = arith.addf %1217, %1220 : vector<16x128xf32>
      %c7_670 = arith.constant 7 : index
      %c3_671 = arith.constant 3 : index
      %1222 = memref.load %arg1[%c7_670, %c3_671] : memref<16x9xf32, #tpu.memory_space<smem>>
      %1223 = vector.broadcast %1222 : f32 to vector<16x128xf32>
      %1224 = arith.mulf %1223, %109 : vector<16x128xf32>
      %1225 = arith.addf %1221, %1224 : vector<16x128xf32>
      %c7_672 = arith.constant 7 : index
      %c4_673 = arith.constant 4 : index
      %1226 = memref.load %arg1[%c7_672, %c4_673] : memref<16x9xf32, #tpu.memory_space<smem>>
      %1227 = vector.broadcast %1226 : f32 to vector<16x128xf32>
      %1228 = arith.mulf %1227, %112 : vector<16x128xf32>
      %1229 = arith.addf %1225, %1228 : vector<16x128xf32>
      %c7_674 = arith.constant 7 : index
      %c5_675 = arith.constant 5 : index
      %1230 = memref.load %arg1[%c7_674, %c5_675] : memref<16x9xf32, #tpu.memory_space<smem>>
      %1231 = vector.broadcast %1230 : f32 to vector<16x128xf32>
      %1232 = arith.mulf %1231, %115 : vector<16x128xf32>
      %1233 = arith.addf %1229, %1232 : vector<16x128xf32>
      %c7_676 = arith.constant 7 : index
      %c6_677 = arith.constant 6 : index
      %1234 = memref.load %arg1[%c7_676, %c6_677] : memref<16x9xf32, #tpu.memory_space<smem>>
      %1235 = vector.broadcast %1234 : f32 to vector<16x128xf32>
      %1236 = arith.mulf %1235, %123 : vector<16x128xf32>
      %1237 = arith.addf %1233, %1236 : vector<16x128xf32>
      %c7_678 = arith.constant 7 : index
      %c7_679 = arith.constant 7 : index
      %1238 = memref.load %arg1[%c7_678, %c7_679] : memref<16x9xf32, #tpu.memory_space<smem>>
      %1239 = vector.broadcast %1238 : f32 to vector<16x128xf32>
      %1240 = arith.mulf %1239, %126 : vector<16x128xf32>
      %1241 = arith.addf %1237, %1240 : vector<16x128xf32>
      %c7_680 = arith.constant 7 : index
      %c8_681 = arith.constant 8 : index
      %1242 = memref.load %arg1[%c7_680, %c8_681] : memref<16x9xf32, #tpu.memory_space<smem>>
      %1243 = vector.broadcast %1242 : f32 to vector<16x128xf32>
      %1244 = arith.mulf %1243, %129 : vector<16x128xf32>
      %1245 = arith.addf %1241, %1244 : vector<16x128xf32>
      %c7_682 = arith.constant 7 : index
      %c0_683 = arith.constant 0 : index
      %1246 = memref.load %arg1[%c7_682, %c0_683] : memref<16x9xf32, #tpu.memory_space<smem>>
      %1247 = vector.broadcast %1246 : f32 to vector<16x128xf32>
      %1248 = arith.mulf %1247, %98 : vector<16x128xf32>
      %c7_684 = arith.constant 7 : index
      %c1_685 = arith.constant 1 : index
      %1249 = memref.load %arg1[%c7_684, %c1_685] : memref<16x9xf32, #tpu.memory_space<smem>>
      %1250 = vector.broadcast %1249 : f32 to vector<16x128xf32>
      %1251 = arith.mulf %1250, %101 : vector<16x128xf32>
      %1252 = arith.addf %1248, %1251 : vector<16x128xf32>
      %c7_686 = arith.constant 7 : index
      %c2_687 = arith.constant 2 : index
      %1253 = memref.load %arg1[%c7_686, %c2_687] : memref<16x9xf32, #tpu.memory_space<smem>>
      %1254 = vector.broadcast %1253 : f32 to vector<16x128xf32>
      %1255 = arith.mulf %1254, %104 : vector<16x128xf32>
      %1256 = arith.addf %1252, %1255 : vector<16x128xf32>
      %c7_688 = arith.constant 7 : index
      %c3_689 = arith.constant 3 : index
      %1257 = memref.load %arg1[%c7_688, %c3_689] : memref<16x9xf32, #tpu.memory_space<smem>>
      %1258 = vector.broadcast %1257 : f32 to vector<16x128xf32>
      %1259 = arith.mulf %1258, %112 : vector<16x128xf32>
      %1260 = arith.addf %1256, %1259 : vector<16x128xf32>
      %c7_690 = arith.constant 7 : index
      %c4_691 = arith.constant 4 : index
      %1261 = memref.load %arg1[%c7_690, %c4_691] : memref<16x9xf32, #tpu.memory_space<smem>>
      %1262 = vector.broadcast %1261 : f32 to vector<16x128xf32>
      %1263 = arith.mulf %1262, %115 : vector<16x128xf32>
      %1264 = arith.addf %1260, %1263 : vector<16x128xf32>
      %c7_692 = arith.constant 7 : index
      %c5_693 = arith.constant 5 : index
      %1265 = memref.load %arg1[%c7_692, %c5_693] : memref<16x9xf32, #tpu.memory_space<smem>>
      %1266 = vector.broadcast %1265 : f32 to vector<16x128xf32>
      %1267 = arith.mulf %1266, %118 : vector<16x128xf32>
      %1268 = arith.addf %1264, %1267 : vector<16x128xf32>
      %c7_694 = arith.constant 7 : index
      %c6_695 = arith.constant 6 : index
      %1269 = memref.load %arg1[%c7_694, %c6_695] : memref<16x9xf32, #tpu.memory_space<smem>>
      %1270 = vector.broadcast %1269 : f32 to vector<16x128xf32>
      %1271 = arith.mulf %1270, %126 : vector<16x128xf32>
      %1272 = arith.addf %1268, %1271 : vector<16x128xf32>
      %c7_696 = arith.constant 7 : index
      %c7_697 = arith.constant 7 : index
      %1273 = memref.load %arg1[%c7_696, %c7_697] : memref<16x9xf32, #tpu.memory_space<smem>>
      %1274 = vector.broadcast %1273 : f32 to vector<16x128xf32>
      %1275 = arith.mulf %1274, %129 : vector<16x128xf32>
      %1276 = arith.addf %1272, %1275 : vector<16x128xf32>
      %c7_698 = arith.constant 7 : index
      %c8_699 = arith.constant 8 : index
      %1277 = memref.load %arg1[%c7_698, %c8_699] : memref<16x9xf32, #tpu.memory_space<smem>>
      %1278 = vector.broadcast %1277 : f32 to vector<16x128xf32>
      %1279 = arith.mulf %1278, %132 : vector<16x128xf32>
      %1280 = arith.addf %1276, %1279 : vector<16x128xf32>
      %c7_700 = arith.constant 7 : index
      %c0_701 = arith.constant 0 : index
      %1281 = memref.load %arg1[%c7_700, %c0_701] : memref<16x9xf32, #tpu.memory_space<smem>>
      %1282 = vector.broadcast %1281 : f32 to vector<16x128xf32>
      %1283 = arith.mulf %1282, %109 : vector<16x128xf32>
      %c7_702 = arith.constant 7 : index
      %c1_703 = arith.constant 1 : index
      %1284 = memref.load %arg1[%c7_702, %c1_703] : memref<16x9xf32, #tpu.memory_space<smem>>
      %1285 = vector.broadcast %1284 : f32 to vector<16x128xf32>
      %1286 = arith.mulf %1285, %112 : vector<16x128xf32>
      %1287 = arith.addf %1283, %1286 : vector<16x128xf32>
      %c7_704 = arith.constant 7 : index
      %c2_705 = arith.constant 2 : index
      %1288 = memref.load %arg1[%c7_704, %c2_705] : memref<16x9xf32, #tpu.memory_space<smem>>
      %1289 = vector.broadcast %1288 : f32 to vector<16x128xf32>
      %1290 = arith.mulf %1289, %115 : vector<16x128xf32>
      %1291 = arith.addf %1287, %1290 : vector<16x128xf32>
      %c7_706 = arith.constant 7 : index
      %c3_707 = arith.constant 3 : index
      %1292 = memref.load %arg1[%c7_706, %c3_707] : memref<16x9xf32, #tpu.memory_space<smem>>
      %1293 = vector.broadcast %1292 : f32 to vector<16x128xf32>
      %1294 = arith.mulf %1293, %123 : vector<16x128xf32>
      %1295 = arith.addf %1291, %1294 : vector<16x128xf32>
      %c7_708 = arith.constant 7 : index
      %c4_709 = arith.constant 4 : index
      %1296 = memref.load %arg1[%c7_708, %c4_709] : memref<16x9xf32, #tpu.memory_space<smem>>
      %1297 = vector.broadcast %1296 : f32 to vector<16x128xf32>
      %1298 = arith.mulf %1297, %126 : vector<16x128xf32>
      %1299 = arith.addf %1295, %1298 : vector<16x128xf32>
      %c7_710 = arith.constant 7 : index
      %c5_711 = arith.constant 5 : index
      %1300 = memref.load %arg1[%c7_710, %c5_711] : memref<16x9xf32, #tpu.memory_space<smem>>
      %1301 = vector.broadcast %1300 : f32 to vector<16x128xf32>
      %1302 = arith.mulf %1301, %129 : vector<16x128xf32>
      %1303 = arith.addf %1299, %1302 : vector<16x128xf32>
      %c7_712 = arith.constant 7 : index
      %c6_713 = arith.constant 6 : index
      %1304 = memref.load %arg1[%c7_712, %c6_713] : memref<16x9xf32, #tpu.memory_space<smem>>
      %1305 = vector.broadcast %1304 : f32 to vector<16x128xf32>
      %1306 = arith.mulf %1305, %137 : vector<16x128xf32>
      %1307 = arith.addf %1303, %1306 : vector<16x128xf32>
      %c7_714 = arith.constant 7 : index
      %c7_715 = arith.constant 7 : index
      %1308 = memref.load %arg1[%c7_714, %c7_715] : memref<16x9xf32, #tpu.memory_space<smem>>
      %1309 = vector.broadcast %1308 : f32 to vector<16x128xf32>
      %1310 = arith.mulf %1309, %140 : vector<16x128xf32>
      %1311 = arith.addf %1307, %1310 : vector<16x128xf32>
      %c7_716 = arith.constant 7 : index
      %c8_717 = arith.constant 8 : index
      %1312 = memref.load %arg1[%c7_716, %c8_717] : memref<16x9xf32, #tpu.memory_space<smem>>
      %1313 = vector.broadcast %1312 : f32 to vector<16x128xf32>
      %1314 = arith.mulf %1313, %143 : vector<16x128xf32>
      %1315 = arith.addf %1311, %1314 : vector<16x128xf32>
      %c7_718 = arith.constant 7 : index
      %c0_719 = arith.constant 0 : index
      %1316 = memref.load %arg1[%c7_718, %c0_719] : memref<16x9xf32, #tpu.memory_space<smem>>
      %1317 = vector.broadcast %1316 : f32 to vector<16x128xf32>
      %1318 = arith.mulf %1317, %112 : vector<16x128xf32>
      %c7_720 = arith.constant 7 : index
      %c1_721 = arith.constant 1 : index
      %1319 = memref.load %arg1[%c7_720, %c1_721] : memref<16x9xf32, #tpu.memory_space<smem>>
      %1320 = vector.broadcast %1319 : f32 to vector<16x128xf32>
      %1321 = arith.mulf %1320, %115 : vector<16x128xf32>
      %1322 = arith.addf %1318, %1321 : vector<16x128xf32>
      %c7_722 = arith.constant 7 : index
      %c2_723 = arith.constant 2 : index
      %1323 = memref.load %arg1[%c7_722, %c2_723] : memref<16x9xf32, #tpu.memory_space<smem>>
      %1324 = vector.broadcast %1323 : f32 to vector<16x128xf32>
      %1325 = arith.mulf %1324, %118 : vector<16x128xf32>
      %1326 = arith.addf %1322, %1325 : vector<16x128xf32>
      %c7_724 = arith.constant 7 : index
      %c3_725 = arith.constant 3 : index
      %1327 = memref.load %arg1[%c7_724, %c3_725] : memref<16x9xf32, #tpu.memory_space<smem>>
      %1328 = vector.broadcast %1327 : f32 to vector<16x128xf32>
      %1329 = arith.mulf %1328, %126 : vector<16x128xf32>
      %1330 = arith.addf %1326, %1329 : vector<16x128xf32>
      %c7_726 = arith.constant 7 : index
      %c4_727 = arith.constant 4 : index
      %1331 = memref.load %arg1[%c7_726, %c4_727] : memref<16x9xf32, #tpu.memory_space<smem>>
      %1332 = vector.broadcast %1331 : f32 to vector<16x128xf32>
      %1333 = arith.mulf %1332, %129 : vector<16x128xf32>
      %1334 = arith.addf %1330, %1333 : vector<16x128xf32>
      %c7_728 = arith.constant 7 : index
      %c5_729 = arith.constant 5 : index
      %1335 = memref.load %arg1[%c7_728, %c5_729] : memref<16x9xf32, #tpu.memory_space<smem>>
      %1336 = vector.broadcast %1335 : f32 to vector<16x128xf32>
      %1337 = arith.mulf %1336, %132 : vector<16x128xf32>
      %1338 = arith.addf %1334, %1337 : vector<16x128xf32>
      %c7_730 = arith.constant 7 : index
      %c6_731 = arith.constant 6 : index
      %1339 = memref.load %arg1[%c7_730, %c6_731] : memref<16x9xf32, #tpu.memory_space<smem>>
      %1340 = vector.broadcast %1339 : f32 to vector<16x128xf32>
      %1341 = arith.mulf %1340, %140 : vector<16x128xf32>
      %1342 = arith.addf %1338, %1341 : vector<16x128xf32>
      %c7_732 = arith.constant 7 : index
      %c7_733 = arith.constant 7 : index
      %1343 = memref.load %arg1[%c7_732, %c7_733] : memref<16x9xf32, #tpu.memory_space<smem>>
      %1344 = vector.broadcast %1343 : f32 to vector<16x128xf32>
      %1345 = arith.mulf %1344, %143 : vector<16x128xf32>
      %1346 = arith.addf %1342, %1345 : vector<16x128xf32>
      %c7_734 = arith.constant 7 : index
      %c8_735 = arith.constant 8 : index
      %1347 = memref.load %arg1[%c7_734, %c8_735] : memref<16x9xf32, #tpu.memory_space<smem>>
      %1348 = vector.broadcast %1347 : f32 to vector<16x128xf32>
      %1349 = arith.mulf %1348, %146 : vector<16x128xf32>
      %1350 = arith.addf %1346, %1349 : vector<16x128xf32>
      %1351 = arith.maximumf %1245, %1280 : vector<16x128xf32>
      %1352 = arith.maximumf %1315, %1350 : vector<16x128xf32>
      %1353 = arith.maximumf %1351, %1352 : vector<16x128xf32>
      %c7_736 = arith.constant 7 : index
      %1354 = memref.load %arg2[%c7_736] : memref<16xf32, #tpu.memory_space<smem>>
      %1355 = vector.broadcast %1354 : f32 to vector<16x128xf32>
      %1356 = arith.addf %1353, %1355 : vector<16x128xf32>
      %cst_737 = arith.constant 0.000000e+00 : f32
      %1357 = vector.broadcast %cst_737 : f32 to vector<16x128xf32>
      %1358 = arith.maximumf %1356, %1357 : vector<16x128xf32>
      %1359 = arith.index_cast %arg8 : i32 to index
      %c112 = arith.constant 112 : index
      %c0_738 = arith.constant 0 : index
      %1360 = vector.load %arg7[%1359, %c112, %c0_738] : memref<13x256x128xf32, #tpu.memory_space<vmem>>, vector<1x16x128xf32>
      %1361 = vector.shape_cast %1360 : vector<1x16x128xf32> to vector<16x128xf32>
      %1362 = vector.shape_cast %1358 : vector<16x128xf32> to vector<1x16x128xf32>
      tpu.vector_store %arg7[%1359, %c112, %c0_738], %1362 {strides = array<i32>} : memref<13x256x128xf32, #tpu.memory_space<vmem>>, vector<1x16x128xf32>,
      %c8_739 = arith.constant 8 : index
      %c0_740 = arith.constant 0 : index
      %1363 = memref.load %arg1[%c8_739, %c0_740] : memref<16x9xf32, #tpu.memory_space<smem>>
      %1364 = vector.broadcast %1363 : f32 to vector<16x128xf32>
      %1365 = arith.mulf %1364, %95 : vector<16x128xf32>
      %c8_741 = arith.constant 8 : index
      %c1_742 = arith.constant 1 : index
      %1366 = memref.load %arg1[%c8_741, %c1_742] : memref<16x9xf32, #tpu.memory_space<smem>>
      %1367 = vector.broadcast %1366 : f32 to vector<16x128xf32>
      %1368 = arith.mulf %1367, %98 : vector<16x128xf32>
      %1369 = arith.addf %1365, %1368 : vector<16x128xf32>
      %c8_743 = arith.constant 8 : index
      %c2_744 = arith.constant 2 : index
      %1370 = memref.load %arg1[%c8_743, %c2_744] : memref<16x9xf32, #tpu.memory_space<smem>>
      %1371 = vector.broadcast %1370 : f32 to vector<16x128xf32>
      %1372 = arith.mulf %1371, %101 : vector<16x128xf32>
      %1373 = arith.addf %1369, %1372 : vector<16x128xf32>
      %c8_745 = arith.constant 8 : index
      %c3_746 = arith.constant 3 : index
      %1374 = memref.load %arg1[%c8_745, %c3_746] : memref<16x9xf32, #tpu.memory_space<smem>>
      %1375 = vector.broadcast %1374 : f32 to vector<16x128xf32>
      %1376 = arith.mulf %1375, %109 : vector<16x128xf32>
      %1377 = arith.addf %1373, %1376 : vector<16x128xf32>
      %c8_747 = arith.constant 8 : index
      %c4_748 = arith.constant 4 : index
      %1378 = memref.load %arg1[%c8_747, %c4_748] : memref<16x9xf32, #tpu.memory_space<smem>>
      %1379 = vector.broadcast %1378 : f32 to vector<16x128xf32>
      %1380 = arith.mulf %1379, %112 : vector<16x128xf32>
      %1381 = arith.addf %1377, %1380 : vector<16x128xf32>
      %c8_749 = arith.constant 8 : index
      %c5_750 = arith.constant 5 : index
      %1382 = memref.load %arg1[%c8_749, %c5_750] : memref<16x9xf32, #tpu.memory_space<smem>>
      %1383 = vector.broadcast %1382 : f32 to vector<16x128xf32>
      %1384 = arith.mulf %1383, %115 : vector<16x128xf32>
      %1385 = arith.addf %1381, %1384 : vector<16x128xf32>
      %c8_751 = arith.constant 8 : index
      %c6_752 = arith.constant 6 : index
      %1386 = memref.load %arg1[%c8_751, %c6_752] : memref<16x9xf32, #tpu.memory_space<smem>>
      %1387 = vector.broadcast %1386 : f32 to vector<16x128xf32>
      %1388 = arith.mulf %1387, %123 : vector<16x128xf32>
      %1389 = arith.addf %1385, %1388 : vector<16x128xf32>
      %c8_753 = arith.constant 8 : index
      %c7_754 = arith.constant 7 : index
      %1390 = memref.load %arg1[%c8_753, %c7_754] : memref<16x9xf32, #tpu.memory_space<smem>>
      %1391 = vector.broadcast %1390 : f32 to vector<16x128xf32>
      %1392 = arith.mulf %1391, %126 : vector<16x128xf32>
      %1393 = arith.addf %1389, %1392 : vector<16x128xf32>
      %c8_755 = arith.constant 8 : index
      %c8_756 = arith.constant 8 : index
      %1394 = memref.load %arg1[%c8_755, %c8_756] : memref<16x9xf32, #tpu.memory_space<smem>>
      %1395 = vector.broadcast %1394 : f32 to vector<16x128xf32>
      %1396 = arith.mulf %1395, %129 : vector<16x128xf32>
      %1397 = arith.addf %1393, %1396 : vector<16x128xf32>
      %c8_757 = arith.constant 8 : index
      %c0_758 = arith.constant 0 : index
      %1398 = memref.load %arg1[%c8_757, %c0_758] : memref<16x9xf32, #tpu.memory_space<smem>>
      %1399 = vector.broadcast %1398 : f32 to vector<16x128xf32>
      %1400 = arith.mulf %1399, %98 : vector<16x128xf32>
      %c8_759 = arith.constant 8 : index
      %c1_760 = arith.constant 1 : index
      %1401 = memref.load %arg1[%c8_759, %c1_760] : memref<16x9xf32, #tpu.memory_space<smem>>
      %1402 = vector.broadcast %1401 : f32 to vector<16x128xf32>
      %1403 = arith.mulf %1402, %101 : vector<16x128xf32>
      %1404 = arith.addf %1400, %1403 : vector<16x128xf32>
      %c8_761 = arith.constant 8 : index
      %c2_762 = arith.constant 2 : index
      %1405 = memref.load %arg1[%c8_761, %c2_762] : memref<16x9xf32, #tpu.memory_space<smem>>
      %1406 = vector.broadcast %1405 : f32 to vector<16x128xf32>
      %1407 = arith.mulf %1406, %104 : vector<16x128xf32>
      %1408 = arith.addf %1404, %1407 : vector<16x128xf32>
      %c8_763 = arith.constant 8 : index
      %c3_764 = arith.constant 3 : index
      %1409 = memref.load %arg1[%c8_763, %c3_764] : memref<16x9xf32, #tpu.memory_space<smem>>
      %1410 = vector.broadcast %1409 : f32 to vector<16x128xf32>
      %1411 = arith.mulf %1410, %112 : vector<16x128xf32>
      %1412 = arith.addf %1408, %1411 : vector<16x128xf32>
      %c8_765 = arith.constant 8 : index
      %c4_766 = arith.constant 4 : index
      %1413 = memref.load %arg1[%c8_765, %c4_766] : memref<16x9xf32, #tpu.memory_space<smem>>
      %1414 = vector.broadcast %1413 : f32 to vector<16x128xf32>
      %1415 = arith.mulf %1414, %115 : vector<16x128xf32>
      %1416 = arith.addf %1412, %1415 : vector<16x128xf32>
      %c8_767 = arith.constant 8 : index
      %c5_768 = arith.constant 5 : index
      %1417 = memref.load %arg1[%c8_767, %c5_768] : memref<16x9xf32, #tpu.memory_space<smem>>
      %1418 = vector.broadcast %1417 : f32 to vector<16x128xf32>
      %1419 = arith.mulf %1418, %118 : vector<16x128xf32>
      %1420 = arith.addf %1416, %1419 : vector<16x128xf32>
      %c8_769 = arith.constant 8 : index
      %c6_770 = arith.constant 6 : index
      %1421 = memref.load %arg1[%c8_769, %c6_770] : memref<16x9xf32, #tpu.memory_space<smem>>
      %1422 = vector.broadcast %1421 : f32 to vector<16x128xf32>
      %1423 = arith.mulf %1422, %126 : vector<16x128xf32>
      %1424 = arith.addf %1420, %1423 : vector<16x128xf32>
      %c8_771 = arith.constant 8 : index
      %c7_772 = arith.constant 7 : index
      %1425 = memref.load %arg1[%c8_771, %c7_772] : memref<16x9xf32, #tpu.memory_space<smem>>
      %1426 = vector.broadcast %1425 : f32 to vector<16x128xf32>
      %1427 = arith.mulf %1426, %129 : vector<16x128xf32>
      %1428 = arith.addf %1424, %1427 : vector<16x128xf32>
      %c8_773 = arith.constant 8 : index
      %c8_774 = arith.constant 8 : index
      %1429 = memref.load %arg1[%c8_773, %c8_774] : memref<16x9xf32, #tpu.memory_space<smem>>
      %1430 = vector.broadcast %1429 : f32 to vector<16x128xf32>
      %1431 = arith.mulf %1430, %132 : vector<16x128xf32>
      %1432 = arith.addf %1428, %1431 : vector<16x128xf32>
      %c8_775 = arith.constant 8 : index
      %c0_776 = arith.constant 0 : index
      %1433 = memref.load %arg1[%c8_775, %c0_776] : memref<16x9xf32, #tpu.memory_space<smem>>
      %1434 = vector.broadcast %1433 : f32 to vector<16x128xf32>
      %1435 = arith.mulf %1434, %109 : vector<16x128xf32>
      %c8_777 = arith.constant 8 : index
      %c1_778 = arith.constant 1 : index
      %1436 = memref.load %arg1[%c8_777, %c1_778] : memref<16x9xf32, #tpu.memory_space<smem>>
      %1437 = vector.broadcast %1436 : f32 to vector<16x128xf32>
      %1438 = arith.mulf %1437, %112 : vector<16x128xf32>
      %1439 = arith.addf %1435, %1438 : vector<16x128xf32>
      %c8_779 = arith.constant 8 : index
      %c2_780 = arith.constant 2 : index
      %1440 = memref.load %arg1[%c8_779, %c2_780] : memref<16x9xf32, #tpu.memory_space<smem>>
      %1441 = vector.broadcast %1440 : f32 to vector<16x128xf32>
      %1442 = arith.mulf %1441, %115 : vector<16x128xf32>
      %1443 = arith.addf %1439, %1442 : vector<16x128xf32>
      %c8_781 = arith.constant 8 : index
      %c3_782 = arith.constant 3 : index
      %1444 = memref.load %arg1[%c8_781, %c3_782] : memref<16x9xf32, #tpu.memory_space<smem>>
      %1445 = vector.broadcast %1444 : f32 to vector<16x128xf32>
      %1446 = arith.mulf %1445, %123 : vector<16x128xf32>
      %1447 = arith.addf %1443, %1446 : vector<16x128xf32>
      %c8_783 = arith.constant 8 : index
      %c4_784 = arith.constant 4 : index
      %1448 = memref.load %arg1[%c8_783, %c4_784] : memref<16x9xf32, #tpu.memory_space<smem>>
      %1449 = vector.broadcast %1448 : f32 to vector<16x128xf32>
      %1450 = arith.mulf %1449, %126 : vector<16x128xf32>
      %1451 = arith.addf %1447, %1450 : vector<16x128xf32>
      %c8_785 = arith.constant 8 : index
      %c5_786 = arith.constant 5 : index
      %1452 = memref.load %arg1[%c8_785, %c5_786] : memref<16x9xf32, #tpu.memory_space<smem>>
      %1453 = vector.broadcast %1452 : f32 to vector<16x128xf32>
      %1454 = arith.mulf %1453, %129 : vector<16x128xf32>
      %1455 = arith.addf %1451, %1454 : vector<16x128xf32>
      %c8_787 = arith.constant 8 : index
      %c6_788 = arith.constant 6 : index
      %1456 = memref.load %arg1[%c8_787, %c6_788] : memref<16x9xf32, #tpu.memory_space<smem>>
      %1457 = vector.broadcast %1456 : f32 to vector<16x128xf32>
      %1458 = arith.mulf %1457, %137 : vector<16x128xf32>
      %1459 = arith.addf %1455, %1458 : vector<16x128xf32>
      %c8_789 = arith.constant 8 : index
      %c7_790 = arith.constant 7 : index
      %1460 = memref.load %arg1[%c8_789, %c7_790] : memref<16x9xf32, #tpu.memory_space<smem>>
      %1461 = vector.broadcast %1460 : f32 to vector<16x128xf32>
      %1462 = arith.mulf %1461, %140 : vector<16x128xf32>
      %1463 = arith.addf %1459, %1462 : vector<16x128xf32>
      %c8_791 = arith.constant 8 : index
      %c8_792 = arith.constant 8 : index
      %1464 = memref.load %arg1[%c8_791, %c8_792] : memref<16x9xf32, #tpu.memory_space<smem>>
      %1465 = vector.broadcast %1464 : f32 to vector<16x128xf32>
      %1466 = arith.mulf %1465, %143 : vector<16x128xf32>
      %1467 = arith.addf %1463, %1466 : vector<16x128xf32>
      %c8_793 = arith.constant 8 : index
      %c0_794 = arith.constant 0 : index
      %1468 = memref.load %arg1[%c8_793, %c0_794] : memref<16x9xf32, #tpu.memory_space<smem>>
      %1469 = vector.broadcast %1468 : f32 to vector<16x128xf32>
      %1470 = arith.mulf %1469, %112 : vector<16x128xf32>
      %c8_795 = arith.constant 8 : index
      %c1_796 = arith.constant 1 : index
      %1471 = memref.load %arg1[%c8_795, %c1_796] : memref<16x9xf32, #tpu.memory_space<smem>>
      %1472 = vector.broadcast %1471 : f32 to vector<16x128xf32>
      %1473 = arith.mulf %1472, %115 : vector<16x128xf32>
      %1474 = arith.addf %1470, %1473 : vector<16x128xf32>
      %c8_797 = arith.constant 8 : index
      %c2_798 = arith.constant 2 : index
      %1475 = memref.load %arg1[%c8_797, %c2_798] : memref<16x9xf32, #tpu.memory_space<smem>>
      %1476 = vector.broadcast %1475 : f32 to vector<16x128xf32>
      %1477 = arith.mulf %1476, %118 : vector<16x128xf32>
      %1478 = arith.addf %1474, %1477 : vector<16x128xf32>
      %c8_799 = arith.constant 8 : index
      %c3_800 = arith.constant 3 : index
      %1479 = memref.load %arg1[%c8_799, %c3_800] : memref<16x9xf32, #tpu.memory_space<smem>>
      %1480 = vector.broadcast %1479 : f32 to vector<16x128xf32>
      %1481 = arith.mulf %1480, %126 : vector<16x128xf32>
      %1482 = arith.addf %1478, %1481 : vector<16x128xf32>
      %c8_801 = arith.constant 8 : index
      %c4_802 = arith.constant 4 : index
      %1483 = memref.load %arg1[%c8_801, %c4_802] : memref<16x9xf32, #tpu.memory_space<smem>>
      %1484 = vector.broadcast %1483 : f32 to vector<16x128xf32>
      %1485 = arith.mulf %1484, %129 : vector<16x128xf32>
      %1486 = arith.addf %1482, %1485 : vector<16x128xf32>
      %c8_803 = arith.constant 8 : index
      %c5_804 = arith.constant 5 : index
      %1487 = memref.load %arg1[%c8_803, %c5_804] : memref<16x9xf32, #tpu.memory_space<smem>>
      %1488 = vector.broadcast %1487 : f32 to vector<16x128xf32>
      %1489 = arith.mulf %1488, %132 : vector<16x128xf32>
      %1490 = arith.addf %1486, %1489 : vector<16x128xf32>
      %c8_805 = arith.constant 8 : index
      %c6_806 = arith.constant 6 : index
      %1491 = memref.load %arg1[%c8_805, %c6_806] : memref<16x9xf32, #tpu.memory_space<smem>>
      %1492 = vector.broadcast %1491 : f32 to vector<16x128xf32>
      %1493 = arith.mulf %1492, %140 : vector<16x128xf32>
      %1494 = arith.addf %1490, %1493 : vector<16x128xf32>
      %c8_807 = arith.constant 8 : index
      %c7_808 = arith.constant 7 : index
      %1495 = memref.load %arg1[%c8_807, %c7_808] : memref<16x9xf32, #tpu.memory_space<smem>>
      %1496 = vector.broadcast %1495 : f32 to vector<16x128xf32>
      %1497 = arith.mulf %1496, %143 : vector<16x128xf32>
      %1498 = arith.addf %1494, %1497 : vector<16x128xf32>
      %c8_809 = arith.constant 8 : index
      %c8_810 = arith.constant 8 : index
      %1499 = memref.load %arg1[%c8_809, %c8_810] : memref<16x9xf32, #tpu.memory_space<smem>>
      %1500 = vector.broadcast %1499 : f32 to vector<16x128xf32>
      %1501 = arith.mulf %1500, %146 : vector<16x128xf32>
      %1502 = arith.addf %1498, %1501 : vector<16x128xf32>
      %1503 = arith.maximumf %1397, %1432 : vector<16x128xf32>
      %1504 = arith.maximumf %1467, %1502 : vector<16x128xf32>
      %1505 = arith.maximumf %1503, %1504 : vector<16x128xf32>
      %c8_811 = arith.constant 8 : index
      %1506 = memref.load %arg2[%c8_811] : memref<16xf32, #tpu.memory_space<smem>>
      %1507 = vector.broadcast %1506 : f32 to vector<16x128xf32>
      %1508 = arith.addf %1505, %1507 : vector<16x128xf32>
      %cst_812 = arith.constant 0.000000e+00 : f32
      %1509 = vector.broadcast %cst_812 : f32 to vector<16x128xf32>
      %1510 = arith.maximumf %1508, %1509 : vector<16x128xf32>
      %1511 = arith.index_cast %arg8 : i32 to index
      %c128 = arith.constant 128 : index
      %c0_813 = arith.constant 0 : index
      %1512 = vector.load %arg7[%1511, %c128, %c0_813] : memref<13x256x128xf32, #tpu.memory_space<vmem>>, vector<1x16x128xf32>
      %1513 = vector.shape_cast %1512 : vector<1x16x128xf32> to vector<16x128xf32>
      %1514 = vector.shape_cast %1510 : vector<16x128xf32> to vector<1x16x128xf32>
      tpu.vector_store %arg7[%1511, %c128, %c0_813], %1514 {strides = array<i32>} : memref<13x256x128xf32, #tpu.memory_space<vmem>>, vector<1x16x128xf32>,
      %c9_814 = arith.constant 9 : index
      %c0_815 = arith.constant 0 : index
      %1515 = memref.load %arg1[%c9_814, %c0_815] : memref<16x9xf32, #tpu.memory_space<smem>>
      %1516 = vector.broadcast %1515 : f32 to vector<16x128xf32>
      %1517 = arith.mulf %1516, %95 : vector<16x128xf32>
      %c9_816 = arith.constant 9 : index
      %c1_817 = arith.constant 1 : index
      %1518 = memref.load %arg1[%c9_816, %c1_817] : memref<16x9xf32, #tpu.memory_space<smem>>
      %1519 = vector.broadcast %1518 : f32 to vector<16x128xf32>
      %1520 = arith.mulf %1519, %98 : vector<16x128xf32>
      %1521 = arith.addf %1517, %1520 : vector<16x128xf32>
      %c9_818 = arith.constant 9 : index
      %c2_819 = arith.constant 2 : index
      %1522 = memref.load %arg1[%c9_818, %c2_819] : memref<16x9xf32, #tpu.memory_space<smem>>
      %1523 = vector.broadcast %1522 : f32 to vector<16x128xf32>
      %1524 = arith.mulf %1523, %101 : vector<16x128xf32>
      %1525 = arith.addf %1521, %1524 : vector<16x128xf32>
      %c9_820 = arith.constant 9 : index
      %c3_821 = arith.constant 3 : index
      %1526 = memref.load %arg1[%c9_820, %c3_821] : memref<16x9xf32, #tpu.memory_space<smem>>
      %1527 = vector.broadcast %1526 : f32 to vector<16x128xf32>
      %1528 = arith.mulf %1527, %109 : vector<16x128xf32>
      %1529 = arith.addf %1525, %1528 : vector<16x128xf32>
      %c9_822 = arith.constant 9 : index
      %c4_823 = arith.constant 4 : index
      %1530 = memref.load %arg1[%c9_822, %c4_823] : memref<16x9xf32, #tpu.memory_space<smem>>
      %1531 = vector.broadcast %1530 : f32 to vector<16x128xf32>
      %1532 = arith.mulf %1531, %112 : vector<16x128xf32>
      %1533 = arith.addf %1529, %1532 : vector<16x128xf32>
      %c9_824 = arith.constant 9 : index
      %c5_825 = arith.constant 5 : index
      %1534 = memref.load %arg1[%c9_824, %c5_825] : memref<16x9xf32, #tpu.memory_space<smem>>
      %1535 = vector.broadcast %1534 : f32 to vector<16x128xf32>
      %1536 = arith.mulf %1535, %115 : vector<16x128xf32>
      %1537 = arith.addf %1533, %1536 : vector<16x128xf32>
      %c9_826 = arith.constant 9 : index
      %c6_827 = arith.constant 6 : index
      %1538 = memref.load %arg1[%c9_826, %c6_827] : memref<16x9xf32, #tpu.memory_space<smem>>
      %1539 = vector.broadcast %1538 : f32 to vector<16x128xf32>
      %1540 = arith.mulf %1539, %123 : vector<16x128xf32>
      %1541 = arith.addf %1537, %1540 : vector<16x128xf32>
      %c9_828 = arith.constant 9 : index
      %c7_829 = arith.constant 7 : index
      %1542 = memref.load %arg1[%c9_828, %c7_829] : memref<16x9xf32, #tpu.memory_space<smem>>
      %1543 = vector.broadcast %1542 : f32 to vector<16x128xf32>
      %1544 = arith.mulf %1543, %126 : vector<16x128xf32>
      %1545 = arith.addf %1541, %1544 : vector<16x128xf32>
      %c9_830 = arith.constant 9 : index
      %c8_831 = arith.constant 8 : index
      %1546 = memref.load %arg1[%c9_830, %c8_831] : memref<16x9xf32, #tpu.memory_space<smem>>
      %1547 = vector.broadcast %1546 : f32 to vector<16x128xf32>
      %1548 = arith.mulf %1547, %129 : vector<16x128xf32>
      %1549 = arith.addf %1545, %1548 : vector<16x128xf32>
      %c9_832 = arith.constant 9 : index
      %c0_833 = arith.constant 0 : index
      %1550 = memref.load %arg1[%c9_832, %c0_833] : memref<16x9xf32, #tpu.memory_space<smem>>
      %1551 = vector.broadcast %1550 : f32 to vector<16x128xf32>
      %1552 = arith.mulf %1551, %98 : vector<16x128xf32>
      %c9_834 = arith.constant 9 : index
      %c1_835 = arith.constant 1 : index
      %1553 = memref.load %arg1[%c9_834, %c1_835] : memref<16x9xf32, #tpu.memory_space<smem>>
      %1554 = vector.broadcast %1553 : f32 to vector<16x128xf32>
      %1555 = arith.mulf %1554, %101 : vector<16x128xf32>
      %1556 = arith.addf %1552, %1555 : vector<16x128xf32>
      %c9_836 = arith.constant 9 : index
      %c2_837 = arith.constant 2 : index
      %1557 = memref.load %arg1[%c9_836, %c2_837] : memref<16x9xf32, #tpu.memory_space<smem>>
      %1558 = vector.broadcast %1557 : f32 to vector<16x128xf32>
      %1559 = arith.mulf %1558, %104 : vector<16x128xf32>
      %1560 = arith.addf %1556, %1559 : vector<16x128xf32>
      %c9_838 = arith.constant 9 : index
      %c3_839 = arith.constant 3 : index
      %1561 = memref.load %arg1[%c9_838, %c3_839] : memref<16x9xf32, #tpu.memory_space<smem>>
      %1562 = vector.broadcast %1561 : f32 to vector<16x128xf32>
      %1563 = arith.mulf %1562, %112 : vector<16x128xf32>
      %1564 = arith.addf %1560, %1563 : vector<16x128xf32>
      %c9_840 = arith.constant 9 : index
      %c4_841 = arith.constant 4 : index
      %1565 = memref.load %arg1[%c9_840, %c4_841] : memref<16x9xf32, #tpu.memory_space<smem>>
      %1566 = vector.broadcast %1565 : f32 to vector<16x128xf32>
      %1567 = arith.mulf %1566, %115 : vector<16x128xf32>
      %1568 = arith.addf %1564, %1567 : vector<16x128xf32>
      %c9_842 = arith.constant 9 : index
      %c5_843 = arith.constant 5 : index
      %1569 = memref.load %arg1[%c9_842, %c5_843] : memref<16x9xf32, #tpu.memory_space<smem>>
      %1570 = vector.broadcast %1569 : f32 to vector<16x128xf32>
      %1571 = arith.mulf %1570, %118 : vector<16x128xf32>
      %1572 = arith.addf %1568, %1571 : vector<16x128xf32>
      %c9_844 = arith.constant 9 : index
      %c6_845 = arith.constant 6 : index
      %1573 = memref.load %arg1[%c9_844, %c6_845] : memref<16x9xf32, #tpu.memory_space<smem>>
      %1574 = vector.broadcast %1573 : f32 to vector<16x128xf32>
      %1575 = arith.mulf %1574, %126 : vector<16x128xf32>
      %1576 = arith.addf %1572, %1575 : vector<16x128xf32>
      %c9_846 = arith.constant 9 : index
      %c7_847 = arith.constant 7 : index
      %1577 = memref.load %arg1[%c9_846, %c7_847] : memref<16x9xf32, #tpu.memory_space<smem>>
      %1578 = vector.broadcast %1577 : f32 to vector<16x128xf32>
      %1579 = arith.mulf %1578, %129 : vector<16x128xf32>
      %1580 = arith.addf %1576, %1579 : vector<16x128xf32>
      %c9_848 = arith.constant 9 : index
      %c8_849 = arith.constant 8 : index
      %1581 = memref.load %arg1[%c9_848, %c8_849] : memref<16x9xf32, #tpu.memory_space<smem>>
      %1582 = vector.broadcast %1581 : f32 to vector<16x128xf32>
      %1583 = arith.mulf %1582, %132 : vector<16x128xf32>
      %1584 = arith.addf %1580, %1583 : vector<16x128xf32>
      %c9_850 = arith.constant 9 : index
      %c0_851 = arith.constant 0 : index
      %1585 = memref.load %arg1[%c9_850, %c0_851] : memref<16x9xf32, #tpu.memory_space<smem>>
      %1586 = vector.broadcast %1585 : f32 to vector<16x128xf32>
      %1587 = arith.mulf %1586, %109 : vector<16x128xf32>
      %c9_852 = arith.constant 9 : index
      %c1_853 = arith.constant 1 : index
      %1588 = memref.load %arg1[%c9_852, %c1_853] : memref<16x9xf32, #tpu.memory_space<smem>>
      %1589 = vector.broadcast %1588 : f32 to vector<16x128xf32>
      %1590 = arith.mulf %1589, %112 : vector<16x128xf32>
      %1591 = arith.addf %1587, %1590 : vector<16x128xf32>
      %c9_854 = arith.constant 9 : index
      %c2_855 = arith.constant 2 : index
      %1592 = memref.load %arg1[%c9_854, %c2_855] : memref<16x9xf32, #tpu.memory_space<smem>>
      %1593 = vector.broadcast %1592 : f32 to vector<16x128xf32>
      %1594 = arith.mulf %1593, %115 : vector<16x128xf32>
      %1595 = arith.addf %1591, %1594 : vector<16x128xf32>
      %c9_856 = arith.constant 9 : index
      %c3_857 = arith.constant 3 : index
      %1596 = memref.load %arg1[%c9_856, %c3_857] : memref<16x9xf32, #tpu.memory_space<smem>>
      %1597 = vector.broadcast %1596 : f32 to vector<16x128xf32>
      %1598 = arith.mulf %1597, %123 : vector<16x128xf32>
      %1599 = arith.addf %1595, %1598 : vector<16x128xf32>
      %c9_858 = arith.constant 9 : index
      %c4_859 = arith.constant 4 : index
      %1600 = memref.load %arg1[%c9_858, %c4_859] : memref<16x9xf32, #tpu.memory_space<smem>>
      %1601 = vector.broadcast %1600 : f32 to vector<16x128xf32>
      %1602 = arith.mulf %1601, %126 : vector<16x128xf32>
      %1603 = arith.addf %1599, %1602 : vector<16x128xf32>
      %c9_860 = arith.constant 9 : index
      %c5_861 = arith.constant 5 : index
      %1604 = memref.load %arg1[%c9_860, %c5_861] : memref<16x9xf32, #tpu.memory_space<smem>>
      %1605 = vector.broadcast %1604 : f32 to vector<16x128xf32>
      %1606 = arith.mulf %1605, %129 : vector<16x128xf32>
      %1607 = arith.addf %1603, %1606 : vector<16x128xf32>
      %c9_862 = arith.constant 9 : index
      %c6_863 = arith.constant 6 : index
      %1608 = memref.load %arg1[%c9_862, %c6_863] : memref<16x9xf32, #tpu.memory_space<smem>>
      %1609 = vector.broadcast %1608 : f32 to vector<16x128xf32>
      %1610 = arith.mulf %1609, %137 : vector<16x128xf32>
      %1611 = arith.addf %1607, %1610 : vector<16x128xf32>
      %c9_864 = arith.constant 9 : index
      %c7_865 = arith.constant 7 : index
      %1612 = memref.load %arg1[%c9_864, %c7_865] : memref<16x9xf32, #tpu.memory_space<smem>>
      %1613 = vector.broadcast %1612 : f32 to vector<16x128xf32>
      %1614 = arith.mulf %1613, %140 : vector<16x128xf32>
      %1615 = arith.addf %1611, %1614 : vector<16x128xf32>
      %c9_866 = arith.constant 9 : index
      %c8_867 = arith.constant 8 : index
      %1616 = memref.load %arg1[%c9_866, %c8_867] : memref<16x9xf32, #tpu.memory_space<smem>>
      %1617 = vector.broadcast %1616 : f32 to vector<16x128xf32>
      %1618 = arith.mulf %1617, %143 : vector<16x128xf32>
      %1619 = arith.addf %1615, %1618 : vector<16x128xf32>
      %c9_868 = arith.constant 9 : index
      %c0_869 = arith.constant 0 : index
      %1620 = memref.load %arg1[%c9_868, %c0_869] : memref<16x9xf32, #tpu.memory_space<smem>>
      %1621 = vector.broadcast %1620 : f32 to vector<16x128xf32>
      %1622 = arith.mulf %1621, %112 : vector<16x128xf32>
      %c9_870 = arith.constant 9 : index
      %c1_871 = arith.constant 1 : index
      %1623 = memref.load %arg1[%c9_870, %c1_871] : memref<16x9xf32, #tpu.memory_space<smem>>
      %1624 = vector.broadcast %1623 : f32 to vector<16x128xf32>
      %1625 = arith.mulf %1624, %115 : vector<16x128xf32>
      %1626 = arith.addf %1622, %1625 : vector<16x128xf32>
      %c9_872 = arith.constant 9 : index
      %c2_873 = arith.constant 2 : index
      %1627 = memref.load %arg1[%c9_872, %c2_873] : memref<16x9xf32, #tpu.memory_space<smem>>
      %1628 = vector.broadcast %1627 : f32 to vector<16x128xf32>
      %1629 = arith.mulf %1628, %118 : vector<16x128xf32>
      %1630 = arith.addf %1626, %1629 : vector<16x128xf32>
      %c9_874 = arith.constant 9 : index
      %c3_875 = arith.constant 3 : index
      %1631 = memref.load %arg1[%c9_874, %c3_875] : memref<16x9xf32, #tpu.memory_space<smem>>
      %1632 = vector.broadcast %1631 : f32 to vector<16x128xf32>
      %1633 = arith.mulf %1632, %126 : vector<16x128xf32>
      %1634 = arith.addf %1630, %1633 : vector<16x128xf32>
      %c9_876 = arith.constant 9 : index
      %c4_877 = arith.constant 4 : index
      %1635 = memref.load %arg1[%c9_876, %c4_877] : memref<16x9xf32, #tpu.memory_space<smem>>
      %1636 = vector.broadcast %1635 : f32 to vector<16x128xf32>
      %1637 = arith.mulf %1636, %129 : vector<16x128xf32>
      %1638 = arith.addf %1634, %1637 : vector<16x128xf32>
      %c9_878 = arith.constant 9 : index
      %c5_879 = arith.constant 5 : index
      %1639 = memref.load %arg1[%c9_878, %c5_879] : memref<16x9xf32, #tpu.memory_space<smem>>
      %1640 = vector.broadcast %1639 : f32 to vector<16x128xf32>
      %1641 = arith.mulf %1640, %132 : vector<16x128xf32>
      %1642 = arith.addf %1638, %1641 : vector<16x128xf32>
      %c9_880 = arith.constant 9 : index
      %c6_881 = arith.constant 6 : index
      %1643 = memref.load %arg1[%c9_880, %c6_881] : memref<16x9xf32, #tpu.memory_space<smem>>
      %1644 = vector.broadcast %1643 : f32 to vector<16x128xf32>
      %1645 = arith.mulf %1644, %140 : vector<16x128xf32>
      %1646 = arith.addf %1642, %1645 : vector<16x128xf32>
      %c9_882 = arith.constant 9 : index
      %c7_883 = arith.constant 7 : index
      %1647 = memref.load %arg1[%c9_882, %c7_883] : memref<16x9xf32, #tpu.memory_space<smem>>
      %1648 = vector.broadcast %1647 : f32 to vector<16x128xf32>
      %1649 = arith.mulf %1648, %143 : vector<16x128xf32>
      %1650 = arith.addf %1646, %1649 : vector<16x128xf32>
      %c9_884 = arith.constant 9 : index
      %c8_885 = arith.constant 8 : index
      %1651 = memref.load %arg1[%c9_884, %c8_885] : memref<16x9xf32, #tpu.memory_space<smem>>
      %1652 = vector.broadcast %1651 : f32 to vector<16x128xf32>
      %1653 = arith.mulf %1652, %146 : vector<16x128xf32>
      %1654 = arith.addf %1650, %1653 : vector<16x128xf32>
      %1655 = arith.maximumf %1549, %1584 : vector<16x128xf32>
      %1656 = arith.maximumf %1619, %1654 : vector<16x128xf32>
      %1657 = arith.maximumf %1655, %1656 : vector<16x128xf32>
      %c9_886 = arith.constant 9 : index
      %1658 = memref.load %arg2[%c9_886] : memref<16xf32, #tpu.memory_space<smem>>
      %1659 = vector.broadcast %1658 : f32 to vector<16x128xf32>
      %1660 = arith.addf %1657, %1659 : vector<16x128xf32>
      %cst_887 = arith.constant 0.000000e+00 : f32
      %1661 = vector.broadcast %cst_887 : f32 to vector<16x128xf32>
      %1662 = arith.maximumf %1660, %1661 : vector<16x128xf32>
      %1663 = arith.index_cast %arg8 : i32 to index
      %c144 = arith.constant 144 : index
      %c0_888 = arith.constant 0 : index
      %1664 = vector.load %arg7[%1663, %c144, %c0_888] : memref<13x256x128xf32, #tpu.memory_space<vmem>>, vector<1x16x128xf32>
      %1665 = vector.shape_cast %1664 : vector<1x16x128xf32> to vector<16x128xf32>
      %1666 = vector.shape_cast %1662 : vector<16x128xf32> to vector<1x16x128xf32>
      tpu.vector_store %arg7[%1663, %c144, %c0_888], %1666 {strides = array<i32>} : memref<13x256x128xf32, #tpu.memory_space<vmem>>, vector<1x16x128xf32>,
      %c10_889 = arith.constant 10 : index
      %c0_890 = arith.constant 0 : index
      %1667 = memref.load %arg1[%c10_889, %c0_890] : memref<16x9xf32, #tpu.memory_space<smem>>
      %1668 = vector.broadcast %1667 : f32 to vector<16x128xf32>
      %1669 = arith.mulf %1668, %95 : vector<16x128xf32>
      %c10_891 = arith.constant 10 : index
      %c1_892 = arith.constant 1 : index
      %1670 = memref.load %arg1[%c10_891, %c1_892] : memref<16x9xf32, #tpu.memory_space<smem>>
      %1671 = vector.broadcast %1670 : f32 to vector<16x128xf32>
      %1672 = arith.mulf %1671, %98 : vector<16x128xf32>
      %1673 = arith.addf %1669, %1672 : vector<16x128xf32>
      %c10_893 = arith.constant 10 : index
      %c2_894 = arith.constant 2 : index
      %1674 = memref.load %arg1[%c10_893, %c2_894] : memref<16x9xf32, #tpu.memory_space<smem>>
      %1675 = vector.broadcast %1674 : f32 to vector<16x128xf32>
      %1676 = arith.mulf %1675, %101 : vector<16x128xf32>
      %1677 = arith.addf %1673, %1676 : vector<16x128xf32>
      %c10_895 = arith.constant 10 : index
      %c3_896 = arith.constant 3 : index
      %1678 = memref.load %arg1[%c10_895, %c3_896] : memref<16x9xf32, #tpu.memory_space<smem>>
      %1679 = vector.broadcast %1678 : f32 to vector<16x128xf32>
      %1680 = arith.mulf %1679, %109 : vector<16x128xf32>
      %1681 = arith.addf %1677, %1680 : vector<16x128xf32>
      %c10_897 = arith.constant 10 : index
      %c4_898 = arith.constant 4 : index
      %1682 = memref.load %arg1[%c10_897, %c4_898] : memref<16x9xf32, #tpu.memory_space<smem>>
      %1683 = vector.broadcast %1682 : f32 to vector<16x128xf32>
      %1684 = arith.mulf %1683, %112 : vector<16x128xf32>
      %1685 = arith.addf %1681, %1684 : vector<16x128xf32>
      %c10_899 = arith.constant 10 : index
      %c5_900 = arith.constant 5 : index
      %1686 = memref.load %arg1[%c10_899, %c5_900] : memref<16x9xf32, #tpu.memory_space<smem>>
      %1687 = vector.broadcast %1686 : f32 to vector<16x128xf32>
      %1688 = arith.mulf %1687, %115 : vector<16x128xf32>
      %1689 = arith.addf %1685, %1688 : vector<16x128xf32>
      %c10_901 = arith.constant 10 : index
      %c6_902 = arith.constant 6 : index
      %1690 = memref.load %arg1[%c10_901, %c6_902] : memref<16x9xf32, #tpu.memory_space<smem>>
      %1691 = vector.broadcast %1690 : f32 to vector<16x128xf32>
      %1692 = arith.mulf %1691, %123 : vector<16x128xf32>
      %1693 = arith.addf %1689, %1692 : vector<16x128xf32>
      %c10_903 = arith.constant 10 : index
      %c7_904 = arith.constant 7 : index
      %1694 = memref.load %arg1[%c10_903, %c7_904] : memref<16x9xf32, #tpu.memory_space<smem>>
      %1695 = vector.broadcast %1694 : f32 to vector<16x128xf32>
      %1696 = arith.mulf %1695, %126 : vector<16x128xf32>
      %1697 = arith.addf %1693, %1696 : vector<16x128xf32>
      %c10_905 = arith.constant 10 : index
      %c8_906 = arith.constant 8 : index
      %1698 = memref.load %arg1[%c10_905, %c8_906] : memref<16x9xf32, #tpu.memory_space<smem>>
      %1699 = vector.broadcast %1698 : f32 to vector<16x128xf32>
      %1700 = arith.mulf %1699, %129 : vector<16x128xf32>
      %1701 = arith.addf %1697, %1700 : vector<16x128xf32>
      %c10_907 = arith.constant 10 : index
      %c0_908 = arith.constant 0 : index
      %1702 = memref.load %arg1[%c10_907, %c0_908] : memref<16x9xf32, #tpu.memory_space<smem>>
      %1703 = vector.broadcast %1702 : f32 to vector<16x128xf32>
      %1704 = arith.mulf %1703, %98 : vector<16x128xf32>
      %c10_909 = arith.constant 10 : index
      %c1_910 = arith.constant 1 : index
      %1705 = memref.load %arg1[%c10_909, %c1_910] : memref<16x9xf32, #tpu.memory_space<smem>>
      %1706 = vector.broadcast %1705 : f32 to vector<16x128xf32>
      %1707 = arith.mulf %1706, %101 : vector<16x128xf32>
      %1708 = arith.addf %1704, %1707 : vector<16x128xf32>
      %c10_911 = arith.constant 10 : index
      %c2_912 = arith.constant 2 : index
      %1709 = memref.load %arg1[%c10_911, %c2_912] : memref<16x9xf32, #tpu.memory_space<smem>>
      %1710 = vector.broadcast %1709 : f32 to vector<16x128xf32>
      %1711 = arith.mulf %1710, %104 : vector<16x128xf32>
      %1712 = arith.addf %1708, %1711 : vector<16x128xf32>
      %c10_913 = arith.constant 10 : index
      %c3_914 = arith.constant 3 : index
      %1713 = memref.load %arg1[%c10_913, %c3_914] : memref<16x9xf32, #tpu.memory_space<smem>>
      %1714 = vector.broadcast %1713 : f32 to vector<16x128xf32>
      %1715 = arith.mulf %1714, %112 : vector<16x128xf32>
      %1716 = arith.addf %1712, %1715 : vector<16x128xf32>
      %c10_915 = arith.constant 10 : index
      %c4_916 = arith.constant 4 : index
      %1717 = memref.load %arg1[%c10_915, %c4_916] : memref<16x9xf32, #tpu.memory_space<smem>>
      %1718 = vector.broadcast %1717 : f32 to vector<16x128xf32>
      %1719 = arith.mulf %1718, %115 : vector<16x128xf32>
      %1720 = arith.addf %1716, %1719 : vector<16x128xf32>
      %c10_917 = arith.constant 10 : index
      %c5_918 = arith.constant 5 : index
      %1721 = memref.load %arg1[%c10_917, %c5_918] : memref<16x9xf32, #tpu.memory_space<smem>>
      %1722 = vector.broadcast %1721 : f32 to vector<16x128xf32>
      %1723 = arith.mulf %1722, %118 : vector<16x128xf32>
      %1724 = arith.addf %1720, %1723 : vector<16x128xf32>
      %c10_919 = arith.constant 10 : index
      %c6_920 = arith.constant 6 : index
      %1725 = memref.load %arg1[%c10_919, %c6_920] : memref<16x9xf32, #tpu.memory_space<smem>>
      %1726 = vector.broadcast %1725 : f32 to vector<16x128xf32>
      %1727 = arith.mulf %1726, %126 : vector<16x128xf32>
      %1728 = arith.addf %1724, %1727 : vector<16x128xf32>
      %c10_921 = arith.constant 10 : index
      %c7_922 = arith.constant 7 : index
      %1729 = memref.load %arg1[%c10_921, %c7_922] : memref<16x9xf32, #tpu.memory_space<smem>>
      %1730 = vector.broadcast %1729 : f32 to vector<16x128xf32>
      %1731 = arith.mulf %1730, %129 : vector<16x128xf32>
      %1732 = arith.addf %1728, %1731 : vector<16x128xf32>
      %c10_923 = arith.constant 10 : index
      %c8_924 = arith.constant 8 : index
      %1733 = memref.load %arg1[%c10_923, %c8_924] : memref<16x9xf32, #tpu.memory_space<smem>>
      %1734 = vector.broadcast %1733 : f32 to vector<16x128xf32>
      %1735 = arith.mulf %1734, %132 : vector<16x128xf32>
      %1736 = arith.addf %1732, %1735 : vector<16x128xf32>
      %c10_925 = arith.constant 10 : index
      %c0_926 = arith.constant 0 : index
      %1737 = memref.load %arg1[%c10_925, %c0_926] : memref<16x9xf32, #tpu.memory_space<smem>>
      %1738 = vector.broadcast %1737 : f32 to vector<16x128xf32>
      %1739 = arith.mulf %1738, %109 : vector<16x128xf32>
      %c10_927 = arith.constant 10 : index
      %c1_928 = arith.constant 1 : index
      %1740 = memref.load %arg1[%c10_927, %c1_928] : memref<16x9xf32, #tpu.memory_space<smem>>
      %1741 = vector.broadcast %1740 : f32 to vector<16x128xf32>
      %1742 = arith.mulf %1741, %112 : vector<16x128xf32>
      %1743 = arith.addf %1739, %1742 : vector<16x128xf32>
      %c10_929 = arith.constant 10 : index
      %c2_930 = arith.constant 2 : index
      %1744 = memref.load %arg1[%c10_929, %c2_930] : memref<16x9xf32, #tpu.memory_space<smem>>
      %1745 = vector.broadcast %1744 : f32 to vector<16x128xf32>
      %1746 = arith.mulf %1745, %115 : vector<16x128xf32>
      %1747 = arith.addf %1743, %1746 : vector<16x128xf32>
      %c10_931 = arith.constant 10 : index
      %c3_932 = arith.constant 3 : index
      %1748 = memref.load %arg1[%c10_931, %c3_932] : memref<16x9xf32, #tpu.memory_space<smem>>
      %1749 = vector.broadcast %1748 : f32 to vector<16x128xf32>
      %1750 = arith.mulf %1749, %123 : vector<16x128xf32>
      %1751 = arith.addf %1747, %1750 : vector<16x128xf32>
      %c10_933 = arith.constant 10 : index
      %c4_934 = arith.constant 4 : index
      %1752 = memref.load %arg1[%c10_933, %c4_934] : memref<16x9xf32, #tpu.memory_space<smem>>
      %1753 = vector.broadcast %1752 : f32 to vector<16x128xf32>
      %1754 = arith.mulf %1753, %126 : vector<16x128xf32>
      %1755 = arith.addf %1751, %1754 : vector<16x128xf32>
      %c10_935 = arith.constant 10 : index
      %c5_936 = arith.constant 5 : index
      %1756 = memref.load %arg1[%c10_935, %c5_936] : memref<16x9xf32, #tpu.memory_space<smem>>
      %1757 = vector.broadcast %1756 : f32 to vector<16x128xf32>
      %1758 = arith.mulf %1757, %129 : vector<16x128xf32>
      %1759 = arith.addf %1755, %1758 : vector<16x128xf32>
      %c10_937 = arith.constant 10 : index
      %c6_938 = arith.constant 6 : index
      %1760 = memref.load %arg1[%c10_937, %c6_938] : memref<16x9xf32, #tpu.memory_space<smem>>
      %1761 = vector.broadcast %1760 : f32 to vector<16x128xf32>
      %1762 = arith.mulf %1761, %137 : vector<16x128xf32>
      %1763 = arith.addf %1759, %1762 : vector<16x128xf32>
      %c10_939 = arith.constant 10 : index
      %c7_940 = arith.constant 7 : index
      %1764 = memref.load %arg1[%c10_939, %c7_940] : memref<16x9xf32, #tpu.memory_space<smem>>
      %1765 = vector.broadcast %1764 : f32 to vector<16x128xf32>
      %1766 = arith.mulf %1765, %140 : vector<16x128xf32>
      %1767 = arith.addf %1763, %1766 : vector<16x128xf32>
      %c10_941 = arith.constant 10 : index
      %c8_942 = arith.constant 8 : index
      %1768 = memref.load %arg1[%c10_941, %c8_942] : memref<16x9xf32, #tpu.memory_space<smem>>
      %1769 = vector.broadcast %1768 : f32 to vector<16x128xf32>
      %1770 = arith.mulf %1769, %143 : vector<16x128xf32>
      %1771 = arith.addf %1767, %1770 : vector<16x128xf32>
      %c10_943 = arith.constant 10 : index
      %c0_944 = arith.constant 0 : index
      %1772 = memref.load %arg1[%c10_943, %c0_944] : memref<16x9xf32, #tpu.memory_space<smem>>
      %1773 = vector.broadcast %1772 : f32 to vector<16x128xf32>
      %1774 = arith.mulf %1773, %112 : vector<16x128xf32>
      %c10_945 = arith.constant 10 : index
      %c1_946 = arith.constant 1 : index
      %1775 = memref.load %arg1[%c10_945, %c1_946] : memref<16x9xf32, #tpu.memory_space<smem>>
      %1776 = vector.broadcast %1775 : f32 to vector<16x128xf32>
      %1777 = arith.mulf %1776, %115 : vector<16x128xf32>
      %1778 = arith.addf %1774, %1777 : vector<16x128xf32>
      %c10_947 = arith.constant 10 : index
      %c2_948 = arith.constant 2 : index
      %1779 = memref.load %arg1[%c10_947, %c2_948] : memref<16x9xf32, #tpu.memory_space<smem>>
      %1780 = vector.broadcast %1779 : f32 to vector<16x128xf32>
      %1781 = arith.mulf %1780, %118 : vector<16x128xf32>
      %1782 = arith.addf %1778, %1781 : vector<16x128xf32>
      %c10_949 = arith.constant 10 : index
      %c3_950 = arith.constant 3 : index
      %1783 = memref.load %arg1[%c10_949, %c3_950] : memref<16x9xf32, #tpu.memory_space<smem>>
      %1784 = vector.broadcast %1783 : f32 to vector<16x128xf32>
      %1785 = arith.mulf %1784, %126 : vector<16x128xf32>
      %1786 = arith.addf %1782, %1785 : vector<16x128xf32>
      %c10_951 = arith.constant 10 : index
      %c4_952 = arith.constant 4 : index
      %1787 = memref.load %arg1[%c10_951, %c4_952] : memref<16x9xf32, #tpu.memory_space<smem>>
      %1788 = vector.broadcast %1787 : f32 to vector<16x128xf32>
      %1789 = arith.mulf %1788, %129 : vector<16x128xf32>
      %1790 = arith.addf %1786, %1789 : vector<16x128xf32>
      %c10_953 = arith.constant 10 : index
      %c5_954 = arith.constant 5 : index
      %1791 = memref.load %arg1[%c10_953, %c5_954] : memref<16x9xf32, #tpu.memory_space<smem>>
      %1792 = vector.broadcast %1791 : f32 to vector<16x128xf32>
      %1793 = arith.mulf %1792, %132 : vector<16x128xf32>
      %1794 = arith.addf %1790, %1793 : vector<16x128xf32>
      %c10_955 = arith.constant 10 : index
      %c6_956 = arith.constant 6 : index
      %1795 = memref.load %arg1[%c10_955, %c6_956] : memref<16x9xf32, #tpu.memory_space<smem>>
      %1796 = vector.broadcast %1795 : f32 to vector<16x128xf32>
      %1797 = arith.mulf %1796, %140 : vector<16x128xf32>
      %1798 = arith.addf %1794, %1797 : vector<16x128xf32>
      %c10_957 = arith.constant 10 : index
      %c7_958 = arith.constant 7 : index
      %1799 = memref.load %arg1[%c10_957, %c7_958] : memref<16x9xf32, #tpu.memory_space<smem>>
      %1800 = vector.broadcast %1799 : f32 to vector<16x128xf32>
      %1801 = arith.mulf %1800, %143 : vector<16x128xf32>
      %1802 = arith.addf %1798, %1801 : vector<16x128xf32>
      %c10_959 = arith.constant 10 : index
      %c8_960 = arith.constant 8 : index
      %1803 = memref.load %arg1[%c10_959, %c8_960] : memref<16x9xf32, #tpu.memory_space<smem>>
      %1804 = vector.broadcast %1803 : f32 to vector<16x128xf32>
      %1805 = arith.mulf %1804, %146 : vector<16x128xf32>
      %1806 = arith.addf %1802, %1805 : vector<16x128xf32>
      %1807 = arith.maximumf %1701, %1736 : vector<16x128xf32>
      %1808 = arith.maximumf %1771, %1806 : vector<16x128xf32>
      %1809 = arith.maximumf %1807, %1808 : vector<16x128xf32>
      %c10_961 = arith.constant 10 : index
      %1810 = memref.load %arg2[%c10_961] : memref<16xf32, #tpu.memory_space<smem>>
      %1811 = vector.broadcast %1810 : f32 to vector<16x128xf32>
      %1812 = arith.addf %1809, %1811 : vector<16x128xf32>
      %cst_962 = arith.constant 0.000000e+00 : f32
      %1813 = vector.broadcast %cst_962 : f32 to vector<16x128xf32>
      %1814 = arith.maximumf %1812, %1813 : vector<16x128xf32>
      %1815 = arith.index_cast %arg8 : i32 to index
      %c160 = arith.constant 160 : index
      %c0_963 = arith.constant 0 : index
      %1816 = vector.load %arg7[%1815, %c160, %c0_963] : memref<13x256x128xf32, #tpu.memory_space<vmem>>, vector<1x16x128xf32>
      %1817 = vector.shape_cast %1816 : vector<1x16x128xf32> to vector<16x128xf32>
      %1818 = vector.shape_cast %1814 : vector<16x128xf32> to vector<1x16x128xf32>
      tpu.vector_store %arg7[%1815, %c160, %c0_963], %1818 {strides = array<i32>} : memref<13x256x128xf32, #tpu.memory_space<vmem>>, vector<1x16x128xf32>,
      %c11_964 = arith.constant 11 : index
      %c0_965 = arith.constant 0 : index
      %1819 = memref.load %arg1[%c11_964, %c0_965] : memref<16x9xf32, #tpu.memory_space<smem>>
      %1820 = vector.broadcast %1819 : f32 to vector<16x128xf32>
      %1821 = arith.mulf %1820, %95 : vector<16x128xf32>
      %c11_966 = arith.constant 11 : index
      %c1_967 = arith.constant 1 : index
      %1822 = memref.load %arg1[%c11_966, %c1_967] : memref<16x9xf32, #tpu.memory_space<smem>>
      %1823 = vector.broadcast %1822 : f32 to vector<16x128xf32>
      %1824 = arith.mulf %1823, %98 : vector<16x128xf32>
      %1825 = arith.addf %1821, %1824 : vector<16x128xf32>
      %c11_968 = arith.constant 11 : index
      %c2_969 = arith.constant 2 : index
      %1826 = memref.load %arg1[%c11_968, %c2_969] : memref<16x9xf32, #tpu.memory_space<smem>>
      %1827 = vector.broadcast %1826 : f32 to vector<16x128xf32>
      %1828 = arith.mulf %1827, %101 : vector<16x128xf32>
      %1829 = arith.addf %1825, %1828 : vector<16x128xf32>
      %c11_970 = arith.constant 11 : index
      %c3_971 = arith.constant 3 : index
      %1830 = memref.load %arg1[%c11_970, %c3_971] : memref<16x9xf32, #tpu.memory_space<smem>>
      %1831 = vector.broadcast %1830 : f32 to vector<16x128xf32>
      %1832 = arith.mulf %1831, %109 : vector<16x128xf32>
      %1833 = arith.addf %1829, %1832 : vector<16x128xf32>
      %c11_972 = arith.constant 11 : index
      %c4_973 = arith.constant 4 : index
      %1834 = memref.load %arg1[%c11_972, %c4_973] : memref<16x9xf32, #tpu.memory_space<smem>>
      %1835 = vector.broadcast %1834 : f32 to vector<16x128xf32>
      %1836 = arith.mulf %1835, %112 : vector<16x128xf32>
      %1837 = arith.addf %1833, %1836 : vector<16x128xf32>
      %c11_974 = arith.constant 11 : index
      %c5_975 = arith.constant 5 : index
      %1838 = memref.load %arg1[%c11_974, %c5_975] : memref<16x9xf32, #tpu.memory_space<smem>>
      %1839 = vector.broadcast %1838 : f32 to vector<16x128xf32>
      %1840 = arith.mulf %1839, %115 : vector<16x128xf32>
      %1841 = arith.addf %1837, %1840 : vector<16x128xf32>
      %c11_976 = arith.constant 11 : index
      %c6_977 = arith.constant 6 : index
      %1842 = memref.load %arg1[%c11_976, %c6_977] : memref<16x9xf32, #tpu.memory_space<smem>>
      %1843 = vector.broadcast %1842 : f32 to vector<16x128xf32>
      %1844 = arith.mulf %1843, %123 : vector<16x128xf32>
      %1845 = arith.addf %1841, %1844 : vector<16x128xf32>
      %c11_978 = arith.constant 11 : index
      %c7_979 = arith.constant 7 : index
      %1846 = memref.load %arg1[%c11_978, %c7_979] : memref<16x9xf32, #tpu.memory_space<smem>>
      %1847 = vector.broadcast %1846 : f32 to vector<16x128xf32>
      %1848 = arith.mulf %1847, %126 : vector<16x128xf32>
      %1849 = arith.addf %1845, %1848 : vector<16x128xf32>
      %c11_980 = arith.constant 11 : index
      %c8_981 = arith.constant 8 : index
      %1850 = memref.load %arg1[%c11_980, %c8_981] : memref<16x9xf32, #tpu.memory_space<smem>>
      %1851 = vector.broadcast %1850 : f32 to vector<16x128xf32>
      %1852 = arith.mulf %1851, %129 : vector<16x128xf32>
      %1853 = arith.addf %1849, %1852 : vector<16x128xf32>
      %c11_982 = arith.constant 11 : index
      %c0_983 = arith.constant 0 : index
      %1854 = memref.load %arg1[%c11_982, %c0_983] : memref<16x9xf32, #tpu.memory_space<smem>>
      %1855 = vector.broadcast %1854 : f32 to vector<16x128xf32>
      %1856 = arith.mulf %1855, %98 : vector<16x128xf32>
      %c11_984 = arith.constant 11 : index
      %c1_985 = arith.constant 1 : index
      %1857 = memref.load %arg1[%c11_984, %c1_985] : memref<16x9xf32, #tpu.memory_space<smem>>
      %1858 = vector.broadcast %1857 : f32 to vector<16x128xf32>
      %1859 = arith.mulf %1858, %101 : vector<16x128xf32>
      %1860 = arith.addf %1856, %1859 : vector<16x128xf32>
      %c11_986 = arith.constant 11 : index
      %c2_987 = arith.constant 2 : index
      %1861 = memref.load %arg1[%c11_986, %c2_987] : memref<16x9xf32, #tpu.memory_space<smem>>
      %1862 = vector.broadcast %1861 : f32 to vector<16x128xf32>
      %1863 = arith.mulf %1862, %104 : vector<16x128xf32>
      %1864 = arith.addf %1860, %1863 : vector<16x128xf32>
      %c11_988 = arith.constant 11 : index
      %c3_989 = arith.constant 3 : index
      %1865 = memref.load %arg1[%c11_988, %c3_989] : memref<16x9xf32, #tpu.memory_space<smem>>
      %1866 = vector.broadcast %1865 : f32 to vector<16x128xf32>
      %1867 = arith.mulf %1866, %112 : vector<16x128xf32>
      %1868 = arith.addf %1864, %1867 : vector<16x128xf32>
      %c11_990 = arith.constant 11 : index
      %c4_991 = arith.constant 4 : index
      %1869 = memref.load %arg1[%c11_990, %c4_991] : memref<16x9xf32, #tpu.memory_space<smem>>
      %1870 = vector.broadcast %1869 : f32 to vector<16x128xf32>
      %1871 = arith.mulf %1870, %115 : vector<16x128xf32>
      %1872 = arith.addf %1868, %1871 : vector<16x128xf32>
      %c11_992 = arith.constant 11 : index
      %c5_993 = arith.constant 5 : index
      %1873 = memref.load %arg1[%c11_992, %c5_993] : memref<16x9xf32, #tpu.memory_space<smem>>
      %1874 = vector.broadcast %1873 : f32 to vector<16x128xf32>
      %1875 = arith.mulf %1874, %118 : vector<16x128xf32>
      %1876 = arith.addf %1872, %1875 : vector<16x128xf32>
      %c11_994 = arith.constant 11 : index
      %c6_995 = arith.constant 6 : index
      %1877 = memref.load %arg1[%c11_994, %c6_995] : memref<16x9xf32, #tpu.memory_space<smem>>
      %1878 = vector.broadcast %1877 : f32 to vector<16x128xf32>
      %1879 = arith.mulf %1878, %126 : vector<16x128xf32>
      %1880 = arith.addf %1876, %1879 : vector<16x128xf32>
      %c11_996 = arith.constant 11 : index
      %c7_997 = arith.constant 7 : index
      %1881 = memref.load %arg1[%c11_996, %c7_997] : memref<16x9xf32, #tpu.memory_space<smem>>
      %1882 = vector.broadcast %1881 : f32 to vector<16x128xf32>
      %1883 = arith.mulf %1882, %129 : vector<16x128xf32>
      %1884 = arith.addf %1880, %1883 : vector<16x128xf32>
      %c11_998 = arith.constant 11 : index
      %c8_999 = arith.constant 8 : index
      %1885 = memref.load %arg1[%c11_998, %c8_999] : memref<16x9xf32, #tpu.memory_space<smem>>
      %1886 = vector.broadcast %1885 : f32 to vector<16x128xf32>
      %1887 = arith.mulf %1886, %132 : vector<16x128xf32>
      %1888 = arith.addf %1884, %1887 : vector<16x128xf32>
      %c11_1000 = arith.constant 11 : index
      %c0_1001 = arith.constant 0 : index
      %1889 = memref.load %arg1[%c11_1000, %c0_1001] : memref<16x9xf32, #tpu.memory_space<smem>>
      %1890 = vector.broadcast %1889 : f32 to vector<16x128xf32>
      %1891 = arith.mulf %1890, %109 : vector<16x128xf32>
      %c11_1002 = arith.constant 11 : index
      %c1_1003 = arith.constant 1 : index
      %1892 = memref.load %arg1[%c11_1002, %c1_1003] : memref<16x9xf32, #tpu.memory_space<smem>>
      %1893 = vector.broadcast %1892 : f32 to vector<16x128xf32>
      %1894 = arith.mulf %1893, %112 : vector<16x128xf32>
      %1895 = arith.addf %1891, %1894 : vector<16x128xf32>
      %c11_1004 = arith.constant 11 : index
      %c2_1005 = arith.constant 2 : index
      %1896 = memref.load %arg1[%c11_1004, %c2_1005] : memref<16x9xf32, #tpu.memory_space<smem>>
      %1897 = vector.broadcast %1896 : f32 to vector<16x128xf32>
      %1898 = arith.mulf %1897, %115 : vector<16x128xf32>
      %1899 = arith.addf %1895, %1898 : vector<16x128xf32>
      %c11_1006 = arith.constant 11 : index
      %c3_1007 = arith.constant 3 : index
      %1900 = memref.load %arg1[%c11_1006, %c3_1007] : memref<16x9xf32, #tpu.memory_space<smem>>
      %1901 = vector.broadcast %1900 : f32 to vector<16x128xf32>
      %1902 = arith.mulf %1901, %123 : vector<16x128xf32>
      %1903 = arith.addf %1899, %1902 : vector<16x128xf32>
      %c11_1008 = arith.constant 11 : index
      %c4_1009 = arith.constant 4 : index
      %1904 = memref.load %arg1[%c11_1008, %c4_1009] : memref<16x9xf32, #tpu.memory_space<smem>>
      %1905 = vector.broadcast %1904 : f32 to vector<16x128xf32>
      %1906 = arith.mulf %1905, %126 : vector<16x128xf32>
      %1907 = arith.addf %1903, %1906 : vector<16x128xf32>
      %c11_1010 = arith.constant 11 : index
      %c5_1011 = arith.constant 5 : index
      %1908 = memref.load %arg1[%c11_1010, %c5_1011] : memref<16x9xf32, #tpu.memory_space<smem>>
      %1909 = vector.broadcast %1908 : f32 to vector<16x128xf32>
      %1910 = arith.mulf %1909, %129 : vector<16x128xf32>
      %1911 = arith.addf %1907, %1910 : vector<16x128xf32>
      %c11_1012 = arith.constant 11 : index
      %c6_1013 = arith.constant 6 : index
      %1912 = memref.load %arg1[%c11_1012, %c6_1013] : memref<16x9xf32, #tpu.memory_space<smem>>
      %1913 = vector.broadcast %1912 : f32 to vector<16x128xf32>
      %1914 = arith.mulf %1913, %137 : vector<16x128xf32>
      %1915 = arith.addf %1911, %1914 : vector<16x128xf32>
      %c11_1014 = arith.constant 11 : index
      %c7_1015 = arith.constant 7 : index
      %1916 = memref.load %arg1[%c11_1014, %c7_1015] : memref<16x9xf32, #tpu.memory_space<smem>>
      %1917 = vector.broadcast %1916 : f32 to vector<16x128xf32>
      %1918 = arith.mulf %1917, %140 : vector<16x128xf32>
      %1919 = arith.addf %1915, %1918 : vector<16x128xf32>
      %c11_1016 = arith.constant 11 : index
      %c8_1017 = arith.constant 8 : index
      %1920 = memref.load %arg1[%c11_1016, %c8_1017] : memref<16x9xf32, #tpu.memory_space<smem>>
      %1921 = vector.broadcast %1920 : f32 to vector<16x128xf32>
      %1922 = arith.mulf %1921, %143 : vector<16x128xf32>
      %1923 = arith.addf %1919, %1922 : vector<16x128xf32>
      %c11_1018 = arith.constant 11 : index
      %c0_1019 = arith.constant 0 : index
      %1924 = memref.load %arg1[%c11_1018, %c0_1019] : memref<16x9xf32, #tpu.memory_space<smem>>
      %1925 = vector.broadcast %1924 : f32 to vector<16x128xf32>
      %1926 = arith.mulf %1925, %112 : vector<16x128xf32>
      %c11_1020 = arith.constant 11 : index
      %c1_1021 = arith.constant 1 : index
      %1927 = memref.load %arg1[%c11_1020, %c1_1021] : memref<16x9xf32, #tpu.memory_space<smem>>
      %1928 = vector.broadcast %1927 : f32 to vector<16x128xf32>
      %1929 = arith.mulf %1928, %115 : vector<16x128xf32>
      %1930 = arith.addf %1926, %1929 : vector<16x128xf32>
      %c11_1022 = arith.constant 11 : index
      %c2_1023 = arith.constant 2 : index
      %1931 = memref.load %arg1[%c11_1022, %c2_1023] : memref<16x9xf32, #tpu.memory_space<smem>>
      %1932 = vector.broadcast %1931 : f32 to vector<16x128xf32>
      %1933 = arith.mulf %1932, %118 : vector<16x128xf32>
      %1934 = arith.addf %1930, %1933 : vector<16x128xf32>
      %c11_1024 = arith.constant 11 : index
      %c3_1025 = arith.constant 3 : index
      %1935 = memref.load %arg1[%c11_1024, %c3_1025] : memref<16x9xf32, #tpu.memory_space<smem>>
      %1936 = vector.broadcast %1935 : f32 to vector<16x128xf32>
      %1937 = arith.mulf %1936, %126 : vector<16x128xf32>
      %1938 = arith.addf %1934, %1937 : vector<16x128xf32>
      %c11_1026 = arith.constant 11 : index
      %c4_1027 = arith.constant 4 : index
      %1939 = memref.load %arg1[%c11_1026, %c4_1027] : memref<16x9xf32, #tpu.memory_space<smem>>
      %1940 = vector.broadcast %1939 : f32 to vector<16x128xf32>
      %1941 = arith.mulf %1940, %129 : vector<16x128xf32>
      %1942 = arith.addf %1938, %1941 : vector<16x128xf32>
      %c11_1028 = arith.constant 11 : index
      %c5_1029 = arith.constant 5 : index
      %1943 = memref.load %arg1[%c11_1028, %c5_1029] : memref<16x9xf32, #tpu.memory_space<smem>>
      %1944 = vector.broadcast %1943 : f32 to vector<16x128xf32>
      %1945 = arith.mulf %1944, %132 : vector<16x128xf32>
      %1946 = arith.addf %1942, %1945 : vector<16x128xf32>
      %c11_1030 = arith.constant 11 : index
      %c6_1031 = arith.constant 6 : index
      %1947 = memref.load %arg1[%c11_1030, %c6_1031] : memref<16x9xf32, #tpu.memory_space<smem>>
      %1948 = vector.broadcast %1947 : f32 to vector<16x128xf32>
      %1949 = arith.mulf %1948, %140 : vector<16x128xf32>
      %1950 = arith.addf %1946, %1949 : vector<16x128xf32>
      %c11_1032 = arith.constant 11 : index
      %c7_1033 = arith.constant 7 : index
      %1951 = memref.load %arg1[%c11_1032, %c7_1033] : memref<16x9xf32, #tpu.memory_space<smem>>
      %1952 = vector.broadcast %1951 : f32 to vector<16x128xf32>
      %1953 = arith.mulf %1952, %143 : vector<16x128xf32>
      %1954 = arith.addf %1950, %1953 : vector<16x128xf32>
      %c11_1034 = arith.constant 11 : index
      %c8_1035 = arith.constant 8 : index
      %1955 = memref.load %arg1[%c11_1034, %c8_1035] : memref<16x9xf32, #tpu.memory_space<smem>>
      %1956 = vector.broadcast %1955 : f32 to vector<16x128xf32>
      %1957 = arith.mulf %1956, %146 : vector<16x128xf32>
      %1958 = arith.addf %1954, %1957 : vector<16x128xf32>
      %1959 = arith.maximumf %1853, %1888 : vector<16x128xf32>
      %1960 = arith.maximumf %1923, %1958 : vector<16x128xf32>
      %1961 = arith.maximumf %1959, %1960 : vector<16x128xf32>
      %c11_1036 = arith.constant 11 : index
      %1962 = memref.load %arg2[%c11_1036] : memref<16xf32, #tpu.memory_space<smem>>
      %1963 = vector.broadcast %1962 : f32 to vector<16x128xf32>
      %1964 = arith.addf %1961, %1963 : vector<16x128xf32>
      %cst_1037 = arith.constant 0.000000e+00 : f32
      %1965 = vector.broadcast %cst_1037 : f32 to vector<16x128xf32>
      %1966 = arith.maximumf %1964, %1965 : vector<16x128xf32>
      %1967 = arith.index_cast %arg8 : i32 to index
      %c176 = arith.constant 176 : index
      %c0_1038 = arith.constant 0 : index
      %1968 = vector.load %arg7[%1967, %c176, %c0_1038] : memref<13x256x128xf32, #tpu.memory_space<vmem>>, vector<1x16x128xf32>
      %1969 = vector.shape_cast %1968 : vector<1x16x128xf32> to vector<16x128xf32>
      %1970 = vector.shape_cast %1966 : vector<16x128xf32> to vector<1x16x128xf32>
      tpu.vector_store %arg7[%1967, %c176, %c0_1038], %1970 {strides = array<i32>} : memref<13x256x128xf32, #tpu.memory_space<vmem>>, vector<1x16x128xf32>,
      %c12_1039 = arith.constant 12 : index
      %c0_1040 = arith.constant 0 : index
      %1971 = memref.load %arg1[%c12_1039, %c0_1040] : memref<16x9xf32, #tpu.memory_space<smem>>
      %1972 = vector.broadcast %1971 : f32 to vector<16x128xf32>
      %1973 = arith.mulf %1972, %95 : vector<16x128xf32>
      %c12_1041 = arith.constant 12 : index
      %c1_1042 = arith.constant 1 : index
      %1974 = memref.load %arg1[%c12_1041, %c1_1042] : memref<16x9xf32, #tpu.memory_space<smem>>
      %1975 = vector.broadcast %1974 : f32 to vector<16x128xf32>
      %1976 = arith.mulf %1975, %98 : vector<16x128xf32>
      %1977 = arith.addf %1973, %1976 : vector<16x128xf32>
      %c12_1043 = arith.constant 12 : index
      %c2_1044 = arith.constant 2 : index
      %1978 = memref.load %arg1[%c12_1043, %c2_1044] : memref<16x9xf32, #tpu.memory_space<smem>>
      %1979 = vector.broadcast %1978 : f32 to vector<16x128xf32>
      %1980 = arith.mulf %1979, %101 : vector<16x128xf32>
      %1981 = arith.addf %1977, %1980 : vector<16x128xf32>
      %c12_1045 = arith.constant 12 : index
      %c3_1046 = arith.constant 3 : index
      %1982 = memref.load %arg1[%c12_1045, %c3_1046] : memref<16x9xf32, #tpu.memory_space<smem>>
      %1983 = vector.broadcast %1982 : f32 to vector<16x128xf32>
      %1984 = arith.mulf %1983, %109 : vector<16x128xf32>
      %1985 = arith.addf %1981, %1984 : vector<16x128xf32>
      %c12_1047 = arith.constant 12 : index
      %c4_1048 = arith.constant 4 : index
      %1986 = memref.load %arg1[%c12_1047, %c4_1048] : memref<16x9xf32, #tpu.memory_space<smem>>
      %1987 = vector.broadcast %1986 : f32 to vector<16x128xf32>
      %1988 = arith.mulf %1987, %112 : vector<16x128xf32>
      %1989 = arith.addf %1985, %1988 : vector<16x128xf32>
      %c12_1049 = arith.constant 12 : index
      %c5_1050 = arith.constant 5 : index
      %1990 = memref.load %arg1[%c12_1049, %c5_1050] : memref<16x9xf32, #tpu.memory_space<smem>>
      %1991 = vector.broadcast %1990 : f32 to vector<16x128xf32>
      %1992 = arith.mulf %1991, %115 : vector<16x128xf32>
      %1993 = arith.addf %1989, %1992 : vector<16x128xf32>
      %c12_1051 = arith.constant 12 : index
      %c6_1052 = arith.constant 6 : index
      %1994 = memref.load %arg1[%c12_1051, %c6_1052] : memref<16x9xf32, #tpu.memory_space<smem>>
      %1995 = vector.broadcast %1994 : f32 to vector<16x128xf32>
      %1996 = arith.mulf %1995, %123 : vector<16x128xf32>
      %1997 = arith.addf %1993, %1996 : vector<16x128xf32>
      %c12_1053 = arith.constant 12 : index
      %c7_1054 = arith.constant 7 : index
      %1998 = memref.load %arg1[%c12_1053, %c7_1054] : memref<16x9xf32, #tpu.memory_space<smem>>
      %1999 = vector.broadcast %1998 : f32 to vector<16x128xf32>
      %2000 = arith.mulf %1999, %126 : vector<16x128xf32>
      %2001 = arith.addf %1997, %2000 : vector<16x128xf32>
      %c12_1055 = arith.constant 12 : index
      %c8_1056 = arith.constant 8 : index
      %2002 = memref.load %arg1[%c12_1055, %c8_1056] : memref<16x9xf32, #tpu.memory_space<smem>>
      %2003 = vector.broadcast %2002 : f32 to vector<16x128xf32>
      %2004 = arith.mulf %2003, %129 : vector<16x128xf32>
      %2005 = arith.addf %2001, %2004 : vector<16x128xf32>
      %c12_1057 = arith.constant 12 : index
      %c0_1058 = arith.constant 0 : index
      %2006 = memref.load %arg1[%c12_1057, %c0_1058] : memref<16x9xf32, #tpu.memory_space<smem>>
      %2007 = vector.broadcast %2006 : f32 to vector<16x128xf32>
      %2008 = arith.mulf %2007, %98 : vector<16x128xf32>
      %c12_1059 = arith.constant 12 : index
      %c1_1060 = arith.constant 1 : index
      %2009 = memref.load %arg1[%c12_1059, %c1_1060] : memref<16x9xf32, #tpu.memory_space<smem>>
      %2010 = vector.broadcast %2009 : f32 to vector<16x128xf32>
      %2011 = arith.mulf %2010, %101 : vector<16x128xf32>
      %2012 = arith.addf %2008, %2011 : vector<16x128xf32>
      %c12_1061 = arith.constant 12 : index
      %c2_1062 = arith.constant 2 : index
      %2013 = memref.load %arg1[%c12_1061, %c2_1062] : memref<16x9xf32, #tpu.memory_space<smem>>
      %2014 = vector.broadcast %2013 : f32 to vector<16x128xf32>
      %2015 = arith.mulf %2014, %104 : vector<16x128xf32>
      %2016 = arith.addf %2012, %2015 : vector<16x128xf32>
      %c12_1063 = arith.constant 12 : index
      %c3_1064 = arith.constant 3 : index
      %2017 = memref.load %arg1[%c12_1063, %c3_1064] : memref<16x9xf32, #tpu.memory_space<smem>>
      %2018 = vector.broadcast %2017 : f32 to vector<16x128xf32>
      %2019 = arith.mulf %2018, %112 : vector<16x128xf32>
      %2020 = arith.addf %2016, %2019 : vector<16x128xf32>
      %c12_1065 = arith.constant 12 : index
      %c4_1066 = arith.constant 4 : index
      %2021 = memref.load %arg1[%c12_1065, %c4_1066] : memref<16x9xf32, #tpu.memory_space<smem>>
      %2022 = vector.broadcast %2021 : f32 to vector<16x128xf32>
      %2023 = arith.mulf %2022, %115 : vector<16x128xf32>
      %2024 = arith.addf %2020, %2023 : vector<16x128xf32>
      %c12_1067 = arith.constant 12 : index
      %c5_1068 = arith.constant 5 : index
      %2025 = memref.load %arg1[%c12_1067, %c5_1068] : memref<16x9xf32, #tpu.memory_space<smem>>
      %2026 = vector.broadcast %2025 : f32 to vector<16x128xf32>
      %2027 = arith.mulf %2026, %118 : vector<16x128xf32>
      %2028 = arith.addf %2024, %2027 : vector<16x128xf32>
      %c12_1069 = arith.constant 12 : index
      %c6_1070 = arith.constant 6 : index
      %2029 = memref.load %arg1[%c12_1069, %c6_1070] : memref<16x9xf32, #tpu.memory_space<smem>>
      %2030 = vector.broadcast %2029 : f32 to vector<16x128xf32>
      %2031 = arith.mulf %2030, %126 : vector<16x128xf32>
      %2032 = arith.addf %2028, %2031 : vector<16x128xf32>
      %c12_1071 = arith.constant 12 : index
      %c7_1072 = arith.constant 7 : index
      %2033 = memref.load %arg1[%c12_1071, %c7_1072] : memref<16x9xf32, #tpu.memory_space<smem>>
      %2034 = vector.broadcast %2033 : f32 to vector<16x128xf32>
      %2035 = arith.mulf %2034, %129 : vector<16x128xf32>
      %2036 = arith.addf %2032, %2035 : vector<16x128xf32>
      %c12_1073 = arith.constant 12 : index
      %c8_1074 = arith.constant 8 : index
      %2037 = memref.load %arg1[%c12_1073, %c8_1074] : memref<16x9xf32, #tpu.memory_space<smem>>
      %2038 = vector.broadcast %2037 : f32 to vector<16x128xf32>
      %2039 = arith.mulf %2038, %132 : vector<16x128xf32>
      %2040 = arith.addf %2036, %2039 : vector<16x128xf32>
      %c12_1075 = arith.constant 12 : index
      %c0_1076 = arith.constant 0 : index
      %2041 = memref.load %arg1[%c12_1075, %c0_1076] : memref<16x9xf32, #tpu.memory_space<smem>>
      %2042 = vector.broadcast %2041 : f32 to vector<16x128xf32>
      %2043 = arith.mulf %2042, %109 : vector<16x128xf32>
      %c12_1077 = arith.constant 12 : index
      %c1_1078 = arith.constant 1 : index
      %2044 = memref.load %arg1[%c12_1077, %c1_1078] : memref<16x9xf32, #tpu.memory_space<smem>>
      %2045 = vector.broadcast %2044 : f32 to vector<16x128xf32>
      %2046 = arith.mulf %2045, %112 : vector<16x128xf32>
      %2047 = arith.addf %2043, %2046 : vector<16x128xf32>
      %c12_1079 = arith.constant 12 : index
      %c2_1080 = arith.constant 2 : index
      %2048 = memref.load %arg1[%c12_1079, %c2_1080] : memref<16x9xf32, #tpu.memory_space<smem>>
      %2049 = vector.broadcast %2048 : f32 to vector<16x128xf32>
      %2050 = arith.mulf %2049, %115 : vector<16x128xf32>
      %2051 = arith.addf %2047, %2050 : vector<16x128xf32>
      %c12_1081 = arith.constant 12 : index
      %c3_1082 = arith.constant 3 : index
      %2052 = memref.load %arg1[%c12_1081, %c3_1082] : memref<16x9xf32, #tpu.memory_space<smem>>
      %2053 = vector.broadcast %2052 : f32 to vector<16x128xf32>
      %2054 = arith.mulf %2053, %123 : vector<16x128xf32>
      %2055 = arith.addf %2051, %2054 : vector<16x128xf32>
      %c12_1083 = arith.constant 12 : index
      %c4_1084 = arith.constant 4 : index
      %2056 = memref.load %arg1[%c12_1083, %c4_1084] : memref<16x9xf32, #tpu.memory_space<smem>>
      %2057 = vector.broadcast %2056 : f32 to vector<16x128xf32>
      %2058 = arith.mulf %2057, %126 : vector<16x128xf32>
      %2059 = arith.addf %2055, %2058 : vector<16x128xf32>
      %c12_1085 = arith.constant 12 : index
      %c5_1086 = arith.constant 5 : index
      %2060 = memref.load %arg1[%c12_1085, %c5_1086] : memref<16x9xf32, #tpu.memory_space<smem>>
      %2061 = vector.broadcast %2060 : f32 to vector<16x128xf32>
      %2062 = arith.mulf %2061, %129 : vector<16x128xf32>
      %2063 = arith.addf %2059, %2062 : vector<16x128xf32>
      %c12_1087 = arith.constant 12 : index
      %c6_1088 = arith.constant 6 : index
      %2064 = memref.load %arg1[%c12_1087, %c6_1088] : memref<16x9xf32, #tpu.memory_space<smem>>
      %2065 = vector.broadcast %2064 : f32 to vector<16x128xf32>
      %2066 = arith.mulf %2065, %137 : vector<16x128xf32>
      %2067 = arith.addf %2063, %2066 : vector<16x128xf32>
      %c12_1089 = arith.constant 12 : index
      %c7_1090 = arith.constant 7 : index
      %2068 = memref.load %arg1[%c12_1089, %c7_1090] : memref<16x9xf32, #tpu.memory_space<smem>>
      %2069 = vector.broadcast %2068 : f32 to vector<16x128xf32>
      %2070 = arith.mulf %2069, %140 : vector<16x128xf32>
      %2071 = arith.addf %2067, %2070 : vector<16x128xf32>
      %c12_1091 = arith.constant 12 : index
      %c8_1092 = arith.constant 8 : index
      %2072 = memref.load %arg1[%c12_1091, %c8_1092] : memref<16x9xf32, #tpu.memory_space<smem>>
      %2073 = vector.broadcast %2072 : f32 to vector<16x128xf32>
      %2074 = arith.mulf %2073, %143 : vector<16x128xf32>
      %2075 = arith.addf %2071, %2074 : vector<16x128xf32>
      %c12_1093 = arith.constant 12 : index
      %c0_1094 = arith.constant 0 : index
      %2076 = memref.load %arg1[%c12_1093, %c0_1094] : memref<16x9xf32, #tpu.memory_space<smem>>
      %2077 = vector.broadcast %2076 : f32 to vector<16x128xf32>
      %2078 = arith.mulf %2077, %112 : vector<16x128xf32>
      %c12_1095 = arith.constant 12 : index
      %c1_1096 = arith.constant 1 : index
      %2079 = memref.load %arg1[%c12_1095, %c1_1096] : memref<16x9xf32, #tpu.memory_space<smem>>
      %2080 = vector.broadcast %2079 : f32 to vector<16x128xf32>
      %2081 = arith.mulf %2080, %115 : vector<16x128xf32>
      %2082 = arith.addf %2078, %2081 : vector<16x128xf32>
      %c12_1097 = arith.constant 12 : index
      %c2_1098 = arith.constant 2 : index
      %2083 = memref.load %arg1[%c12_1097, %c2_1098] : memref<16x9xf32, #tpu.memory_space<smem>>
      %2084 = vector.broadcast %2083 : f32 to vector<16x128xf32>
      %2085 = arith.mulf %2084, %118 : vector<16x128xf32>
      %2086 = arith.addf %2082, %2085 : vector<16x128xf32>
      %c12_1099 = arith.constant 12 : index
      %c3_1100 = arith.constant 3 : index
      %2087 = memref.load %arg1[%c12_1099, %c3_1100] : memref<16x9xf32, #tpu.memory_space<smem>>
      %2088 = vector.broadcast %2087 : f32 to vector<16x128xf32>
      %2089 = arith.mulf %2088, %126 : vector<16x128xf32>
      %2090 = arith.addf %2086, %2089 : vector<16x128xf32>
      %c12_1101 = arith.constant 12 : index
      %c4_1102 = arith.constant 4 : index
      %2091 = memref.load %arg1[%c12_1101, %c4_1102] : memref<16x9xf32, #tpu.memory_space<smem>>
      %2092 = vector.broadcast %2091 : f32 to vector<16x128xf32>
      %2093 = arith.mulf %2092, %129 : vector<16x128xf32>
      %2094 = arith.addf %2090, %2093 : vector<16x128xf32>
      %c12_1103 = arith.constant 12 : index
      %c5_1104 = arith.constant 5 : index
      %2095 = memref.load %arg1[%c12_1103, %c5_1104] : memref<16x9xf32, #tpu.memory_space<smem>>
      %2096 = vector.broadcast %2095 : f32 to vector<16x128xf32>
      %2097 = arith.mulf %2096, %132 : vector<16x128xf32>
      %2098 = arith.addf %2094, %2097 : vector<16x128xf32>
      %c12_1105 = arith.constant 12 : index
      %c6_1106 = arith.constant 6 : index
      %2099 = memref.load %arg1[%c12_1105, %c6_1106] : memref<16x9xf32, #tpu.memory_space<smem>>
      %2100 = vector.broadcast %2099 : f32 to vector<16x128xf32>
      %2101 = arith.mulf %2100, %140 : vector<16x128xf32>
      %2102 = arith.addf %2098, %2101 : vector<16x128xf32>
      %c12_1107 = arith.constant 12 : index
      %c7_1108 = arith.constant 7 : index
      %2103 = memref.load %arg1[%c12_1107, %c7_1108] : memref<16x9xf32, #tpu.memory_space<smem>>
      %2104 = vector.broadcast %2103 : f32 to vector<16x128xf32>
      %2105 = arith.mulf %2104, %143 : vector<16x128xf32>
      %2106 = arith.addf %2102, %2105 : vector<16x128xf32>
      %c12_1109 = arith.constant 12 : index
      %c8_1110 = arith.constant 8 : index
      %2107 = memref.load %arg1[%c12_1109, %c8_1110] : memref<16x9xf32, #tpu.memory_space<smem>>
      %2108 = vector.broadcast %2107 : f32 to vector<16x128xf32>
      %2109 = arith.mulf %2108, %146 : vector<16x128xf32>
      %2110 = arith.addf %2106, %2109 : vector<16x128xf32>
      %2111 = arith.maximumf %2005, %2040 : vector<16x128xf32>
      %2112 = arith.maximumf %2075, %2110 : vector<16x128xf32>
      %2113 = arith.maximumf %2111, %2112 : vector<16x128xf32>
      %c12_1111 = arith.constant 12 : index
      %2114 = memref.load %arg2[%c12_1111] : memref<16xf32, #tpu.memory_space<smem>>
      %2115 = vector.broadcast %2114 : f32 to vector<16x128xf32>
      %2116 = arith.addf %2113, %2115 : vector<16x128xf32>
      %cst_1112 = arith.constant 0.000000e+00 : f32
      %2117 = vector.broadcast %cst_1112 : f32 to vector<16x128xf32>
      %2118 = arith.maximumf %2116, %2117 : vector<16x128xf32>
      %2119 = arith.index_cast %arg8 : i32 to index
      %c192 = arith.constant 192 : index
      %c0_1113 = arith.constant 0 : index
      %2120 = vector.load %arg7[%2119, %c192, %c0_1113] : memref<13x256x128xf32, #tpu.memory_space<vmem>>, vector<1x16x128xf32>
      %2121 = vector.shape_cast %2120 : vector<1x16x128xf32> to vector<16x128xf32>
      %2122 = vector.shape_cast %2118 : vector<16x128xf32> to vector<1x16x128xf32>
      tpu.vector_store %arg7[%2119, %c192, %c0_1113], %2122 {strides = array<i32>} : memref<13x256x128xf32, #tpu.memory_space<vmem>>, vector<1x16x128xf32>,
      %c13 = arith.constant 13 : index
      %c0_1114 = arith.constant 0 : index
      %2123 = memref.load %arg1[%c13, %c0_1114] : memref<16x9xf32, #tpu.memory_space<smem>>
      %2124 = vector.broadcast %2123 : f32 to vector<16x128xf32>
      %2125 = arith.mulf %2124, %95 : vector<16x128xf32>
      %c13_1115 = arith.constant 13 : index
      %c1_1116 = arith.constant 1 : index
      %2126 = memref.load %arg1[%c13_1115, %c1_1116] : memref<16x9xf32, #tpu.memory_space<smem>>
      %2127 = vector.broadcast %2126 : f32 to vector<16x128xf32>
      %2128 = arith.mulf %2127, %98 : vector<16x128xf32>
      %2129 = arith.addf %2125, %2128 : vector<16x128xf32>
      %c13_1117 = arith.constant 13 : index
      %c2_1118 = arith.constant 2 : index
      %2130 = memref.load %arg1[%c13_1117, %c2_1118] : memref<16x9xf32, #tpu.memory_space<smem>>
      %2131 = vector.broadcast %2130 : f32 to vector<16x128xf32>
      %2132 = arith.mulf %2131, %101 : vector<16x128xf32>
      %2133 = arith.addf %2129, %2132 : vector<16x128xf32>
      %c13_1119 = arith.constant 13 : index
      %c3_1120 = arith.constant 3 : index
      %2134 = memref.load %arg1[%c13_1119, %c3_1120] : memref<16x9xf32, #tpu.memory_space<smem>>
      %2135 = vector.broadcast %2134 : f32 to vector<16x128xf32>
      %2136 = arith.mulf %2135, %109 : vector<16x128xf32>
      %2137 = arith.addf %2133, %2136 : vector<16x128xf32>
      %c13_1121 = arith.constant 13 : index
      %c4_1122 = arith.constant 4 : index
      %2138 = memref.load %arg1[%c13_1121, %c4_1122] : memref<16x9xf32, #tpu.memory_space<smem>>
      %2139 = vector.broadcast %2138 : f32 to vector<16x128xf32>
      %2140 = arith.mulf %2139, %112 : vector<16x128xf32>
      %2141 = arith.addf %2137, %2140 : vector<16x128xf32>
      %c13_1123 = arith.constant 13 : index
      %c5_1124 = arith.constant 5 : index
      %2142 = memref.load %arg1[%c13_1123, %c5_1124] : memref<16x9xf32, #tpu.memory_space<smem>>
      %2143 = vector.broadcast %2142 : f32 to vector<16x128xf32>
      %2144 = arith.mulf %2143, %115 : vector<16x128xf32>
      %2145 = arith.addf %2141, %2144 : vector<16x128xf32>
      %c13_1125 = arith.constant 13 : index
      %c6_1126 = arith.constant 6 : index
      %2146 = memref.load %arg1[%c13_1125, %c6_1126] : memref<16x9xf32, #tpu.memory_space<smem>>
      %2147 = vector.broadcast %2146 : f32 to vector<16x128xf32>
      %2148 = arith.mulf %2147, %123 : vector<16x128xf32>
      %2149 = arith.addf %2145, %2148 : vector<16x128xf32>
      %c13_1127 = arith.constant 13 : index
      %c7_1128 = arith.constant 7 : index
      %2150 = memref.load %arg1[%c13_1127, %c7_1128] : memref<16x9xf32, #tpu.memory_space<smem>>
      %2151 = vector.broadcast %2150 : f32 to vector<16x128xf32>
      %2152 = arith.mulf %2151, %126 : vector<16x128xf32>
      %2153 = arith.addf %2149, %2152 : vector<16x128xf32>
      %c13_1129 = arith.constant 13 : index
      %c8_1130 = arith.constant 8 : index
      %2154 = memref.load %arg1[%c13_1129, %c8_1130] : memref<16x9xf32, #tpu.memory_space<smem>>
      %2155 = vector.broadcast %2154 : f32 to vector<16x128xf32>
      %2156 = arith.mulf %2155, %129 : vector<16x128xf32>
      %2157 = arith.addf %2153, %2156 : vector<16x128xf32>
      %c13_1131 = arith.constant 13 : index
      %c0_1132 = arith.constant 0 : index
      %2158 = memref.load %arg1[%c13_1131, %c0_1132] : memref<16x9xf32, #tpu.memory_space<smem>>
      %2159 = vector.broadcast %2158 : f32 to vector<16x128xf32>
      %2160 = arith.mulf %2159, %98 : vector<16x128xf32>
      %c13_1133 = arith.constant 13 : index
      %c1_1134 = arith.constant 1 : index
      %2161 = memref.load %arg1[%c13_1133, %c1_1134] : memref<16x9xf32, #tpu.memory_space<smem>>
      %2162 = vector.broadcast %2161 : f32 to vector<16x128xf32>
      %2163 = arith.mulf %2162, %101 : vector<16x128xf32>
      %2164 = arith.addf %2160, %2163 : vector<16x128xf32>
      %c13_1135 = arith.constant 13 : index
      %c2_1136 = arith.constant 2 : index
      %2165 = memref.load %arg1[%c13_1135, %c2_1136] : memref<16x9xf32, #tpu.memory_space<smem>>
      %2166 = vector.broadcast %2165 : f32 to vector<16x128xf32>
      %2167 = arith.mulf %2166, %104 : vector<16x128xf32>
      %2168 = arith.addf %2164, %2167 : vector<16x128xf32>
      %c13_1137 = arith.constant 13 : index
      %c3_1138 = arith.constant 3 : index
      %2169 = memref.load %arg1[%c13_1137, %c3_1138] : memref<16x9xf32, #tpu.memory_space<smem>>
      %2170 = vector.broadcast %2169 : f32 to vector<16x128xf32>
      %2171 = arith.mulf %2170, %112 : vector<16x128xf32>
      %2172 = arith.addf %2168, %2171 : vector<16x128xf32>
      %c13_1139 = arith.constant 13 : index
      %c4_1140 = arith.constant 4 : index
      %2173 = memref.load %arg1[%c13_1139, %c4_1140] : memref<16x9xf32, #tpu.memory_space<smem>>
      %2174 = vector.broadcast %2173 : f32 to vector<16x128xf32>
      %2175 = arith.mulf %2174, %115 : vector<16x128xf32>
      %2176 = arith.addf %2172, %2175 : vector<16x128xf32>
      %c13_1141 = arith.constant 13 : index
      %c5_1142 = arith.constant 5 : index
      %2177 = memref.load %arg1[%c13_1141, %c5_1142] : memref<16x9xf32, #tpu.memory_space<smem>>
      %2178 = vector.broadcast %2177 : f32 to vector<16x128xf32>
      %2179 = arith.mulf %2178, %118 : vector<16x128xf32>
      %2180 = arith.addf %2176, %2179 : vector<16x128xf32>
      %c13_1143 = arith.constant 13 : index
      %c6_1144 = arith.constant 6 : index
      %2181 = memref.load %arg1[%c13_1143, %c6_1144] : memref<16x9xf32, #tpu.memory_space<smem>>
      %2182 = vector.broadcast %2181 : f32 to vector<16x128xf32>
      %2183 = arith.mulf %2182, %126 : vector<16x128xf32>
      %2184 = arith.addf %2180, %2183 : vector<16x128xf32>
      %c13_1145 = arith.constant 13 : index
      %c7_1146 = arith.constant 7 : index
      %2185 = memref.load %arg1[%c13_1145, %c7_1146] : memref<16x9xf32, #tpu.memory_space<smem>>
      %2186 = vector.broadcast %2185 : f32 to vector<16x128xf32>
      %2187 = arith.mulf %2186, %129 : vector<16x128xf32>
      %2188 = arith.addf %2184, %2187 : vector<16x128xf32>
      %c13_1147 = arith.constant 13 : index
      %c8_1148 = arith.constant 8 : index
      %2189 = memref.load %arg1[%c13_1147, %c8_1148] : memref<16x9xf32, #tpu.memory_space<smem>>
      %2190 = vector.broadcast %2189 : f32 to vector<16x128xf32>
      %2191 = arith.mulf %2190, %132 : vector<16x128xf32>
      %2192 = arith.addf %2188, %2191 : vector<16x128xf32>
      %c13_1149 = arith.constant 13 : index
      %c0_1150 = arith.constant 0 : index
      %2193 = memref.load %arg1[%c13_1149, %c0_1150] : memref<16x9xf32, #tpu.memory_space<smem>>
      %2194 = vector.broadcast %2193 : f32 to vector<16x128xf32>
      %2195 = arith.mulf %2194, %109 : vector<16x128xf32>
      %c13_1151 = arith.constant 13 : index
      %c1_1152 = arith.constant 1 : index
      %2196 = memref.load %arg1[%c13_1151, %c1_1152] : memref<16x9xf32, #tpu.memory_space<smem>>
      %2197 = vector.broadcast %2196 : f32 to vector<16x128xf32>
      %2198 = arith.mulf %2197, %112 : vector<16x128xf32>
      %2199 = arith.addf %2195, %2198 : vector<16x128xf32>
      %c13_1153 = arith.constant 13 : index
      %c2_1154 = arith.constant 2 : index
      %2200 = memref.load %arg1[%c13_1153, %c2_1154] : memref<16x9xf32, #tpu.memory_space<smem>>
      %2201 = vector.broadcast %2200 : f32 to vector<16x128xf32>
      %2202 = arith.mulf %2201, %115 : vector<16x128xf32>
      %2203 = arith.addf %2199, %2202 : vector<16x128xf32>
      %c13_1155 = arith.constant 13 : index
      %c3_1156 = arith.constant 3 : index
      %2204 = memref.load %arg1[%c13_1155, %c3_1156] : memref<16x9xf32, #tpu.memory_space<smem>>
      %2205 = vector.broadcast %2204 : f32 to vector<16x128xf32>
      %2206 = arith.mulf %2205, %123 : vector<16x128xf32>
      %2207 = arith.addf %2203, %2206 : vector<16x128xf32>
      %c13_1157 = arith.constant 13 : index
      %c4_1158 = arith.constant 4 : index
      %2208 = memref.load %arg1[%c13_1157, %c4_1158] : memref<16x9xf32, #tpu.memory_space<smem>>
      %2209 = vector.broadcast %2208 : f32 to vector<16x128xf32>
      %2210 = arith.mulf %2209, %126 : vector<16x128xf32>
      %2211 = arith.addf %2207, %2210 : vector<16x128xf32>
      %c13_1159 = arith.constant 13 : index
      %c5_1160 = arith.constant 5 : index
      %2212 = memref.load %arg1[%c13_1159, %c5_1160] : memref<16x9xf32, #tpu.memory_space<smem>>
      %2213 = vector.broadcast %2212 : f32 to vector<16x128xf32>
      %2214 = arith.mulf %2213, %129 : vector<16x128xf32>
      %2215 = arith.addf %2211, %2214 : vector<16x128xf32>
      %c13_1161 = arith.constant 13 : index
      %c6_1162 = arith.constant 6 : index
      %2216 = memref.load %arg1[%c13_1161, %c6_1162] : memref<16x9xf32, #tpu.memory_space<smem>>
      %2217 = vector.broadcast %2216 : f32 to vector<16x128xf32>
      %2218 = arith.mulf %2217, %137 : vector<16x128xf32>
      %2219 = arith.addf %2215, %2218 : vector<16x128xf32>
      %c13_1163 = arith.constant 13 : index
      %c7_1164 = arith.constant 7 : index
      %2220 = memref.load %arg1[%c13_1163, %c7_1164] : memref<16x9xf32, #tpu.memory_space<smem>>
      %2221 = vector.broadcast %2220 : f32 to vector<16x128xf32>
      %2222 = arith.mulf %2221, %140 : vector<16x128xf32>
      %2223 = arith.addf %2219, %2222 : vector<16x128xf32>
      %c13_1165 = arith.constant 13 : index
      %c8_1166 = arith.constant 8 : index
      %2224 = memref.load %arg1[%c13_1165, %c8_1166] : memref<16x9xf32, #tpu.memory_space<smem>>
      %2225 = vector.broadcast %2224 : f32 to vector<16x128xf32>
      %2226 = arith.mulf %2225, %143 : vector<16x128xf32>
      %2227 = arith.addf %2223, %2226 : vector<16x128xf32>
      %c13_1167 = arith.constant 13 : index
      %c0_1168 = arith.constant 0 : index
      %2228 = memref.load %arg1[%c13_1167, %c0_1168] : memref<16x9xf32, #tpu.memory_space<smem>>
      %2229 = vector.broadcast %2228 : f32 to vector<16x128xf32>
      %2230 = arith.mulf %2229, %112 : vector<16x128xf32>
      %c13_1169 = arith.constant 13 : index
      %c1_1170 = arith.constant 1 : index
      %2231 = memref.load %arg1[%c13_1169, %c1_1170] : memref<16x9xf32, #tpu.memory_space<smem>>
      %2232 = vector.broadcast %2231 : f32 to vector<16x128xf32>
      %2233 = arith.mulf %2232, %115 : vector<16x128xf32>
      %2234 = arith.addf %2230, %2233 : vector<16x128xf32>
      %c13_1171 = arith.constant 13 : index
      %c2_1172 = arith.constant 2 : index
      %2235 = memref.load %arg1[%c13_1171, %c2_1172] : memref<16x9xf32, #tpu.memory_space<smem>>
      %2236 = vector.broadcast %2235 : f32 to vector<16x128xf32>
      %2237 = arith.mulf %2236, %118 : vector<16x128xf32>
      %2238 = arith.addf %2234, %2237 : vector<16x128xf32>
      %c13_1173 = arith.constant 13 : index
      %c3_1174 = arith.constant 3 : index
      %2239 = memref.load %arg1[%c13_1173, %c3_1174] : memref<16x9xf32, #tpu.memory_space<smem>>
      %2240 = vector.broadcast %2239 : f32 to vector<16x128xf32>
      %2241 = arith.mulf %2240, %126 : vector<16x128xf32>
      %2242 = arith.addf %2238, %2241 : vector<16x128xf32>
      %c13_1175 = arith.constant 13 : index
      %c4_1176 = arith.constant 4 : index
      %2243 = memref.load %arg1[%c13_1175, %c4_1176] : memref<16x9xf32, #tpu.memory_space<smem>>
      %2244 = vector.broadcast %2243 : f32 to vector<16x128xf32>
      %2245 = arith.mulf %2244, %129 : vector<16x128xf32>
      %2246 = arith.addf %2242, %2245 : vector<16x128xf32>
      %c13_1177 = arith.constant 13 : index
      %c5_1178 = arith.constant 5 : index
      %2247 = memref.load %arg1[%c13_1177, %c5_1178] : memref<16x9xf32, #tpu.memory_space<smem>>
      %2248 = vector.broadcast %2247 : f32 to vector<16x128xf32>
      %2249 = arith.mulf %2248, %132 : vector<16x128xf32>
      %2250 = arith.addf %2246, %2249 : vector<16x128xf32>
      %c13_1179 = arith.constant 13 : index
      %c6_1180 = arith.constant 6 : index
      %2251 = memref.load %arg1[%c13_1179, %c6_1180] : memref<16x9xf32, #tpu.memory_space<smem>>
      %2252 = vector.broadcast %2251 : f32 to vector<16x128xf32>
      %2253 = arith.mulf %2252, %140 : vector<16x128xf32>
      %2254 = arith.addf %2250, %2253 : vector<16x128xf32>
      %c13_1181 = arith.constant 13 : index
      %c7_1182 = arith.constant 7 : index
      %2255 = memref.load %arg1[%c13_1181, %c7_1182] : memref<16x9xf32, #tpu.memory_space<smem>>
      %2256 = vector.broadcast %2255 : f32 to vector<16x128xf32>
      %2257 = arith.mulf %2256, %143 : vector<16x128xf32>
      %2258 = arith.addf %2254, %2257 : vector<16x128xf32>
      %c13_1183 = arith.constant 13 : index
      %c8_1184 = arith.constant 8 : index
      %2259 = memref.load %arg1[%c13_1183, %c8_1184] : memref<16x9xf32, #tpu.memory_space<smem>>
      %2260 = vector.broadcast %2259 : f32 to vector<16x128xf32>
      %2261 = arith.mulf %2260, %146 : vector<16x128xf32>
      %2262 = arith.addf %2258, %2261 : vector<16x128xf32>
      %2263 = arith.maximumf %2157, %2192 : vector<16x128xf32>
      %2264 = arith.maximumf %2227, %2262 : vector<16x128xf32>
      %2265 = arith.maximumf %2263, %2264 : vector<16x128xf32>
      %c13_1185 = arith.constant 13 : index
      %2266 = memref.load %arg2[%c13_1185] : memref<16xf32, #tpu.memory_space<smem>>
      %2267 = vector.broadcast %2266 : f32 to vector<16x128xf32>
      %2268 = arith.addf %2265, %2267 : vector<16x128xf32>
      %cst_1186 = arith.constant 0.000000e+00 : f32
      %2269 = vector.broadcast %cst_1186 : f32 to vector<16x128xf32>
      %2270 = arith.maximumf %2268, %2269 : vector<16x128xf32>
      %2271 = arith.index_cast %arg8 : i32 to index
      %c208 = arith.constant 208 : index
      %c0_1187 = arith.constant 0 : index
      %2272 = vector.load %arg7[%2271, %c208, %c0_1187] : memref<13x256x128xf32, #tpu.memory_space<vmem>>, vector<1x16x128xf32>
      %2273 = vector.shape_cast %2272 : vector<1x16x128xf32> to vector<16x128xf32>
      %2274 = vector.shape_cast %2270 : vector<16x128xf32> to vector<1x16x128xf32>
      tpu.vector_store %arg7[%2271, %c208, %c0_1187], %2274 {strides = array<i32>} : memref<13x256x128xf32, #tpu.memory_space<vmem>>, vector<1x16x128xf32>,
      %c14 = arith.constant 14 : index
      %c0_1188 = arith.constant 0 : index
      %2275 = memref.load %arg1[%c14, %c0_1188] : memref<16x9xf32, #tpu.memory_space<smem>>
      %2276 = vector.broadcast %2275 : f32 to vector<16x128xf32>
      %2277 = arith.mulf %2276, %95 : vector<16x128xf32>
      %c14_1189 = arith.constant 14 : index
      %c1_1190 = arith.constant 1 : index
      %2278 = memref.load %arg1[%c14_1189, %c1_1190] : memref<16x9xf32, #tpu.memory_space<smem>>
      %2279 = vector.broadcast %2278 : f32 to vector<16x128xf32>
      %2280 = arith.mulf %2279, %98 : vector<16x128xf32>
      %2281 = arith.addf %2277, %2280 : vector<16x128xf32>
      %c14_1191 = arith.constant 14 : index
      %c2_1192 = arith.constant 2 : index
      %2282 = memref.load %arg1[%c14_1191, %c2_1192] : memref<16x9xf32, #tpu.memory_space<smem>>
      %2283 = vector.broadcast %2282 : f32 to vector<16x128xf32>
      %2284 = arith.mulf %2283, %101 : vector<16x128xf32>
      %2285 = arith.addf %2281, %2284 : vector<16x128xf32>
      %c14_1193 = arith.constant 14 : index
      %c3_1194 = arith.constant 3 : index
      %2286 = memref.load %arg1[%c14_1193, %c3_1194] : memref<16x9xf32, #tpu.memory_space<smem>>
      %2287 = vector.broadcast %2286 : f32 to vector<16x128xf32>
      %2288 = arith.mulf %2287, %109 : vector<16x128xf32>
      %2289 = arith.addf %2285, %2288 : vector<16x128xf32>
      %c14_1195 = arith.constant 14 : index
      %c4_1196 = arith.constant 4 : index
      %2290 = memref.load %arg1[%c14_1195, %c4_1196] : memref<16x9xf32, #tpu.memory_space<smem>>
      %2291 = vector.broadcast %2290 : f32 to vector<16x128xf32>
      %2292 = arith.mulf %2291, %112 : vector<16x128xf32>
      %2293 = arith.addf %2289, %2292 : vector<16x128xf32>
      %c14_1197 = arith.constant 14 : index
      %c5_1198 = arith.constant 5 : index
      %2294 = memref.load %arg1[%c14_1197, %c5_1198] : memref<16x9xf32, #tpu.memory_space<smem>>
      %2295 = vector.broadcast %2294 : f32 to vector<16x128xf32>
      %2296 = arith.mulf %2295, %115 : vector<16x128xf32>
      %2297 = arith.addf %2293, %2296 : vector<16x128xf32>
      %c14_1199 = arith.constant 14 : index
      %c6_1200 = arith.constant 6 : index
      %2298 = memref.load %arg1[%c14_1199, %c6_1200] : memref<16x9xf32, #tpu.memory_space<smem>>
      %2299 = vector.broadcast %2298 : f32 to vector<16x128xf32>
      %2300 = arith.mulf %2299, %123 : vector<16x128xf32>
      %2301 = arith.addf %2297, %2300 : vector<16x128xf32>
      %c14_1201 = arith.constant 14 : index
      %c7_1202 = arith.constant 7 : index
      %2302 = memref.load %arg1[%c14_1201, %c7_1202] : memref<16x9xf32, #tpu.memory_space<smem>>
      %2303 = vector.broadcast %2302 : f32 to vector<16x128xf32>
      %2304 = arith.mulf %2303, %126 : vector<16x128xf32>
      %2305 = arith.addf %2301, %2304 : vector<16x128xf32>
      %c14_1203 = arith.constant 14 : index
      %c8_1204 = arith.constant 8 : index
      %2306 = memref.load %arg1[%c14_1203, %c8_1204] : memref<16x9xf32, #tpu.memory_space<smem>>
      %2307 = vector.broadcast %2306 : f32 to vector<16x128xf32>
      %2308 = arith.mulf %2307, %129 : vector<16x128xf32>
      %2309 = arith.addf %2305, %2308 : vector<16x128xf32>
      %c14_1205 = arith.constant 14 : index
      %c0_1206 = arith.constant 0 : index
      %2310 = memref.load %arg1[%c14_1205, %c0_1206] : memref<16x9xf32, #tpu.memory_space<smem>>
      %2311 = vector.broadcast %2310 : f32 to vector<16x128xf32>
      %2312 = arith.mulf %2311, %98 : vector<16x128xf32>
      %c14_1207 = arith.constant 14 : index
      %c1_1208 = arith.constant 1 : index
      %2313 = memref.load %arg1[%c14_1207, %c1_1208] : memref<16x9xf32, #tpu.memory_space<smem>>
      %2314 = vector.broadcast %2313 : f32 to vector<16x128xf32>
      %2315 = arith.mulf %2314, %101 : vector<16x128xf32>
      %2316 = arith.addf %2312, %2315 : vector<16x128xf32>
      %c14_1209 = arith.constant 14 : index
      %c2_1210 = arith.constant 2 : index
      %2317 = memref.load %arg1[%c14_1209, %c2_1210] : memref<16x9xf32, #tpu.memory_space<smem>>
      %2318 = vector.broadcast %2317 : f32 to vector<16x128xf32>
      %2319 = arith.mulf %2318, %104 : vector<16x128xf32>
      %2320 = arith.addf %2316, %2319 : vector<16x128xf32>
      %c14_1211 = arith.constant 14 : index
      %c3_1212 = arith.constant 3 : index
      %2321 = memref.load %arg1[%c14_1211, %c3_1212] : memref<16x9xf32, #tpu.memory_space<smem>>
      %2322 = vector.broadcast %2321 : f32 to vector<16x128xf32>
      %2323 = arith.mulf %2322, %112 : vector<16x128xf32>
      %2324 = arith.addf %2320, %2323 : vector<16x128xf32>
      %c14_1213 = arith.constant 14 : index
      %c4_1214 = arith.constant 4 : index
      %2325 = memref.load %arg1[%c14_1213, %c4_1214] : memref<16x9xf32, #tpu.memory_space<smem>>
      %2326 = vector.broadcast %2325 : f32 to vector<16x128xf32>
      %2327 = arith.mulf %2326, %115 : vector<16x128xf32>
      %2328 = arith.addf %2324, %2327 : vector<16x128xf32>
      %c14_1215 = arith.constant 14 : index
      %c5_1216 = arith.constant 5 : index
      %2329 = memref.load %arg1[%c14_1215, %c5_1216] : memref<16x9xf32, #tpu.memory_space<smem>>
      %2330 = vector.broadcast %2329 : f32 to vector<16x128xf32>
      %2331 = arith.mulf %2330, %118 : vector<16x128xf32>
      %2332 = arith.addf %2328, %2331 : vector<16x128xf32>
      %c14_1217 = arith.constant 14 : index
      %c6_1218 = arith.constant 6 : index
      %2333 = memref.load %arg1[%c14_1217, %c6_1218] : memref<16x9xf32, #tpu.memory_space<smem>>
      %2334 = vector.broadcast %2333 : f32 to vector<16x128xf32>
      %2335 = arith.mulf %2334, %126 : vector<16x128xf32>
      %2336 = arith.addf %2332, %2335 : vector<16x128xf32>
      %c14_1219 = arith.constant 14 : index
      %c7_1220 = arith.constant 7 : index
      %2337 = memref.load %arg1[%c14_1219, %c7_1220] : memref<16x9xf32, #tpu.memory_space<smem>>
      %2338 = vector.broadcast %2337 : f32 to vector<16x128xf32>
      %2339 = arith.mulf %2338, %129 : vector<16x128xf32>
      %2340 = arith.addf %2336, %2339 : vector<16x128xf32>
      %c14_1221 = arith.constant 14 : index
      %c8_1222 = arith.constant 8 : index
      %2341 = memref.load %arg1[%c14_1221, %c8_1222] : memref<16x9xf32, #tpu.memory_space<smem>>
      %2342 = vector.broadcast %2341 : f32 to vector<16x128xf32>
      %2343 = arith.mulf %2342, %132 : vector<16x128xf32>
      %2344 = arith.addf %2340, %2343 : vector<16x128xf32>
      %c14_1223 = arith.constant 14 : index
      %c0_1224 = arith.constant 0 : index
      %2345 = memref.load %arg1[%c14_1223, %c0_1224] : memref<16x9xf32, #tpu.memory_space<smem>>
      %2346 = vector.broadcast %2345 : f32 to vector<16x128xf32>
      %2347 = arith.mulf %2346, %109 : vector<16x128xf32>
      %c14_1225 = arith.constant 14 : index
      %c1_1226 = arith.constant 1 : index
      %2348 = memref.load %arg1[%c14_1225, %c1_1226] : memref<16x9xf32, #tpu.memory_space<smem>>
      %2349 = vector.broadcast %2348 : f32 to vector<16x128xf32>
      %2350 = arith.mulf %2349, %112 : vector<16x128xf32>
      %2351 = arith.addf %2347, %2350 : vector<16x128xf32>
      %c14_1227 = arith.constant 14 : index
      %c2_1228 = arith.constant 2 : index
      %2352 = memref.load %arg1[%c14_1227, %c2_1228] : memref<16x9xf32, #tpu.memory_space<smem>>
      %2353 = vector.broadcast %2352 : f32 to vector<16x128xf32>
      %2354 = arith.mulf %2353, %115 : vector<16x128xf32>
      %2355 = arith.addf %2351, %2354 : vector<16x128xf32>
      %c14_1229 = arith.constant 14 : index
      %c3_1230 = arith.constant 3 : index
      %2356 = memref.load %arg1[%c14_1229, %c3_1230] : memref<16x9xf32, #tpu.memory_space<smem>>
      %2357 = vector.broadcast %2356 : f32 to vector<16x128xf32>
      %2358 = arith.mulf %2357, %123 : vector<16x128xf32>
      %2359 = arith.addf %2355, %2358 : vector<16x128xf32>
      %c14_1231 = arith.constant 14 : index
      %c4_1232 = arith.constant 4 : index
      %2360 = memref.load %arg1[%c14_1231, %c4_1232] : memref<16x9xf32, #tpu.memory_space<smem>>
      %2361 = vector.broadcast %2360 : f32 to vector<16x128xf32>
      %2362 = arith.mulf %2361, %126 : vector<16x128xf32>
      %2363 = arith.addf %2359, %2362 : vector<16x128xf32>
      %c14_1233 = arith.constant 14 : index
      %c5_1234 = arith.constant 5 : index
      %2364 = memref.load %arg1[%c14_1233, %c5_1234] : memref<16x9xf32, #tpu.memory_space<smem>>
      %2365 = vector.broadcast %2364 : f32 to vector<16x128xf32>
      %2366 = arith.mulf %2365, %129 : vector<16x128xf32>
      %2367 = arith.addf %2363, %2366 : vector<16x128xf32>
      %c14_1235 = arith.constant 14 : index
      %c6_1236 = arith.constant 6 : index
      %2368 = memref.load %arg1[%c14_1235, %c6_1236] : memref<16x9xf32, #tpu.memory_space<smem>>
      %2369 = vector.broadcast %2368 : f32 to vector<16x128xf32>
      %2370 = arith.mulf %2369, %137 : vector<16x128xf32>
      %2371 = arith.addf %2367, %2370 : vector<16x128xf32>
      %c14_1237 = arith.constant 14 : index
      %c7_1238 = arith.constant 7 : index
      %2372 = memref.load %arg1[%c14_1237, %c7_1238] : memref<16x9xf32, #tpu.memory_space<smem>>
      %2373 = vector.broadcast %2372 : f32 to vector<16x128xf32>
      %2374 = arith.mulf %2373, %140 : vector<16x128xf32>
      %2375 = arith.addf %2371, %2374 : vector<16x128xf32>
      %c14_1239 = arith.constant 14 : index
      %c8_1240 = arith.constant 8 : index
      %2376 = memref.load %arg1[%c14_1239, %c8_1240] : memref<16x9xf32, #tpu.memory_space<smem>>
      %2377 = vector.broadcast %2376 : f32 to vector<16x128xf32>
      %2378 = arith.mulf %2377, %143 : vector<16x128xf32>
      %2379 = arith.addf %2375, %2378 : vector<16x128xf32>
      %c14_1241 = arith.constant 14 : index
      %c0_1242 = arith.constant 0 : index
      %2380 = memref.load %arg1[%c14_1241, %c0_1242] : memref<16x9xf32, #tpu.memory_space<smem>>
      %2381 = vector.broadcast %2380 : f32 to vector<16x128xf32>
      %2382 = arith.mulf %2381, %112 : vector<16x128xf32>
      %c14_1243 = arith.constant 14 : index
      %c1_1244 = arith.constant 1 : index
      %2383 = memref.load %arg1[%c14_1243, %c1_1244] : memref<16x9xf32, #tpu.memory_space<smem>>
      %2384 = vector.broadcast %2383 : f32 to vector<16x128xf32>
      %2385 = arith.mulf %2384, %115 : vector<16x128xf32>
      %2386 = arith.addf %2382, %2385 : vector<16x128xf32>
      %c14_1245 = arith.constant 14 : index
      %c2_1246 = arith.constant 2 : index
      %2387 = memref.load %arg1[%c14_1245, %c2_1246] : memref<16x9xf32, #tpu.memory_space<smem>>
      %2388 = vector.broadcast %2387 : f32 to vector<16x128xf32>
      %2389 = arith.mulf %2388, %118 : vector<16x128xf32>
      %2390 = arith.addf %2386, %2389 : vector<16x128xf32>
      %c14_1247 = arith.constant 14 : index
      %c3_1248 = arith.constant 3 : index
      %2391 = memref.load %arg1[%c14_1247, %c3_1248] : memref<16x9xf32, #tpu.memory_space<smem>>
      %2392 = vector.broadcast %2391 : f32 to vector<16x128xf32>
      %2393 = arith.mulf %2392, %126 : vector<16x128xf32>
      %2394 = arith.addf %2390, %2393 : vector<16x128xf32>
      %c14_1249 = arith.constant 14 : index
      %c4_1250 = arith.constant 4 : index
      %2395 = memref.load %arg1[%c14_1249, %c4_1250] : memref<16x9xf32, #tpu.memory_space<smem>>
      %2396 = vector.broadcast %2395 : f32 to vector<16x128xf32>
      %2397 = arith.mulf %2396, %129 : vector<16x128xf32>
      %2398 = arith.addf %2394, %2397 : vector<16x128xf32>
      %c14_1251 = arith.constant 14 : index
      %c5_1252 = arith.constant 5 : index
      %2399 = memref.load %arg1[%c14_1251, %c5_1252] : memref<16x9xf32, #tpu.memory_space<smem>>
      %2400 = vector.broadcast %2399 : f32 to vector<16x128xf32>
      %2401 = arith.mulf %2400, %132 : vector<16x128xf32>
      %2402 = arith.addf %2398, %2401 : vector<16x128xf32>
      %c14_1253 = arith.constant 14 : index
      %c6_1254 = arith.constant 6 : index
      %2403 = memref.load %arg1[%c14_1253, %c6_1254] : memref<16x9xf32, #tpu.memory_space<smem>>
      %2404 = vector.broadcast %2403 : f32 to vector<16x128xf32>
      %2405 = arith.mulf %2404, %140 : vector<16x128xf32>
      %2406 = arith.addf %2402, %2405 : vector<16x128xf32>
      %c14_1255 = arith.constant 14 : index
      %c7_1256 = arith.constant 7 : index
      %2407 = memref.load %arg1[%c14_1255, %c7_1256] : memref<16x9xf32, #tpu.memory_space<smem>>
      %2408 = vector.broadcast %2407 : f32 to vector<16x128xf32>
      %2409 = arith.mulf %2408, %143 : vector<16x128xf32>
      %2410 = arith.addf %2406, %2409 : vector<16x128xf32>
      %c14_1257 = arith.constant 14 : index
      %c8_1258 = arith.constant 8 : index
      %2411 = memref.load %arg1[%c14_1257, %c8_1258] : memref<16x9xf32, #tpu.memory_space<smem>>
      %2412 = vector.broadcast %2411 : f32 to vector<16x128xf32>
      %2413 = arith.mulf %2412, %146 : vector<16x128xf32>
      %2414 = arith.addf %2410, %2413 : vector<16x128xf32>
      %2415 = arith.maximumf %2309, %2344 : vector<16x128xf32>
      %2416 = arith.maximumf %2379, %2414 : vector<16x128xf32>
      %2417 = arith.maximumf %2415, %2416 : vector<16x128xf32>
      %c14_1259 = arith.constant 14 : index
      %2418 = memref.load %arg2[%c14_1259] : memref<16xf32, #tpu.memory_space<smem>>
      %2419 = vector.broadcast %2418 : f32 to vector<16x128xf32>
      %2420 = arith.addf %2417, %2419 : vector<16x128xf32>
      %cst_1260 = arith.constant 0.000000e+00 : f32
      %2421 = vector.broadcast %cst_1260 : f32 to vector<16x128xf32>
      %2422 = arith.maximumf %2420, %2421 : vector<16x128xf32>
      %2423 = arith.index_cast %arg8 : i32 to index
      %c224 = arith.constant 224 : index
      %c0_1261 = arith.constant 0 : index
      %2424 = vector.load %arg7[%2423, %c224, %c0_1261] : memref<13x256x128xf32, #tpu.memory_space<vmem>>, vector<1x16x128xf32>
      %2425 = vector.shape_cast %2424 : vector<1x16x128xf32> to vector<16x128xf32>
      %2426 = vector.shape_cast %2422 : vector<16x128xf32> to vector<1x16x128xf32>
      tpu.vector_store %arg7[%2423, %c224, %c0_1261], %2426 {strides = array<i32>} : memref<13x256x128xf32, #tpu.memory_space<vmem>>, vector<1x16x128xf32>,
      %c15 = arith.constant 15 : index
      %c0_1262 = arith.constant 0 : index
      %2427 = memref.load %arg1[%c15, %c0_1262] : memref<16x9xf32, #tpu.memory_space<smem>>
      %2428 = vector.broadcast %2427 : f32 to vector<16x128xf32>
      %2429 = arith.mulf %2428, %95 : vector<16x128xf32>
      %c15_1263 = arith.constant 15 : index
      %c1_1264 = arith.constant 1 : index
      %2430 = memref.load %arg1[%c15_1263, %c1_1264] : memref<16x9xf32, #tpu.memory_space<smem>>
      %2431 = vector.broadcast %2430 : f32 to vector<16x128xf32>
      %2432 = arith.mulf %2431, %98 : vector<16x128xf32>
      %2433 = arith.addf %2429, %2432 : vector<16x128xf32>
      %c15_1265 = arith.constant 15 : index
      %c2_1266 = arith.constant 2 : index
      %2434 = memref.load %arg1[%c15_1265, %c2_1266] : memref<16x9xf32, #tpu.memory_space<smem>>
      %2435 = vector.broadcast %2434 : f32 to vector<16x128xf32>
      %2436 = arith.mulf %2435, %101 : vector<16x128xf32>
      %2437 = arith.addf %2433, %2436 : vector<16x128xf32>
      %c15_1267 = arith.constant 15 : index
      %c3_1268 = arith.constant 3 : index
      %2438 = memref.load %arg1[%c15_1267, %c3_1268] : memref<16x9xf32, #tpu.memory_space<smem>>
      %2439 = vector.broadcast %2438 : f32 to vector<16x128xf32>
      %2440 = arith.mulf %2439, %109 : vector<16x128xf32>
      %2441 = arith.addf %2437, %2440 : vector<16x128xf32>
      %c15_1269 = arith.constant 15 : index
      %c4_1270 = arith.constant 4 : index
      %2442 = memref.load %arg1[%c15_1269, %c4_1270] : memref<16x9xf32, #tpu.memory_space<smem>>
      %2443 = vector.broadcast %2442 : f32 to vector<16x128xf32>
      %2444 = arith.mulf %2443, %112 : vector<16x128xf32>
      %2445 = arith.addf %2441, %2444 : vector<16x128xf32>
      %c15_1271 = arith.constant 15 : index
      %c5_1272 = arith.constant 5 : index
      %2446 = memref.load %arg1[%c15_1271, %c5_1272] : memref<16x9xf32, #tpu.memory_space<smem>>
      %2447 = vector.broadcast %2446 : f32 to vector<16x128xf32>
      %2448 = arith.mulf %2447, %115 : vector<16x128xf32>
      %2449 = arith.addf %2445, %2448 : vector<16x128xf32>
      %c15_1273 = arith.constant 15 : index
      %c6_1274 = arith.constant 6 : index
      %2450 = memref.load %arg1[%c15_1273, %c6_1274] : memref<16x9xf32, #tpu.memory_space<smem>>
      %2451 = vector.broadcast %2450 : f32 to vector<16x128xf32>
      %2452 = arith.mulf %2451, %123 : vector<16x128xf32>
      %2453 = arith.addf %2449, %2452 : vector<16x128xf32>
      %c15_1275 = arith.constant 15 : index
      %c7_1276 = arith.constant 7 : index
      %2454 = memref.load %arg1[%c15_1275, %c7_1276] : memref<16x9xf32, #tpu.memory_space<smem>>
      %2455 = vector.broadcast %2454 : f32 to vector<16x128xf32>
      %2456 = arith.mulf %2455, %126 : vector<16x128xf32>
      %2457 = arith.addf %2453, %2456 : vector<16x128xf32>
      %c15_1277 = arith.constant 15 : index
      %c8_1278 = arith.constant 8 : index
      %2458 = memref.load %arg1[%c15_1277, %c8_1278] : memref<16x9xf32, #tpu.memory_space<smem>>
      %2459 = vector.broadcast %2458 : f32 to vector<16x128xf32>
      %2460 = arith.mulf %2459, %129 : vector<16x128xf32>
      %2461 = arith.addf %2457, %2460 : vector<16x128xf32>
      %c15_1279 = arith.constant 15 : index
      %c0_1280 = arith.constant 0 : index
      %2462 = memref.load %arg1[%c15_1279, %c0_1280] : memref<16x9xf32, #tpu.memory_space<smem>>
      %2463 = vector.broadcast %2462 : f32 to vector<16x128xf32>
      %2464 = arith.mulf %2463, %98 : vector<16x128xf32>
      %c15_1281 = arith.constant 15 : index
      %c1_1282 = arith.constant 1 : index
      %2465 = memref.load %arg1[%c15_1281, %c1_1282] : memref<16x9xf32, #tpu.memory_space<smem>>
      %2466 = vector.broadcast %2465 : f32 to vector<16x128xf32>
      %2467 = arith.mulf %2466, %101 : vector<16x128xf32>
      %2468 = arith.addf %2464, %2467 : vector<16x128xf32>
      %c15_1283 = arith.constant 15 : index
      %c2_1284 = arith.constant 2 : index
      %2469 = memref.load %arg1[%c15_1283, %c2_1284] : memref<16x9xf32, #tpu.memory_space<smem>>
      %2470 = vector.broadcast %2469 : f32 to vector<16x128xf32>
      %2471 = arith.mulf %2470, %104 : vector<16x128xf32>
      %2472 = arith.addf %2468, %2471 : vector<16x128xf32>
      %c15_1285 = arith.constant 15 : index
      %c3_1286 = arith.constant 3 : index
      %2473 = memref.load %arg1[%c15_1285, %c3_1286] : memref<16x9xf32, #tpu.memory_space<smem>>
      %2474 = vector.broadcast %2473 : f32 to vector<16x128xf32>
      %2475 = arith.mulf %2474, %112 : vector<16x128xf32>
      %2476 = arith.addf %2472, %2475 : vector<16x128xf32>
      %c15_1287 = arith.constant 15 : index
      %c4_1288 = arith.constant 4 : index
      %2477 = memref.load %arg1[%c15_1287, %c4_1288] : memref<16x9xf32, #tpu.memory_space<smem>>
      %2478 = vector.broadcast %2477 : f32 to vector<16x128xf32>
      %2479 = arith.mulf %2478, %115 : vector<16x128xf32>
      %2480 = arith.addf %2476, %2479 : vector<16x128xf32>
      %c15_1289 = arith.constant 15 : index
      %c5_1290 = arith.constant 5 : index
      %2481 = memref.load %arg1[%c15_1289, %c5_1290] : memref<16x9xf32, #tpu.memory_space<smem>>
      %2482 = vector.broadcast %2481 : f32 to vector<16x128xf32>
      %2483 = arith.mulf %2482, %118 : vector<16x128xf32>
      %2484 = arith.addf %2480, %2483 : vector<16x128xf32>
      %c15_1291 = arith.constant 15 : index
      %c6_1292 = arith.constant 6 : index
      %2485 = memref.load %arg1[%c15_1291, %c6_1292] : memref<16x9xf32, #tpu.memory_space<smem>>
      %2486 = vector.broadcast %2485 : f32 to vector<16x128xf32>
      %2487 = arith.mulf %2486, %126 : vector<16x128xf32>
      %2488 = arith.addf %2484, %2487 : vector<16x128xf32>
      %c15_1293 = arith.constant 15 : index
      %c7_1294 = arith.constant 7 : index
      %2489 = memref.load %arg1[%c15_1293, %c7_1294] : memref<16x9xf32, #tpu.memory_space<smem>>
      %2490 = vector.broadcast %2489 : f32 to vector<16x128xf32>
      %2491 = arith.mulf %2490, %129 : vector<16x128xf32>
      %2492 = arith.addf %2488, %2491 : vector<16x128xf32>
      %c15_1295 = arith.constant 15 : index
      %c8_1296 = arith.constant 8 : index
      %2493 = memref.load %arg1[%c15_1295, %c8_1296] : memref<16x9xf32, #tpu.memory_space<smem>>
      %2494 = vector.broadcast %2493 : f32 to vector<16x128xf32>
      %2495 = arith.mulf %2494, %132 : vector<16x128xf32>
      %2496 = arith.addf %2492, %2495 : vector<16x128xf32>
      %c15_1297 = arith.constant 15 : index
      %c0_1298 = arith.constant 0 : index
      %2497 = memref.load %arg1[%c15_1297, %c0_1298] : memref<16x9xf32, #tpu.memory_space<smem>>
      %2498 = vector.broadcast %2497 : f32 to vector<16x128xf32>
      %2499 = arith.mulf %2498, %109 : vector<16x128xf32>
      %c15_1299 = arith.constant 15 : index
      %c1_1300 = arith.constant 1 : index
      %2500 = memref.load %arg1[%c15_1299, %c1_1300] : memref<16x9xf32, #tpu.memory_space<smem>>
      %2501 = vector.broadcast %2500 : f32 to vector<16x128xf32>
      %2502 = arith.mulf %2501, %112 : vector<16x128xf32>
      %2503 = arith.addf %2499, %2502 : vector<16x128xf32>
      %c15_1301 = arith.constant 15 : index
      %c2_1302 = arith.constant 2 : index
      %2504 = memref.load %arg1[%c15_1301, %c2_1302] : memref<16x9xf32, #tpu.memory_space<smem>>
      %2505 = vector.broadcast %2504 : f32 to vector<16x128xf32>
      %2506 = arith.mulf %2505, %115 : vector<16x128xf32>
      %2507 = arith.addf %2503, %2506 : vector<16x128xf32>
      %c15_1303 = arith.constant 15 : index
      %c3_1304 = arith.constant 3 : index
      %2508 = memref.load %arg1[%c15_1303, %c3_1304] : memref<16x9xf32, #tpu.memory_space<smem>>
      %2509 = vector.broadcast %2508 : f32 to vector<16x128xf32>
      %2510 = arith.mulf %2509, %123 : vector<16x128xf32>
      %2511 = arith.addf %2507, %2510 : vector<16x128xf32>
      %c15_1305 = arith.constant 15 : index
      %c4_1306 = arith.constant 4 : index
      %2512 = memref.load %arg1[%c15_1305, %c4_1306] : memref<16x9xf32, #tpu.memory_space<smem>>
      %2513 = vector.broadcast %2512 : f32 to vector<16x128xf32>
      %2514 = arith.mulf %2513, %126 : vector<16x128xf32>
      %2515 = arith.addf %2511, %2514 : vector<16x128xf32>
      %c15_1307 = arith.constant 15 : index
      %c5_1308 = arith.constant 5 : index
      %2516 = memref.load %arg1[%c15_1307, %c5_1308] : memref<16x9xf32, #tpu.memory_space<smem>>
      %2517 = vector.broadcast %2516 : f32 to vector<16x128xf32>
      %2518 = arith.mulf %2517, %129 : vector<16x128xf32>
      %2519 = arith.addf %2515, %2518 : vector<16x128xf32>
      %c15_1309 = arith.constant 15 : index
      %c6_1310 = arith.constant 6 : index
      %2520 = memref.load %arg1[%c15_1309, %c6_1310] : memref<16x9xf32, #tpu.memory_space<smem>>
      %2521 = vector.broadcast %2520 : f32 to vector<16x128xf32>
      %2522 = arith.mulf %2521, %137 : vector<16x128xf32>
      %2523 = arith.addf %2519, %2522 : vector<16x128xf32>
      %c15_1311 = arith.constant 15 : index
      %c7_1312 = arith.constant 7 : index
      %2524 = memref.load %arg1[%c15_1311, %c7_1312] : memref<16x9xf32, #tpu.memory_space<smem>>
      %2525 = vector.broadcast %2524 : f32 to vector<16x128xf32>
      %2526 = arith.mulf %2525, %140 : vector<16x128xf32>
      %2527 = arith.addf %2523, %2526 : vector<16x128xf32>
      %c15_1313 = arith.constant 15 : index
      %c8_1314 = arith.constant 8 : index
      %2528 = memref.load %arg1[%c15_1313, %c8_1314] : memref<16x9xf32, #tpu.memory_space<smem>>
      %2529 = vector.broadcast %2528 : f32 to vector<16x128xf32>
      %2530 = arith.mulf %2529, %143 : vector<16x128xf32>
      %2531 = arith.addf %2527, %2530 : vector<16x128xf32>
      %c15_1315 = arith.constant 15 : index
      %c0_1316 = arith.constant 0 : index
      %2532 = memref.load %arg1[%c15_1315, %c0_1316] : memref<16x9xf32, #tpu.memory_space<smem>>
      %2533 = vector.broadcast %2532 : f32 to vector<16x128xf32>
      %2534 = arith.mulf %2533, %112 : vector<16x128xf32>
      %c15_1317 = arith.constant 15 : index
      %c1_1318 = arith.constant 1 : index
      %2535 = memref.load %arg1[%c15_1317, %c1_1318] : memref<16x9xf32, #tpu.memory_space<smem>>
      %2536 = vector.broadcast %2535 : f32 to vector<16x128xf32>
      %2537 = arith.mulf %2536, %115 : vector<16x128xf32>
      %2538 = arith.addf %2534, %2537 : vector<16x128xf32>
      %c15_1319 = arith.constant 15 : index
      %c2_1320 = arith.constant 2 : index
      %2539 = memref.load %arg1[%c15_1319, %c2_1320] : memref<16x9xf32, #tpu.memory_space<smem>>
      %2540 = vector.broadcast %2539 : f32 to vector<16x128xf32>
      %2541 = arith.mulf %2540, %118 : vector<16x128xf32>
      %2542 = arith.addf %2538, %2541 : vector<16x128xf32>
      %c15_1321 = arith.constant 15 : index
      %c3_1322 = arith.constant 3 : index
      %2543 = memref.load %arg1[%c15_1321, %c3_1322] : memref<16x9xf32, #tpu.memory_space<smem>>
      %2544 = vector.broadcast %2543 : f32 to vector<16x128xf32>
      %2545 = arith.mulf %2544, %126 : vector<16x128xf32>
      %2546 = arith.addf %2542, %2545 : vector<16x128xf32>
      %c15_1323 = arith.constant 15 : index
      %c4_1324 = arith.constant 4 : index
      %2547 = memref.load %arg1[%c15_1323, %c4_1324] : memref<16x9xf32, #tpu.memory_space<smem>>
      %2548 = vector.broadcast %2547 : f32 to vector<16x128xf32>
      %2549 = arith.mulf %2548, %129 : vector<16x128xf32>
      %2550 = arith.addf %2546, %2549 : vector<16x128xf32>
      %c15_1325 = arith.constant 15 : index
      %c5_1326 = arith.constant 5 : index
      %2551 = memref.load %arg1[%c15_1325, %c5_1326] : memref<16x9xf32, #tpu.memory_space<smem>>
      %2552 = vector.broadcast %2551 : f32 to vector<16x128xf32>
      %2553 = arith.mulf %2552, %132 : vector<16x128xf32>
      %2554 = arith.addf %2550, %2553 : vector<16x128xf32>
      %c15_1327 = arith.constant 15 : index
      %c6_1328 = arith.constant 6 : index
      %2555 = memref.load %arg1[%c15_1327, %c6_1328] : memref<16x9xf32, #tpu.memory_space<smem>>
      %2556 = vector.broadcast %2555 : f32 to vector<16x128xf32>
      %2557 = arith.mulf %2556, %140 : vector<16x128xf32>
      %2558 = arith.addf %2554, %2557 : vector<16x128xf32>
      %c15_1329 = arith.constant 15 : index
      %c7_1330 = arith.constant 7 : index
      %2559 = memref.load %arg1[%c15_1329, %c7_1330] : memref<16x9xf32, #tpu.memory_space<smem>>
      %2560 = vector.broadcast %2559 : f32 to vector<16x128xf32>
      %2561 = arith.mulf %2560, %143 : vector<16x128xf32>
      %2562 = arith.addf %2558, %2561 : vector<16x128xf32>
      %c15_1331 = arith.constant 15 : index
      %c8_1332 = arith.constant 8 : index
      %2563 = memref.load %arg1[%c15_1331, %c8_1332] : memref<16x9xf32, #tpu.memory_space<smem>>
      %2564 = vector.broadcast %2563 : f32 to vector<16x128xf32>
      %2565 = arith.mulf %2564, %146 : vector<16x128xf32>
      %2566 = arith.addf %2562, %2565 : vector<16x128xf32>
      %2567 = arith.maximumf %2461, %2496 : vector<16x128xf32>
      %2568 = arith.maximumf %2531, %2566 : vector<16x128xf32>
      %2569 = arith.maximumf %2567, %2568 : vector<16x128xf32>
      %c15_1333 = arith.constant 15 : index
      %2570 = memref.load %arg2[%c15_1333] : memref<16xf32, #tpu.memory_space<smem>>
      %2571 = vector.broadcast %2570 : f32 to vector<16x128xf32>
      %2572 = arith.addf %2569, %2571 : vector<16x128xf32>
      %cst_1334 = arith.constant 0.000000e+00 : f32
      %2573 = vector.broadcast %cst_1334 : f32 to vector<16x128xf32>
      %2574 = arith.maximumf %2572, %2573 : vector<16x128xf32>
      %2575 = arith.index_cast %arg8 : i32 to index
      %c240 = arith.constant 240 : index
      %c0_1335 = arith.constant 0 : index
      %2576 = vector.load %arg7[%2575, %c240, %c0_1335] : memref<13x256x128xf32, #tpu.memory_space<vmem>>, vector<1x16x128xf32>
      %2577 = vector.shape_cast %2576 : vector<1x16x128xf32> to vector<16x128xf32>
      %2578 = vector.shape_cast %2574 : vector<16x128xf32> to vector<1x16x128xf32>
      tpu.vector_store %arg7[%2575, %c240, %c0_1335], %2578 {strides = array<i32>} : memref<13x256x128xf32, #tpu.memory_space<vmem>>, vector<1x16x128xf32>,
    }
    %c13_i32_0 = arith.constant 13 : i32
    %c0 = arith.constant 0 : index
    %c0_1 = arith.constant 0 : index
    %1 = vector.load %arg5[%c0, %c0_1] : memref<16x128xf32, #tpu.memory_space<vmem>>, vector<16x128xf32>
    %c0_2 = arith.constant 0 : index
    %c0_3 = arith.constant 0 : index
    %c0_4 = arith.constant 0 : index
    %2 = vector.load %arg4[%c0_2, %c0_3, %c0_4] : memref<13x16x256xf32, #tpu.memory_space<vmem>>, vector<1x16x256xf32>
    %3 = vector.shape_cast %2 : vector<1x16x256xf32> to vector<16x256xf32>
    %c0_5 = arith.constant 0 : index
    %c0_6 = arith.constant 0 : index
    %c0_7 = arith.constant 0 : index
    %4 = vector.load %arg7[%c0_5, %c0_6, %c0_7] : memref<13x256x128xf32, #tpu.memory_space<vmem>>, vector<1x256x128xf32>
    %5 = vector.shape_cast %4 : vector<1x256x128xf32> to vector<256x128xf32>
    %cst = arith.constant dense<0.000000e+00> : vector<16x128xf32>
    %6 = tpu.matmul %3, %5, %cst {dimension_numbers = #tpu.dot_dimension_numbers<[1], [0], [0], [1], [0, 0, 1, 1], [], []>} : vector<16x256xf32>, vector<256x128xf32>, vector<16x128xf32> -> vector<16x128xf32>
    %7 = arith.addf %1, %6 : vector<16x128xf32>
    %c1 = arith.constant 1 : index
    %c0_8 = arith.constant 0 : index
    %c0_9 = arith.constant 0 : index
    %8 = vector.load %arg4[%c1, %c0_8, %c0_9] : memref<13x16x256xf32, #tpu.memory_space<vmem>>, vector<1x16x256xf32>
    %9 = vector.shape_cast %8 : vector<1x16x256xf32> to vector<16x256xf32>
    %c1_10 = arith.constant 1 : index
    %c0_11 = arith.constant 0 : index
    %c0_12 = arith.constant 0 : index
    %10 = vector.load %arg7[%c1_10, %c0_11, %c0_12] : memref<13x256x128xf32, #tpu.memory_space<vmem>>, vector<1x256x128xf32>
    %11 = vector.shape_cast %10 : vector<1x256x128xf32> to vector<256x128xf32>
    %cst_13 = arith.constant dense<0.000000e+00> : vector<16x128xf32>
    %12 = tpu.matmul %9, %11, %cst_13 {dimension_numbers = #tpu.dot_dimension_numbers<[1], [0], [0], [1], [0, 0, 1, 1], [], []>} : vector<16x256xf32>, vector<256x128xf32>, vector<16x128xf32> -> vector<16x128xf32>
    %13 = arith.addf %7, %12 : vector<16x128xf32>
    %c2 = arith.constant 2 : index
    %c0_14 = arith.constant 0 : index
    %c0_15 = arith.constant 0 : index
    %14 = vector.load %arg4[%c2, %c0_14, %c0_15] : memref<13x16x256xf32, #tpu.memory_space<vmem>>, vector<1x16x256xf32>
    %15 = vector.shape_cast %14 : vector<1x16x256xf32> to vector<16x256xf32>
    %c2_16 = arith.constant 2 : index
    %c0_17 = arith.constant 0 : index
    %c0_18 = arith.constant 0 : index
    %16 = vector.load %arg7[%c2_16, %c0_17, %c0_18] : memref<13x256x128xf32, #tpu.memory_space<vmem>>, vector<1x256x128xf32>
    %17 = vector.shape_cast %16 : vector<1x256x128xf32> to vector<256x128xf32>
    %cst_19 = arith.constant dense<0.000000e+00> : vector<16x128xf32>
    %18 = tpu.matmul %15, %17, %cst_19 {dimension_numbers = #tpu.dot_dimension_numbers<[1], [0], [0], [1], [0, 0, 1, 1], [], []>} : vector<16x256xf32>, vector<256x128xf32>, vector<16x128xf32> -> vector<16x128xf32>
    %19 = arith.addf %13, %18 : vector<16x128xf32>
    %c3 = arith.constant 3 : index
    %c0_20 = arith.constant 0 : index
    %c0_21 = arith.constant 0 : index
    %20 = vector.load %arg4[%c3, %c0_20, %c0_21] : memref<13x16x256xf32, #tpu.memory_space<vmem>>, vector<1x16x256xf32>
    %21 = vector.shape_cast %20 : vector<1x16x256xf32> to vector<16x256xf32>
    %c3_22 = arith.constant 3 : index
    %c0_23 = arith.constant 0 : index
    %c0_24 = arith.constant 0 : index
    %22 = vector.load %arg7[%c3_22, %c0_23, %c0_24] : memref<13x256x128xf32, #tpu.memory_space<vmem>>, vector<1x256x128xf32>
    %23 = vector.shape_cast %22 : vector<1x256x128xf32> to vector<256x128xf32>
    %cst_25 = arith.constant dense<0.000000e+00> : vector<16x128xf32>
    %24 = tpu.matmul %21, %23, %cst_25 {dimension_numbers = #tpu.dot_dimension_numbers<[1], [0], [0], [1], [0, 0, 1, 1], [], []>} : vector<16x256xf32>, vector<256x128xf32>, vector<16x128xf32> -> vector<16x128xf32>
    %25 = arith.addf %19, %24 : vector<16x128xf32>
    %c4 = arith.constant 4 : index
    %c0_26 = arith.constant 0 : index
    %c0_27 = arith.constant 0 : index
    %26 = vector.load %arg4[%c4, %c0_26, %c0_27] : memref<13x16x256xf32, #tpu.memory_space<vmem>>, vector<1x16x256xf32>
    %27 = vector.shape_cast %26 : vector<1x16x256xf32> to vector<16x256xf32>
    %c4_28 = arith.constant 4 : index
    %c0_29 = arith.constant 0 : index
    %c0_30 = arith.constant 0 : index
    %28 = vector.load %arg7[%c4_28, %c0_29, %c0_30] : memref<13x256x128xf32, #tpu.memory_space<vmem>>, vector<1x256x128xf32>
    %29 = vector.shape_cast %28 : vector<1x256x128xf32> to vector<256x128xf32>
    %cst_31 = arith.constant dense<0.000000e+00> : vector<16x128xf32>
    %30 = tpu.matmul %27, %29, %cst_31 {dimension_numbers = #tpu.dot_dimension_numbers<[1], [0], [0], [1], [0, 0, 1, 1], [], []>} : vector<16x256xf32>, vector<256x128xf32>, vector<16x128xf32> -> vector<16x128xf32>
    %31 = arith.addf %25, %30 : vector<16x128xf32>
    %c5 = arith.constant 5 : index
    %c0_32 = arith.constant 0 : index
    %c0_33 = arith.constant 0 : index
    %32 = vector.load %arg4[%c5, %c0_32, %c0_33] : memref<13x16x256xf32, #tpu.memory_space<vmem>>, vector<1x16x256xf32>
    %33 = vector.shape_cast %32 : vector<1x16x256xf32> to vector<16x256xf32>
    %c5_34 = arith.constant 5 : index
    %c0_35 = arith.constant 0 : index
    %c0_36 = arith.constant 0 : index
    %34 = vector.load %arg7[%c5_34, %c0_35, %c0_36] : memref<13x256x128xf32, #tpu.memory_space<vmem>>, vector<1x256x128xf32>
    %35 = vector.shape_cast %34 : vector<1x256x128xf32> to vector<256x128xf32>
    %cst_37 = arith.constant dense<0.000000e+00> : vector<16x128xf32>
    %36 = tpu.matmul %33, %35, %cst_37 {dimension_numbers = #tpu.dot_dimension_numbers<[1], [0], [0], [1], [0, 0, 1, 1], [], []>} : vector<16x256xf32>, vector<256x128xf32>, vector<16x128xf32> -> vector<16x128xf32>
    %37 = arith.addf %31, %36 : vector<16x128xf32>
    %c6 = arith.constant 6 : index
    %c0_38 = arith.constant 0 : index
    %c0_39 = arith.constant 0 : index
    %38 = vector.load %arg4[%c6, %c0_38, %c0_39] : memref<13x16x256xf32, #tpu.memory_space<vmem>>, vector<1x16x256xf32>
    %39 = vector.shape_cast %38 : vector<1x16x256xf32> to vector<16x256xf32>
    %c6_40 = arith.constant 6 : index
    %c0_41 = arith.constant 0 : index
    %c0_42 = arith.constant 0 : index
    %40 = vector.load %arg7[%c6_40, %c0_41, %c0_42] : memref<13x256x128xf32, #tpu.memory_space<vmem>>, vector<1x256x128xf32>
    %41 = vector.shape_cast %40 : vector<1x256x128xf32> to vector<256x128xf32>
    %cst_43 = arith.constant dense<0.000000e+00> : vector<16x128xf32>
    %42 = tpu.matmul %39, %41, %cst_43 {dimension_numbers = #tpu.dot_dimension_numbers<[1], [0], [0], [1], [0, 0, 1, 1], [], []>} : vector<16x256xf32>, vector<256x128xf32>, vector<16x128xf32> -> vector<16x128xf32>
    %43 = arith.addf %37, %42 : vector<16x128xf32>
    %c7 = arith.constant 7 : index
    %c0_44 = arith.constant 0 : index
    %c0_45 = arith.constant 0 : index
    %44 = vector.load %arg4[%c7, %c0_44, %c0_45] : memref<13x16x256xf32, #tpu.memory_space<vmem>>, vector<1x16x256xf32>
    %45 = vector.shape_cast %44 : vector<1x16x256xf32> to vector<16x256xf32>
    %c7_46 = arith.constant 7 : index
    %c0_47 = arith.constant 0 : index
    %c0_48 = arith.constant 0 : index
    %46 = vector.load %arg7[%c7_46, %c0_47, %c0_48] : memref<13x256x128xf32, #tpu.memory_space<vmem>>, vector<1x256x128xf32>
    %47 = vector.shape_cast %46 : vector<1x256x128xf32> to vector<256x128xf32>
    %cst_49 = arith.constant dense<0.000000e+00> : vector<16x128xf32>
    %48 = tpu.matmul %45, %47, %cst_49 {dimension_numbers = #tpu.dot_dimension_numbers<[1], [0], [0], [1], [0, 0, 1, 1], [], []>} : vector<16x256xf32>, vector<256x128xf32>, vector<16x128xf32> -> vector<16x128xf32>
    %49 = arith.addf %43, %48 : vector<16x128xf32>
    %c8 = arith.constant 8 : index
    %c0_50 = arith.constant 0 : index
    %c0_51 = arith.constant 0 : index
    %50 = vector.load %arg4[%c8, %c0_50, %c0_51] : memref<13x16x256xf32, #tpu.memory_space<vmem>>, vector<1x16x256xf32>
    %51 = vector.shape_cast %50 : vector<1x16x256xf32> to vector<16x256xf32>
    %c8_52 = arith.constant 8 : index
    %c0_53 = arith.constant 0 : index
    %c0_54 = arith.constant 0 : index
    %52 = vector.load %arg7[%c8_52, %c0_53, %c0_54] : memref<13x256x128xf32, #tpu.memory_space<vmem>>, vector<1x256x128xf32>
    %53 = vector.shape_cast %52 : vector<1x256x128xf32> to vector<256x128xf32>
    %cst_55 = arith.constant dense<0.000000e+00> : vector<16x128xf32>
    %54 = tpu.matmul %51, %53, %cst_55 {dimension_numbers = #tpu.dot_dimension_numbers<[1], [0], [0], [1], [0, 0, 1, 1], [], []>} : vector<16x256xf32>, vector<256x128xf32>, vector<16x128xf32> -> vector<16x128xf32>
    %55 = arith.addf %49, %54 : vector<16x128xf32>
    %c9 = arith.constant 9 : index
    %c0_56 = arith.constant 0 : index
    %c0_57 = arith.constant 0 : index
    %56 = vector.load %arg4[%c9, %c0_56, %c0_57] : memref<13x16x256xf32, #tpu.memory_space<vmem>>, vector<1x16x256xf32>
    %57 = vector.shape_cast %56 : vector<1x16x256xf32> to vector<16x256xf32>
    %c9_58 = arith.constant 9 : index
    %c0_59 = arith.constant 0 : index
    %c0_60 = arith.constant 0 : index
    %58 = vector.load %arg7[%c9_58, %c0_59, %c0_60] : memref<13x256x128xf32, #tpu.memory_space<vmem>>, vector<1x256x128xf32>
    %59 = vector.shape_cast %58 : vector<1x256x128xf32> to vector<256x128xf32>
    %cst_61 = arith.constant dense<0.000000e+00> : vector<16x128xf32>
    %60 = tpu.matmul %57, %59, %cst_61 {dimension_numbers = #tpu.dot_dimension_numbers<[1], [0], [0], [1], [0, 0, 1, 1], [], []>} : vector<16x256xf32>, vector<256x128xf32>, vector<16x128xf32> -> vector<16x128xf32>
    %61 = arith.addf %55, %60 : vector<16x128xf32>
    %c10 = arith.constant 10 : index
    %c0_62 = arith.constant 0 : index
    %c0_63 = arith.constant 0 : index
    %62 = vector.load %arg4[%c10, %c0_62, %c0_63] : memref<13x16x256xf32, #tpu.memory_space<vmem>>, vector<1x16x256xf32>
    %63 = vector.shape_cast %62 : vector<1x16x256xf32> to vector<16x256xf32>
    %c10_64 = arith.constant 10 : index
    %c0_65 = arith.constant 0 : index
    %c0_66 = arith.constant 0 : index
    %64 = vector.load %arg7[%c10_64, %c0_65, %c0_66] : memref<13x256x128xf32, #tpu.memory_space<vmem>>, vector<1x256x128xf32>
    %65 = vector.shape_cast %64 : vector<1x256x128xf32> to vector<256x128xf32>
    %cst_67 = arith.constant dense<0.000000e+00> : vector<16x128xf32>
    %66 = tpu.matmul %63, %65, %cst_67 {dimension_numbers = #tpu.dot_dimension_numbers<[1], [0], [0], [1], [0, 0, 1, 1], [], []>} : vector<16x256xf32>, vector<256x128xf32>, vector<16x128xf32> -> vector<16x128xf32>
    %67 = arith.addf %61, %66 : vector<16x128xf32>
    %c11 = arith.constant 11 : index
    %c0_68 = arith.constant 0 : index
    %c0_69 = arith.constant 0 : index
    %68 = vector.load %arg4[%c11, %c0_68, %c0_69] : memref<13x16x256xf32, #tpu.memory_space<vmem>>, vector<1x16x256xf32>
    %69 = vector.shape_cast %68 : vector<1x16x256xf32> to vector<16x256xf32>
    %c11_70 = arith.constant 11 : index
    %c0_71 = arith.constant 0 : index
    %c0_72 = arith.constant 0 : index
    %70 = vector.load %arg7[%c11_70, %c0_71, %c0_72] : memref<13x256x128xf32, #tpu.memory_space<vmem>>, vector<1x256x128xf32>
    %71 = vector.shape_cast %70 : vector<1x256x128xf32> to vector<256x128xf32>
    %cst_73 = arith.constant dense<0.000000e+00> : vector<16x128xf32>
    %72 = tpu.matmul %69, %71, %cst_73 {dimension_numbers = #tpu.dot_dimension_numbers<[1], [0], [0], [1], [0, 0, 1, 1], [], []>} : vector<16x256xf32>, vector<256x128xf32>, vector<16x128xf32> -> vector<16x128xf32>
    %73 = arith.addf %67, %72 : vector<16x128xf32>
    %c12 = arith.constant 12 : index
    %c0_74 = arith.constant 0 : index
    %c0_75 = arith.constant 0 : index
    %74 = vector.load %arg4[%c12, %c0_74, %c0_75] : memref<13x16x256xf32, #tpu.memory_space<vmem>>, vector<1x16x256xf32>
    %75 = vector.shape_cast %74 : vector<1x16x256xf32> to vector<16x256xf32>
    %c12_76 = arith.constant 12 : index
    %c0_77 = arith.constant 0 : index
    %c0_78 = arith.constant 0 : index
    %76 = vector.load %arg7[%c12_76, %c0_77, %c0_78] : memref<13x256x128xf32, #tpu.memory_space<vmem>>, vector<1x256x128xf32>
    %77 = vector.shape_cast %76 : vector<1x256x128xf32> to vector<256x128xf32>
    %cst_79 = arith.constant dense<0.000000e+00> : vector<16x128xf32>
    %78 = tpu.matmul %75, %77, %cst_79 {dimension_numbers = #tpu.dot_dimension_numbers<[1], [0], [0], [1], [0, 0, 1, 1], [], []>} : vector<16x256xf32>, vector<256x128xf32>, vector<16x128xf32> -> vector<16x128xf32>
    %79 = arith.addf %73, %78 : vector<16x128xf32>
    %cst_80 = arith.constant dense<0xFF800000> : vector<128xf32>
    %80 = vector.multi_reduction <maximumf>, %79, %cst_80 [0] : vector<16x128xf32> to vector<128xf32>
    %81 = vector.shape_cast %80 : vector<128xf32> to vector<1x128xf32>
    %82 = vector.broadcast %81 : vector<1x128xf32> to vector<16x128xf32>
    %83 = arith.subf %79, %82 : vector<16x128xf32>
    %84 = math.exp %83 : vector<16x128xf32>
    %cst_81 = arith.constant dense<0.000000e+00> : vector<128xf32>
    %85 = vector.multi_reduction <add>, %84, %cst_81 [0] : vector<16x128xf32> to vector<128xf32>
    %86 = vector.shape_cast %85 : vector<128xf32> to vector<1x128xf32>
    %87 = math.log %86 : vector<1x128xf32>
    %88 = vector.broadcast %87 : vector<1x128xf32> to vector<16x128xf32>
    %89 = arith.subf %83, %88 : vector<16x128xf32>
    %c0_82 = arith.constant 0 : index
    %c0_83 = arith.constant 0 : index
    %90 = vector.load %arg6[%c0_82, %c0_83] : memref<16x128xf32, #tpu.memory_space<vmem>>, vector<16x128xf32>
    tpu.vector_store %arg6[%c0_82, %c0_83], %89 {strides = array<i32>} : memref<16x128xf32, #tpu.memory_space<vmem>>, vector<16x128xf32>,
    return
  }
  func.func @transform_0(%arg0: i32) -> (i32, i32) {
    %c0_i32 = arith.constant 0 : i32
    %c0_i32_0 = arith.constant 0 : i32
    %c0_i32_1 = arith.constant 0 : i32
    return %c0_i32, %c0_i32_0 : i32, i32
  }
  func.func @transform_1(%arg0: i32) -> i32 {
    %c0_i32 = arith.constant 0 : i32
    %c0_i32_0 = arith.constant 0 : i32
    return %c0_i32 : i32
  }
  func.func @transform_2(%arg0: i32) -> (i32, i32, i32, i32) {
    %c0_i32 = arith.constant 0 : i32
    %c0_i32_0 = arith.constant 0 : i32
    %c0_i32_1 = arith.constant 0 : i32
    %c0_i32_2 = arith.constant 0 : i32
    return %c0_i32, %c0_i32_0, %c0_i32_1, %arg0 : i32, i32, i32, i32
  }
  func.func @transform_3(%arg0: i32) -> (i32, i32, i32) {
    %c0_i32 = arith.constant 0 : i32
    %c0_i32_0 = arith.constant 0 : i32
    %c0_i32_1 = arith.constant 0 : i32
    %c0_i32_2 = arith.constant 0 : i32
    return %c0_i32, %c0_i32_0, %c0_i32_1 : i32, i32, i32
  }
  func.func @transform_4(%arg0: i32) -> (i32, i32) {
    %c0_i32 = arith.constant 0 : i32
    %c0_i32_0 = arith.constant 0 : i32
    %c0_i32_1 = arith.constant 0 : i32
    return %c0_i32, %c0_i32_0 : i32, i32
  }
  func.func @transform_5(%arg0: i32) -> (i32, i32) {
    %c0_i32 = arith.constant 0 : i32
    %c0_i32_0 = arith.constant 0 : i32
    return %c0_i32, %arg0 : i32, i32
  }
}

</mosaic_0001>

<llo_original>
// kernel: net_forward.1
$region0: #{net_forward.1}
  #allocation0 [shape = 'u32[]', space=smem, size = 0x4, offset = 0x4, fixed_abs, tag = 'smem constant byte address 0x4 - core index']
  #allocation1 [shape = 'u32[144,128]{1,0:T(1,128)}', space=vmem, size = 0x12000, scoped, tag = 'internal scratch']
  #allocation2 [shape = 'f32[13,256,128]{2,1,0:T(8,128)}', space=vmem, size = 0x1a0000, scoped, tag = 'scratch operand']
  %s0 = inlined_call_operand.vmem [shape: f32[16,9], index: 0, kind: input, shape index: {}]
  %s1 = inlined_call_operand.vmem [shape: f32[16], index: 1, kind: input, shape index: {}]
  %s2 = inlined_call_operand.vmem [shape: f32[2,28,24,128], index: 2, kind: input, shape index: {}]
  %s3 = inlined_call_operand.vmem [shape: f32[13,16,256], index: 3, kind: input, shape index: {}]
  %s4 = inlined_call_operand.vmem [shape: f32[16,128], index: 4, kind: input, shape index: {}]
  %s5 = inlined_call_operand.vmem [shape: f32[16,128], index: 5, kind: output, shape index: {}]
  %s6 = sld [smem:[#allocation0]]
  $region45: #{net_forward.1} parent=0
    _
  %s8 = ssub.s32 1, %s6
  %s9 = scalar_select 0, %s8, %s6
  $region1: #{net_forward.1} parent=0
    #allocation3 [shape = 'u8[8192]{0}', space=smem, size = 0x2000, scoped, tag = 'input window, operand 0, single buffered']
    #allocation4 [shape = 's32[1]{0}', space=sflag, size = 0x4, scoped, tag = 'scoped memory for net_forward.1']
    #allocation5 [shape = 'u8[512]{0}', space=smem, size = 0x200, scoped, tag = 'input window, operand 1, single buffered']
    #allocation6 [shape = 's32[1]{0}', space=sflag, size = 0x4, scoped, tag = 'scoped memory for net_forward.1']
    %10 = vsyncpa [#allocation4], 0
    %11 = vsyncpa [#allocation6], 0
    // Predicated region
    $region2: #{net_forward.1} parent=1 // pred_check
      _
    $region3: #{net_forward.1} parent=1 // pred_check_branch
      %13 = sbr.rel (0) target = $region5
    $region4: #{net_forward.1} parent=1 // pred_region
      %s15 = ssub.s32 256, 256
      %16 = vsyncadd [#allocation4], %s15
      %s17 = sshll.u32 %s0, 4
      %s18 = int_to_ptr.vmem [resolvable:$true] %s17
      %23 = dma.vmem_to_smem %s18, 256, [#allocation3], [#allocation4], 128, 128, 8
    $region5: #{net_forward.1} parent=1 // pred_fallthru
      _
    // Predicated region
    $region6: #{net_forward.1} parent=1 // pred_check
      _
    $region7: #{net_forward.1} parent=1 // pred_check_branch
      %25 = sbr.rel (0) target = $region9
    $region8: #{net_forward.1} parent=1 // pred_region
      %s27 = ssub.s32 16, 16
      %28 = vsyncadd [#allocation6], %s27
      %s30 = sshll.u32 %s1, 4
      %s31 = int_to_ptr.vmem [resolvable:$true] %s30
      %33 = dma.vmem_to_smem %s31, 16, [#allocation5], [#allocation6]
    $region9: #{net_forward.1} parent=1 // pred_fallthru
      _
    // Predicated region
    $region10: #{net_forward.1} parent=1 // pred_check
      _
    $region11: #{net_forward.1} parent=1 // pred_check_branch
      %35 = sbr.rel (0) target = $region13
    $region12: #{net_forward.1} parent=1 // pred_region
      _
    $region13: #{net_forward.1} parent=1 // pred_fallthru
      _
    // Predicated region
    $region14: #{net_forward.1} parent=1 // pred_check
      _
    $region15: #{net_forward.1} parent=1 // pred_check_branch
      %37 = sbr.rel (0) target = $region17
    $region16: #{net_forward.1} parent=1 // pred_region
      _
    $region17: #{net_forward.1} parent=1 // pred_fallthru
      _
    // Predicated region
    $region18: #{net_forward.1} parent=1 // pred_check
      _
    $region19: #{net_forward.1} parent=1 // pred_check_branch
      %39 = sbr.rel (0) target = $region21
    $region20: #{net_forward.1} parent=1 // pred_region
      _
    $region21: #{net_forward.1} parent=1 // pred_fallthru
      _
    // Predicated region
    $region22: #{net_forward.1} parent=1 // pred_check
      _
    $region23: #{net_forward.1} parent=1 // pred_check_branch
      %41 = sbr.rel (0) target = $region25
    $region24: #{net_forward.1} parent=1 // pred_region
      %42 = dma.done [#allocation4], 256
    $region25: #{net_forward.1} parent=1 // pred_fallthru
      _
    // Predicated region
    $region26: #{net_forward.1} parent=1 // pred_check
      _
    $region27: #{net_forward.1} parent=1 // pred_check_branch
      %44 = sbr.rel (0) target = $region29
    $region28: #{net_forward.1} parent=1 // pred_region
      %45 = dma.done [#allocation6], 16
    $region29: #{net_forward.1} parent=1 // pred_fallthru
      _
    %46 = sfence
    loop: start=0, step=1, limit=13
    $region30: #{net_forward.1} parent=1 // loop_pre_header
      _
    $region31: #{net_forward.1} parent=1 // loop_header
      %s48 = sphi 0, %s52
      %p49 = scmp.ge.s32.totalorder %s48, 13
    $region32: #{net_forward.1} parent=1 // loop_header_branch
      %51 = sbr.rel (%p49) target = $region36
    $region33: #{net_forward.1} parent=1 // loop_body
      %s53 = smul.u32 %s48, 2
      %s54 = smul.u32 %s53, 24
      %s55 = scalar_lea.vmem %s2, %s54
      %v56 = vld [vmem:[%s55] sm:$0xff]
      %v57 = vld [vmem:[%s55 + $0x8] sm:$0xff]
      %s58 = sadd.s32 %s54, 672
      %s59 = scalar_lea.vmem %s2, %s58
      %v60 = vld [vmem:[%s59] sm:$0xff]
      %v61 = vld [vmem:[%s59 + $0x8] sm:$0xff]
      %v62 = vld [vmem:[%s55 + $0x1] sm:$0xff]
      %v63 = vld [vmem:[%s55 + $0x9] sm:$0xff]
      %v64 = vld [vmem:[%s59 + $0x1] sm:$0xff]
      %v65 = vld [vmem:[%s59 + $0x9] sm:$0xff]
      %s66 = sadd.s32 %s53, 1
      %s67 = smul.u32 %s66, 24
      %s68 = scalar_lea.vmem %s2, %s67
      %v69 = vld [vmem:[%s68] sm:$0xff]
      %v70 = vld [vmem:[%s68 + $0x8] sm:$0xff]
      %s71 = sadd.s32 %s67, 672
      %s72 = scalar_lea.vmem %s2, %s71
      %v73 = vld [vmem:[%s72] sm:$0xff]
      %v74 = vld [vmem:[%s72 + $0x8] sm:$0xff]
      %v75 = vld [vmem:[%s68 + $0x1] sm:$0xff]
      %v76 = vld [vmem:[%s68 + $0x9] sm:$0xff]
      %v77 = vld [vmem:[%s72 + $0x1] sm:$0xff]
      %v78 = vld [vmem:[%s72 + $0x9] sm:$0xff]
      %s79 = sadd.s32 %s53, 2
      %s80 = smul.u32 %s79, 24
      %s81 = scalar_lea.vmem %s2, %s80
      %v82 = vld [vmem:[%s81] sm:$0xff]
      %v83 = vld [vmem:[%s81 + $0x8] sm:$0xff]
      %s84 = sadd.s32 %s80, 672
      %s85 = scalar_lea.vmem %s2, %s84
      %v86 = vld [vmem:[%s85] sm:$0xff]
      %v87 = vld [vmem:[%s85 + $0x8] sm:$0xff]
      %v88 = vld [vmem:[%s81 + $0x1] sm:$0xff]
      %v89 = vld [vmem:[%s81 + $0x9] sm:$0xff]
      %v90 = vld [vmem:[%s85 + $0x1] sm:$0xff]
      %v91 = vld [vmem:[%s85 + $0x9] sm:$0xff]
      %s92 = sadd.s32 %s53, 3
      %s93 = smul.u32 %s92, 24
      %s94 = scalar_lea.vmem %s2, %s93
      %v95 = vld [vmem:[%s94] sm:$0xff]
      %v96 = vld [vmem:[%s94 + $0x8] sm:$0xff]
      %s97 = sadd.s32 %s93, 672
      %s98 = scalar_lea.vmem %s2, %s97
      %v99 = vld [vmem:[%s98] sm:$0xff]
      %v100 = vld [vmem:[%s98 + $0x8] sm:$0xff]
      %v101 = vld [vmem:[%s94 + $0x1] sm:$0xff]
      %v102 = vld [vmem:[%s94 + $0x9] sm:$0xff]
      %v103 = vld [vmem:[%s98 + $0x1] sm:$0xff]
      %v104 = vld [vmem:[%s98 + $0x9] sm:$0xff]
      %s105 = sld [smem:[#allocation3]]
      %v106 = vstv %s105
      %v107 = vmul.f32 %v106, %v56
      %v108 = vmul.f32 %v106, %v57
      %s109 = sld [smem:[#allocation3 + $0x1]]
      %v110 = vstv %s109
      %v111 = vmul.f32 %v110, %v60
      %v112 = vmul.f32 %v110, %v61
      %v113 = vadd.f32 %v107, %v111
      %v114 = vadd.f32 %v108, %v112
      %s115 = sld [smem:[#allocation3 + $0x2]]
      %v116 = vstv %s115
      %v117 = vmul.f32 %v116, %v62
      %v118 = vmul.f32 %v116, %v63
      %v119 = vadd.f32 %v113, %v117
      %v120 = vadd.f32 %v114, %v118
      %s121 = sld [smem:[#allocation3 + $0x3]]
      %v122 = vstv %s121
      %v123 = vmul.f32 %v122, %v69
      %v124 = vmul.f32 %v122, %v70
      %v125 = vadd.f32 %v119, %v123
      %v126 = vadd.f32 %v120, %v124
      %s127 = sld [smem:[#allocation3 + $0x4]]
      %v128 = vstv %s127
      %v129 = vmul.f32 %v128, %v73
      %v130 = vmul.f32 %v128, %v74
      %v131 = vadd.f32 %v125, %v129
      %v132 = vadd.f32 %v126, %v130
      %s133 = sld [smem:[#allocation3 + $0x5]]
      %v134 = vstv %s133
      %v135 = vmul.f32 %v134, %v75
      %v136 = vmul.f32 %v134, %v76
      %v137 = vadd.f32 %v131, %v135
      %v138 = vadd.f32 %v132, %v136
      %s139 = sld [smem:[#allocation3 + $0x6]]
      %v140 = vstv %s139
      %v141 = vmul.f32 %v140, %v82
      %v142 = vmul.f32 %v140, %v83
      %v143 = vadd.f32 %v137, %v141
      %v144 = vadd.f32 %v138, %v142
      %s145 = sld [smem:[#allocation3 + $0x7]]
      %v146 = vstv %s145
      %v147 = vmul.f32 %v146, %v86
      %v148 = vmul.f32 %v146, %v87
      %v149 = vadd.f32 %v143, %v147
      %v150 = vadd.f32 %v144, %v148
      %s151 = sld [smem:[#allocation3 + $0x8]]
      %v152 = vstv %s151
      %v153 = vmul.f32 %v152, %v88
      %v154 = vmul.f32 %v152, %v89
      %v155 = vadd.f32 %v149, %v153
      %v156 = vadd.f32 %v150, %v154
      %v157 = vmul.f32 %v106, %v60
      %v158 = vmul.f32 %v106, %v61
      %v159 = vmul.f32 %v110, %v62
      %v160 = vmul.f32 %v110, %v63
      %v161 = vadd.f32 %v157, %v159
      %v162 = vadd.f32 %v158, %v160
      %v163 = vmul.f32 %v116, %v64
      %v164 = vmul.f32 %v116, %v65
      %v165 = vadd.f32 %v161, %v163
      %v166 = vadd.f32 %v162, %v164
      %v167 = vmul.f32 %v122, %v73
      %v168 = vmul.f32 %v122, %v74
      %v169 = vadd.f32 %v165, %v167
      %v170 = vadd.f32 %v166, %v168
      %v171 = vmul.f32 %v128, %v75
      %v172 = vmul.f32 %v128, %v76
      %v173 = vadd.f32 %v169, %v171
      %v174 = vadd.f32 %v170, %v172
      %v175 = vmul.f32 %v134, %v77
      %v176 = vmul.f32 %v134, %v78
      %v177 = vadd.f32 %v173, %v175
      %v178 = vadd.f32 %v174, %v176
      %v179 = vmul.f32 %v140, %v86
      %v180 = vmul.f32 %v140, %v87
      %v181 = vadd.f32 %v177, %v179
      %v182 = vadd.f32 %v178, %v180
      %v183 = vmul.f32 %v146, %v88
      %v184 = vmul.f32 %v146, %v89
      %v185 = vadd.f32 %v181, %v183
      %v186 = vadd.f32 %v182, %v184
      %v187 = vmul.f32 %v152, %v90
      %v188 = vmul.f32 %v152, %v91
      %v189 = vadd.f32 %v185, %v187
      %v190 = vadd.f32 %v186, %v188
      %v191 = vmul.f32 %v106, %v69
      %v192 = vmul.f32 %v106, %v70
      %v193 = vmul.f32 %v110, %v73
      %v194 = vmul.f32 %v110, %v74
      %v195 = vadd.f32 %v191, %v193
      %v196 = vadd.f32 %v192, %v194
      %v197 = vmul.f32 %v116, %v75
      %v198 = vmul.f32 %v116, %v76
      %v199 = vadd.f32 %v195, %v197
      %v200 = vadd.f32 %v196, %v198
      %v201 = vmul.f32 %v122, %v82
      %v202 = vmul.f32 %v122, %v83
      %v203 = vadd.f32 %v199, %v201
      %v204 = vadd.f32 %v200, %v202
      %v205 = vmul.f32 %v128, %v86
      %v206 = vmul.f32 %v128, %v87
      %v207 = vadd.f32 %v203, %v205
      %v208 = vadd.f32 %v204, %v206
      %v209 = vmul.f32 %v134, %v88
      %v210 = vmul.f32 %v134, %v89
      %v211 = vadd.f32 %v207, %v209
      %v212 = vadd.f32 %v208, %v210
      %v213 = vmul.f32 %v140, %v95
      %v214 = vmul.f32 %v140, %v96
      %v215 = vadd.f32 %v211, %v213
      %v216 = vadd.f32 %v212, %v214
      %v217 = vmul.f32 %v146, %v99
      %v218 = vmul.f32 %v146, %v100
      %v219 = vadd.f32 %v215, %v217
      %v220 = vadd.f32 %v216, %v218
      %v221 = vmul.f32 %v152, %v101
      %v222 = vmul.f32 %v152, %v102
      %v223 = vadd.f32 %v219, %v221
      %v224 = vadd.f32 %v220, %v222
      %v225 = vmul.f32 %v106, %v73
      %v226 = vmul.f32 %v106, %v74
      %v227 = vmul.f32 %v110, %v75
      %v228 = vmul.f32 %v110, %v76
      %v229 = vadd.f32 %v225, %v227
      %v230 = vadd.f32 %v226, %v228
      %v231 = vmul.f32 %v116, %v77
      %v232 = vmul.f32 %v116, %v78
      %v233 = vadd.f32 %v229, %v231
      %v234 = vadd.f32 %v230, %v232
      %v235 = vmul.f32 %v122, %v86
      %v236 = vmul.f32 %v122, %v87
      %v237 = vadd.f32 %v233, %v235
      %v238 = vadd.f32 %v234, %v236
      %v239 = vmul.f32 %v128, %v88
      %v240 = vmul.f32 %v128, %v89
      %v241 = vadd.f32 %v237, %v239
      %v242 = vadd.f32 %v238, %v240
      %v243 = vmul.f32 %v134, %v90
      %v244 = vmul.f32 %v134, %v91
      %v245 = vadd.f32 %v241, %v243
      %v246 = vadd.f32 %v242, %v244
      %v247 = vmul.f32 %v140, %v99
      %v248 = vmul.f32 %v140, %v100
      %v249 = vadd.f32 %v245, %v247
      %v250 = vadd.f32 %v246, %v248
      %v251 = vmul.f32 %v146, %v101
      %v252 = vmul.f32 %v146, %v102
      %v253 = vadd.f32 %v249, %v251
      %v254 = vadd.f32 %v250, %v252
      %v255 = vmul.f32 %v152, %v103
      %v256 = vmul.f32 %v152, %v104
      %v257 = vadd.f32 %v253, %v255
      %v258 = vadd.f32 %v254, %v256
      %v259 = vmax.f32 %v155, %v189
      %v260 = vmax.f32 %v156, %v190
      %v261 = vmax.f32 %v223, %v257
      %v262 = vmax.f32 %v224, %v258
      %v263 = vmax.f32 %v259, %v261
      %v264 = vmax.f32 %v260, %v262
      %s265 = sld [smem:[#allocation5]]
      %v266 = vstv %s265
      %v267 = vadd.f32 %v263, %v266
      %v268 = vadd.f32 %v264, %v266
      %v269 = vmax.f32 %v267, 0.0
      %v270 = vmax.f32 %v268, 0.0
      %s271 = smul.u32 %s48, 256
      %s272 = scalar_lea.vmem [#allocation2], %s271
      %273 = vst [vmem:[%s272] sm:$0xff] %v269
      %274 = vst [vmem:[%s272 + $0x8] sm:$0xff] %v270
      %s275 = sld [smem:[#allocation3 + $0x80]]
      %v276 = vstv %s275
      %v277 = vmul.f32 %v276, %v56
      %v278 = vmul.f32 %v276, %v57
      %s279 = sld [smem:[#allocation3 + $0x81]]
      %v280 = vstv %s279
      %v281 = vmul.f32 %v280, %v60
      %v282 = vmul.f32 %v280, %v61
      %v283 = vadd.f32 %v277, %v281
      %v284 = vadd.f32 %v278, %v282
      %s285 = sld [smem:[#allocation3 + $0x82]]
      %v286 = vstv %s285
      %v287 = vmul.f32 %v286, %v62
      %v288 = vmul.f32 %v286, %v63
      %v289 = vadd.f32 %v283, %v287
      %v290 = vadd.f32 %v284, %v288
      %s291 = sld [smem:[#allocation3 + $0x83]]
      %v292 = vstv %s291
      %v293 = vmul.f32 %v292, %v69
      %v294 = vmul.f32 %v292, %v70
      %v295 = vadd.f32 %v289, %v293
      %v296 = vadd.f32 %v290, %v294
      %s297 = sld [smem:[#allocation3 + $0x84]]
      %v298 = vstv %s297
      %v299 = vmul.f32 %v298, %v73
      %v300 = vmul.f32 %v298, %v74
      %v301 = vadd.f32 %v295, %v299
      %v302 = vadd.f32 %v296, %v300
      %s303 = sld [smem:[#allocation3 + $0x85]]
      %v304 = vstv %s303
      %v305 = vmul.f32 %v304, %v75
      %v306 = vmul.f32 %v304, %v76
      %v307 = vadd.f32 %v301, %v305
      %v308 = vadd.f32 %v302, %v306
      %s309 = sld [smem:[#allocation3 + $0x86]]
      %v310 = vstv %s309
      %v311 = vmul.f32 %v310, %v82
      %v312 = vmul.f32 %v310, %v83
      %v313 = vadd.f32 %v307, %v311
      %v314 = vadd.f32 %v308, %v312
      %s315 = sld [smem:[#allocation3 + $0x87]]
      %v316 = vstv %s315
      %v317 = vmul.f32 %v316, %v86
      %v318 = vmul.f32 %v316, %v87
      %v319 = vadd.f32 %v313, %v317
      %v320 = vadd.f32 %v314, %v318
      %s321 = sld [smem:[#allocation3 + $0x88]]
      %v322 = vstv %s321
      %v323 = vmul.f32 %v322, %v88
      %v324 = vmul.f32 %v322, %v89
      %v325 = vadd.f32 %v319, %v323
      %v326 = vadd.f32 %v320, %v324
      %v327 = vmul.f32 %v276, %v60
      %v328 = vmul.f32 %v276, %v61
      %v329 = vmul.f32 %v280, %v62
      %v330 = vmul.f32 %v280, %v63
      %v331 = vadd.f32 %v327, %v329
      %v332 = vadd.f32 %v328, %v330
      %v333 = vmul.f32 %v286, %v64
      %v334 = vmul.f32 %v286, %v65
      %v335 = vadd.f32 %v331, %v333
      %v336 = vadd.f32 %v332, %v334
      %v337 = vmul.f32 %v292, %v73
      %v338 = vmul.f32 %v292, %v74
      %v339 = vadd.f32 %v335, %v337
      %v340 = vadd.f32 %v336, %v338
      %v341 = vmul.f32 %v298, %v75
      %v342 = vmul.f32 %v298, %v76
      %v343 = vadd.f32 %v339, %v341
      %v344 = vadd.f32 %v340, %v342
      %v345 = vmul.f32 %v304, %v77
      %v346 = vmul.f32 %v304, %v78
      %v347 = vadd.f32 %v343, %v345
      %v348 = vadd.f32 %v344, %v346
      %v349 = vmul.f32 %v310, %v86
      %v350 = vmul.f32 %v310, %v87
      %v351 = vadd.f32 %v347, %v349
      %v352 = vadd.f32 %v348, %v350
      %v353 = vmul.f32 %v316, %v88
      %v354 = vmul.f32 %v316, %v89
      %v355 = vadd.f32 %v351, %v353
      %v356 = vadd.f32 %v352, %v354
      %v357 = vmul.f32 %v322, %v90
      %v358 = vmul.f32 %v322, %v91
      %v359 = vadd.f32 %v355, %v357
      %v360 = vadd.f32 %v356, %v358
      %v361 = vmul.f32 %v276, %v69
      %v362 = vmul.f32 %v276, %v70
      %v363 = vmul.f32 %v280, %v73
      %v364 = vmul.f32 %v280, %v74
      %v365 = vadd.f32 %v361, %v363
      %v366 = vadd.f32 %v362, %v364
      %v367 = vmul.f32 %v286, %v75
      %v368 = vmul.f32 %v286, %v76
      %v369 = vadd.f32 %v365, %v367
      %v370 = vadd.f32 %v366, %v368
      %v371 = vmul.f32 %v292, %v82
      %v372 = vmul.f32 %v292, %v83
      %v373 = vadd.f32 %v369, %v371
      %v374 = vadd.f32 %v370, %v372
      %v375 = vmul.f32 %v298, %v86
      %v376 = vmul.f32 %v298, %v87
      %v377 = vadd.f32 %v373, %v375
      %v378 = vadd.f32 %v374, %v376
      %v379 = vmul.f32 %v304, %v88
      %v380 = vmul.f32 %v304, %v89
      %v381 = vadd.f32 %v377, %v379
      %v382 = vadd.f32 %v378, %v380
      %v383 = vmul.f32 %v310, %v95
      %v384 = vmul.f32 %v310, %v96
      %v385 = vadd.f32 %v381, %v383
      %v386 = vadd.f32 %v382, %v384
      %v387 = vmul.f32 %v316, %v99
      %v388 = vmul.f32 %v316, %v100
      %v389 = vadd.f32 %v385, %v387
      %v390 = vadd.f32 %v386, %v388
      %v391 = vmul.f32 %v322, %v101
      %v392 = vmul.f32 %v322, %v102
      %v393 = vadd.f32 %v389, %v391
      %v394 = vadd.f32 %v390, %v392
      %v395 = vmul.f32 %v276, %v73
      %v396 = vmul.f32 %v276, %v74
      %v397 = vmul.f32 %v280, %v75
      %v398 = vmul.f32 %v280, %v76
      %v399 = vadd.f32 %v395, %v397
      %v400 = vadd.f32 %v396, %v398
      %v401 = vmul.f32 %v286, %v77
      %v402 = vmul.f32 %v286, %v78
      %v403 = vadd.f32 %v399, %v401
      %v404 = vadd.f32 %v400, %v402
      %v405 = vmul.f32 %v292, %v86
      %v406 = vmul.f32 %v292, %v87
      %v407 = vadd.f32 %v403, %v405
      %v408 = vadd.f32 %v404, %v406
      %v409 = vmul.f32 %v298, %v88
      %v410 = vmul.f32 %v298, %v89
      %v411 = vadd.f32 %v407, %v409
      %v412 = vadd.f32 %v408, %v410
      %v413 = vmul.f32 %v304, %v90
      %v414 = vmul.f32 %v304, %v91
      %v415 = vadd.f32 %v411, %v413
      %v416 = vadd.f32 %v412, %v414
      %v417 = vmul.f32 %v310, %v99
      %v418 = vmul.f32 %v310, %v100
      %v419 = vadd.f32 %v415, %v417
      %v420 = vadd.f32 %v416, %v418
      %v421 = vmul.f32 %v316, %v101
      %v422 = vmul.f32 %v316, %v102
      %v423 = vadd.f32 %v419, %v421
      %v424 = vadd.f32 %v420, %v422
      %v425 = vmul.f32 %v322, %v103
      %v426 = vmul.f32 %v322, %v104
      %v427 = vadd.f32 %v423, %v425
      %v428 = vadd.f32 %v424, %v426
      %v429 = vmax.f32 %v325, %v359
      %v430 = vmax.f32 %v326, %v360
      %v431 = vmax.f32 %v393, %v427
      %v432 = vmax.f32 %v394, %v428
      %v433 = vmax.f32 %v429, %v431
      %v434 = vmax.f32 %v430, %v432
      %s435 = sld [smem:[#allocation5 + $0x1]]
      %v436 = vstv %s435
      %v437 = vadd.f32 %v433, %v436
      %v438 = vadd.f32 %v434, %v436
      %v439 = vmax.f32 %v437, 0.0
      %v440 = vmax.f32 %v438, 0.0
      %441 = vst [vmem:[%s272 + $0x10] sm:$0xff] %v439
      %442 = vst [vmem:[%s272 + $0x18] sm:$0xff] %v440
      %s443 = sld [smem:[#allocation3 + $0x100]]
      %v444 = vstv %s443
      %v445 = vmul.f32 %v444, %v56
      %v446 = vmul.f32 %v444, %v57
      %s447 = sld [smem:[#allocation3 + $0x101]]
      %v448 = vstv %s447
      %v449 = vmul.f32 %v448, %v60
      %v450 = vmul.f32 %v448, %v61
      %v451 = vadd.f32 %v445, %v449
      %v452 = vadd.f32 %v446, %v450
      %s453 = sld [smem:[#allocation3 + $0x102]]
      %v454 = vstv %s453
      %v455 = vmul.f32 %v454, %v62
      %v456 = vmul.f32 %v454, %v63
      %v457 = vadd.f32 %v451, %v455
      %v458 = vadd.f32 %v452, %v456
      %s459 = sld [smem:[#allocation3 + $0x103]]
      %v460 = vstv %s459
      %v461 = vmul.f32 %v460, %v69
      %v462 = vmul.f32 %v460, %v70
      %v463 = vadd.f32 %v457, %v461
      %v464 = vadd.f32 %v458, %v462
      %s465 = sld [smem:[#allocation3 + $0x104]]
      %v466 = vstv %s465
      %v467 = vmul.f32 %v466, %v73
      %v468 = vmul.f32 %v466, %v74
      %v469 = vadd.f32 %v463, %v467
      %v470 = vadd.f32 %v464, %v468
      %s471 = sld [smem:[#allocation3 + $0x105]]
      %v472 = vstv %s471
      %v473 = vmul.f32 %v472, %v75
      %v474 = vmul.f32 %v472, %v76
      %v475 = vadd.f32 %v469, %v473
      %v476 = vadd.f32 %v470, %v474
      %s477 = sld [smem:[#allocation3 + $0x106]]
      %v478 = vstv %s477
      %v479 = vmul.f32 %v478, %v82
      %v480 = vmul.f32 %v478, %v83
      %v481 = vadd.f32 %v475, %v479
      %v482 = vadd.f32 %v476, %v480
      %s483 = sld [smem:[#allocation3 + $0x107]]
      %v484 = vstv %s483
      %v485 = vmul.f32 %v484, %v86
      %v486 = vmul.f32 %v484, %v87
      %v487 = vadd.f32 %v481, %v485
      %v488 = vadd.f32 %v482, %v486
      %s489 = sld [smem:[#allocation3 + $0x108]]
      %v490 = vstv %s489
      %v491 = vmul.f32 %v490, %v88
      %v492 = vmul.f32 %v490, %v89
      %v493 = vadd.f32 %v487, %v491
      %v494 = vadd.f32 %v488, %v492
      %v495 = vmul.f32 %v444, %v60
      %v496 = vmul.f32 %v444, %v61
      %v497 = vmul.f32 %v448, %v62
      %v498 = vmul.f32 %v448, %v63
      %v499 = vadd.f32 %v495, %v497
      %v500 = vadd.f32 %v496, %v498
      %v501 = vmul.f32 %v454, %v64
      %v502 = vmul.f32 %v454, %v65
      %v503 = vadd.f32 %v499, %v501
      %v504 = vadd.f32 %v500, %v502
      %v505 = vmul.f32 %v460, %v73
      %v506 = vmul.f32 %v460, %v74
      %v507 = vadd.f32 %v503, %v505
      %v508 = vadd.f32 %v504, %v506
      %v509 = vmul.f32 %v466, %v75
      %v510 = vmul.f32 %v466, %v76
      %v511 = vadd.f32 %v507, %v509
      %v512 = vadd.f32 %v508, %v510
      %v513 = vmul.f32 %v472, %v77
      %v514 = vmul.f32 %v472, %v78
      %v515 = vadd.f32 %v511, %v513
      %v516 = vadd.f32 %v512, %v514
      %v517 = vmul.f32 %v478, %v86
      %v518 = vmul.f32 %v478, %v87
      %v519 = vadd.f32 %v515, %v517
      %v520 = vadd.f32 %v516, %v518
      %v521 = vmul.f32 %v484, %v88
      %v522 = vmul.f32 %v484, %v89
      %v523 = vadd.f32 %v519, %v521
      %v524 = vadd.f32 %v520, %v522
      %v525 = vmul.f32 %v490, %v90
      %v526 = vmul.f32 %v490, %v91
      %v527 = vadd.f32 %v523, %v525
      %v528 = vadd.f32 %v524, %v526
      %v529 = vmul.f32 %v444, %v69
      %v530 = vmul.f32 %v444, %v70
      %v531 = vmul.f32 %v448, %v73
      %v532 = vmul.f32 %v448, %v74
      %v533 = vadd.f32 %v529, %v531
      %v534 = vadd.f32 %v530, %v532
      %v535 = vmul.f32 %v454, %v75
      %v536 = vmul.f32 %v454, %v76
      %v537 = vadd.f32 %v533, %v535
      %v538 = vadd.f32 %v534, %v536
      %v539 = vmul.f32 %v460, %v82
      %v540 = vmul.f32 %v460, %v83
      %v541 = vadd.f32 %v537, %v539
      %v542 = vadd.f32 %v538, %v540
      %v543 = vmul.f32 %v466, %v86
      %v544 = vmul.f32 %v466, %v87
      %v545 = vadd.f32 %v541, %v543
      %v546 = vadd.f32 %v542, %v544
      %v547 = vmul.f32 %v472, %v88
      %v548 = vmul.f32 %v472, %v89
      %v549 = vadd.f32 %v545, %v547
      %v550 = vadd.f32 %v546, %v548
      %v551 = vmul.f32 %v478, %v95
      %v552 = vmul.f32 %v478, %v96
      %v553 = vadd.f32 %v549, %v551
      %v554 = vadd.f32 %v550, %v552
      %v555 = vmul.f32 %v484, %v99
      %v556 = vmul.f32 %v484, %v100
      %v557 = vadd.f32 %v553, %v555
      %v558 = vadd.f32 %v554, %v556
      %v559 = vmul.f32 %v490, %v101
      %v560 = vmul.f32 %v490, %v102
      %v561 = vadd.f32 %v557, %v559
      %v562 = vadd.f32 %v558, %v560
      %v563 = vmul.f32 %v444, %v73
      %v564 = vmul.f32 %v444, %v74
      %v565 = vmul.f32 %v448, %v75
      %v566 = vmul.f32 %v448, %v76
      %v567 = vadd.f32 %v563, %v565
      %v568 = vadd.f32 %v564, %v566
      %v569 = vmul.f32 %v454, %v77
      %v570 = vmul.f32 %v454, %v78
      %v571 = vadd.f32 %v567, %v569
      %v572 = vadd.f32 %v568, %v570
      %v573 = vmul.f32 %v460, %v86
      %v574 = vmul.f32 %v460, %v87
      %v575 = vadd.f32 %v571, %v573
      %v576 = vadd.f32 %v572, %v574
      %v577 = vmul.f32 %v466, %v88
      %v578 = vmul.f32 %v466, %v89
      %v579 = vadd.f32 %v575, %v577
      %v580 = vadd.f32 %v576, %v578
      %v581 = vmul.f32 %v472, %v90
      %v582 = vmul.f32 %v472, %v91
      %v583 = vadd.f32 %v579, %v581
      %v584 = vadd.f32 %v580, %v582
      %v585 = vmul.f32 %v478, %v99
      %v586 = vmul.f32 %v478, %v100
      %v587 = vadd.f32 %v583, %v585
      %v588 = vadd.f32 %v584, %v586
      %v589 = vmul.f32 %v484, %v101
      %v590 = vmul.f32 %v484, %v102
      %v591 = vadd.f32 %v587, %v589
      %v592 = vadd.f32 %v588, %v590
      %v593 = vmul.f32 %v490, %v103
      %v594 = vmul.f32 %v490, %v104
      %v595 = vadd.f32 %v591, %v593
      %v596 = vadd.f32 %v592, %v594
      %v597 = vmax.f32 %v493, %v527
      %v598 = vmax.f32 %v494, %v528
      %v599 = vmax.f32 %v561, %v595
      %v600 = vmax.f32 %v562, %v596
      %v601 = vmax.f32 %v597, %v599
      %v602 = vmax.f32 %v598, %v600
      %s603 = sld [smem:[#allocation5 + $0x2]]
      %v604 = vstv %s603
      %v605 = vadd.f32 %v601, %v604
      %v606 = vadd.f32 %v602, %v604
      %v607 = vmax.f32 %v605, 0.0
      %v608 = vmax.f32 %v606, 0.0
      %609 = vst [vmem:[%s272 + $0x20] sm:$0xff] %v607
      %610 = vst [vmem:[%s272 + $0x28] sm:$0xff] %v608
      %s611 = sld [smem:[#allocation3 + $0x180]]
      %v612 = vstv %s611
      %v613 = vmul.f32 %v612, %v56
      %v614 = vmul.f32 %v612, %v57
      %s615 = sld [smem:[#allocation3 + $0x181]]
      %v616 = vstv %s615
      %v617 = vmul.f32 %v616, %v60
      %v618 = vmul.f32 %v616, %v61
      %v619 = vadd.f32 %v613, %v617
      %v620 = vadd.f32 %v614, %v618
      %s621 = sld [smem:[#allocation3 + $0x182]]
      %v622 = vstv %s621
      %v623 = vmul.f32 %v622, %v62
      %v624 = vmul.f32 %v622, %v63
      %v625 = vadd.f32 %v619, %v623
      %v626 = vadd.f32 %v620, %v624
      %s627 = sld [smem:[#allocation3 + $0x183]]
      %v628 = vstv %s627
      %v629 = vmul.f32 %v628, %v69
      %v630 = vmul.f32 %v628, %v70
      %v631 = vadd.f32 %v625, %v629
      %v632 = vadd.f32 %v626, %v630
      %s633 = sld [smem:[#allocation3 + $0x184]]
      %v634 = vstv %s633
      %v635 = vmul.f32 %v634, %v73
      %v636 = vmul.f32 %v634, %v74
      %v637 = vadd.f32 %v631, %v635
      %v638 = vadd.f32 %v632, %v636
      %s639 = sld [smem:[#allocation3 + $0x185]]
      %v640 = vstv %s639
      %v641 = vmul.f32 %v640, %v75
      %v642 = vmul.f32 %v640, %v76
      %v643 = vadd.f32 %v637, %v641
      %v644 = vadd.f32 %v638, %v642
      %s645 = sld [smem:[#allocation3 + $0x186]]
      %v646 = vstv %s645
      %v647 = vmul.f32 %v646, %v82
      %v648 = vmul.f32 %v646, %v83
      %v649 = vadd.f32 %v643, %v647
      %v650 = vadd.f32 %v644, %v648
      %s651 = sld [smem:[#allocation3 + $0x187]]
      %v652 = vstv %s651
      %v653 = vmul.f32 %v652, %v86
      %v654 = vmul.f32 %v652, %v87
      %v655 = vadd.f32 %v649, %v653
      %v656 = vadd.f32 %v650, %v654
      %s657 = sld [smem:[#allocation3 + $0x188]]
      %v658 = vstv %s657
      %v659 = vmul.f32 %v658, %v88
      %v660 = vmul.f32 %v658, %v89
      %v661 = vadd.f32 %v655, %v659
      %v662 = vadd.f32 %v656, %v660
      %v663 = vmul.f32 %v612, %v60
      %v664 = vmul.f32 %v612, %v61
      %v665 = vmul.f32 %v616, %v62
      %v666 = vmul.f32 %v616, %v63
      %v667 = vadd.f32 %v663, %v665
      %v668 = vadd.f32 %v664, %v666
      %v669 = vmul.f32 %v622, %v64
      %v670 = vmul.f32 %v622, %v65
      %v671 = vadd.f32 %v667, %v669
      %v672 = vadd.f32 %v668, %v670
      %v673 = vmul.f32 %v628, %v73
      %v674 = vmul.f32 %v628, %v74
      %v675 = vadd.f32 %v671, %v673
      %v676 = vadd.f32 %v672, %v674
      %v677 = vmul.f32 %v634, %v75
      %v678 = vmul.f32 %v634, %v76
      %v679 = vadd.f32 %v675, %v677
      %v680 = vadd.f32 %v676, %v678
      %v681 = vmul.f32 %v640, %v77
      %v682 = vmul.f32 %v640, %v78
      %v683 = vadd.f32 %v679, %v681
      %v684 = vadd.f32 %v680, %v682
      %v685 = vmul.f32 %v646, %v86
      %v686 = vmul.f32 %v646, %v87
      %v687 = vadd.f32 %v683, %v685
      %v688 = vadd.f32 %v684, %v686
      %v689 = vmul.f32 %v652, %v88
      %v690 = vmul.f32 %v652, %v89
      %v691 = vadd.f32 %v687, %v689
      %v692 = vadd.f32 %v688, %v690
      %v693 = vmul.f32 %v658, %v90
      %v694 = vmul.f32 %v658, %v91
      %v695 = vadd.f32 %v691, %v693
      %v696 = vadd.f32 %v692, %v694
      %v697 = vmul.f32 %v612, %v69
      %v698 = vmul.f32 %v612, %v70
      %v699 = vmul.f32 %v616, %v73
      %v700 = vmul.f32 %v616, %v74
      %v701 = vadd.f32 %v697, %v699
      %v702 = vadd.f32 %v698, %v700
      %v703 = vmul.f32 %v622, %v75
      %v704 = vmul.f32 %v622, %v76
      %v705 = vadd.f32 %v701, %v703
      %v706 = vadd.f32 %v702, %v704
      %v707 = vmul.f32 %v628, %v82
      %v708 = vmul.f32 %v628, %v83
      %v709 = vadd.f32 %v705, %v707
      %v710 = vadd.f32 %v706, %v708
      %v711 = vmul.f32 %v634, %v86
      %v712 = vmul.f32 %v634, %v87
      %v713 = vadd.f32 %v709, %v711
      %v714 = vadd.f32 %v710, %v712
      %v715 = vmul.f32 %v640, %v88
      %v716 = vmul.f32 %v640, %v89
      %v717 = vadd.f32 %v713, %v715
      %v718 = vadd.f32 %v714, %v716
      %v719 = vmul.f32 %v646, %v95
      %v720 = vmul.f32 %v646, %v96
      %v721 = vadd.f32 %v717, %v719
      %v722 = vadd.f32 %v718, %v720
      %v723 = vmul.f32 %v652, %v99
      %v724 = vmul.f32 %v652, %v100
      %v725 = vadd.f32 %v721, %v723
      %v726 = vadd.f32 %v722, %v724
      %v727 = vmul.f32 %v658, %v101
      %v728 = vmul.f32 %v658, %v102
      %v729 = vadd.f32 %v725, %v727
      %v730 = vadd.f32 %v726, %v728
      %v731 = vmul.f32 %v612, %v73
      %v732 = vmul.f32 %v612, %v74
      %v733 = vmul.f32 %v616, %v75
      %v734 = vmul.f32 %v616, %v76
      %v735 = vadd.f32 %v731, %v733
      %v736 = vadd.f32 %v732, %v734
      %v737 = vmul.f32 %v622, %v77
      %v738 = vmul.f32 %v622, %v78
      %v739 = vadd.f32 %v735, %v737
      %v740 = vadd.f32 %v736, %v738
      %v741 = vmul.f32 %v628, %v86
      %v742 = vmul.f32 %v628, %v87
      %v743 = vadd.f32 %v739, %v741
      %v744 = vadd.f32 %v740, %v742
      %v745 = vmul.f32 %v634, %v88
      %v746 = vmul.f32 %v634, %v89
      %v747 = vadd.f32 %v743, %v745
      %v748 = vadd.f32 %v744, %v746
      %v749 = vmul.f32 %v640, %v90
      %v750 = vmul.f32 %v640, %v91
      %v751 = vadd.f32 %v747, %v749
      %v752 = vadd.f32 %v748, %v750
      %v753 = vmul.f32 %v646, %v99
      %v754 = vmul.f32 %v646, %v100
      %v755 = vadd.f32 %v751, %v753
      %v756 = vadd.f32 %v752, %v754
      %v757 = vmul.f32 %v652, %v101
      %v758 = vmul.f32 %v652, %v102
      %v759 = vadd.f32 %v755, %v757
      %v760 = vadd.f32 %v756, %v758
      %v761 = vmul.f32 %v658, %v103
      %v762 = vmul.f32 %v658, %v104
      %v763 = vadd.f32 %v759, %v761
      %v764 = vadd.f32 %v760, %v762
      %v765 = vmax.f32 %v661, %v695
      %v766 = vmax.f32 %v662, %v696
      %v767 = vmax.f32 %v729, %v763
      %v768 = vmax.f32 %v730, %v764
      %v769 = vmax.f32 %v765, %v767
      %v770 = vmax.f32 %v766, %v768
      %s771 = sld [smem:[#allocation5 + $0x3]]
      %v772 = vstv %s771
      %v773 = vadd.f32 %v769, %v772
      %v774 = vadd.f32 %v770, %v772
      %v775 = vmax.f32 %v773, 0.0
      %v776 = vmax.f32 %v774, 0.0
      %777 = vst [vmem:[%s272 + $0x30] sm:$0xff] %v775
      %778 = vst [vmem:[%s272 + $0x38] sm:$0xff] %v776
      %s779 = sld [smem:[#allocation3 + $0x200]]
      %v780 = vstv %s779
      %v781 = vmul.f32 %v780, %v56
      %v782 = vmul.f32 %v780, %v57
      %s783 = sld [smem:[#allocation3 + $0x201]]
      %v784 = vstv %s783
      %v785 = vmul.f32 %v784, %v60
      %v786 = vmul.f32 %v784, %v61
      %v787 = vadd.f32 %v781, %v785
      %v788 = vadd.f32 %v782, %v786
      %s789 = sld [smem:[#allocation3 + $0x202]]
      %v790 = vstv %s789
      %v791 = vmul.f32 %v790, %v62
      %v792 = vmul.f32 %v790, %v63
      %v793 = vadd.f32 %v787, %v791
      %v794 = vadd.f32 %v788, %v792
      %s795 = sld [smem:[#allocation3 + $0x203]]
      %v796 = vstv %s795
      %v797 = vmul.f32 %v796, %v69
      %v798 = vmul.f32 %v796, %v70
      %v799 = vadd.f32 %v793, %v797
      %v800 = vadd.f32 %v794, %v798
      %s801 = sld [smem:[#allocation3 + $0x204]]
      %v802 = vstv %s801
      %v803 = vmul.f32 %v802, %v73
      %v804 = vmul.f32 %v802, %v74
      %v805 = vadd.f32 %v799, %v803
      %v806 = vadd.f32 %v800, %v804
      %s807 = sld [smem:[#allocation3 + $0x205]]
      %v808 = vstv %s807
      %v809 = vmul.f32 %v808, %v75
      %v810 = vmul.f32 %v808, %v76
      %v811 = vadd.f32 %v805, %v809
      %v812 = vadd.f32 %v806, %v810
      %s813 = sld [smem:[#allocation3 + $0x206]]
      %v814 = vstv %s813
      %v815 = vmul.f32 %v814, %v82
      %v816 = vmul.f32 %v814, %v83
      %v817 = vadd.f32 %v811, %v815
      %v818 = vadd.f32 %v812, %v816
      %s819 = sld [smem:[#allocation3 + $0x207]]
      %v820 = vstv %s819
      %v821 = vmul.f32 %v820, %v86
      %v822 = vmul.f32 %v820, %v87
      %v823 = vadd.f32 %v817, %v821
      %v824 = vadd.f32 %v818, %v822
      %s825 = sld [smem:[#allocation3 + $0x208]]
      %v826 = vstv %s825
      %v827 = vmul.f32 %v826, %v88
      %v828 = vmul.f32 %v826, %v89
      %v829 = vadd.f32 %v823, %v827
      %v830 = vadd.f32 %v824, %v828
      %v831 = vmul.f32 %v780, %v60
      %v832 = vmul.f32 %v780, %v61
      %v833 = vmul.f32 %v784, %v62
      %v834 = vmul.f32 %v784, %v63
      %v835 = vadd.f32 %v831, %v833
      %v836 = vadd.f32 %v832, %v834
      %v837 = vmul.f32 %v790, %v64
      %v838 = vmul.f32 %v790, %v65
      %v839 = vadd.f32 %v835, %v837
      %v840 = vadd.f32 %v836, %v838
      %v841 = vmul.f32 %v796, %v73
      %v842 = vmul.f32 %v796, %v74
      %v843 = vadd.f32 %v839, %v841
      %v844 = vadd.f32 %v840, %v842
      %v845 = vmul.f32 %v802, %v75
      %v846 = vmul.f32 %v802, %v76
      %v847 = vadd.f32 %v843, %v845
      %v848 = vadd.f32 %v844, %v846
      %v849 = vmul.f32 %v808, %v77
      %v850 = vmul.f32 %v808, %v78
      %v851 = vadd.f32 %v847, %v849
      %v852 = vadd.f32 %v848, %v850
      %v853 = vmul.f32 %v814, %v86
      %v854 = vmul.f32 %v814, %v87
      %v855 = vadd.f32 %v851, %v853
      %v856 = vadd.f32 %v852, %v854
      %v857 = vmul.f32 %v820, %v88
      %v858 = vmul.f32 %v820, %v89
      %v859 = vadd.f32 %v855, %v857
      %v860 = vadd.f32 %v856, %v858
      %v861 = vmul.f32 %v826, %v90
      %v862 = vmul.f32 %v826, %v91
      %v863 = vadd.f32 %v859, %v861
      %v864 = vadd.f32 %v860, %v862
      %v865 = vmul.f32 %v780, %v69
      %v866 = vmul.f32 %v780, %v70
      %v867 = vmul.f32 %v784, %v73
      %v868 = vmul.f32 %v784, %v74
      %v869 = vadd.f32 %v865, %v867
      %v870 = vadd.f32 %v866, %v868
      %v871 = vmul.f32 %v790, %v75
      %v872 = vmul.f32 %v790, %v76
      %v873 = vadd.f32 %v869, %v871
      %v874 = vadd.f32 %v870, %v872
      %v875 = vmul.f32 %v796, %v82
      %v876 = vmul.f32 %v796, %v83
      %v877 = vadd.f32 %v873, %v875
      %v878 = vadd.f32 %v874, %v876
      %v879 = vmul.f32 %v802, %v86
      %v880 = vmul.f32 %v802, %v87
      %v881 = vadd.f32 %v877, %v879
      %v882 = vadd.f32 %v878, %v880
      %v883 = vmul.f32 %v808, %v88
      %v884 = vmul.f32 %v808, %v89
      %v885 = vadd.f32 %v881, %v883
      %v886 = vadd.f32 %v882, %v884
      %v887 = vmul.f32 %v814, %v95
      %v888 = vmul.f32 %v814, %v96
      %v889 = vadd.f32 %v885, %v887
      %v890 = vadd.f32 %v886, %v888
      %v891 = vmul.f32 %v820, %v99
      %v892 = vmul.f32 %v820, %v100
      %v893 = vadd.f32 %v889, %v891
      %v894 = vadd.f32 %v890, %v892
      %v895 = vmul.f32 %v826, %v101
      %v896 = vmul.f32 %v826, %v102
      %v897 = vadd.f32 %v893, %v895
      %v898 = vadd.f32 %v894, %v896
      %v899 = vmul.f32 %v780, %v73
      %v900 = vmul.f32 %v780, %v74
      %v901 = vmul.f32 %v784, %v75
      %v902 = vmul.f32 %v784, %v76
      %v903 = vadd.f32 %v899, %v901
      %v904 = vadd.f32 %v900, %v902
      %v905 = vmul.f32 %v790, %v77
      %v906 = vmul.f32 %v790, %v78
      %v907 = vadd.f32 %v903, %v905
      %v908 = vadd.f32 %v904, %v906
      %v909 = vmul.f32 %v796, %v86
      %v910 = vmul.f32 %v796, %v87
      %v911 = vadd.f32 %v907, %v909
      %v912 = vadd.f32 %v908, %v910
      %v913 = vmul.f32 %v802, %v88
      %v914 = vmul.f32 %v802, %v89
      %v915 = vadd.f32 %v911, %v913
      %v916 = vadd.f32 %v912, %v914
      %v917 = vmul.f32 %v808, %v90
      %v918 = vmul.f32 %v808, %v91
      %v919 = vadd.f32 %v915, %v917
      %v920 = vadd.f32 %v916, %v918
      %v921 = vmul.f32 %v814, %v99
      %v922 = vmul.f32 %v814, %v100
      %v923 = vadd.f32 %v919, %v921
      %v924 = vadd.f32 %v920, %v922
      %v925 = vmul.f32 %v820, %v101
      %v926 = vmul.f32 %v820, %v102
      %v927 = vadd.f32 %v923, %v925
      %v928 = vadd.f32 %v924, %v926
      %v929 = vmul.f32 %v826, %v103
      %v930 = vmul.f32 %v826, %v104
      %v931 = vadd.f32 %v927, %v929
      %v932 = vadd.f32 %v928, %v930
      %v933 = vmax.f32 %v829, %v863
      %v934 = vmax.f32 %v830, %v864
      %v935 = vmax.f32 %v897, %v931
      %v936 = vmax.f32 %v898, %v932
      %v937 = vmax.f32 %v933, %v935
      %v938 = vmax.f32 %v934, %v936
      %s939 = sld [smem:[#allocation5 + $0x4]]
      %v940 = vstv %s939
      %v941 = vadd.f32 %v937, %v940
      %v942 = vadd.f32 %v938, %v940
      %v943 = vmax.f32 %v941, 0.0
      %v944 = vmax.f32 %v942, 0.0
      %945 = vst [vmem:[%s272 + $0x40] sm:$0xff] %v943
      %946 = vst [vmem:[%s272 + $0x48] sm:$0xff] %v944
      %s947 = sld [smem:[#allocation3 + $0x280]]
      %v948 = vstv %s947
      %v949 = vmul.f32 %v948, %v56
      %v950 = vmul.f32 %v948, %v57
      %s951 = sld [smem:[#allocation3 + $0x281]]
      %v952 = vstv %s951
      %v953 = vmul.f32 %v952, %v60
      %v954 = vmul.f32 %v952, %v61
      %v955 = vadd.f32 %v949, %v953
      %v956 = vadd.f32 %v950, %v954
      %s957 = sld [smem:[#allocation3 + $0x282]]
      %v958 = vstv %s957
      %v959 = vmul.f32 %v958, %v62
      %v960 = vmul.f32 %v958, %v63
      %v961 = vadd.f32 %v955, %v959
      %v962 = vadd.f32 %v956, %v960
      %s963 = sld [smem:[#allocation3 + $0x283]]
      %v964 = vstv %s963
      %v965 = vmul.f32 %v964, %v69
      %v966 = vmul.f32 %v964, %v70
      %v967 = vadd.f32 %v961, %v965
      %v968 = vadd.f32 %v962, %v966
      %s969 = sld [smem:[#allocation3 + $0x284]]
      %v970 = vstv %s969
      %v971 = vmul.f32 %v970, %v73
      %v972 = vmul.f32 %v970, %v74
      %v973 = vadd.f32 %v967, %v971
      %v974 = vadd.f32 %v968, %v972
      %s975 = sld [smem:[#allocation3 + $0x285]]
      %v976 = vstv %s975
      %v977 = vmul.f32 %v976, %v75
      %v978 = vmul.f32 %v976, %v76
      %v979 = vadd.f32 %v973, %v977
      %v980 = vadd.f32 %v974, %v978
      %s981 = sld [smem:[#allocation3 + $0x286]]
      %v982 = vstv %s981
      %v983 = vmul.f32 %v982, %v82
      %v984 = vmul.f32 %v982, %v83
      %v985 = vadd.f32 %v979, %v983
      %v986 = vadd.f32 %v980, %v984
      %s987 = sld [smem:[#allocation3 + $0x287]]
      %v988 = vstv %s987
      %v989 = vmul.f32 %v988, %v86
      %v990 = vmul.f32 %v988, %v87
      %v991 = vadd.f32 %v985, %v989
      %v992 = vadd.f32 %v986, %v990
      %s993 = sld [smem:[#allocation3 + $0x288]]
      %v994 = vstv %s993
      %v995 = vmul.f32 %v994, %v88
      %v996 = vmul.f32 %v994, %v89
      %v997 = vadd.f32 %v991, %v995
      %v998 = vadd.f32 %v992, %v996
      %v999 = vmul.f32 %v948, %v60
      %v1000 = vmul.f32 %v948, %v61
      %v1001 = vmul.f32 %v952, %v62
      %v1002 = vmul.f32 %v952, %v63
      %v1003 = vadd.f32 %v999, %v1001
      %v1004 = vadd.f32 %v1000, %v1002
      %v1005 = vmul.f32 %v958, %v64
      %v1006 = vmul.f32 %v958, %v65
      %v1007 = vadd.f32 %v1003, %v1005
      %v1008 = vadd.f32 %v1004, %v1006
      %v1009 = vmul.f32 %v964, %v73
      %v1010 = vmul.f32 %v964, %v74
      %v1011 = vadd.f32 %v1007, %v1009
      %v1012 = vadd.f32 %v1008, %v1010
      %v1013 = vmul.f32 %v970, %v75
      %v1014 = vmul.f32 %v970, %v76
      %v1015 = vadd.f32 %v1011, %v1013
      %v1016 = vadd.f32 %v1012, %v1014
      %v1017 = vmul.f32 %v976, %v77
      %v1018 = vmul.f32 %v976, %v78
      %v1019 = vadd.f32 %v1015, %v1017
      %v1020 = vadd.f32 %v1016, %v1018
      %v1021 = vmul.f32 %v982, %v86
      %v1022 = vmul.f32 %v982, %v87
      %v1023 = vadd.f32 %v1019, %v1021
      %v1024 = vadd.f32 %v1020, %v1022
      %v1025 = vmul.f32 %v988, %v88
      %v1026 = vmul.f32 %v988, %v89
      %v1027 = vadd.f32 %v1023, %v1025
      %v1028 = vadd.f32 %v1024, %v1026
      %v1029 = vmul.f32 %v994, %v90
      %v1030 = vmul.f32 %v994, %v91
      %v1031 = vadd.f32 %v1027, %v1029
      %v1032 = vadd.f32 %v1028, %v1030
      %v1033 = vmul.f32 %v948, %v69
      %v1034 = vmul.f32 %v948, %v70
      %v1035 = vmul.f32 %v952, %v73
      %v1036 = vmul.f32 %v952, %v74
      %v1037 = vadd.f32 %v1033, %v1035
      %v1038 = vadd.f32 %v1034, %v1036
      %v1039 = vmul.f32 %v958, %v75
      %v1040 = vmul.f32 %v958, %v76
      %v1041 = vadd.f32 %v1037, %v1039
      %v1042 = vadd.f32 %v1038, %v1040
      %v1043 = vmul.f32 %v964, %v82
      %v1044 = vmul.f32 %v964, %v83
      %v1045 = vadd.f32 %v1041, %v1043
      %v1046 = vadd.f32 %v1042, %v1044
      %v1047 = vmul.f32 %v970, %v86
      %v1048 = vmul.f32 %v970, %v87
      %v1049 = vadd.f32 %v1045, %v1047
      %v1050 = vadd.f32 %v1046, %v1048
      %v1051 = vmul.f32 %v976, %v88
      %v1052 = vmul.f32 %v976, %v89
      %v1053 = vadd.f32 %v1049, %v1051
      %v1054 = vadd.f32 %v1050, %v1052
      %v1055 = vmul.f32 %v982, %v95
      %v1056 = vmul.f32 %v982, %v96
      %v1057 = vadd.f32 %v1053, %v1055
      %v1058 = vadd.f32 %v1054, %v1056
      %v1059 = vmul.f32 %v988, %v99
      %v1060 = vmul.f32 %v988, %v100
      %v1061 = vadd.f32 %v1057, %v1059
      %v1062 = vadd.f32 %v1058, %v1060
      %v1063 = vmul.f32 %v994, %v101
      %v1064 = vmul.f32 %v994, %v102
      %v1065 = vadd.f32 %v1061, %v1063
      %v1066 = vadd.f32 %v1062, %v1064
      %v1067 = vmul.f32 %v948, %v73
      %v1068 = vmul.f32 %v948, %v74
      %v1069 = vmul.f32 %v952, %v75
      %v1070 = vmul.f32 %v952, %v76
      %v1071 = vadd.f32 %v1067, %v1069
      %v1072 = vadd.f32 %v1068, %v1070
      %v1073 = vmul.f32 %v958, %v77
      %v1074 = vmul.f32 %v958, %v78
      %v1075 = vadd.f32 %v1071, %v1073
      %v1076 = vadd.f32 %v1072, %v1074
      %v1077 = vmul.f32 %v964, %v86
      %v1078 = vmul.f32 %v964, %v87
      %v1079 = vadd.f32 %v1075, %v1077
      %v1080 = vadd.f32 %v1076, %v1078
      %v1081 = vmul.f32 %v970, %v88
      %v1082 = vmul.f32 %v970, %v89
      %v1083 = vadd.f32 %v1079, %v1081
      %v1084 = vadd.f32 %v1080, %v1082
      %v1085 = vmul.f32 %v976, %v90
      %v1086 = vmul.f32 %v976, %v91
      %v1087 = vadd.f32 %v1083, %v1085
      %v1088 = vadd.f32 %v1084, %v1086
      %v1089 = vmul.f32 %v982, %v99
      %v1090 = vmul.f32 %v982, %v100
      %v1091 = vadd.f32 %v1087, %v1089
      %v1092 = vadd.f32 %v1088, %v1090
      %v1093 = vmul.f32 %v988, %v101
      %v1094 = vmul.f32 %v988, %v102
      %v1095 = vadd.f32 %v1091, %v1093
      %v1096 = vadd.f32 %v1092, %v1094
      %v1097 = vmul.f32 %v994, %v103
      %v1098 = vmul.f32 %v994, %v104
      %v1099 = vadd.f32 %v1095, %v1097
      %v1100 = vadd.f32 %v1096, %v1098
      %v1101 = vmax.f32 %v997, %v1031
      %v1102 = vmax.f32 %v998, %v1032
      %v1103 = vmax.f32 %v1065, %v1099
      %v1104 = vmax.f32 %v1066, %v1100
      %v1105 = vmax.f32 %v1101, %v1103
      %v1106 = vmax.f32 %v1102, %v1104
      %s1107 = sld [smem:[#allocation5 + $0x5]]
      %v1108 = vstv %s1107
      %v1109 = vadd.f32 %v1105, %v1108
      %v1110 = vadd.f32 %v1106, %v1108
      %v1111 = vmax.f32 %v1109, 0.0
      %v1112 = vmax.f32 %v1110, 0.0
      %1113 = vst [vmem:[%s272 + $0x50] sm:$0xff] %v1111
      %1114 = vst [vmem:[%s272 + $0x58] sm:$0xff] %v1112
      %s1115 = sld [smem:[#allocation3 + $0x300]]
      %v1116 = vstv %s1115
      %v1117 = vmul.f32 %v1116, %v56
      %v1118 = vmul.f32 %v1116, %v57
      %s1119 = sld [smem:[#allocation3 + $0x301]]
      %v1120 = vstv %s1119
      %v1121 = vmul.f32 %v1120, %v60
      %v1122 = vmul.f32 %v1120, %v61
      %v1123 = vadd.f32 %v1117, %v1121
      %v1124 = vadd.f32 %v1118, %v1122
      %s1125 = sld [smem:[#allocation3 + $0x302]]
      %v1126 = vstv %s1125
      %v1127 = vmul.f32 %v1126, %v62
      %v1128 = vmul.f32 %v1126, %v63
      %v1129 = vadd.f32 %v1123, %v1127
      %v1130 = vadd.f32 %v1124, %v1128
      %s1131 = sld [smem:[#allocation3 + $0x303]]
      %v1132 = vstv %s1131
      %v1133 = vmul.f32 %v1132, %v69
      %v1134 = vmul.f32 %v1132, %v70
      %v1135 = vadd.f32 %v1129, %v1133
      %v1136 = vadd.f32 %v1130, %v1134
      %s1137 = sld [smem:[#allocation3 + $0x304]]
      %v1138 = vstv %s1137
      %v1139 = vmul.f32 %v1138, %v73
      %v1140 = vmul.f32 %v1138, %v74
      %v1141 = vadd.f32 %v1135, %v1139
      %v1142 = vadd.f32 %v1136, %v1140
      %s1143 = sld [smem:[#allocation3 + $0x305]]
      %v1144 = vstv %s1143
      %v1145 = vmul.f32 %v1144, %v75
      %v1146 = vmul.f32 %v1144, %v76
      %v1147 = vadd.f32 %v1141, %v1145
      %v1148 = vadd.f32 %v1142, %v1146
      %s1149 = sld [smem:[#allocation3 + $0x306]]
      %v1150 = vstv %s1149
      %v1151 = vmul.f32 %v1150, %v82
      %v1152 = vmul.f32 %v1150, %v83
      %v1153 = vadd.f32 %v1147, %v1151
      %v1154 = vadd.f32 %v1148, %v1152
      %s1155 = sld [smem:[#allocation3 + $0x307]]
      %v1156 = vstv %s1155
      %v1157 = vmul.f32 %v1156, %v86
      %v1158 = vmul.f32 %v1156, %v87
      %v1159 = vadd.f32 %v1153, %v1157
      %v1160 = vadd.f32 %v1154, %v1158
      %s1161 = sld [smem:[#allocation3 + $0x308]]
      %v1162 = vstv %s1161
      %v1163 = vmul.f32 %v1162, %v88
      %v1164 = vmul.f32 %v1162, %v89
      %v1165 = vadd.f32 %v1159, %v1163
      %v1166 = vadd.f32 %v1160, %v1164
      %v1167 = vmul.f32 %v1116, %v60
      %v1168 = vmul.f32 %v1116, %v61
      %v1169 = vmul.f32 %v1120, %v62
      %v1170 = vmul.f32 %v1120, %v63
      %v1171 = vadd.f32 %v1167, %v1169
      %v1172 = vadd.f32 %v1168, %v1170
      %v1173 = vmul.f32 %v1126, %v64
      %v1174 = vmul.f32 %v1126, %v65
      %v1175 = vadd.f32 %v1171, %v1173
      %v1176 = vadd.f32 %v1172, %v1174
      %v1177 = vmul.f32 %v1132, %v73
      %v1178 = vmul.f32 %v1132, %v74
      %v1179 = vadd.f32 %v1175, %v1177
      %v1180 = vadd.f32 %v1176, %v1178
      %v1181 = vmul.f32 %v1138, %v75
      %v1182 = vmul.f32 %v1138, %v76
      %v1183 = vadd.f32 %v1179, %v1181
      %v1184 = vadd.f32 %v1180, %v1182
      %v1185 = vmul.f32 %v1144, %v77
      %v1186 = vmul.f32 %v1144, %v78
      %v1187 = vadd.f32 %v1183, %v1185
      %v1188 = vadd.f32 %v1184, %v1186
      %v1189 = vmul.f32 %v1150, %v86
      %v1190 = vmul.f32 %v1150, %v87
      %v1191 = vadd.f32 %v1187, %v1189
      %v1192 = vadd.f32 %v1188, %v1190
      %v1193 = vmul.f32 %v1156, %v88
      %v1194 = vmul.f32 %v1156, %v89
      %v1195 = vadd.f32 %v1191, %v1193
      %v1196 = vadd.f32 %v1192, %v1194
      %v1197 = vmul.f32 %v1162, %v90
      %v1198 = vmul.f32 %v1162, %v91
      %v1199 = vadd.f32 %v1195, %v1197
      %v1200 = vadd.f32 %v1196, %v1198
      %v1201 = vmul.f32 %v1116, %v69
      %v1202 = vmul.f32 %v1116, %v70
      %v1203 = vmul.f32 %v1120, %v73
      %v1204 = vmul.f32 %v1120, %v74
      %v1205 = vadd.f32 %v1201, %v1203
      %v1206 = vadd.f32 %v1202, %v1204
      %v1207 = vmul.f32 %v1126, %v75
      %v1208 = vmul.f32 %v1126, %v76
      %v1209 = vadd.f32 %v1205, %v1207
      %v1210 = vadd.f32 %v1206, %v1208
      %v1211 = vmul.f32 %v1132, %v82
      %v1212 = vmul.f32 %v1132, %v83
      %v1213 = vadd.f32 %v1209, %v1211
      %v1214 = vadd.f32 %v1210, %v1212
      %v1215 = vmul.f32 %v1138, %v86
      %v1216 = vmul.f32 %v1138, %v87
      %v1217 = vadd.f32 %v1213, %v1215
      %v1218 = vadd.f32 %v1214, %v1216
      %v1219 = vmul.f32 %v1144, %v88
      %v1220 = vmul.f32 %v1144, %v89
      %v1221 = vadd.f32 %v1217, %v1219
      %v1222 = vadd.f32 %v1218, %v1220
      %v1223 = vmul.f32 %v1150, %v95
      %v1224 = vmul.f32 %v1150, %v96
      %v1225 = vadd.f32 %v1221, %v1223
      %v1226 = vadd.f32 %v1222, %v1224
      %v1227 = vmul.f32 %v1156, %v99
      %v1228 = vmul.f32 %v1156, %v100
      %v1229 = vadd.f32 %v1225, %v1227
      %v1230 = vadd.f32 %v1226, %v1228
      %v1231 = vmul.f32 %v1162, %v101
      %v1232 = vmul.f32 %v1162, %v102
      %v1233 = vadd.f32 %v1229, %v1231
      %v1234 = vadd.f32 %v1230, %v1232
      %v1235 = vmul.f32 %v1116, %v73
      %v1236 = vmul.f32 %v1116, %v74
      %v1237 = vmul.f32 %v1120, %v75
      %v1238 = vmul.f32 %v1120, %v76
      %v1239 = vadd.f32 %v1235, %v1237
      %v1240 = vadd.f32 %v1236, %v1238
      %v1241 = vmul.f32 %v1126, %v77
      %v1242 = vmul.f32 %v1126, %v78
      %v1243 = vadd.f32 %v1239, %v1241
      %v1244 = vadd.f32 %v1240, %v1242
      %v1245 = vmul.f32 %v1132, %v86
      %v1246 = vmul.f32 %v1132, %v87
      %v1247 = vadd.f32 %v1243, %v1245
      %v1248 = vadd.f32 %v1244, %v1246
      %v1249 = vmul.f32 %v1138, %v88
      %v1250 = vmul.f32 %v1138, %v89
      %v1251 = vadd.f32 %v1247, %v1249
      %v1252 = vadd.f32 %v1248, %v1250
      %v1253 = vmul.f32 %v1144, %v90
      %v1254 = vmul.f32 %v1144, %v91
      %v1255 = vadd.f32 %v1251, %v1253
      %v1256 = vadd.f32 %v1252, %v1254
      %v1257 = vmul.f32 %v1150, %v99
      %v1258 = vmul.f32 %v1150, %v100
      %v1259 = vadd.f32 %v1255, %v1257
      %v1260 = vadd.f32 %v1256, %v1258
      %v1261 = vmul.f32 %v1156, %v101
      %v1262 = vmul.f32 %v1156, %v102
      %v1263 = vadd.f32 %v1259, %v1261
      %v1264 = vadd.f32 %v1260, %v1262
      %v1265 = vmul.f32 %v1162, %v103
      %v1266 = vmul.f32 %v1162, %v104
      %v1267 = vadd.f32 %v1263, %v1265
      %v1268 = vadd.f32 %v1264, %v1266
      %v1269 = vmax.f32 %v1165, %v1199
      %v1270 = vmax.f32 %v1166, %v1200
      %v1271 = vmax.f32 %v1233, %v1267
      %v1272 = vmax.f32 %v1234, %v1268
      %v1273 = vmax.f32 %v1269, %v1271
      %v1274 = vmax.f32 %v1270, %v1272
      %s1275 = sld [smem:[#allocation5 + $0x6]]
      %v1276 = vstv %s1275
      %v1277 = vadd.f32 %v1273, %v1276
      %v1278 = vadd.f32 %v1274, %v1276
      %v1279 = vmax.f32 %v1277, 0.0
      %v1280 = vmax.f32 %v1278, 0.0
      %1281 = vst [vmem:[%s272 + $0x60] sm:$0xff] %v1279
      %1282 = vst [vmem:[%s272 + $0x68] sm:$0xff] %v1280
      %s1283 = sld [smem:[#allocation3 + $0x380]]
      %v1284 = vstv %s1283
      %v1285 = vmul.f32 %v1284, %v56
      %v1286 = vmul.f32 %v1284, %v57
      %s1287 = sld [smem:[#allocation3 + $0x381]]
      %v1288 = vstv %s1287
      %v1289 = vmul.f32 %v1288, %v60
      %v1290 = vmul.f32 %v1288, %v61
      %v1291 = vadd.f32 %v1285, %v1289
      %v1292 = vadd.f32 %v1286, %v1290
      %s1293 = sld [smem:[#allocation3 + $0x382]]
      %v1294 = vstv %s1293
      %v1295 = vmul.f32 %v1294, %v62
      %v1296 = vmul.f32 %v1294, %v63
      %v1297 = vadd.f32 %v1291, %v1295
      %v1298 = vadd.f32 %v1292, %v1296
      %s1299 = sld [smem:[#allocation3 + $0x383]]
      %v1300 = vstv %s1299
      %v1301 = vmul.f32 %v1300, %v69
      %v1302 = vmul.f32 %v1300, %v70
      %v1303 = vadd.f32 %v1297, %v1301
      %v1304 = vadd.f32 %v1298, %v1302
      %s1305 = sld [smem:[#allocation3 + $0x384]]
      %v1306 = vstv %s1305
      %v1307 = vmul.f32 %v1306, %v73
      %v1308 = vmul.f32 %v1306, %v74
      %v1309 = vadd.f32 %v1303, %v1307
      %v1310 = vadd.f32 %v1304, %v1308
      %s1311 = sld [smem:[#allocation3 + $0x385]]
      %v1312 = vstv %s1311
      %v1313 = vmul.f32 %v1312, %v75
      %v1314 = vmul.f32 %v1312, %v76
      %v1315 = vadd.f32 %v1309, %v1313
      %v1316 = vadd.f32 %v1310, %v1314
      %s1317 = sld [smem:[#allocation3 + $0x386]]
      %v1318 = vstv %s1317
      %v1319 = vmul.f32 %v1318, %v82
      %v1320 = vmul.f32 %v1318, %v83
      %v1321 = vadd.f32 %v1315, %v1319
      %v1322 = vadd.f32 %v1316, %v1320
      %s1323 = sld [smem:[#allocation3 + $0x387]]
      %v1324 = vstv %s1323
      %v1325 = vmul.f32 %v1324, %v86
      %v1326 = vmul.f32 %v1324, %v87
      %v1327 = vadd.f32 %v1321, %v1325
      %v1328 = vadd.f32 %v1322, %v1326
      %s1329 = sld [smem:[#allocation3 + $0x388]]
      %v1330 = vstv %s1329
      %v1331 = vmul.f32 %v1330, %v88
      %v1332 = vmul.f32 %v1330, %v89
      %v1333 = vadd.f32 %v1327, %v1331
      %v1334 = vadd.f32 %v1328, %v1332
      %v1335 = vmul.f32 %v1284, %v60
      %v1336 = vmul.f32 %v1284, %v61
      %v1337 = vmul.f32 %v1288, %v62
      %v1338 = vmul.f32 %v1288, %v63
      %v1339 = vadd.f32 %v1335, %v1337
      %v1340 = vadd.f32 %v1336, %v1338
      %v1341 = vmul.f32 %v1294, %v64
      %v1342 = vmul.f32 %v1294, %v65
      %v1343 = vadd.f32 %v1339, %v1341
      %v1344 = vadd.f32 %v1340, %v1342
      %v1345 = vmul.f32 %v1300, %v73
      %v1346 = vmul.f32 %v1300, %v74
      %v1347 = vadd.f32 %v1343, %v1345
      %v1348 = vadd.f32 %v1344, %v1346
      %v1349 = vmul.f32 %v1306, %v75
      %v1350 = vmul.f32 %v1306, %v76
      %v1351 = vadd.f32 %v1347, %v1349
      %v1352 = vadd.f32 %v1348, %v1350
      %v1353 = vmul.f32 %v1312, %v77
      %v1354 = vmul.f32 %v1312, %v78
      %v1355 = vadd.f32 %v1351, %v1353
      %v1356 = vadd.f32 %v1352, %v1354
      %v1357 = vmul.f32 %v1318, %v86
      %v1358 = vmul.f32 %v1318, %v87
      %v1359 = vadd.f32 %v1355, %v1357
      %v1360 = vadd.f32 %v1356, %v1358
      %v1361 = vmul.f32 %v1324, %v88
      %v1362 = vmul.f32 %v1324, %v89
      %v1363 = vadd.f32 %v1359, %v1361
      %v1364 = vadd.f32 %v1360, %v1362
      %v1365 = vmul.f32 %v1330, %v90
      %v1366 = vmul.f32 %v1330, %v91
      %v1367 = vadd.f32 %v1363, %v1365
      %v1368 = vadd.f32 %v1364, %v1366
      %v1369 = vmul.f32 %v1284, %v69
      %v1370 = vmul.f32 %v1284, %v70
      %v1371 = vmul.f32 %v1288, %v73
      %v1372 = vmul.f32 %v1288, %v74
      %v1373 = vadd.f32 %v1369, %v1371
      %v1374 = vadd.f32 %v1370, %v1372
      %v1375 = vmul.f32 %v1294, %v75
      %v1376 = vmul.f32 %v1294, %v76
      %v1377 = vadd.f32 %v1373, %v1375
      %v1378 = vadd.f32 %v1374, %v1376
      %v1379 = vmul.f32 %v1300, %v82
      %v1380 = vmul.f32 %v1300, %v83
      %v1381 = vadd.f32 %v1377, %v1379
      %v1382 = vadd.f32 %v1378, %v1380
      %v1383 = vmul.f32 %v1306, %v86
      %v1384 = vmul.f32 %v1306, %v87
      %v1385 = vadd.f32 %v1381, %v1383
      %v1386 = vadd.f32 %v1382, %v1384
      %v1387 = vmul.f32 %v1312, %v88
      %v1388 = vmul.f32 %v1312, %v89
      %v1389 = vadd.f32 %v1385, %v1387
      %v1390 = vadd.f32 %v1386, %v1388
      %v1391 = vmul.f32 %v1318, %v95
      %v1392 = vmul.f32 %v1318, %v96
      %v1393 = vadd.f32 %v1389, %v1391
      %v1394 = vadd.f32 %v1390, %v1392
      %v1395 = vmul.f32 %v1324, %v99
      %v1396 = vmul.f32 %v1324, %v100
      %v1397 = vadd.f32 %v1393, %v1395
      %v1398 = vadd.f32 %v1394, %v1396
      %v1399 = vmul.f32 %v1330, %v101
      %v1400 = vmul.f32 %v1330, %v102
      %v1401 = vadd.f32 %v1397, %v1399
      %v1402 = vadd.f32 %v1398, %v1400
      %v1403 = vmul.f32 %v1284, %v73
      %v1404 = vmul.f32 %v1284, %v74
      %v1405 = vmul.f32 %v1288, %v75
      %v1406 = vmul.f32 %v1288, %v76
      %v1407 = vadd.f32 %v1403, %v1405
      %v1408 = vadd.f32 %v1404, %v1406
      %v1409 = vmul.f32 %v1294, %v77
      %v1410 = vmul.f32 %v1294, %v78
      %v1411 = vadd.f32 %v1407, %v1409
      %v1412 = vadd.f32 %v1408, %v1410
      %v1413 = vmul.f32 %v1300, %v86
      %v1414 = vmul.f32 %v1300, %v87
      %v1415 = vadd.f32 %v1411, %v1413
      %v1416 = vadd.f32 %v1412, %v1414
      %v1417 = vmul.f32 %v1306, %v88
      %v1418 = vmul.f32 %v1306, %v89
      %v1419 = vadd.f32 %v1415, %v1417
      %v1420 = vadd.f32 %v1416, %v1418
      %v1421 = vmul.f32 %v1312, %v90
      %v1422 = vmul.f32 %v1312, %v91
      %v1423 = vadd.f32 %v1419, %v1421
      %v1424 = vadd.f32 %v1420, %v1422
      %v1425 = vmul.f32 %v1318, %v99
      %v1426 = vmul.f32 %v1318, %v100
      %v1427 = vadd.f32 %v1423, %v1425
      %v1428 = vadd.f32 %v1424, %v1426
      %v1429 = vmul.f32 %v1324, %v101
      %v1430 = vmul.f32 %v1324, %v102
      %v1431 = vadd.f32 %v1427, %v1429
      %v1432 = vadd.f32 %v1428, %v1430
      %v1433 = vmul.f32 %v1330, %v103
      %v1434 = vmul.f32 %v1330, %v104
      %v1435 = vadd.f32 %v1431, %v1433
      %v1436 = vadd.f32 %v1432, %v1434
      %v1437 = vmax.f32 %v1333, %v1367
      %v1438 = vmax.f32 %v1334, %v1368
      %v1439 = vmax.f32 %v1401, %v1435
      %v1440 = vmax.f32 %v1402, %v1436
      %v1441 = vmax.f32 %v1437, %v1439
      %v1442 = vmax.f32 %v1438, %v1440
      %s1443 = sld [smem:[#allocation5 + $0x7]]
      %v1444 = vstv %s1443
      %v1445 = vadd.f32 %v1441, %v1444
      %v1446 = vadd.f32 %v1442, %v1444
      %v1447 = vmax.f32 %v1445, 0.0
      %v1448 = vmax.f32 %v1446, 0.0
      %1449 = vst [vmem:[%s272 + $0x70] sm:$0xff] %v1447
      %1450 = vst [vmem:[%s272 + $0x78] sm:$0xff] %v1448
      %s1451 = sld [smem:[#allocation3 + $0x400]]
      %v1452 = vstv %s1451
      %v1453 = vmul.f32 %v1452, %v56
      %v1454 = vmul.f32 %v1452, %v57
      %s1455 = sld [smem:[#allocation3 + $0x401]]
      %v1456 = vstv %s1455
      %v1457 = vmul.f32 %v1456, %v60
      %v1458 = vmul.f32 %v1456, %v61
      %v1459 = vadd.f32 %v1453, %v1457
      %v1460 = vadd.f32 %v1454, %v1458
      %s1461 = sld [smem:[#allocation3 + $0x402]]
      %v1462 = vstv %s1461
      %v1463 = vmul.f32 %v1462, %v62
      %v1464 = vmul.f32 %v1462, %v63
      %v1465 = vadd.f32 %v1459, %v1463
      %v1466 = vadd.f32 %v1460, %v1464
      %s1467 = sld [smem:[#allocation3 + $0x403]]
      %v1468 = vstv %s1467
      %v1469 = vmul.f32 %v1468, %v69
      %v1470 = vmul.f32 %v1468, %v70
      %v1471 = vadd.f32 %v1465, %v1469
      %v1472 = vadd.f32 %v1466, %v1470
      %s1473 = sld [smem:[#allocation3 + $0x404]]
      %v1474 = vstv %s1473
      %v1475 = vmul.f32 %v1474, %v73
      %v1476 = vmul.f32 %v1474, %v74
      %v1477 = vadd.f32 %v1471, %v1475
      %v1478 = vadd.f32 %v1472, %v1476
      %s1479 = sld [smem:[#allocation3 + $0x405]]
      %v1480 = vstv %s1479
      %v1481 = vmul.f32 %v1480, %v75
      %v1482 = vmul.f32 %v1480, %v76
      %v1483 = vadd.f32 %v1477, %v1481
      %v1484 = vadd.f32 %v1478, %v1482
      %s1485 = sld [smem:[#allocation3 + $0x406]]
      %v1486 = vstv %s1485
      %v1487 = vmul.f32 %v1486, %v82
      %v1488 = vmul.f32 %v1486, %v83
      %v1489 = vadd.f32 %v1483, %v1487
      %v1490 = vadd.f32 %v1484, %v1488
      %s1491 = sld [smem:[#allocation3 + $0x407]]
      %v1492 = vstv %s1491
      %v1493 = vmul.f32 %v1492, %v86
      %v1494 = vmul.f32 %v1492, %v87
      %v1495 = vadd.f32 %v1489, %v1493
      %v1496 = vadd.f32 %v1490, %v1494
      %s1497 = sld [smem:[#allocation3 + $0x408]]
      %v1498 = vstv %s1497
      %v1499 = vmul.f32 %v1498, %v88
      %v1500 = vmul.f32 %v1498, %v89
      %v1501 = vadd.f32 %v1495, %v1499
      %v1502 = vadd.f32 %v1496, %v1500
      %v1503 = vmul.f32 %v1452, %v60
      %v1504 = vmul.f32 %v1452, %v61
      %v1505 = vmul.f32 %v1456, %v62
      %v1506 = vmul.f32 %v1456, %v63
      %v1507 = vadd.f32 %v1503, %v1505
      %v1508 = vadd.f32 %v1504, %v1506
      %v1509 = vmul.f32 %v1462, %v64
      %v1510 = vmul.f32 %v1462, %v65
      %v1511 = vadd.f32 %v1507, %v1509
      %v1512 = vadd.f32 %v1508, %v1510
      %v1513 = vmul.f32 %v1468, %v73
      %v1514 = vmul.f32 %v1468, %v74
      %v1515 = vadd.f32 %v1511, %v1513
      %v1516 = vadd.f32 %v1512, %v1514
      %v1517 = vmul.f32 %v1474, %v75
      %v1518 = vmul.f32 %v1474, %v76
      %v1519 = vadd.f32 %v1515, %v1517
      %v1520 = vadd.f32 %v1516, %v1518
      %v1521 = vmul.f32 %v1480, %v77
      %v1522 = vmul.f32 %v1480, %v78
      %v1523 = vadd.f32 %v1519, %v1521
      %v1524 = vadd.f32 %v1520, %v1522
      %v1525 = vmul.f32 %v1486, %v86
      %v1526 = vmul.f32 %v1486, %v87
      %v1527 = vadd.f32 %v1523, %v1525
      %v1528 = vadd.f32 %v1524, %v1526
      %v1529 = vmul.f32 %v1492, %v88
      %v1530 = vmul.f32 %v1492, %v89
      %v1531 = vadd.f32 %v1527, %v1529
      %v1532 = vadd.f32 %v1528, %v1530
      %v1533 = vmul.f32 %v1498, %v90
      %v1534 = vmul.f32 %v1498, %v91
      %v1535 = vadd.f32 %v1531, %v1533
      %v1536 = vadd.f32 %v1532, %v1534
      %v1537 = vmul.f32 %v1452, %v69
      %v1538 = vmul.f32 %v1452, %v70
      %v1539 = vmul.f32 %v1456, %v73
      %v1540 = vmul.f32 %v1456, %v74
      %v1541 = vadd.f32 %v1537, %v1539
      %v1542 = vadd.f32 %v1538, %v1540
      %v1543 = vmul.f32 %v1462, %v75
      %v1544 = vmul.f32 %v1462, %v76
      %v1545 = vadd.f32 %v1541, %v1543
      %v1546 = vadd.f32 %v1542, %v1544
      %v1547 = vmul.f32 %v1468, %v82
      %v1548 = vmul.f32 %v1468, %v83
      %v1549 = vadd.f32 %v1545, %v1547
      %v1550 = vadd.f32 %v1546, %v1548
      %v1551 = vmul.f32 %v1474, %v86
      %v1552 = vmul.f32 %v1474, %v87
      %v1553 = vadd.f32 %v1549, %v1551
      %v1554 = vadd.f32 %v1550, %v1552
      %v1555 = vmul.f32 %v1480, %v88
      %v1556 = vmul.f32 %v1480, %v89
      %v1557 = vadd.f32 %v1553, %v1555
      %v1558 = vadd.f32 %v1554, %v1556
      %v1559 = vmul.f32 %v1486, %v95
      %v1560 = vmul.f32 %v1486, %v96
      %v1561 = vadd.f32 %v1557, %v1559
      %v1562 = vadd.f32 %v1558, %v1560
      %v1563 = vmul.f32 %v1492, %v99
      %v1564 = vmul.f32 %v1492, %v100
      %v1565 = vadd.f32 %v1561, %v1563
      %v1566 = vadd.f32 %v1562, %v1564
      %v1567 = vmul.f32 %v1498, %v101
      %v1568 = vmul.f32 %v1498, %v102
      %v1569 = vadd.f32 %v1565, %v1567
      %v1570 = vadd.f32 %v1566, %v1568
      %v1571 = vmul.f32 %v1452, %v73
      %v1572 = vmul.f32 %v1452, %v74
      %v1573 = vmul.f32 %v1456, %v75
      %v1574 = vmul.f32 %v1456, %v76
      %v1575 = vadd.f32 %v1571, %v1573
      %v1576 = vadd.f32 %v1572, %v1574
      %v1577 = vmul.f32 %v1462, %v77
      %v1578 = vmul.f32 %v1462, %v78
      %v1579 = vadd.f32 %v1575, %v1577
      %v1580 = vadd.f32 %v1576, %v1578
      %v1581 = vmul.f32 %v1468, %v86
      %v1582 = vmul.f32 %v1468, %v87
      %v1583 = vadd.f32 %v1579, %v1581
      %v1584 = vadd.f32 %v1580, %v1582
      %v1585 = vmul.f32 %v1474, %v88
      %v1586 = vmul.f32 %v1474, %v89
      %v1587 = vadd.f32 %v1583, %v1585
      %v1588 = vadd.f32 %v1584, %v1586
      %v1589 = vmul.f32 %v1480, %v90
      %v1590 = vmul.f32 %v1480, %v91
      %v1591 = vadd.f32 %v1587, %v1589
      %v1592 = vadd.f32 %v1588, %v1590
      %v1593 = vmul.f32 %v1486, %v99
      %v1594 = vmul.f32 %v1486, %v100
      %v1595 = vadd.f32 %v1591, %v1593
      %v1596 = vadd.f32 %v1592, %v1594
      %v1597 = vmul.f32 %v1492, %v101
      %v1598 = vmul.f32 %v1492, %v102
      %v1599 = vadd.f32 %v1595, %v1597
      %v1600 = vadd.f32 %v1596, %v1598
      %v1601 = vmul.f32 %v1498, %v103
      %v1602 = vmul.f32 %v1498, %v104
      %v1603 = vadd.f32 %v1599, %v1601
      %v1604 = vadd.f32 %v1600, %v1602
      %v1605 = vmax.f32 %v1501, %v1535
      %v1606 = vmax.f32 %v1502, %v1536
      %v1607 = vmax.f32 %v1569, %v1603
      %v1608 = vmax.f32 %v1570, %v1604
      %v1609 = vmax.f32 %v1605, %v1607
      %v1610 = vmax.f32 %v1606, %v1608
      %s1611 = sld [smem:[#allocation5 + $0x8]]
      %v1612 = vstv %s1611
      %v1613 = vadd.f32 %v1609, %v1612
      %v1614 = vadd.f32 %v1610, %v1612
      %v1615 = vmax.f32 %v1613, 0.0
      %v1616 = vmax.f32 %v1614, 0.0
      %1617 = vst [vmem:[%s272 + $0x80] sm:$0xff] %v1615
      %1618 = vst [vmem:[%s272 + $0x88] sm:$0xff] %v1616
      %s1619 = sld [smem:[#allocation3 + $0x480]]
      %v1620 = vstv %s1619
      %v1621 = vmul.f32 %v1620, %v56
      %v1622 = vmul.f32 %v1620, %v57
      %s1623 = sld [smem:[#allocation3 + $0x481]]
      %v1624 = vstv %s1623
      %v1625 = vmul.f32 %v1624, %v60
      %v1626 = vmul.f32 %v1624, %v61
      %v1627 = vadd.f32 %v1621, %v1625
      %v1628 = vadd.f32 %v1622, %v1626
      %s1629 = sld [smem:[#allocation3 + $0x482]]
      %v1630 = vstv %s1629
      %v1631 = vmul.f32 %v1630, %v62
      %v1632 = vmul.f32 %v1630, %v63
      %v1633 = vadd.f32 %v1627, %v1631
      %v1634 = vadd.f32 %v1628, %v1632
      %s1635 = sld [smem:[#allocation3 + $0x483]]
      %v1636 = vstv %s1635
      %v1637 = vmul.f32 %v1636, %v69
      %v1638 = vmul.f32 %v1636, %v70
      %v1639 = vadd.f32 %v1633, %v1637
      %v1640 = vadd.f32 %v1634, %v1638
      %s1641 = sld [smem:[#allocation3 + $0x484]]
      %v1642 = vstv %s1641
      %v1643 = vmul.f32 %v1642, %v73
      %v1644 = vmul.f32 %v1642, %v74
      %v1645 = vadd.f32 %v1639, %v1643
      %v1646 = vadd.f32 %v1640, %v1644
      %s1647 = sld [smem:[#allocation3 + $0x485]]
      %v1648 = vstv %s1647
      %v1649 = vmul.f32 %v1648, %v75
      %v1650 = vmul.f32 %v1648, %v76
      %v1651 = vadd.f32 %v1645, %v1649
      %v1652 = vadd.f32 %v1646, %v1650
      %s1653 = sld [smem:[#allocation3 + $0x486]]
      %v1654 = vstv %s1653
      %v1655 = vmul.f32 %v1654, %v82
      %v1656 = vmul.f32 %v1654, %v83
      %v1657 = vadd.f32 %v1651, %v1655
      %v1658 = vadd.f32 %v1652, %v1656
      %s1659 = sld [smem:[#allocation3 + $0x487]]
      %v1660 = vstv %s1659
      %v1661 = vmul.f32 %v1660, %v86
      %v1662 = vmul.f32 %v1660, %v87
      %v1663 = vadd.f32 %v1657, %v1661
      %v1664 = vadd.f32 %v1658, %v1662
      %s1665 = sld [smem:[#allocation3 + $0x488]]
      %v1666 = vstv %s1665
      %v1667 = vmul.f32 %v1666, %v88
      %v1668 = vmul.f32 %v1666, %v89
      %v1669 = vadd.f32 %v1663, %v1667
      %v1670 = vadd.f32 %v1664, %v1668
      %v1671 = vmul.f32 %v1620, %v60
      %v1672 = vmul.f32 %v1620, %v61
      %v1673 = vmul.f32 %v1624, %v62
      %v1674 = vmul.f32 %v1624, %v63
      %v1675 = vadd.f32 %v1671, %v1673
      %v1676 = vadd.f32 %v1672, %v1674
      %v1677 = vmul.f32 %v1630, %v64
      %v1678 = vmul.f32 %v1630, %v65
      %v1679 = vadd.f32 %v1675, %v1677
      %v1680 = vadd.f32 %v1676, %v1678
      %v1681 = vmul.f32 %v1636, %v73
      %v1682 = vmul.f32 %v1636, %v74
      %v1683 = vadd.f32 %v1679, %v1681
      %v1684 = vadd.f32 %v1680, %v1682
      %v1685 = vmul.f32 %v1642, %v75
      %v1686 = vmul.f32 %v1642, %v76
      %v1687 = vadd.f32 %v1683, %v1685
      %v1688 = vadd.f32 %v1684, %v1686
      %v1689 = vmul.f32 %v1648, %v77
      %v1690 = vmul.f32 %v1648, %v78
      %v1691 = vadd.f32 %v1687, %v1689
      %v1692 = vadd.f32 %v1688, %v1690
      %v1693 = vmul.f32 %v1654, %v86
      %v1694 = vmul.f32 %v1654, %v87
      %v1695 = vadd.f32 %v1691, %v1693
      %v1696 = vadd.f32 %v1692, %v1694
      %v1697 = vmul.f32 %v1660, %v88
      %v1698 = vmul.f32 %v1660, %v89
      %v1699 = vadd.f32 %v1695, %v1697
      %v1700 = vadd.f32 %v1696, %v1698
      %v1701 = vmul.f32 %v1666, %v90
      %v1702 = vmul.f32 %v1666, %v91
      %v1703 = vadd.f32 %v1699, %v1701
      %v1704 = vadd.f32 %v1700, %v1702
      %v1705 = vmul.f32 %v1620, %v69
      %v1706 = vmul.f32 %v1620, %v70
      %v1707 = vmul.f32 %v1624, %v73
      %v1708 = vmul.f32 %v1624, %v74
      %v1709 = vadd.f32 %v1705, %v1707
      %v1710 = vadd.f32 %v1706, %v1708
      %v1711 = vmul.f32 %v1630, %v75
      %v1712 = vmul.f32 %v1630, %v76
      %v1713 = vadd.f32 %v1709, %v1711
      %v1714 = vadd.f32 %v1710, %v1712
      %v1715 = vmul.f32 %v1636, %v82
      %v1716 = vmul.f32 %v1636, %v83
      %v1717 = vadd.f32 %v1713, %v1715
      %v1718 = vadd.f32 %v1714, %v1716
      %v1719 = vmul.f32 %v1642, %v86
      %v1720 = vmul.f32 %v1642, %v87
      %v1721 = vadd.f32 %v1717, %v1719
      %v1722 = vadd.f32 %v1718, %v1720
      %v1723 = vmul.f32 %v1648, %v88
      %v1724 = vmul.f32 %v1648, %v89
      %v1725 = vadd.f32 %v1721, %v1723
      %v1726 = vadd.f32 %v1722, %v1724
      %v1727 = vmul.f32 %v1654, %v95
      %v1728 = vmul.f32 %v1654, %v96
      %v1729 = vadd.f32 %v1725, %v1727
      %v1730 = vadd.f32 %v1726, %v1728
      %v1731 = vmul.f32 %v1660, %v99
      %v1732 = vmul.f32 %v1660, %v100
      %v1733 = vadd.f32 %v1729, %v1731
      %v1734 = vadd.f32 %v1730, %v1732
      %v1735 = vmul.f32 %v1666, %v101
      %v1736 = vmul.f32 %v1666, %v102
      %v1737 = vadd.f32 %v1733, %v1735
      %v1738 = vadd.f32 %v1734, %v1736
      %v1739 = vmul.f32 %v1620, %v73
      %v1740 = vmul.f32 %v1620, %v74
      %v1741 = vmul.f32 %v1624, %v75
      %v1742 = vmul.f32 %v1624, %v76
      %v1743 = vadd.f32 %v1739, %v1741
      %v1744 = vadd.f32 %v1740, %v1742
      %v1745 = vmul.f32 %v1630, %v77
      %v1746 = vmul.f32 %v1630, %v78
      %v1747 = vadd.f32 %v1743, %v1745
      %v1748 = vadd.f32 %v1744, %v1746
      %v1749 = vmul.f32 %v1636, %v86
      %v1750 = vmul.f32 %v1636, %v87
      %v1751 = vadd.f32 %v1747, %v1749
      %v1752 = vadd.f32 %v1748, %v1750
      %v1753 = vmul.f32 %v1642, %v88
      %v1754 = vmul.f32 %v1642, %v89
      %v1755 = vadd.f32 %v1751, %v1753
      %v1756 = vadd.f32 %v1752, %v1754
      %v1757 = vmul.f32 %v1648, %v90
      %v1758 = vmul.f32 %v1648, %v91
      %v1759 = vadd.f32 %v1755, %v1757
      %v1760 = vadd.f32 %v1756, %v1758
      %v1761 = vmul.f32 %v1654, %v99
      %v1762 = vmul.f32 %v1654, %v100
      %v1763 = vadd.f32 %v1759, %v1761
      %v1764 = vadd.f32 %v1760, %v1762
      %v1765 = vmul.f32 %v1660, %v101
      %v1766 = vmul.f32 %v1660, %v102
      %v1767 = vadd.f32 %v1763, %v1765
      %v1768 = vadd.f32 %v1764, %v1766
      %v1769 = vmul.f32 %v1666, %v103
      %v1770 = vmul.f32 %v1666, %v104
      %v1771 = vadd.f32 %v1767, %v1769
      %v1772 = vadd.f32 %v1768, %v1770
      %v1773 = vmax.f32 %v1669, %v1703
      %v1774 = vmax.f32 %v1670, %v1704
      %v1775 = vmax.f32 %v1737, %v1771
      %v1776 = vmax.f32 %v1738, %v1772
      %v1777 = vmax.f32 %v1773, %v1775
      %v1778 = vmax.f32 %v1774, %v1776
      %s1779 = sld [smem:[#allocation5 + $0x9]]
      %v1780 = vstv %s1779
      %v1781 = vadd.f32 %v1777, %v1780
      %v1782 = vadd.f32 %v1778, %v1780
      %v1783 = vmax.f32 %v1781, 0.0
      %v1784 = vmax.f32 %v1782, 0.0
      %1785 = vst [vmem:[%s272 + $0x90] sm:$0xff] %v1783
      %1786 = vst [vmem:[%s272 + $0x98] sm:$0xff] %v1784
      %s1787 = sld [smem:[#allocation3 + $0x500]]
      %v1788 = vstv %s1787
      %v1789 = vmul.f32 %v1788, %v56
      %v1790 = vmul.f32 %v1788, %v57
      %s1791 = sld [smem:[#allocation3 + $0x501]]
      %v1792 = vstv %s1791
      %v1793 = vmul.f32 %v1792, %v60
      %v1794 = vmul.f32 %v1792, %v61
      %v1795 = vadd.f32 %v1789, %v1793
      %v1796 = vadd.f32 %v1790, %v1794
      %s1797 = sld [smem:[#allocation3 + $0x502]]
      %v1798 = vstv %s1797
      %v1799 = vmul.f32 %v1798, %v62
      %v1800 = vmul.f32 %v1798, %v63
      %v1801 = vadd.f32 %v1795, %v1799
      %v1802 = vadd.f32 %v1796, %v1800
      %s1803 = sld [smem:[#allocation3 + $0x503]]
      %v1804 = vstv %s1803
      %v1805 = vmul.f32 %v1804, %v69
      %v1806 = vmul.f32 %v1804, %v70
      %v1807 = vadd.f32 %v1801, %v1805
      %v1808 = vadd.f32 %v1802, %v1806
      %s1809 = sld [smem:[#allocation3 + $0x504]]
      %v1810 = vstv %s1809
      %v1811 = vmul.f32 %v1810, %v73
      %v1812 = vmul.f32 %v1810, %v74
      %v1813 = vadd.f32 %v1807, %v1811
      %v1814 = vadd.f32 %v1808, %v1812
      %s1815 = sld [smem:[#allocation3 + $0x505]]
      %v1816 = vstv %s1815
      %v1817 = vmul.f32 %v1816, %v75
      %v1818 = vmul.f32 %v1816, %v76
      %v1819 = vadd.f32 %v1813, %v1817
      %v1820 = vadd.f32 %v1814, %v1818
      %s1821 = sld [smem:[#allocation3 + $0x506]]
      %v1822 = vstv %s1821
      %v1823 = vmul.f32 %v1822, %v82
      %v1824 = vmul.f32 %v1822, %v83
      %v1825 = vadd.f32 %v1819, %v1823
      %v1826 = vadd.f32 %v1820, %v1824
      %s1827 = sld [smem:[#allocation3 + $0x507]]
      %v1828 = vstv %s1827
      %v1829 = vmul.f32 %v1828, %v86
      %v1830 = vmul.f32 %v1828, %v87
      %v1831 = vadd.f32 %v1825, %v1829
      %v1832 = vadd.f32 %v1826, %v1830
      %s1833 = sld [smem:[#allocation3 + $0x508]]
      %v1834 = vstv %s1833
      %v1835 = vmul.f32 %v1834, %v88
      %v1836 = vmul.f32 %v1834, %v89
      %v1837 = vadd.f32 %v1831, %v1835
      %v1838 = vadd.f32 %v1832, %v1836
      %v1839 = vmul.f32 %v1788, %v60
      %v1840 = vmul.f32 %v1788, %v61
      %v1841 = vmul.f32 %v1792, %v62
      %v1842 = vmul.f32 %v1792, %v63
      %v1843 = vadd.f32 %v1839, %v1841
      %v1844 = vadd.f32 %v1840, %v1842
      %v1845 = vmul.f32 %v1798, %v64
      %v1846 = vmul.f32 %v1798, %v65
      %v1847 = vadd.f32 %v1843, %v1845
      %v1848 = vadd.f32 %v1844, %v1846
      %v1849 = vmul.f32 %v1804, %v73
      %v1850 = vmul.f32 %v1804, %v74
      %v1851 = vadd.f32 %v1847, %v1849
      %v1852 = vadd.f32 %v1848, %v1850
      %v1853 = vmul.f32 %v1810, %v75
      %v1854 = vmul.f32 %v1810, %v76
      %v1855 = vadd.f32 %v1851, %v1853
      %v1856 = vadd.f32 %v1852, %v1854
      %v1857 = vmul.f32 %v1816, %v77
      %v1858 = vmul.f32 %v1816, %v78
      %v1859 = vadd.f32 %v1855, %v1857
      %v1860 = vadd.f32 %v1856, %v1858
      %v1861 = vmul.f32 %v1822, %v86
      %v1862 = vmul.f32 %v1822, %v87
      %v1863 = vadd.f32 %v1859, %v1861
      %v1864 = vadd.f32 %v1860, %v1862
      %v1865 = vmul.f32 %v1828, %v88
      %v1866 = vmul.f32 %v1828, %v89
      %v1867 = vadd.f32 %v1863, %v1865
      %v1868 = vadd.f32 %v1864, %v1866
      %v1869 = vmul.f32 %v1834, %v90
      %v1870 = vmul.f32 %v1834, %v91
      %v1871 = vadd.f32 %v1867, %v1869
      %v1872 = vadd.f32 %v1868, %v1870
      %v1873 = vmul.f32 %v1788, %v69
      %v1874 = vmul.f32 %v1788, %v70
      %v1875 = vmul.f32 %v1792, %v73
      %v1876 = vmul.f32 %v1792, %v74
      %v1877 = vadd.f32 %v1873, %v1875
      %v1878 = vadd.f32 %v1874, %v1876
      %v1879 = vmul.f32 %v1798, %v75
      %v1880 = vmul.f32 %v1798, %v76
      %v1881 = vadd.f32 %v1877, %v1879
      %v1882 = vadd.f32 %v1878, %v1880
      %v1883 = vmul.f32 %v1804, %v82
      %v1884 = vmul.f32 %v1804, %v83
      %v1885 = vadd.f32 %v1881, %v1883
      %v1886 = vadd.f32 %v1882, %v1884
      %v1887 = vmul.f32 %v1810, %v86
      %v1888 = vmul.f32 %v1810, %v87
      %v1889 = vadd.f32 %v1885, %v1887
      %v1890 = vadd.f32 %v1886, %v1888
      %v1891 = vmul.f32 %v1816, %v88
      %v1892 = vmul.f32 %v1816, %v89
      %v1893 = vadd.f32 %v1889, %v1891
      %v1894 = vadd.f32 %v1890, %v1892
      %v1895 = vmul.f32 %v1822, %v95
      %v1896 = vmul.f32 %v1822, %v96
      %v1897 = vadd.f32 %v1893, %v1895
      %v1898 = vadd.f32 %v1894, %v1896
      %v1899 = vmul.f32 %v1828, %v99
      %v1900 = vmul.f32 %v1828, %v100
      %v1901 = vadd.f32 %v1897, %v1899
      %v1902 = vadd.f32 %v1898, %v1900
      %v1903 = vmul.f32 %v1834, %v101
      %v1904 = vmul.f32 %v1834, %v102
      %v1905 = vadd.f32 %v1901, %v1903
      %v1906 = vadd.f32 %v1902, %v1904
      %v1907 = vmul.f32 %v1788, %v73
      %v1908 = vmul.f32 %v1788, %v74
      %v1909 = vmul.f32 %v1792, %v75
      %v1910 = vmul.f32 %v1792, %v76
      %v1911 = vadd.f32 %v1907, %v1909
      %v1912 = vadd.f32 %v1908, %v1910
      %v1913 = vmul.f32 %v1798, %v77
      %v1914 = vmul.f32 %v1798, %v78
      %v1915 = vadd.f32 %v1911, %v1913
      %v1916 = vadd.f32 %v1912, %v1914
      %v1917 = vmul.f32 %v1804, %v86
      %v1918 = vmul.f32 %v1804, %v87
      %v1919 = vadd.f32 %v1915, %v1917
      %v1920 = vadd.f32 %v1916, %v1918
      %v1921 = vmul.f32 %v1810, %v88
      %v1922 = vmul.f32 %v1810, %v89
      %v1923 = vadd.f32 %v1919, %v1921
      %v1924 = vadd.f32 %v1920, %v1922
      %v1925 = vmul.f32 %v1816, %v90
      %v1926 = vmul.f32 %v1816, %v91
      %v1927 = vadd.f32 %v1923, %v1925
      %v1928 = vadd.f32 %v1924, %v1926
      %v1929 = vmul.f32 %v1822, %v99
      %v1930 = vmul.f32 %v1822, %v100
      %v1931 = vadd.f32 %v1927, %v1929
      %v1932 = vadd.f32 %v1928, %v1930
      %v1933 = vmul.f32 %v1828, %v101
      %v1934 = vmul.f32 %v1828, %v102
      %v1935 = vadd.f32 %v1931, %v1933
      %v1936 = vadd.f32 %v1932, %v1934
      %v1937 = vmul.f32 %v1834, %v103
      %v1938 = vmul.f32 %v1834, %v104
      %v1939 = vadd.f32 %v1935, %v1937
      %v1940 = vadd.f32 %v1936, %v1938
      %v1941 = vmax.f32 %v1837, %v1871
      %v1942 = vmax.f32 %v1838, %v1872
      %v1943 = vmax.f32 %v1905, %v1939
      %v1944 = vmax.f32 %v1906, %v1940
      %v1945 = vmax.f32 %v1941, %v1943
      %v1946 = vmax.f32 %v1942, %v1944
      %s1947 = sld [smem:[#allocation5 + $0xa]]
      %v1948 = vstv %s1947
      %v1949 = vadd.f32 %v1945, %v1948
      %v1950 = vadd.f32 %v1946, %v1948
      %v1951 = vmax.f32 %v1949, 0.0
      %v1952 = vmax.f32 %v1950, 0.0
      %1953 = vst [vmem:[%s272 + $0xa0] sm:$0xff] %v1951
      %1954 = vst [vmem:[%s272 + $0xa8] sm:$0xff] %v1952
      %s1955 = sld [smem:[#allocation3 + $0x580]]
      %v1956 = vstv %s1955
      %v1957 = vmul.f32 %v1956, %v56
      %v1958 = vmul.f32 %v1956, %v57
      %s1959 = sld [smem:[#allocation3 + $0x581]]
      %v1960 = vstv %s1959
      %v1961 = vmul.f32 %v1960, %v60
      %v1962 = vmul.f32 %v1960, %v61
      %v1963 = vadd.f32 %v1957, %v1961
      %v1964 = vadd.f32 %v1958, %v1962
      %s1965 = sld [smem:[#allocation3 + $0x582]]
      %v1966 = vstv %s1965
      %v1967 = vmul.f32 %v1966, %v62
      %v1968 = vmul.f32 %v1966, %v63
      %v1969 = vadd.f32 %v1963, %v1967
      %v1970 = vadd.f32 %v1964, %v1968
      %s1971 = sld [smem:[#allocation3 + $0x583]]
      %v1972 = vstv %s1971
      %v1973 = vmul.f32 %v1972, %v69
      %v1974 = vmul.f32 %v1972, %v70
      %v1975 = vadd.f32 %v1969, %v1973
      %v1976 = vadd.f32 %v1970, %v1974
      %s1977 = sld [smem:[#allocation3 + $0x584]]
      %v1978 = vstv %s1977
      %v1979 = vmul.f32 %v1978, %v73
      %v1980 = vmul.f32 %v1978, %v74
      %v1981 = vadd.f32 %v1975, %v1979
      %v1982 = vadd.f32 %v1976, %v1980
      %s1983 = sld [smem:[#allocation3 + $0x585]]
      %v1984 = vstv %s1983
      %v1985 = vmul.f32 %v1984, %v75
      %v1986 = vmul.f32 %v1984, %v76
      %v1987 = vadd.f32 %v1981, %v1985
      %v1988 = vadd.f32 %v1982, %v1986
      %s1989 = sld [smem:[#allocation3 + $0x586]]
      %v1990 = vstv %s1989
      %v1991 = vmul.f32 %v1990, %v82
      %v1992 = vmul.f32 %v1990, %v83
      %v1993 = vadd.f32 %v1987, %v1991
      %v1994 = vadd.f32 %v1988, %v1992
      %s1995 = sld [smem:[#allocation3 + $0x587]]
      %v1996 = vstv %s1995
      %v1997 = vmul.f32 %v1996, %v86
      %v1998 = vmul.f32 %v1996, %v87
      %v1999 = vadd.f32 %v1993, %v1997
      %v2000 = vadd.f32 %v1994, %v1998
      %s2001 = sld [smem:[#allocation3 + $0x588]]
      %v2002 = vstv %s2001
      %v2003 = vmul.f32 %v2002, %v88
      %v2004 = vmul.f32 %v2002, %v89
      %v2005 = vadd.f32 %v1999, %v2003
      %v2006 = vadd.f32 %v2000, %v2004
      %v2007 = vmul.f32 %v1956, %v60
      %v2008 = vmul.f32 %v1956, %v61
      %v2009 = vmul.f32 %v1960, %v62
      %v2010 = vmul.f32 %v1960, %v63
      %v2011 = vadd.f32 %v2007, %v2009
      %v2012 = vadd.f32 %v2008, %v2010
      %v2013 = vmul.f32 %v1966, %v64
      %v2014 = vmul.f32 %v1966, %v65
      %v2015 = vadd.f32 %v2011, %v2013
      %v2016 = vadd.f32 %v2012, %v2014
      %v2017 = vmul.f32 %v1972, %v73
      %v2018 = vmul.f32 %v1972, %v74
      %v2019 = vadd.f32 %v2015, %v2017
      %v2020 = vadd.f32 %v2016, %v2018
      %v2021 = vmul.f32 %v1978, %v75
      %v2022 = vmul.f32 %v1978, %v76
      %v2023 = vadd.f32 %v2019, %v2021
      %v2024 = vadd.f32 %v2020, %v2022
      %v2025 = vmul.f32 %v1984, %v77
      %v2026 = vmul.f32 %v1984, %v78
      %v2027 = vadd.f32 %v2023, %v2025
      %v2028 = vadd.f32 %v2024, %v2026
      %v2029 = vmul.f32 %v1990, %v86
      %v2030 = vmul.f32 %v1990, %v87
      %v2031 = vadd.f32 %v2027, %v2029
      %v2032 = vadd.f32 %v2028, %v2030
      %v2033 = vmul.f32 %v1996, %v88
      %v2034 = vmul.f32 %v1996, %v89
      %v2035 = vadd.f32 %v2031, %v2033
      %v2036 = vadd.f32 %v2032, %v2034
      %v2037 = vmul.f32 %v2002, %v90
      %v2038 = vmul.f32 %v2002, %v91
      %v2039 = vadd.f32 %v2035, %v2037
      %v2040 = vadd.f32 %v2036, %v2038
      %v2041 = vmul.f32 %v1956, %v69
      %v2042 = vmul.f32 %v1956, %v70
      %v2043 = vmul.f32 %v1960, %v73
      %v2044 = vmul.f32 %v1960, %v74
      %v2045 = vadd.f32 %v2041, %v2043
      %v2046 = vadd.f32 %v2042, %v2044
      %v2047 = vmul.f32 %v1966, %v75
      %v2048 = vmul.f32 %v1966, %v76
      %v2049 = vadd.f32 %v2045, %v2047
      %v2050 = vadd.f32 %v2046, %v2048
      %v2051 = vmul.f32 %v1972, %v82
      %v2052 = vmul.f32 %v1972, %v83
      %v2053 = vadd.f32 %v2049, %v2051
      %v2054 = vadd.f32 %v2050, %v2052
      %v2055 = vmul.f32 %v1978, %v86
      %v2056 = vmul.f32 %v1978, %v87
      %v2057 = vadd.f32 %v2053, %v2055
      %v2058 = vadd.f32 %v2054, %v2056
      %v2059 = vmul.f32 %v1984, %v88
      %v2060 = vmul.f32 %v1984, %v89
      %v2061 = vadd.f32 %v2057, %v2059
      %v2062 = vadd.f32 %v2058, %v2060
      %v2063 = vmul.f32 %v1990, %v95
      %v2064 = vmul.f32 %v1990, %v96
      %v2065 = vadd.f32 %v2061, %v2063
      %v2066 = vadd.f32 %v2062, %v2064
      %v2067 = vmul.f32 %v1996, %v99
      %v2068 = vmul.f32 %v1996, %v100
      %v2069 = vadd.f32 %v2065, %v2067
      %v2070 = vadd.f32 %v2066, %v2068
      %v2071 = vmul.f32 %v2002, %v101
      %v2072 = vmul.f32 %v2002, %v102
      %v2073 = vadd.f32 %v2069, %v2071
      %v2074 = vadd.f32 %v2070, %v2072
      %v2075 = vmul.f32 %v1956, %v73
      %v2076 = vmul.f32 %v1956, %v74
      %v2077 = vmul.f32 %v1960, %v75
      %v2078 = vmul.f32 %v1960, %v76
      %v2079 = vadd.f32 %v2075, %v2077
      %v2080 = vadd.f32 %v2076, %v2078
      %v2081 = vmul.f32 %v1966, %v77
      %v2082 = vmul.f32 %v1966, %v78
      %v2083 = vadd.f32 %v2079, %v2081
      %v2084 = vadd.f32 %v2080, %v2082
      %v2085 = vmul.f32 %v1972, %v86
      %v2086 = vmul.f32 %v1972, %v87
      %v2087 = vadd.f32 %v2083, %v2085
      %v2088 = vadd.f32 %v2084, %v2086
      %v2089 = vmul.f32 %v1978, %v88
      %v2090 = vmul.f32 %v1978, %v89
      %v2091 = vadd.f32 %v2087, %v2089
      %v2092 = vadd.f32 %v2088, %v2090
      %v2093 = vmul.f32 %v1984, %v90
      %v2094 = vmul.f32 %v1984, %v91
      %v2095 = vadd.f32 %v2091, %v2093
      %v2096 = vadd.f32 %v2092, %v2094
      %v2097 = vmul.f32 %v1990, %v99
      %v2098 = vmul.f32 %v1990, %v100
      %v2099 = vadd.f32 %v2095, %v2097
      %v2100 = vadd.f32 %v2096, %v2098
      %v2101 = vmul.f32 %v1996, %v101
      %v2102 = vmul.f32 %v1996, %v102
      %v2103 = vadd.f32 %v2099, %v2101
      %v2104 = vadd.f32 %v2100, %v2102
      %v2105 = vmul.f32 %v2002, %v103
      %v2106 = vmul.f32 %v2002, %v104
      %v2107 = vadd.f32 %v2103, %v2105
      %v2108 = vadd.f32 %v2104, %v2106
      %v2109 = vmax.f32 %v2005, %v2039
      %v2110 = vmax.f32 %v2006, %v2040
      %v2111 = vmax.f32 %v2073, %v2107
      %v2112 = vmax.f32 %v2074, %v2108
      %v2113 = vmax.f32 %v2109, %v2111
      %v2114 = vmax.f32 %v2110, %v2112
      %s2115 = sld [smem:[#allocation5 + $0xb]]
      %v2116 = vstv %s2115
      %v2117 = vadd.f32 %v2113, %v2116
      %v2118 = vadd.f32 %v2114, %v2116
      %v2119 = vmax.f32 %v2117, 0.0
      %v2120 = vmax.f32 %v2118, 0.0
      %2121 = vst [vmem:[%s272 + $0xb0] sm:$0xff] %v2119
      %2122 = vst [vmem:[%s272 + $0xb8] sm:$0xff] %v2120
      %s2123 = sld [smem:[#allocation3 + $0x600]]
      %v2124 = vstv %s2123
      %v2125 = vmul.f32 %v2124, %v56
      %v2126 = vmul.f32 %v2124, %v57
      %s2127 = sld [smem:[#allocation3 + $0x601]]
      %v2128 = vstv %s2127
      %v2129 = vmul.f32 %v2128, %v60
      %v2130 = vmul.f32 %v2128, %v61
      %v2131 = vadd.f32 %v2125, %v2129
      %v2132 = vadd.f32 %v2126, %v2130
      %s2133 = sld [smem:[#allocation3 + $0x602]]
      %v2134 = vstv %s2133
      %v2135 = vmul.f32 %v2134, %v62
      %v2136 = vmul.f32 %v2134, %v63
      %v2137 = vadd.f32 %v2131, %v2135
      %v2138 = vadd.f32 %v2132, %v2136
      %s2139 = sld [smem:[#allocation3 + $0x603]]
      %v2140 = vstv %s2139
      %v2141 = vmul.f32 %v2140, %v69
      %v2142 = vmul.f32 %v2140, %v70
      %v2143 = vadd.f32 %v2137, %v2141
      %v2144 = vadd.f32 %v2138, %v2142
      %s2145 = sld [smem:[#allocation3 + $0x604]]
      %v2146 = vstv %s2145
      %v2147 = vmul.f32 %v2146, %v73
      %v2148 = vmul.f32 %v2146, %v74
      %v2149 = vadd.f32 %v2143, %v2147
      %v2150 = vadd.f32 %v2144, %v2148
      %s2151 = sld [smem:[#allocation3 + $0x605]]
      %v2152 = vstv %s2151
      %v2153 = vmul.f32 %v2152, %v75
      %v2154 = vmul.f32 %v2152, %v76
      %v2155 = vadd.f32 %v2149, %v2153
      %v2156 = vadd.f32 %v2150, %v2154
      %s2157 = sld [smem:[#allocation3 + $0x606]]
      %v2158 = vstv %s2157
      %v2159 = vmul.f32 %v2158, %v82
      %v2160 = vmul.f32 %v2158, %v83
      %v2161 = vadd.f32 %v2155, %v2159
      %v2162 = vadd.f32 %v2156, %v2160
      %s2163 = sld [smem:[#allocation3 + $0x607]]
      %v2164 = vstv %s2163
      %v2165 = vmul.f32 %v2164, %v86
      %v2166 = vmul.f32 %v2164, %v87
      %v2167 = vadd.f32 %v2161, %v2165
      %v2168 = vadd.f32 %v2162, %v2166
      %s2169 = sld [smem:[#allocation3 + $0x608]]
      %v2170 = vstv %s2169
      %v2171 = vmul.f32 %v2170, %v88
      %v2172 = vmul.f32 %v2170, %v89
      %v2173 = vadd.f32 %v2167, %v2171
      %v2174 = vadd.f32 %v2168, %v2172
      %v2175 = vmul.f32 %v2124, %v60
      %v2176 = vmul.f32 %v2124, %v61
      %v2177 = vmul.f32 %v2128, %v62
      %v2178 = vmul.f32 %v2128, %v63
      %v2179 = vadd.f32 %v2175, %v2177
      %v2180 = vadd.f32 %v2176, %v2178
      %v2181 = vmul.f32 %v2134, %v64
      %v2182 = vmul.f32 %v2134, %v65
      %v2183 = vadd.f32 %v2179, %v2181
      %v2184 = vadd.f32 %v2180, %v2182
      %v2185 = vmul.f32 %v2140, %v73
      %v2186 = vmul.f32 %v2140, %v74
      %v2187 = vadd.f32 %v2183, %v2185
      %v2188 = vadd.f32 %v2184, %v2186
      %v2189 = vmul.f32 %v2146, %v75
      %v2190 = vmul.f32 %v2146, %v76
      %v2191 = vadd.f32 %v2187, %v2189
      %v2192 = vadd.f32 %v2188, %v2190
      %v2193 = vmul.f32 %v2152, %v77
      %v2194 = vmul.f32 %v2152, %v78
      %v2195 = vadd.f32 %v2191, %v2193
      %v2196 = vadd.f32 %v2192, %v2194
      %v2197 = vmul.f32 %v2158, %v86
      %v2198 = vmul.f32 %v2158, %v87
      %v2199 = vadd.f32 %v2195, %v2197
      %v2200 = vadd.f32 %v2196, %v2198
      %v2201 = vmul.f32 %v2164, %v88
      %v2202 = vmul.f32 %v2164, %v89
      %v2203 = vadd.f32 %v2199, %v2201
      %v2204 = vadd.f32 %v2200, %v2202
      %v2205 = vmul.f32 %v2170, %v90
      %v2206 = vmul.f32 %v2170, %v91
      %v2207 = vadd.f32 %v2203, %v2205
      %v2208 = vadd.f32 %v2204, %v2206
      %v2209 = vmul.f32 %v2124, %v69
      %v2210 = vmul.f32 %v2124, %v70
      %v2211 = vmul.f32 %v2128, %v73
      %v2212 = vmul.f32 %v2128, %v74
      %v2213 = vadd.f32 %v2209, %v2211
      %v2214 = vadd.f32 %v2210, %v2212
      %v2215 = vmul.f32 %v2134, %v75
      %v2216 = vmul.f32 %v2134, %v76
      %v2217 = vadd.f32 %v2213, %v2215
      %v2218 = vadd.f32 %v2214, %v2216
      %v2219 = vmul.f32 %v2140, %v82
      %v2220 = vmul.f32 %v2140, %v83
      %v2221 = vadd.f32 %v2217, %v2219
      %v2222 = vadd.f32 %v2218, %v2220
      %v2223 = vmul.f32 %v2146, %v86
      %v2224 = vmul.f32 %v2146, %v87
      %v2225 = vadd.f32 %v2221, %v2223
      %v2226 = vadd.f32 %v2222, %v2224
      %v2227 = vmul.f32 %v2152, %v88
      %v2228 = vmul.f32 %v2152, %v89
      %v2229 = vadd.f32 %v2225, %v2227
      %v2230 = vadd.f32 %v2226, %v2228
      %v2231 = vmul.f32 %v2158, %v95
      %v2232 = vmul.f32 %v2158, %v96
      %v2233 = vadd.f32 %v2229, %v2231
      %v2234 = vadd.f32 %v2230, %v2232
      %v2235 = vmul.f32 %v2164, %v99
      %v2236 = vmul.f32 %v2164, %v100
      %v2237 = vadd.f32 %v2233, %v2235
      %v2238 = vadd.f32 %v2234, %v2236
      %v2239 = vmul.f32 %v2170, %v101
      %v2240 = vmul.f32 %v2170, %v102
      %v2241 = vadd.f32 %v2237, %v2239
      %v2242 = vadd.f32 %v2238, %v2240
      %v2243 = vmul.f32 %v2124, %v73
      %v2244 = vmul.f32 %v2124, %v74
      %v2245 = vmul.f32 %v2128, %v75
      %v2246 = vmul.f32 %v2128, %v76
      %v2247 = vadd.f32 %v2243, %v2245
      %v2248 = vadd.f32 %v2244, %v2246
      %v2249 = vmul.f32 %v2134, %v77
      %v2250 = vmul.f32 %v2134, %v78
      %v2251 = vadd.f32 %v2247, %v2249
      %v2252 = vadd.f32 %v2248, %v2250
      %v2253 = vmul.f32 %v2140, %v86
      %v2254 = vmul.f32 %v2140, %v87
      %v2255 = vadd.f32 %v2251, %v2253
      %v2256 = vadd.f32 %v2252, %v2254
      %v2257 = vmul.f32 %v2146, %v88
      %v2258 = vmul.f32 %v2146, %v89
      %v2259 = vadd.f32 %v2255, %v2257
      %v2260 = vadd.f32 %v2256, %v2258
      %v2261 = vmul.f32 %v2152, %v90
      %v2262 = vmul.f32 %v2152, %v91
      %v2263 = vadd.f32 %v2259, %v2261
      %v2264 = vadd.f32 %v2260, %v2262
      %v2265 = vmul.f32 %v2158, %v99
      %v2266 = vmul.f32 %v2158, %v100
      %v2267 = vadd.f32 %v2263, %v2265
      %v2268 = vadd.f32 %v2264, %v2266
      %v2269 = vmul.f32 %v2164, %v101
      %v2270 = vmul.f32 %v2164, %v102
      %v2271 = vadd.f32 %v2267, %v2269
      %v2272 = vadd.f32 %v2268, %v2270
      %v2273 = vmul.f32 %v2170, %v103
      %v2274 = vmul.f32 %v2170, %v104
      %v2275 = vadd.f32 %v2271, %v2273
      %v2276 = vadd.f32 %v2272, %v2274
      %v2277 = vmax.f32 %v2173, %v2207
      %v2278 = vmax.f32 %v2174, %v2208
      %v2279 = vmax.f32 %v2241, %v2275
      %v2280 = vmax.f32 %v2242, %v2276
      %v2281 = vmax.f32 %v2277, %v2279
      %v2282 = vmax.f32 %v2278, %v2280
      %s2283 = sld [smem:[#allocation5 + $0xc]]
      %v2284 = vstv %s2283
      %v2285 = vadd.f32 %v2281, %v2284
      %v2286 = vadd.f32 %v2282, %v2284
      %v2287 = vmax.f32 %v2285, 0.0
      %v2288 = vmax.f32 %v2286, 0.0
      %2289 = vst [vmem:[%s272 + $0xc0] sm:$0xff] %v2287
      %2290 = vst [vmem:[%s272 + $0xc8] sm:$0xff] %v2288
      %s2291 = sld [smem:[#allocation3 + $0x680]]
      %v2292 = vstv %s2291
      %v2293 = vmul.f32 %v2292, %v56
      %v2294 = vmul.f32 %v2292, %v57
      %s2295 = sld [smem:[#allocation3 + $0x681]]
      %v2296 = vstv %s2295
      %v2297 = vmul.f32 %v2296, %v60
      %v2298 = vmul.f32 %v2296, %v61
      %v2299 = vadd.f32 %v2293, %v2297
      %v2300 = vadd.f32 %v2294, %v2298
      %s2301 = sld [smem:[#allocation3 + $0x682]]
      %v2302 = vstv %s2301
      %v2303 = vmul.f32 %v2302, %v62
      %v2304 = vmul.f32 %v2302, %v63
      %v2305 = vadd.f32 %v2299, %v2303
      %v2306 = vadd.f32 %v2300, %v2304
      %s2307 = sld [smem:[#allocation3 + $0x683]]
      %v2308 = vstv %s2307
      %v2309 = vmul.f32 %v2308, %v69
      %v2310 = vmul.f32 %v2308, %v70
      %v2311 = vadd.f32 %v2305, %v2309
      %v2312 = vadd.f32 %v2306, %v2310
      %s2313 = sld [smem:[#allocation3 + $0x684]]
      %v2314 = vstv %s2313
      %v2315 = vmul.f32 %v2314, %v73
      %v2316 = vmul.f32 %v2314, %v74
      %v2317 = vadd.f32 %v2311, %v2315
      %v2318 = vadd.f32 %v2312, %v2316
      %s2319 = sld [smem:[#allocation3 + $0x685]]
      %v2320 = vstv %s2319
      %v2321 = vmul.f32 %v2320, %v75
      %v2322 = vmul.f32 %v2320, %v76
      %v2323 = vadd.f32 %v2317, %v2321
      %v2324 = vadd.f32 %v2318, %v2322
      %s2325 = sld [smem:[#allocation3 + $0x686]]
      %v2326 = vstv %s2325
      %v2327 = vmul.f32 %v2326, %v82
      %v2328 = vmul.f32 %v2326, %v83
      %v2329 = vadd.f32 %v2323, %v2327
      %v2330 = vadd.f32 %v2324, %v2328
      %s2331 = sld [smem:[#allocation3 + $0x687]]
      %v2332 = vstv %s2331
      %v2333 = vmul.f32 %v2332, %v86
      %v2334 = vmul.f32 %v2332, %v87
      %v2335 = vadd.f32 %v2329, %v2333
      %v2336 = vadd.f32 %v2330, %v2334
      %s2337 = sld [smem:[#allocation3 + $0x688]]
      %v2338 = vstv %s2337
      %v2339 = vmul.f32 %v2338, %v88
      %v2340 = vmul.f32 %v2338, %v89
      %v2341 = vadd.f32 %v2335, %v2339
      %v2342 = vadd.f32 %v2336, %v2340
      %v2343 = vmul.f32 %v2292, %v60
      %v2344 = vmul.f32 %v2292, %v61
      %v2345 = vmul.f32 %v2296, %v62
      %v2346 = vmul.f32 %v2296, %v63
      %v2347 = vadd.f32 %v2343, %v2345
      %v2348 = vadd.f32 %v2344, %v2346
      %v2349 = vmul.f32 %v2302, %v64
      %v2350 = vmul.f32 %v2302, %v65
      %v2351 = vadd.f32 %v2347, %v2349
      %v2352 = vadd.f32 %v2348, %v2350
      %v2353 = vmul.f32 %v2308, %v73
      %v2354 = vmul.f32 %v2308, %v74
      %v2355 = vadd.f32 %v2351, %v2353
      %v2356 = vadd.f32 %v2352, %v2354
      %v2357 = vmul.f32 %v2314, %v75
      %v2358 = vmul.f32 %v2314, %v76
      %v2359 = vadd.f32 %v2355, %v2357
      %v2360 = vadd.f32 %v2356, %v2358
      %v2361 = vmul.f32 %v2320, %v77
      %v2362 = vmul.f32 %v2320, %v78
      %v2363 = vadd.f32 %v2359, %v2361
      %v2364 = vadd.f32 %v2360, %v2362
      %v2365 = vmul.f32 %v2326, %v86
      %v2366 = vmul.f32 %v2326, %v87
      %v2367 = vadd.f32 %v2363, %v2365
      %v2368 = vadd.f32 %v2364, %v2366
      %v2369 = vmul.f32 %v2332, %v88
      %v2370 = vmul.f32 %v2332, %v89
      %v2371 = vadd.f32 %v2367, %v2369
      %v2372 = vadd.f32 %v2368, %v2370
      %v2373 = vmul.f32 %v2338, %v90
      %v2374 = vmul.f32 %v2338, %v91
      %v2375 = vadd.f32 %v2371, %v2373
      %v2376 = vadd.f32 %v2372, %v2374
      %v2377 = vmul.f32 %v2292, %v69
      %v2378 = vmul.f32 %v2292, %v70
      %v2379 = vmul.f32 %v2296, %v73
      %v2380 = vmul.f32 %v2296, %v74
      %v2381 = vadd.f32 %v2377, %v2379
      %v2382 = vadd.f32 %v2378, %v2380
      %v2383 = vmul.f32 %v2302, %v75
      %v2384 = vmul.f32 %v2302, %v76
      %v2385 = vadd.f32 %v2381, %v2383
      %v2386 = vadd.f32 %v2382, %v2384
      %v2387 = vmul.f32 %v2308, %v82
      %v2388 = vmul.f32 %v2308, %v83
      %v2389 = vadd.f32 %v2385, %v2387
      %v2390 = vadd.f32 %v2386, %v2388
      %v2391 = vmul.f32 %v2314, %v86
      %v2392 = vmul.f32 %v2314, %v87
      %v2393 = vadd.f32 %v2389, %v2391
      %v2394 = vadd.f32 %v2390, %v2392
      %v2395 = vmul.f32 %v2320, %v88
      %v2396 = vmul.f32 %v2320, %v89
      %v2397 = vadd.f32 %v2393, %v2395
      %v2398 = vadd.f32 %v2394, %v2396
      %v2399 = vmul.f32 %v2326, %v95
      %v2400 = vmul.f32 %v2326, %v96
      %v2401 = vadd.f32 %v2397, %v2399
      %v2402 = vadd.f32 %v2398, %v2400
      %v2403 = vmul.f32 %v2332, %v99
      %v2404 = vmul.f32 %v2332, %v100
      %v2405 = vadd.f32 %v2401, %v2403
      %v2406 = vadd.f32 %v2402, %v2404
      %v2407 = vmul.f32 %v2338, %v101
      %v2408 = vmul.f32 %v2338, %v102
      %v2409 = vadd.f32 %v2405, %v2407
      %v2410 = vadd.f32 %v2406, %v2408
      %v2411 = vmul.f32 %v2292, %v73
      %v2412 = vmul.f32 %v2292, %v74
      %v2413 = vmul.f32 %v2296, %v75
      %v2414 = vmul.f32 %v2296, %v76
      %v2415 = vadd.f32 %v2411, %v2413
      %v2416 = vadd.f32 %v2412, %v2414
      %v2417 = vmul.f32 %v2302, %v77
      %v2418 = vmul.f32 %v2302, %v78
      %v2419 = vadd.f32 %v2415, %v2417
      %v2420 = vadd.f32 %v2416, %v2418
      %v2421 = vmul.f32 %v2308, %v86
      %v2422 = vmul.f32 %v2308, %v87
      %v2423 = vadd.f32 %v2419, %v2421
      %v2424 = vadd.f32 %v2420, %v2422
      %v2425 = vmul.f32 %v2314, %v88
      %v2426 = vmul.f32 %v2314, %v89
      %v2427 = vadd.f32 %v2423, %v2425
      %v2428 = vadd.f32 %v2424, %v2426
      %v2429 = vmul.f32 %v2320, %v90
      %v2430 = vmul.f32 %v2320, %v91
      %v2431 = vadd.f32 %v2427, %v2429
      %v2432 = vadd.f32 %v2428, %v2430
      %v2433 = vmul.f32 %v2326, %v99
      %v2434 = vmul.f32 %v2326, %v100
      %v2435 = vadd.f32 %v2431, %v2433
      %v2436 = vadd.f32 %v2432, %v2434
      %v2437 = vmul.f32 %v2332, %v101
      %v2438 = vmul.f32 %v2332, %v102
      %v2439 = vadd.f32 %v2435, %v2437
      %v2440 = vadd.f32 %v2436, %v2438
      %v2441 = vmul.f32 %v2338, %v103
      %v2442 = vmul.f32 %v2338, %v104
      %v2443 = vadd.f32 %v2439, %v2441
      %v2444 = vadd.f32 %v2440, %v2442
      %v2445 = vmax.f32 %v2341, %v2375
      %v2446 = vmax.f32 %v2342, %v2376
      %v2447 = vmax.f32 %v2409, %v2443
      %v2448 = vmax.f32 %v2410, %v2444
      %v2449 = vmax.f32 %v2445, %v2447
      %v2450 = vmax.f32 %v2446, %v2448
      %s2451 = sld [smem:[#allocation5 + $0xd]]
      %v2452 = vstv %s2451
      %v2453 = vadd.f32 %v2449, %v2452
      %v2454 = vadd.f32 %v2450, %v2452
      %v2455 = vmax.f32 %v2453, 0.0
      %v2456 = vmax.f32 %v2454, 0.0
      %2457 = vst [vmem:[%s272 + $0xd0] sm:$0xff] %v2455
      %2458 = vst [vmem:[%s272 + $0xd8] sm:$0xff] %v2456
      %s2459 = sld [smem:[#allocation3 + $0x700]]
      %v2460 = vstv %s2459
      %v2461 = vmul.f32 %v2460, %v56
      %v2462 = vmul.f32 %v2460, %v57
      %s2463 = sld [smem:[#allocation3 + $0x701]]
      %v2464 = vstv %s2463
      %v2465 = vmul.f32 %v2464, %v60
      %v2466 = vmul.f32 %v2464, %v61
      %v2467 = vadd.f32 %v2461, %v2465
      %v2468 = vadd.f32 %v2462, %v2466
      %s2469 = sld [smem:[#allocation3 + $0x702]]
      %v2470 = vstv %s2469
      %v2471 = vmul.f32 %v2470, %v62
      %v2472 = vmul.f32 %v2470, %v63
      %v2473 = vadd.f32 %v2467, %v2471
      %v2474 = vadd.f32 %v2468, %v2472
      %s2475 = sld [smem:[#allocation3 + $0x703]]
      %v2476 = vstv %s2475
      %v2477 = vmul.f32 %v2476, %v69
      %v2478 = vmul.f32 %v2476, %v70
      %v2479 = vadd.f32 %v2473, %v2477
      %v2480 = vadd.f32 %v2474, %v2478
      %s2481 = sld [smem:[#allocation3 + $0x704]]
      %v2482 = vstv %s2481
      %v2483 = vmul.f32 %v2482, %v73
      %v2484 = vmul.f32 %v2482, %v74
      %v2485 = vadd.f32 %v2479, %v2483
      %v2486 = vadd.f32 %v2480, %v2484
      %s2487 = sld [smem:[#allocation3 + $0x705]]
      %v2488 = vstv %s2487
      %v2489 = vmul.f32 %v2488, %v75
      %v2490 = vmul.f32 %v2488, %v76
      %v2491 = vadd.f32 %v2485, %v2489
      %v2492 = vadd.f32 %v2486, %v2490
      %s2493 = sld [smem:[#allocation3 + $0x706]]
      %v2494 = vstv %s2493
      %v2495 = vmul.f32 %v2494, %v82
      %v2496 = vmul.f32 %v2494, %v83
      %v2497 = vadd.f32 %v2491, %v2495
      %v2498 = vadd.f32 %v2492, %v2496
      %s2499 = sld [smem:[#allocation3 + $0x707]]
      %v2500 = vstv %s2499
      %v2501 = vmul.f32 %v2500, %v86
      %v2502 = vmul.f32 %v2500, %v87
      %v2503 = vadd.f32 %v2497, %v2501
      %v2504 = vadd.f32 %v2498, %v2502
      %s2505 = sld [smem:[#allocation3 + $0x708]]
      %v2506 = vstv %s2505
      %v2507 = vmul.f32 %v2506, %v88
      %v2508 = vmul.f32 %v2506, %v89
      %v2509 = vadd.f32 %v2503, %v2507
      %v2510 = vadd.f32 %v2504, %v2508
      %v2511 = vmul.f32 %v2460, %v60
      %v2512 = vmul.f32 %v2460, %v61
      %v2513 = vmul.f32 %v2464, %v62
      %v2514 = vmul.f32 %v2464, %v63
      %v2515 = vadd.f32 %v2511, %v2513
      %v2516 = vadd.f32 %v2512, %v2514
      %v2517 = vmul.f32 %v2470, %v64
      %v2518 = vmul.f32 %v2470, %v65
      %v2519 = vadd.f32 %v2515, %v2517
      %v2520 = vadd.f32 %v2516, %v2518
      %v2521 = vmul.f32 %v2476, %v73
      %v2522 = vmul.f32 %v2476, %v74
      %v2523 = vadd.f32 %v2519, %v2521
      %v2524 = vadd.f32 %v2520, %v2522
      %v2525 = vmul.f32 %v2482, %v75
      %v2526 = vmul.f32 %v2482, %v76
      %v2527 = vadd.f32 %v2523, %v2525
      %v2528 = vadd.f32 %v2524, %v2526
      %v2529 = vmul.f32 %v2488, %v77
      %v2530 = vmul.f32 %v2488, %v78
      %v2531 = vadd.f32 %v2527, %v2529
      %v2532 = vadd.f32 %v2528, %v2530
      %v2533 = vmul.f32 %v2494, %v86
      %v2534 = vmul.f32 %v2494, %v87
      %v2535 = vadd.f32 %v2531, %v2533
      %v2536 = vadd.f32 %v2532, %v2534
      %v2537 = vmul.f32 %v2500, %v88
      %v2538 = vmul.f32 %v2500, %v89
      %v2539 = vadd.f32 %v2535, %v2537
      %v2540 = vadd.f32 %v2536, %v2538
      %v2541 = vmul.f32 %v2506, %v90
      %v2542 = vmul.f32 %v2506, %v91
      %v2543 = vadd.f32 %v2539, %v2541
      %v2544 = vadd.f32 %v2540, %v2542
      %v2545 = vmul.f32 %v2460, %v69
      %v2546 = vmul.f32 %v2460, %v70
      %v2547 = vmul.f32 %v2464, %v73
      %v2548 = vmul.f32 %v2464, %v74
      %v2549 = vadd.f32 %v2545, %v2547
      %v2550 = vadd.f32 %v2546, %v2548
      %v2551 = vmul.f32 %v2470, %v75
      %v2552 = vmul.f32 %v2470, %v76
      %v2553 = vadd.f32 %v2549, %v2551
      %v2554 = vadd.f32 %v2550, %v2552
      %v2555 = vmul.f32 %v2476, %v82
      %v2556 = vmul.f32 %v2476, %v83
      %v2557 = vadd.f32 %v2553, %v2555
      %v2558 = vadd.f32 %v2554, %v2556
      %v2559 = vmul.f32 %v2482, %v86
      %v2560 = vmul.f32 %v2482, %v87
      %v2561 = vadd.f32 %v2557, %v2559
      %v2562 = vadd.f32 %v2558, %v2560
      %v2563 = vmul.f32 %v2488, %v88
      %v2564 = vmul.f32 %v2488, %v89
      %v2565 = vadd.f32 %v2561, %v2563
      %v2566 = vadd.f32 %v2562, %v2564
      %v2567 = vmul.f32 %v2494, %v95
      %v2568 = vmul.f32 %v2494, %v96
      %v2569 = vadd.f32 %v2565, %v2567
      %v2570 = vadd.f32 %v2566, %v2568
      %v2571 = vmul.f32 %v2500, %v99
      %v2572 = vmul.f32 %v2500, %v100
      %v2573 = vadd.f32 %v2569, %v2571
      %v2574 = vadd.f32 %v2570, %v2572
      %v2575 = vmul.f32 %v2506, %v101
      %v2576 = vmul.f32 %v2506, %v102
      %v2577 = vadd.f32 %v2573, %v2575
      %v2578 = vadd.f32 %v2574, %v2576
      %v2579 = vmul.f32 %v2460, %v73
      %v2580 = vmul.f32 %v2460, %v74
      %v2581 = vmul.f32 %v2464, %v75
      %v2582 = vmul.f32 %v2464, %v76
      %v2583 = vadd.f32 %v2579, %v2581
      %v2584 = vadd.f32 %v2580, %v2582
      %v2585 = vmul.f32 %v2470, %v77
      %v2586 = vmul.f32 %v2470, %v78
      %v2587 = vadd.f32 %v2583, %v2585
      %v2588 = vadd.f32 %v2584, %v2586
      %v2589 = vmul.f32 %v2476, %v86
      %v2590 = vmul.f32 %v2476, %v87
      %v2591 = vadd.f32 %v2587, %v2589
      %v2592 = vadd.f32 %v2588, %v2590
      %v2593 = vmul.f32 %v2482, %v88
      %v2594 = vmul.f32 %v2482, %v89
      %v2595 = vadd.f32 %v2591, %v2593
      %v2596 = vadd.f32 %v2592, %v2594
      %v2597 = vmul.f32 %v2488, %v90
      %v2598 = vmul.f32 %v2488, %v91
      %v2599 = vadd.f32 %v2595, %v2597
      %v2600 = vadd.f32 %v2596, %v2598
      %v2601 = vmul.f32 %v2494, %v99
      %v2602 = vmul.f32 %v2494, %v100
      %v2603 = vadd.f32 %v2599, %v2601
      %v2604 = vadd.f32 %v2600, %v2602
      %v2605 = vmul.f32 %v2500, %v101
      %v2606 = vmul.f32 %v2500, %v102
      %v2607 = vadd.f32 %v2603, %v2605
      %v2608 = vadd.f32 %v2604, %v2606
      %v2609 = vmul.f32 %v2506, %v103
      %v2610 = vmul.f32 %v2506, %v104
      %v2611 = vadd.f32 %v2607, %v2609
      %v2612 = vadd.f32 %v2608, %v2610
      %v2613 = vmax.f32 %v2509, %v2543
      %v2614 = vmax.f32 %v2510, %v2544
      %v2615 = vmax.f32 %v2577, %v2611
      %v2616 = vmax.f32 %v2578, %v2612
      %v2617 = vmax.f32 %v2613, %v2615
      %v2618 = vmax.f32 %v2614, %v2616
      %s2619 = sld [smem:[#allocation5 + $0xe]]
      %v2620 = vstv %s2619
      %v2621 = vadd.f32 %v2617, %v2620
      %v2622 = vadd.f32 %v2618, %v2620
      %v2623 = vmax.f32 %v2621, 0.0
      %v2624 = vmax.f32 %v2622, 0.0
      %2625 = vst [vmem:[%s272 + $0xe0] sm:$0xff] %v2623
      %2626 = vst [vmem:[%s272 + $0xe8] sm:$0xff] %v2624
      %s2627 = sld [smem:[#allocation3 + $0x780]]
      %v2628 = vstv %s2627
      %v2629 = vmul.f32 %v2628, %v56
      %v2630 = vmul.f32 %v2628, %v57
      %s2631 = sld [smem:[#allocation3 + $0x781]]
      %v2632 = vstv %s2631
      %v2633 = vmul.f32 %v2632, %v60
      %v2634 = vmul.f32 %v2632, %v61
      %v2635 = vadd.f32 %v2629, %v2633
      %v2636 = vadd.f32 %v2630, %v2634
      %s2637 = sld [smem:[#allocation3 + $0x782]]
      %v2638 = vstv %s2637
      %v2639 = vmul.f32 %v2638, %v62
      %v2640 = vmul.f32 %v2638, %v63
      %v2641 = vadd.f32 %v2635, %v2639
      %v2642 = vadd.f32 %v2636, %v2640
      %s2643 = sld [smem:[#allocation3 + $0x783]]
      %v2644 = vstv %s2643
      %v2645 = vmul.f32 %v2644, %v69
      %v2646 = vmul.f32 %v2644, %v70
      %v2647 = vadd.f32 %v2641, %v2645
      %v2648 = vadd.f32 %v2642, %v2646
      %s2649 = sld [smem:[#allocation3 + $0x784]]
      %v2650 = vstv %s2649
      %v2651 = vmul.f32 %v2650, %v73
      %v2652 = vmul.f32 %v2650, %v74
      %v2653 = vadd.f32 %v2647, %v2651
      %v2654 = vadd.f32 %v2648, %v2652
      %s2655 = sld [smem:[#allocation3 + $0x785]]
      %v2656 = vstv %s2655
      %v2657 = vmul.f32 %v2656, %v75
      %v2658 = vmul.f32 %v2656, %v76
      %v2659 = vadd.f32 %v2653, %v2657
      %v2660 = vadd.f32 %v2654, %v2658
      %s2661 = sld [smem:[#allocation3 + $0x786]]
      %v2662 = vstv %s2661
      %v2663 = vmul.f32 %v2662, %v82
      %v2664 = vmul.f32 %v2662, %v83
      %v2665 = vadd.f32 %v2659, %v2663
      %v2666 = vadd.f32 %v2660, %v2664
      %s2667 = sld [smem:[#allocation3 + $0x787]]
      %v2668 = vstv %s2667
      %v2669 = vmul.f32 %v2668, %v86
      %v2670 = vmul.f32 %v2668, %v87
      %v2671 = vadd.f32 %v2665, %v2669
      %v2672 = vadd.f32 %v2666, %v2670
      %s2673 = sld [smem:[#allocation3 + $0x788]]
      %v2674 = vstv %s2673
      %v2675 = vmul.f32 %v2674, %v88
      %v2676 = vmul.f32 %v2674, %v89
      %v2677 = vadd.f32 %v2671, %v2675
      %v2678 = vadd.f32 %v2672, %v2676
      %v2679 = vmul.f32 %v2628, %v60
      %v2680 = vmul.f32 %v2628, %v61
      %v2681 = vmul.f32 %v2632, %v62
      %v2682 = vmul.f32 %v2632, %v63
      %v2683 = vadd.f32 %v2679, %v2681
      %v2684 = vadd.f32 %v2680, %v2682
      %v2685 = vmul.f32 %v2638, %v64
      %v2686 = vmul.f32 %v2638, %v65
      %v2687 = vadd.f32 %v2683, %v2685
      %v2688 = vadd.f32 %v2684, %v2686
      %v2689 = vmul.f32 %v2644, %v73
      %v2690 = vmul.f32 %v2644, %v74
      %v2691 = vadd.f32 %v2687, %v2689
      %v2692 = vadd.f32 %v2688, %v2690
      %v2693 = vmul.f32 %v2650, %v75
      %v2694 = vmul.f32 %v2650, %v76
      %v2695 = vadd.f32 %v2691, %v2693
      %v2696 = vadd.f32 %v2692, %v2694
      %v2697 = vmul.f32 %v2656, %v77
      %v2698 = vmul.f32 %v2656, %v78
      %v2699 = vadd.f32 %v2695, %v2697
      %v2700 = vadd.f32 %v2696, %v2698
      %v2701 = vmul.f32 %v2662, %v86
      %v2702 = vmul.f32 %v2662, %v87
      %v2703 = vadd.f32 %v2699, %v2701
      %v2704 = vadd.f32 %v2700, %v2702
      %v2705 = vmul.f32 %v2668, %v88
      %v2706 = vmul.f32 %v2668, %v89
      %v2707 = vadd.f32 %v2703, %v2705
      %v2708 = vadd.f32 %v2704, %v2706
      %v2709 = vmul.f32 %v2674, %v90
      %v2710 = vmul.f32 %v2674, %v91
      %v2711 = vadd.f32 %v2707, %v2709
      %v2712 = vadd.f32 %v2708, %v2710
      %v2713 = vmul.f32 %v2628, %v69
      %v2714 = vmul.f32 %v2628, %v70
      %v2715 = vmul.f32 %v2632, %v73
      %v2716 = vmul.f32 %v2632, %v74
      %v2717 = vadd.f32 %v2713, %v2715
      %v2718 = vadd.f32 %v2714, %v2716
      %v2719 = vmul.f32 %v2638, %v75
      %v2720 = vmul.f32 %v2638, %v76
      %v2721 = vadd.f32 %v2717, %v2719
      %v2722 = vadd.f32 %v2718, %v2720
      %v2723 = vmul.f32 %v2644, %v82
      %v2724 = vmul.f32 %v2644, %v83
      %v2725 = vadd.f32 %v2721, %v2723
      %v2726 = vadd.f32 %v2722, %v2724
      %v2727 = vmul.f32 %v2650, %v86
      %v2728 = vmul.f32 %v2650, %v87
      %v2729 = vadd.f32 %v2725, %v2727
      %v2730 = vadd.f32 %v2726, %v2728
      %v2731 = vmul.f32 %v2656, %v88
      %v2732 = vmul.f32 %v2656, %v89
      %v2733 = vadd.f32 %v2729, %v2731
      %v2734 = vadd.f32 %v2730, %v2732
      %v2735 = vmul.f32 %v2662, %v95
      %v2736 = vmul.f32 %v2662, %v96
      %v2737 = vadd.f32 %v2733, %v2735
      %v2738 = vadd.f32 %v2734, %v2736
      %v2739 = vmul.f32 %v2668, %v99
      %v2740 = vmul.f32 %v2668, %v100
      %v2741 = vadd.f32 %v2737, %v2739
      %v2742 = vadd.f32 %v2738, %v2740
      %v2743 = vmul.f32 %v2674, %v101
      %v2744 = vmul.f32 %v2674, %v102
      %v2745 = vadd.f32 %v2741, %v2743
      %v2746 = vadd.f32 %v2742, %v2744
      %v2747 = vmul.f32 %v2628, %v73
      %v2748 = vmul.f32 %v2628, %v74
      %v2749 = vmul.f32 %v2632, %v75
      %v2750 = vmul.f32 %v2632, %v76
      %v2751 = vadd.f32 %v2747, %v2749
      %v2752 = vadd.f32 %v2748, %v2750
      %v2753 = vmul.f32 %v2638, %v77
      %v2754 = vmul.f32 %v2638, %v78
      %v2755 = vadd.f32 %v2751, %v2753
      %v2756 = vadd.f32 %v2752, %v2754
      %v2757 = vmul.f32 %v2644, %v86
      %v2758 = vmul.f32 %v2644, %v87
      %v2759 = vadd.f32 %v2755, %v2757
      %v2760 = vadd.f32 %v2756, %v2758
      %v2761 = vmul.f32 %v2650, %v88
      %v2762 = vmul.f32 %v2650, %v89
      %v2763 = vadd.f32 %v2759, %v2761
      %v2764 = vadd.f32 %v2760, %v2762
      %v2765 = vmul.f32 %v2656, %v90
      %v2766 = vmul.f32 %v2656, %v91
      %v2767 = vadd.f32 %v2763, %v2765
      %v2768 = vadd.f32 %v2764, %v2766
      %v2769 = vmul.f32 %v2662, %v99
      %v2770 = vmul.f32 %v2662, %v100
      %v2771 = vadd.f32 %v2767, %v2769
      %v2772 = vadd.f32 %v2768, %v2770
      %v2773 = vmul.f32 %v2668, %v101
      %v2774 = vmul.f32 %v2668, %v102
      %v2775 = vadd.f32 %v2771, %v2773
      %v2776 = vadd.f32 %v2772, %v2774
      %v2777 = vmul.f32 %v2674, %v103
      %v2778 = vmul.f32 %v2674, %v104
      %v2779 = vadd.f32 %v2775, %v2777
      %v2780 = vadd.f32 %v2776, %v2778
      %v2781 = vmax.f32 %v2677, %v2711
      %v2782 = vmax.f32 %v2678, %v2712
      %v2783 = vmax.f32 %v2745, %v2779
      %v2784 = vmax.f32 %v2746, %v2780
      %v2785 = vmax.f32 %v2781, %v2783
      %v2786 = vmax.f32 %v2782, %v2784
      %s2787 = sld [smem:[#allocation5 + $0xf]]
      %v2788 = vstv %s2787
      %v2789 = vadd.f32 %v2785, %v2788
      %v2790 = vadd.f32 %v2786, %v2788
      %v2791 = vmax.f32 %v2789, 0.0
      %v2792 = vmax.f32 %v2790, 0.0
      %2793 = vst [vmem:[%s272 + $0xf0] sm:$0xff] %v2791
      %2794 = vst [vmem:[%s272 + $0xf8] sm:$0xff] %v2792
    $region34: #{net_forward.1} parent=1 // loop_footer
      %s52 = sadd.s32 1, %s48
    $region35: #{net_forward.1} parent=1 // loop_footer_branch
      %47 = sbr.rel target = $region31
    $region36: #{net_forward.1} parent=1 // loop_exit
      _
    %v2795 = vld [vmem:[%s4] sm:$0xff]
    %v2796 = vld [vmem:[%s4 + $0x8] sm:$0xff]
    %v2797 = vld [vmem:[%s3] sm:$0xff]
    %v2798 = vld [vmem:[%s3 + $0x8] sm:$0xff]
    %v2799 = vld [vmem:[%s3 + $0x10] sm:$0xff]
    %v2800 = vld [vmem:[%s3 + $0x18] sm:$0xff]
    %v2801 = vld [vmem:[#allocation2] sm:$0xff]
    %v2802 = vld [vmem:[#allocation2 + $0x8] sm:$0xff]
    %v2803 = vld [vmem:[#allocation2 + $0x10] sm:$0xff]
    %v2804 = vld [vmem:[#allocation2 + $0x18] sm:$0xff]
    %v2805 = vld [vmem:[#allocation2 + $0x20] sm:$0xff]
    %v2806 = vld [vmem:[#allocation2 + $0x28] sm:$0xff]
    %v2807 = vld [vmem:[#allocation2 + $0x30] sm:$0xff]
    %v2808 = vld [vmem:[#allocation2 + $0x38] sm:$0xff]
    %v2809 = vld [vmem:[#allocation2 + $0x40] sm:$0xff]
    %v2810 = vld [vmem:[#allocation2 + $0x48] sm:$0xff]
    %v2811 = vld [vmem:[#allocation2 + $0x50] sm:$0xff]
    %v2812 = vld [vmem:[#allocation2 + $0x58] sm:$0xff]
    %v2813 = vld [vmem:[#allocation2 + $0x60] sm:$0xff]
    %v2814 = vld [vmem:[#allocation2 + $0x68] sm:$0xff]
    %v2815 = vld [vmem:[#allocation2 + $0x70] sm:$0xff]
    %v2816 = vld [vmem:[#allocation2 + $0x78] sm:$0xff]
    %v2817 = vld [vmem:[#allocation2 + $0x80] sm:$0xff]
    %v2818 = vld [vmem:[#allocation2 + $0x88] sm:$0xff]
    %v2819 = vld [vmem:[#allocation2 + $0x90] sm:$0xff]
    %v2820 = vld [vmem:[#allocation2 + $0x98] sm:$0xff]
    %v2821 = vld [vmem:[#allocation2 + $0xa0] sm:$0xff]
    %v2822 = vld [vmem:[#allocation2 + $0xa8] sm:$0xff]
    %v2823 = vld [vmem:[#allocation2 + $0xb0] sm:$0xff]
    %v2824 = vld [vmem:[#allocation2 + $0xb8] sm:$0xff]
    %v2825 = vld [vmem:[#allocation2 + $0xc0] sm:$0xff]
    %v2826 = vld [vmem:[#allocation2 + $0xc8] sm:$0xff]
    %v2827 = vld [vmem:[#allocation2 + $0xd0] sm:$0xff]
    %v2828 = vld [vmem:[#allocation2 + $0xd8] sm:$0xff]
    %v2829 = vld [vmem:[#allocation2 + $0xe0] sm:$0xff]
    %v2830 = vld [vmem:[#allocation2 + $0xe8] sm:$0xff]
    %v2831 = vld [vmem:[#allocation2 + $0xf0] sm:$0xff]
    %v2832 = vld [vmem:[#allocation2 + $0xf8] sm:$0xff]
    %2833 = vmatprep.subr.mxu0 0.0
    %2834 = vmatpush1.msra.mxu0 %v2801
    %2835 = vmatprep.subr.mxu0 0.0
    %2836 = vmatpush1.msra.mxu0 %v2802
    %2837 = vmatprep.subr.mxu0 0.0
    %2838 = vmatpush1.msra.mxu0 %v2803
    %2839 = vmatprep.subr.mxu0 0.0
    %2840 = vmatpush1.msra.mxu0 %v2804
    %2841 = vmatprep.subr.mxu0 0.0
    %2842 = vmatpush1.msra.mxu0 %v2805
    %2843 = vmatprep.subr.mxu0 0.0
    %2844 = vmatpush1.msra.mxu0 %v2806
    %2845 = vmatprep.subr.mxu0 0.0
    %2846 = vmatpush1.msra.mxu0 %v2807
    %2847 = vmatprep.subr.mxu0 0.0
    %2848 = vmatpush1.msra.mxu0 %v2808
    %2849 = vmatprep.subr.mxu0 0.0
    %2850 = vmatpush1.msra.mxu0 %v2809
    %2851 = vmatprep.subr.mxu0 0.0
    %2852 = vmatpush1.msra.mxu0 %v2810
    %2853 = vmatprep.subr.mxu0 0.0
    %2854 = vmatpush1.msra.mxu0 %v2811
    %2855 = vmatprep.subr.mxu0 0.0
    %2856 = vmatpush1.msra.mxu0 %v2812
    %2857 = vmatprep.subr.mxu0 0.0
    %2858 = vmatpush1.msra.mxu0 %v2813
    %2859 = vmatprep.subr.mxu0 0.0
    %2860 = vmatpush1.msra.mxu0 %v2814
    %2861 = vmatprep.subr.mxu0 0.0
    %2862 = vmatpush1.msra.mxu0 %v2815
    %2863 = vmatprep.subr.mxu0 0.0
    %2864 = vmatpush1.msra.mxu0 %v2816
    %2865 = vmatprep.subr.mxu0 0.0
    %2866 = vmatpush1.msra.mxu0 %v2817
    %2867 = vmatprep.subr.mxu0 0.0
    %2868 = vmatpush1.msra.mxu0 %v2818
    %2869 = vmatprep.subr.mxu0 0.0
    %2870 = vmatpush1.msra.mxu0 %v2819
    %2871 = vmatprep.subr.mxu0 0.0
    %2872 = vmatpush1.msra.mxu0 %v2820
    %2873 = vmatprep.subr.mxu0 0.0
    %2874 = vmatpush1.msra.mxu0 %v2821
    %2875 = vmatprep.subr.mxu0 0.0
    %2876 = vmatpush1.msra.mxu0 %v2822
    %2877 = vmatprep.subr.mxu0 0.0
    %2878 = vmatpush1.msra.mxu0 %v2823
    %2879 = vmatprep.subr.mxu0 0.0
    %2880 = vmatpush1.msra.mxu0 %v2824
    %2881 = vmatprep.subr.mxu0 0.0
    %2882 = vmatpush1.msra.mxu0 %v2825
    %2883 = vmatprep.subr.mxu0 0.0
    %2884 = vmatpush1.msra.mxu0 %v2826
    %2885 = vmatprep.subr.mxu0 0.0
    %2886 = vmatpush1.msra.mxu0 %v2827
    %2887 = vmatprep.subr.mxu0 0.0
    %2888 = vmatpush1.msra.mxu0 %v2828
    %2889 = vmatprep.subr.mxu0 0.0
    %2890 = vmatpush1.msra.mxu0 %v2829
    %2891 = vmatprep.subr.mxu0 0.0
    %2892 = vmatpush1.msra.mxu0 %v2830
    %2893 = vmatprep.subr.mxu0 0.0
    %2894 = vmatpush1.msra.mxu0 %v2831
    %2895 = vmatprep.subr.mxu0 0.0
    %2896 = vmatpush1.msra.mxu0 %v2832
    %2897 = vmatprep.mubr.f32.mxu0 %v2798
    %2898 = vmatmul.mubr.f32.gmra.mrb[0].mxu0 %v2797
    %v2899 = vpop.f32.mrb[0].mxu0
    %v2900 = vadd.f32 0.0, %v2899
    %v2901 = vpop.f32.mrb[0].mxu0
    %2902 = vmatprep.mubr.f32.mxu0 %v2800
    %2903 = vmatmul.mubr.f32.gmra.mrb[0].mxu0 %v2799
    %v2904 = vpop.f32.mrb[0].mxu0
    %v2905 = vadd.f32 0.0, %v2904
    %v2906 = vpop.f32.mrb[0].mxu0
    %2907 = vdwg.mxu0
    %v2908 = vadd.f32 %v2795, %v2900
    %v2909 = vadd.f32 %v2796, %v2905
    %s2910 = scalar_lea.vmem %s3, 32
    %v2911 = vld [vmem:[%s2910] sm:$0xff]
    %v2912 = vld [vmem:[%s2910 + $0x8] sm:$0xff]
    %v2913 = vld [vmem:[%s2910 + $0x10] sm:$0xff]
    %v2914 = vld [vmem:[%s2910 + $0x18] sm:$0xff]
    %s2915 = scalar_lea.vmem [#allocation2], 256
    %v2916 = vld [vmem:[%s2915] sm:$0xff]
    %v2917 = vld [vmem:[%s2915 + $0x8] sm:$0xff]
    %v2918 = vld [vmem:[%s2915 + $0x10] sm:$0xff]
    %v2919 = vld [vmem:[%s2915 + $0x18] sm:$0xff]
    %v2920 = vld [vmem:[%s2915 + $0x20] sm:$0xff]
    %v2921 = vld [vmem:[%s2915 + $0x28] sm:$0xff]
    %v2922 = vld [vmem:[%s2915 + $0x30] sm:$0xff]
    %v2923 = vld [vmem:[%s2915 + $0x38] sm:$0xff]
    %v2924 = vld [vmem:[%s2915 + $0x40] sm:$0xff]
    %v2925 = vld [vmem:[%s2915 + $0x48] sm:$0xff]
    %v2926 = vld [vmem:[%s2915 + $0x50] sm:$0xff]
    %v2927 = vld [vmem:[%s2915 + $0x58] sm:$0xff]
    %v2928 = vld [vmem:[%s2915 + $0x60] sm:$0xff]
    %v2929 = vld [vmem:[%s2915 + $0x68] sm:$0xff]
    %v2930 = vld [vmem:[%s2915 + $0x70] sm:$0xff]
    %v2931 = vld [vmem:[%s2915 + $0x78] sm:$0xff]
    %v2932 = vld [vmem:[%s2915 + $0x80] sm:$0xff]
    %v2933 = vld [vmem:[%s2915 + $0x88] sm:$0xff]
    %v2934 = vld [vmem:[%s2915 + $0x90] sm:$0xff]
    %v2935 = vld [vmem:[%s2915 + $0x98] sm:$0xff]
    %v2936 = vld [vmem:[%s2915 + $0xa0] sm:$0xff]
    %v2937 = vld [vmem:[%s2915 + $0xa8] sm:$0xff]
    %v2938 = vld [vmem:[%s2915 + $0xb0] sm:$0xff]
    %v2939 = vld [vmem:[%s2915 + $0xb8] sm:$0xff]
    %v2940 = vld [vmem:[%s2915 + $0xc0] sm:$0xff]
    %v2941 = vld [vmem:[%s2915 + $0xc8] sm:$0xff]
    %v2942 = vld [vmem:[%s2915 + $0xd0] sm:$0xff]
    %v2943 = vld [vmem:[%s2915 + $0xd8] sm:$0xff]
    %v2944 = vld [vmem:[%s2915 + $0xe0] sm:$0xff]
    %v2945 = vld [vmem:[%s2915 + $0xe8] sm:$0xff]
    %v2946 = vld [vmem:[%s2915 + $0xf0] sm:$0xff]
    %v2947 = vld [vmem:[%s2915 + $0xf8] sm:$0xff]
    %2948 = vmatprep.subr.mxu0 0.0
    %2949 = vmatpush1.msra.mxu0 %v2916
    %2950 = vmatprep.subr.mxu0 0.0
    %2951 = vmatpush1.msra.mxu0 %v2917
    %2952 = vmatprep.subr.mxu0 0.0
    %2953 = vmatpush1.msra.mxu0 %v2918
    %2954 = vmatprep.subr.mxu0 0.0
    %2955 = vmatpush1.msra.mxu0 %v2919
    %2956 = vmatprep.subr.mxu0 0.0
    %2957 = vmatpush1.msra.mxu0 %v2920
    %2958 = vmatprep.subr.mxu0 0.0
    %2959 = vmatpush1.msra.mxu0 %v2921
    %2960 = vmatprep.subr.mxu0 0.0
    %2961 = vmatpush1.msra.mxu0 %v2922
    %2962 = vmatprep.subr.mxu0 0.0
    %2963 = vmatpush1.msra.mxu0 %v2923
    %2964 = vmatprep.subr.mxu0 0.0
    %2965 = vmatpush1.msra.mxu0 %v2924
    %2966 = vmatprep.subr.mxu0 0.0
    %2967 = vmatpush1.msra.mxu0 %v2925
    %2968 = vmatprep.subr.mxu0 0.0
    %2969 = vmatpush1.msra.mxu0 %v2926
    %2970 = vmatprep.subr.mxu0 0.0
    %2971 = vmatpush1.msra.mxu0 %v2927
    %2972 = vmatprep.subr.mxu0 0.0
    %2973 = vmatpush1.msra.mxu0 %v2928
    %2974 = vmatprep.subr.mxu0 0.0
    %2975 = vmatpush1.msra.mxu0 %v2929
    %2976 = vmatprep.subr.mxu0 0.0
    %2977 = vmatpush1.msra.mxu0 %v2930
    %2978 = vmatprep.subr.mxu0 0.0
    %2979 = vmatpush1.msra.mxu0 %v2931
    %2980 = vmatprep.subr.mxu0 0.0
    %2981 = vmatpush1.msra.mxu0 %v2932
    %2982 = vmatprep.subr.mxu0 0.0
    %2983 = vmatpush1.msra.mxu0 %v2933
    %2984 = vmatprep.subr.mxu0 0.0
    %2985 = vmatpush1.msra.mxu0 %v2934
    %2986 = vmatprep.subr.mxu0 0.0
    %2987 = vmatpush1.msra.mxu0 %v2935
    %2988 = vmatprep.subr.mxu0 0.0
    %2989 = vmatpush1.msra.mxu0 %v2936
    %2990 = vmatprep.subr.mxu0 0.0
    %2991 = vmatpush1.msra.mxu0 %v2937
    %2992 = vmatprep.subr.mxu0 0.0
    %2993 = vmatpush1.msra.mxu0 %v2938
    %2994 = vmatprep.subr.mxu0 0.0
    %2995 = vmatpush1.msra.mxu0 %v2939
    %2996 = vmatprep.subr.mxu0 0.0
    %2997 = vmatpush1.msra.mxu0 %v2940
    %2998 = vmatprep.subr.mxu0 0.0
    %2999 = vmatpush1.msra.mxu0 %v2941
    %3000 = vmatprep.subr.mxu0 0.0
    %3001 = vmatpush1.msra.mxu0 %v2942
    %3002 = vmatprep.subr.mxu0 0.0
    %3003 = vmatpush1.msra.mxu0 %v2943
    %3004 = vmatprep.subr.mxu0 0.0
    %3005 = vmatpush1.msra.mxu0 %v2944
    %3006 = vmatprep.subr.mxu0 0.0
    %3007 = vmatpush1.msra.mxu0 %v2945
    %3008 = vmatprep.subr.mxu0 0.0
    %3009 = vmatpush1.msra.mxu0 %v2946
    %3010 = vmatprep.subr.mxu0 0.0
    %3011 = vmatpush1.msra.mxu0 %v2947
    %3012 = vmatprep.mubr.f32.mxu0 %v2912
    %3013 = vmatmul.mubr.f32.gmra.mrb[0].mxu0 %v2911
    %v3014 = vpop.f32.mrb[0].mxu0
    %v3015 = vadd.f32 0.0, %v3014
    %v3016 = vpop.f32.mrb[0].mxu0
    %3017 = vmatprep.mubr.f32.mxu0 %v2914
    %3018 = vmatmul.mubr.f32.gmra.mrb[0].mxu0 %v2913
    %v3019 = vpop.f32.mrb[0].mxu0
    %v3020 = vadd.f32 0.0, %v3019
    %v3021 = vpop.f32.mrb[0].mxu0
    %3022 = vdwg.mxu0
    %v3023 = vadd.f32 %v2908, %v3015
    %v3024 = vadd.f32 %v2909, %v3020
    %s3025 = scalar_lea.vmem %s3, 64
    %v3026 = vld [vmem:[%s3025] sm:$0xff]
    %v3027 = vld [vmem:[%s3025 + $0x8] sm:$0xff]
    %v3028 = vld [vmem:[%s3025 + $0x10] sm:$0xff]
    %v3029 = vld [vmem:[%s3025 + $0x18] sm:$0xff]
    %s3030 = scalar_lea.vmem [#allocation2], 512
    %v3031 = vld [vmem:[%s3030] sm:$0xff]
    %v3032 = vld [vmem:[%s3030 + $0x8] sm:$0xff]
    %v3033 = vld [vmem:[%s3030 + $0x10] sm:$0xff]
    %v3034 = vld [vmem:[%s3030 + $0x18] sm:$0xff]
    %v3035 = vld [vmem:[%s3030 + $0x20] sm:$0xff]
    %v3036 = vld [vmem:[%s3030 + $0x28] sm:$0xff]
    %v3037 = vld [vmem:[%s3030 + $0x30] sm:$0xff]
    %v3038 = vld [vmem:[%s3030 + $0x38] sm:$0xff]
    %v3039 = vld [vmem:[%s3030 + $0x40] sm:$0xff]
    %v3040 = vld [vmem:[%s3030 + $0x48] sm:$0xff]
    %v3041 = vld [vmem:[%s3030 + $0x50] sm:$0xff]
    %v3042 = vld [vmem:[%s3030 + $0x58] sm:$0xff]
    %v3043 = vld [vmem:[%s3030 + $0x60] sm:$0xff]
    %v3044 = vld [vmem:[%s3030 + $0x68] sm:$0xff]
    %v3045 = vld [vmem:[%s3030 + $0x70] sm:$0xff]
    %v3046 = vld [vmem:[%s3030 + $0x78] sm:$0xff]
    %v3047 = vld [vmem:[%s3030 + $0x80] sm:$0xff]
    %v3048 = vld [vmem:[%s3030 + $0x88] sm:$0xff]
    %v3049 = vld [vmem:[%s3030 + $0x90] sm:$0xff]
    %v3050 = vld [vmem:[%s3030 + $0x98] sm:$0xff]
    %v3051 = vld [vmem:[%s3030 + $0xa0] sm:$0xff]
    %v3052 = vld [vmem:[%s3030 + $0xa8] sm:$0xff]
    %v3053 = vld [vmem:[%s3030 + $0xb0] sm:$0xff]
    %v3054 = vld [vmem:[%s3030 + $0xb8] sm:$0xff]
    %v3055 = vld [vmem:[%s3030 + $0xc0] sm:$0xff]
    %v3056 = vld [vmem:[%s3030 + $0xc8] sm:$0xff]
    %v3057 = vld [vmem:[%s3030 + $0xd0] sm:$0xff]
    %v3058 = vld [vmem:[%s3030 + $0xd8] sm:$0xff]
    %v3059 = vld [vmem:[%s3030 + $0xe0] sm:$0xff]
    %v3060 = vld [vmem:[%s3030 + $0xe8] sm:$0xff]
    %v3061 = vld [vmem:[%s3030 + $0xf0] sm:$0xff]
    %v3062 = vld [vmem:[%s3030 + $0xf8] sm:$0xff]
    %3063 = vmatprep.subr.mxu0 0.0
    %3064 = vmatpush1.msra.mxu0 %v3031
    %3065 = vmatprep.subr.mxu0 0.0
    %3066 = vmatpush1.msra.mxu0 %v3032
    %3067 = vmatprep.subr.mxu0 0.0
    %3068 = vmatpush1.msra.mxu0 %v3033
    %3069 = vmatprep.subr.mxu0 0.0
    %3070 = vmatpush1.msra.mxu0 %v3034
    %3071 = vmatprep.subr.mxu0 0.0
    %3072 = vmatpush1.msra.mxu0 %v3035
    %3073 = vmatprep.subr.mxu0 0.0
    %3074 = vmatpush1.msra.mxu0 %v3036
    %3075 = vmatprep.subr.mxu0 0.0
    %3076 = vmatpush1.msra.mxu0 %v3037
    %3077 = vmatprep.subr.mxu0 0.0
    %3078 = vmatpush1.msra.mxu0 %v3038
    %3079 = vmatprep.subr.mxu0 0.0
    %3080 = vmatpush1.msra.mxu0 %v3039
    %3081 = vmatprep.subr.mxu0 0.0
    %3082 = vmatpush1.msra.mxu0 %v3040
    %3083 = vmatprep.subr.mxu0 0.0
    %3084 = vmatpush1.msra.mxu0 %v3041
    %3085 = vmatprep.subr.mxu0 0.0
    %3086 = vmatpush1.msra.mxu0 %v3042
    %3087 = vmatprep.subr.mxu0 0.0
    %3088 = vmatpush1.msra.mxu0 %v3043
    %3089 = vmatprep.subr.mxu0 0.0
    %3090 = vmatpush1.msra.mxu0 %v3044
    %3091 = vmatprep.subr.mxu0 0.0
    %3092 = vmatpush1.msra.mxu0 %v3045
    %3093 = vmatprep.subr.mxu0 0.0
    %3094 = vmatpush1.msra.mxu0 %v3046
    %3095 = vmatprep.subr.mxu0 0.0
    %3096 = vmatpush1.msra.mxu0 %v3047
    %3097 = vmatprep.subr.mxu0 0.0
    %3098 = vmatpush1.msra.mxu0 %v3048
    %3099 = vmatprep.subr.mxu0 0.0
    %3100 = vmatpush1.msra.mxu0 %v3049
    %3101 = vmatprep.subr.mxu0 0.0
    %3102 = vmatpush1.msra.mxu0 %v3050
    %3103 = vmatprep.subr.mxu0 0.0
    %3104 = vmatpush1.msra.mxu0 %v3051
    %3105 = vmatprep.subr.mxu0 0.0
    %3106 = vmatpush1.msra.mxu0 %v3052
    %3107 = vmatprep.subr.mxu0 0.0
    %3108 = vmatpush1.msra.mxu0 %v3053
    %3109 = vmatprep.subr.mxu0 0.0
    %3110 = vmatpush1.msra.mxu0 %v3054
    %3111 = vmatprep.subr.mxu0 0.0
    %3112 = vmatpush1.msra.mxu0 %v3055
    %3113 = vmatprep.subr.mxu0 0.0
    %3114 = vmatpush1.msra.mxu0 %v3056
    %3115 = vmatprep.subr.mxu0 0.0
    %3116 = vmatpush1.msra.mxu0 %v3057
    %3117 = vmatprep.subr.mxu0 0.0
    %3118 = vmatpush1.msra.mxu0 %v3058
    %3119 = vmatprep.subr.mxu0 0.0
    %3120 = vmatpush1.msra.mxu0 %v3059
    %3121 = vmatprep.subr.mxu0 0.0
    %3122 = vmatpush1.msra.mxu0 %v3060
    %3123 = vmatprep.subr.mxu0 0.0
    %3124 = vmatpush1.msra.mxu0 %v3061
    %3125 = vmatprep.subr.mxu0 0.0
    %3126 = vmatpush1.msra.mxu0 %v3062
    %3127 = vmatprep.mubr.f32.mxu0 %v3027
    %3128 = vmatmul.mubr.f32.gmra.mrb[0].mxu0 %v3026
    %v3129 = vpop.f32.mrb[0].mxu0
    %v3130 = vadd.f32 0.0, %v3129
    %v3131 = vpop.f32.mrb[0].mxu0
    %3132 = vmatprep.mubr.f32.mxu0 %v3029
    %3133 = vmatmul.mubr.f32.gmra.mrb[0].mxu0 %v3028
    %v3134 = vpop.f32.mrb[0].mxu0
    %v3135 = vadd.f32 0.0, %v3134
    %v3136 = vpop.f32.mrb[0].mxu0
    %3137 = vdwg.mxu0
    %v3138 = vadd.f32 %v3023, %v3130
    %v3139 = vadd.f32 %v3024, %v3135
    %s3140 = scalar_lea.vmem %s3, 96
    %v3141 = vld [vmem:[%s3140] sm:$0xff]
    %v3142 = vld [vmem:[%s3140 + $0x8] sm:$0xff]
    %v3143 = vld [vmem:[%s3140 + $0x10] sm:$0xff]
    %v3144 = vld [vmem:[%s3140 + $0x18] sm:$0xff]
    %s3145 = scalar_lea.vmem [#allocation2], 768
    %v3146 = vld [vmem:[%s3145] sm:$0xff]
    %v3147 = vld [vmem:[%s3145 + $0x8] sm:$0xff]
    %v3148 = vld [vmem:[%s3145 + $0x10] sm:$0xff]
    %v3149 = vld [vmem:[%s3145 + $0x18] sm:$0xff]
    %v3150 = vld [vmem:[%s3145 + $0x20] sm:$0xff]
    %v3151 = vld [vmem:[%s3145 + $0x28] sm:$0xff]
    %v3152 = vld [vmem:[%s3145 + $0x30] sm:$0xff]
    %v3153 = vld [vmem:[%s3145 + $0x38] sm:$0xff]
    %v3154 = vld [vmem:[%s3145 + $0x40] sm:$0xff]
    %v3155 = vld [vmem:[%s3145 + $0x48] sm:$0xff]
    %v3156 = vld [vmem:[%s3145 + $0x50] sm:$0xff]
    %v3157 = vld [vmem:[%s3145 + $0x58] sm:$0xff]
    %v3158 = vld [vmem:[%s3145 + $0x60] sm:$0xff]
    %v3159 = vld [vmem:[%s3145 + $0x68] sm:$0xff]
    %v3160 = vld [vmem:[%s3145 + $0x70] sm:$0xff]
    %v3161 = vld [vmem:[%s3145 + $0x78] sm:$0xff]
    %v3162 = vld [vmem:[%s3145 + $0x80] sm:$0xff]
    %v3163 = vld [vmem:[%s3145 + $0x88] sm:$0xff]
    %v3164 = vld [vmem:[%s3145 + $0x90] sm:$0xff]
    %v3165 = vld [vmem:[%s3145 + $0x98] sm:$0xff]
    %v3166 = vld [vmem:[%s3145 + $0xa0] sm:$0xff]
    %v3167 = vld [vmem:[%s3145 + $0xa8] sm:$0xff]
    %v3168 = vld [vmem:[%s3145 + $0xb0] sm:$0xff]
    %v3169 = vld [vmem:[%s3145 + $0xb8] sm:$0xff]
    %v3170 = vld [vmem:[%s3145 + $0xc0] sm:$0xff]
    %v3171 = vld [vmem:[%s3145 + $0xc8] sm:$0xff]
    %v3172 = vld [vmem:[%s3145 + $0xd0] sm:$0xff]
    %v3173 = vld [vmem:[%s3145 + $0xd8] sm:$0xff]
    %v3174 = vld [vmem:[%s3145 + $0xe0] sm:$0xff]
    %v3175 = vld [vmem:[%s3145 + $0xe8] sm:$0xff]
    %v3176 = vld [vmem:[%s3145 + $0xf0] sm:$0xff]
    %v3177 = vld [vmem:[%s3145 + $0xf8] sm:$0xff]
    %3178 = vmatprep.subr.mxu0 0.0
    %3179 = vmatpush1.msra.mxu0 %v3146
    %3180 = vmatprep.subr.mxu0 0.0
    %3181 = vmatpush1.msra.mxu0 %v3147
    %3182 = vmatprep.subr.mxu0 0.0
    %3183 = vmatpush1.msra.mxu0 %v3148
    %3184 = vmatprep.subr.mxu0 0.0
    %3185 = vmatpush1.msra.mxu0 %v3149
    %3186 = vmatprep.subr.mxu0 0.0
    %3187 = vmatpush1.msra.mxu0 %v3150
    %3188 = vmatprep.subr.mxu0 0.0
    %3189 = vmatpush1.msra.mxu0 %v3151
    %3190 = vmatprep.subr.mxu0 0.0
    %3191 = vmatpush1.msra.mxu0 %v3152
    %3192 = vmatprep.subr.mxu0 0.0
    %3193 = vmatpush1.msra.mxu0 %v3153
    %3194 = vmatprep.subr.mxu0 0.0
    %3195 = vmatpush1.msra.mxu0 %v3154
    %3196 = vmatprep.subr.mxu0 0.0
    %3197 = vmatpush1.msra.mxu0 %v3155
    %3198 = vmatprep.subr.mxu0 0.0
    %3199 = vmatpush1.msra.mxu0 %v3156
    %3200 = vmatprep.subr.mxu0 0.0
    %3201 = vmatpush1.msra.mxu0 %v3157
    %3202 = vmatprep.subr.mxu0 0.0
    %3203 = vmatpush1.msra.mxu0 %v3158
    %3204 = vmatprep.subr.mxu0 0.0
    %3205 = vmatpush1.msra.mxu0 %v3159
    %3206 = vmatprep.subr.mxu0 0.0
    %3207 = vmatpush1.msra.mxu0 %v3160
    %3208 = vmatprep.subr.mxu0 0.0
    %3209 = vmatpush1.msra.mxu0 %v3161
    %3210 = vmatprep.subr.mxu0 0.0
    %3211 = vmatpush1.msra.mxu0 %v3162
    %3212 = vmatprep.subr.mxu0 0.0
    %3213 = vmatpush1.msra.mxu0 %v3163
    %3214 = vmatprep.subr.mxu0 0.0
    %3215 = vmatpush1.msra.mxu0 %v3164
    %3216 = vmatprep.subr.mxu0 0.0
    %3217 = vmatpush1.msra.mxu0 %v3165
    %3218 = vmatprep.subr.mxu0 0.0
    %3219 = vmatpush1.msra.mxu0 %v3166
    %3220 = vmatprep.subr.mxu0 0.0
    %3221 = vmatpush1.msra.mxu0 %v3167
    %3222 = vmatprep.subr.mxu0 0.0
    %3223 = vmatpush1.msra.mxu0 %v3168
    %3224 = vmatprep.subr.mxu0 0.0
    %3225 = vmatpush1.msra.mxu0 %v3169
    %3226 = vmatprep.subr.mxu0 0.0
    %3227 = vmatpush1.msra.mxu0 %v3170
    %3228 = vmatprep.subr.mxu0 0.0
    %3229 = vmatpush1.msra.mxu0 %v3171
    %3230 = vmatprep.subr.mxu0 0.0
    %3231 = vmatpush1.msra.mxu0 %v3172
    %3232 = vmatprep.subr.mxu0 0.0
    %3233 = vmatpush1.msra.mxu0 %v3173
    %3234 = vmatprep.subr.mxu0 0.0
    %3235 = vmatpush1.msra.mxu0 %v3174
    %3236 = vmatprep.subr.mxu0 0.0
    %3237 = vmatpush1.msra.mxu0 %v3175
    %3238 = vmatprep.subr.mxu0 0.0
    %3239 = vmatpush1.msra.mxu0 %v3176
    %3240 = vmatprep.subr.mxu0 0.0
    %3241 = vmatpush1.msra.mxu0 %v3177
    %3242 = vmatprep.mubr.f32.mxu0 %v3142
    %3243 = vmatmul.mubr.f32.gmra.mrb[0].mxu0 %v3141
    %v3244 = vpop.f32.mrb[0].mxu0
    %v3245 = vadd.f32 0.0, %v3244
    %v3246 = vpop.f32.mrb[0].mxu0
    %3247 = vmatprep.mubr.f32.mxu0 %v3144
    %3248 = vmatmul.mubr.f32.gmra.mrb[0].mxu0 %v3143
    %v3249 = vpop.f32.mrb[0].mxu0
    %v3250 = vadd.f32 0.0, %v3249
    %v3251 = vpop.f32.mrb[0].mxu0
    %3252 = vdwg.mxu0
    %v3253 = vadd.f32 %v3138, %v3245
    %v3254 = vadd.f32 %v3139, %v3250
    %s3255 = scalar_lea.vmem %s3, 128
    %v3256 = vld [vmem:[%s3255] sm:$0xff]
    %v3257 = vld [vmem:[%s3255 + $0x8] sm:$0xff]
    %v3258 = vld [vmem:[%s3255 + $0x10] sm:$0xff]
    %v3259 = vld [vmem:[%s3255 + $0x18] sm:$0xff]
    %s3260 = scalar_lea.vmem [#allocation2], 1024
    %v3261 = vld [vmem:[%s3260] sm:$0xff]
    %v3262 = vld [vmem:[%s3260 + $0x8] sm:$0xff]
    %v3263 = vld [vmem:[%s3260 + $0x10] sm:$0xff]
    %v3264 = vld [vmem:[%s3260 + $0x18] sm:$0xff]
    %v3265 = vld [vmem:[%s3260 + $0x20] sm:$0xff]
    %v3266 = vld [vmem:[%s3260 + $0x28] sm:$0xff]
    %v3267 = vld [vmem:[%s3260 + $0x30] sm:$0xff]
    %v3268 = vld [vmem:[%s3260 + $0x38] sm:$0xff]
    %v3269 = vld [vmem:[%s3260 + $0x40] sm:$0xff]
    %v3270 = vld [vmem:[%s3260 + $0x48] sm:$0xff]
    %v3271 = vld [vmem:[%s3260 + $0x50] sm:$0xff]
    %v3272 = vld [vmem:[%s3260 + $0x58] sm:$0xff]
    %v3273 = vld [vmem:[%s3260 + $0x60] sm:$0xff]
    %v3274 = vld [vmem:[%s3260 + $0x68] sm:$0xff]
    %v3275 = vld [vmem:[%s3260 + $0x70] sm:$0xff]
    %v3276 = vld [vmem:[%s3260 + $0x78] sm:$0xff]
    %v3277 = vld [vmem:[%s3260 + $0x80] sm:$0xff]
    %v3278 = vld [vmem:[%s3260 + $0x88] sm:$0xff]
    %v3279 = vld [vmem:[%s3260 + $0x90] sm:$0xff]
    %v3280 = vld [vmem:[%s3260 + $0x98] sm:$0xff]
    %v3281 = vld [vmem:[%s3260 + $0xa0] sm:$0xff]
    %v3282 = vld [vmem:[%s3260 + $0xa8] sm:$0xff]
    %v3283 = vld [vmem:[%s3260 + $0xb0] sm:$0xff]
    %v3284 = vld [vmem:[%s3260 + $0xb8] sm:$0xff]
    %v3285 = vld [vmem:[%s3260 + $0xc0] sm:$0xff]
    %v3286 = vld [vmem:[%s3260 + $0xc8] sm:$0xff]
    %v3287 = vld [vmem:[%s3260 + $0xd0] sm:$0xff]
    %v3288 = vld [vmem:[%s3260 + $0xd8] sm:$0xff]
    %v3289 = vld [vmem:[%s3260 + $0xe0] sm:$0xff]
    %v3290 = vld [vmem:[%s3260 + $0xe8] sm:$0xff]
    %v3291 = vld [vmem:[%s3260 + $0xf0] sm:$0xff]
    %v3292 = vld [vmem:[%s3260 + $0xf8] sm:$0xff]
    %3293 = vmatprep.subr.mxu0 0.0
    %3294 = vmatpush1.msra.mxu0 %v3261
    %3295 = vmatprep.subr.mxu0 0.0
    %3296 = vmatpush1.msra.mxu0 %v3262
    %3297 = vmatprep.subr.mxu0 0.0
    %3298 = vmatpush1.msra.mxu0 %v3263
    %3299 = vmatprep.subr.mxu0 0.0
    %3300 = vmatpush1.msra.mxu0 %v3264
    %3301 = vmatprep.subr.mxu0 0.0
    %3302 = vmatpush1.msra.mxu0 %v3265
    %3303 = vmatprep.subr.mxu0 0.0
    %3304 = vmatpush1.msra.mxu0 %v3266
    %3305 = vmatprep.subr.mxu0 0.0
    %3306 = vmatpush1.msra.mxu0 %v3267
    %3307 = vmatprep.subr.mxu0 0.0
    %3308 = vmatpush1.msra.mxu0 %v3268
    %3309 = vmatprep.subr.mxu0 0.0
    %3310 = vmatpush1.msra.mxu0 %v3269
    %3311 = vmatprep.subr.mxu0 0.0
    %3312 = vmatpush1.msra.mxu0 %v3270
    %3313 = vmatprep.subr.mxu0 0.0
    %3314 = vmatpush1.msra.mxu0 %v3271
    %3315 = vmatprep.subr.mxu0 0.0
    %3316 = vmatpush1.msra.mxu0 %v3272
    %3317 = vmatprep.subr.mxu0 0.0
    %3318 = vmatpush1.msra.mxu0 %v3273
    %3319 = vmatprep.subr.mxu0 0.0
    %3320 = vmatpush1.msra.mxu0 %v3274
    %3321 = vmatprep.subr.mxu0 0.0
    %3322 = vmatpush1.msra.mxu0 %v3275
    %3323 = vmatprep.subr.mxu0 0.0
    %3324 = vmatpush1.msra.mxu0 %v3276
    %3325 = vmatprep.subr.mxu0 0.0
    %3326 = vmatpush1.msra.mxu0 %v3277
    %3327 = vmatprep.subr.mxu0 0.0
    %3328 = vmatpush1.msra.mxu0 %v3278
    %3329 = vmatprep.subr.mxu0 0.0
    %3330 = vmatpush1.msra.mxu0 %v3279
    %3331 = vmatprep.subr.mxu0 0.0
    %3332 = vmatpush1.msra.mxu0 %v3280
    %3333 = vmatprep.subr.mxu0 0.0
    %3334 = vmatpush1.msra.mxu0 %v3281
    %3335 = vmatprep.subr.mxu0 0.0
    %3336 = vmatpush1.msra.mxu0 %v3282
    %3337 = vmatprep.subr.mxu0 0.0
    %3338 = vmatpush1.msra.mxu0 %v3283
    %3339 = vmatprep.subr.mxu0 0.0
    %3340 = vmatpush1.msra.mxu0 %v3284
    %3341 = vmatprep.subr.mxu0 0.0
    %3342 = vmatpush1.msra.mxu0 %v3285
    %3343 = vmatprep.subr.mxu0 0.0
    %3344 = vmatpush1.msra.mxu0 %v3286
    %3345 = vmatprep.subr.mxu0 0.0
    %3346 = vmatpush1.msra.mxu0 %v3287
    %3347 = vmatprep.subr.mxu0 0.0
    %3348 = vmatpush1.msra.mxu0 %v3288
    %3349 = vmatprep.subr.mxu0 0.0
    %3350 = vmatpush1.msra.mxu0 %v3289
    %3351 = vmatprep.subr.mxu0 0.0
    %3352 = vmatpush1.msra.mxu0 %v3290
    %3353 = vmatprep.subr.mxu0 0.0
    %3354 = vmatpush1.msra.mxu0 %v3291
    %3355 = vmatprep.subr.mxu0 0.0
    %3356 = vmatpush1.msra.mxu0 %v3292
    %3357 = vmatprep.mubr.f32.mxu0 %v3257
    %3358 = vmatmul.mubr.f32.gmra.mrb[0].mxu0 %v3256
    %v3359 = vpop.f32.mrb[0].mxu0
    %v3360 = vadd.f32 0.0, %v3359
    %v3361 = vpop.f32.mrb[0].mxu0
    %3362 = vmatprep.mubr.f32.mxu0 %v3259
    %3363 = vmatmul.mubr.f32.gmra.mrb[0].mxu0 %v3258
    %v3364 = vpop.f32.mrb[0].mxu0
    %v3365 = vadd.f32 0.0, %v3364
    %v3366 = vpop.f32.mrb[0].mxu0
    %3367 = vdwg.mxu0
    %v3368 = vadd.f32 %v3253, %v3360
    %v3369 = vadd.f32 %v3254, %v3365
    %s3370 = scalar_lea.vmem %s3, 160
    %v3371 = vld [vmem:[%s3370] sm:$0xff]
    %v3372 = vld [vmem:[%s3370 + $0x8] sm:$0xff]
    %v3373 = vld [vmem:[%s3370 + $0x10] sm:$0xff]
    %v3374 = vld [vmem:[%s3370 + $0x18] sm:$0xff]
    %s3375 = scalar_lea.vmem [#allocation2], 1280
    %v3376 = vld [vmem:[%s3375] sm:$0xff]
    %v3377 = vld [vmem:[%s3375 + $0x8] sm:$0xff]
    %v3378 = vld [vmem:[%s3375 + $0x10] sm:$0xff]
    %v3379 = vld [vmem:[%s3375 + $0x18] sm:$0xff]
    %v3380 = vld [vmem:[%s3375 + $0x20] sm:$0xff]
    %v3381 = vld [vmem:[%s3375 + $0x28] sm:$0xff]
    %v3382 = vld [vmem:[%s3375 + $0x30] sm:$0xff]
    %v3383 = vld [vmem:[%s3375 + $0x38] sm:$0xff]
    %v3384 = vld [vmem:[%s3375 + $0x40] sm:$0xff]
    %v3385 = vld [vmem:[%s3375 + $0x48] sm:$0xff]
    %v3386 = vld [vmem:[%s3375 + $0x50] sm:$0xff]
    %v3387 = vld [vmem:[%s3375 + $0x58] sm:$0xff]
    %v3388 = vld [vmem:[%s3375 + $0x60] sm:$0xff]
    %v3389 = vld [vmem:[%s3375 + $0x68] sm:$0xff]
    %v3390 = vld [vmem:[%s3375 + $0x70] sm:$0xff]
    %v3391 = vld [vmem:[%s3375 + $0x78] sm:$0xff]
    %v3392 = vld [vmem:[%s3375 + $0x80] sm:$0xff]
    %v3393 = vld [vmem:[%s3375 + $0x88] sm:$0xff]
    %v3394 = vld [vmem:[%s3375 + $0x90] sm:$0xff]
    %v3395 = vld [vmem:[%s3375 + $0x98] sm:$0xff]
    %v3396 = vld [vmem:[%s3375 + $0xa0] sm:$0xff]
    %v3397 = vld [vmem:[%s3375 + $0xa8] sm:$0xff]
    %v3398 = vld [vmem:[%s3375 + $0xb0] sm:$0xff]
    %v3399 = vld [vmem:[%s3375 + $0xb8] sm:$0xff]
    %v3400 = vld [vmem:[%s3375 + $0xc0] sm:$0xff]
    %v3401 = vld [vmem:[%s3375 + $0xc8] sm:$0xff]
    %v3402 = vld [vmem:[%s3375 + $0xd0] sm:$0xff]
    %v3403 = vld [vmem:[%s3375 + $0xd8] sm:$0xff]
    %v3404 = vld [vmem:[%s3375 + $0xe0] sm:$0xff]
    %v3405 = vld [vmem:[%s3375 + $0xe8] sm:$0xff]
    %v3406 = vld [vmem:[%s3375 + $0xf0] sm:$0xff]
    %v3407 = vld [vmem:[%s3375 + $0xf8] sm:$0xff]
    %3408 = vmatprep.subr.mxu0 0.0
    %3409 = vmatpush1.msra.mxu0 %v3376
    %3410 = vmatprep.subr.mxu0 0.0
    %3411 = vmatpush1.msra.mxu0 %v3377
    %3412 = vmatprep.subr.mxu0 0.0
    %3413 = vmatpush1.msra.mxu0 %v3378
    %3414 = vmatprep.subr.mxu0 0.0
    %3415 = vmatpush1.msra.mxu0 %v3379
    %3416 = vmatprep.subr.mxu0 0.0
    %3417 = vmatpush1.msra.mxu0 %v3380
    %3418 = vmatprep.subr.mxu0 0.0
    %3419 = vmatpush1.msra.mxu0 %v3381
    %3420 = vmatprep.subr.mxu0 0.0
    %3421 = vmatpush1.msra.mxu0 %v3382
    %3422 = vmatprep.subr.mxu0 0.0
    %3423 = vmatpush1.msra.mxu0 %v3383
    %3424 = vmatprep.subr.mxu0 0.0
    %3425 = vmatpush1.msra.mxu0 %v3384
    %3426 = vmatprep.subr.mxu0 0.0
    %3427 = vmatpush1.msra.mxu0 %v3385
    %3428 = vmatprep.subr.mxu0 0.0
    %3429 = vmatpush1.msra.mxu0 %v3386
    %3430 = vmatprep.subr.mxu0 0.0
    %3431 = vmatpush1.msra.mxu0 %v3387
    %3432 = vmatprep.subr.mxu0 0.0
    %3433 = vmatpush1.msra.mxu0 %v3388
    %3434 = vmatprep.subr.mxu0 0.0
    %3435 = vmatpush1.msra.mxu0 %v3389
    %3436 = vmatprep.subr.mxu0 0.0
    %3437 = vmatpush1.msra.mxu0 %v3390
    %3438 = vmatprep.subr.mxu0 0.0
    %3439 = vmatpush1.msra.mxu0 %v3391
    %3440 = vmatprep.subr.mxu0 0.0
    %3441 = vmatpush1.msra.mxu0 %v3392
    %3442 = vmatprep.subr.mxu0 0.0
    %3443 = vmatpush1.msra.mxu0 %v3393
    %3444 = vmatprep.subr.mxu0 0.0
    %3445 = vmatpush1.msra.mxu0 %v3394
    %3446 = vmatprep.subr.mxu0 0.0
    %3447 = vmatpush1.msra.mxu0 %v3395
    %3448 = vmatprep.subr.mxu0 0.0
    %3449 = vmatpush1.msra.mxu0 %v3396
    %3450 = vmatprep.subr.mxu0 0.0
    %3451 = vmatpush1.msra.mxu0 %v3397
    %3452 = vmatprep.subr.mxu0 0.0
    %3453 = vmatpush1.msra.mxu0 %v3398
    %3454 = vmatprep.subr.mxu0 0.0
    %3455 = vmatpush1.msra.mxu0 %v3399
    %3456 = vmatprep.subr.mxu0 0.0
    %3457 = vmatpush1.msra.mxu0 %v3400
    %3458 = vmatprep.subr.mxu0 0.0
    %3459 = vmatpush1.msra.mxu0 %v3401
    %3460 = vmatprep.subr.mxu0 0.0
    %3461 = vmatpush1.msra.mxu0 %v3402
    %3462 = vmatprep.subr.mxu0 0.0
    %3463 = vmatpush1.msra.mxu0 %v3403
    %3464 = vmatprep.subr.mxu0 0.0
    %3465 = vmatpush1.msra.mxu0 %v3404
    %3466 = vmatprep.subr.mxu0 0.0
    %3467 = vmatpush1.msra.mxu0 %v3405
    %3468 = vmatprep.subr.mxu0 0.0
    %3469 = vmatpush1.msra.mxu0 %v3406
    %3470 = vmatprep.subr.mxu0 0.0
    %3471 = vmatpush1.msra.mxu0 %v3407
    %3472 = vmatprep.mubr.f32.mxu0 %v3372
    %3473 = vmatmul.mubr.f32.gmra.mrb[0].mxu0 %v3371
    %v3474 = vpop.f32.mrb[0].mxu0
    %v3475 = vadd.f32 0.0, %v3474
    %v3476 = vpop.f32.mrb[0].mxu0
    %3477 = vmatprep.mubr.f32.mxu0 %v3374
    %3478 = vmatmul.mubr.f32.gmra.mrb[0].mxu0 %v3373
    %v3479 = vpop.f32.mrb[0].mxu0
    %v3480 = vadd.f32 0.0, %v3479
    %v3481 = vpop.f32.mrb[0].mxu0
    %3482 = vdwg.mxu0
    %v3483 = vadd.f32 %v3368, %v3475
    %v3484 = vadd.f32 %v3369, %v3480
    %s3485 = scalar_lea.vmem %s3, 192
    %v3486 = vld [vmem:[%s3485] sm:$0xff]
    %v3487 = vld [vmem:[%s3485 + $0x8] sm:$0xff]
    %v3488 = vld [vmem:[%s3485 + $0x10] sm:$0xff]
    %v3489 = vld [vmem:[%s3485 + $0x18] sm:$0xff]
    %s3490 = scalar_lea.vmem [#allocation2], 1536
    %v3491 = vld [vmem:[%s3490] sm:$0xff]
    %v3492 = vld [vmem:[%s3490 + $0x8] sm:$0xff]
    %v3493 = vld [vmem:[%s3490 + $0x10] sm:$0xff]
    %v3494 = vld [vmem:[%s3490 + $0x18] sm:$0xff]
    %v3495 = vld [vmem:[%s3490 + $0x20] sm:$0xff]
    %v3496 = vld [vmem:[%s3490 + $0x28] sm:$0xff]
    %v3497 = vld [vmem:[%s3490 + $0x30] sm:$0xff]
    %v3498 = vld [vmem:[%s3490 + $0x38] sm:$0xff]
    %v3499 = vld [vmem:[%s3490 + $0x40] sm:$0xff]
    %v3500 = vld [vmem:[%s3490 + $0x48] sm:$0xff]
    %v3501 = vld [vmem:[%s3490 + $0x50] sm:$0xff]
    %v3502 = vld [vmem:[%s3490 + $0x58] sm:$0xff]
    %v3503 = vld [vmem:[%s3490 + $0x60] sm:$0xff]
    %v3504 = vld [vmem:[%s3490 + $0x68] sm:$0xff]
    %v3505 = vld [vmem:[%s3490 + $0x70] sm:$0xff]
    %v3506 = vld [vmem:[%s3490 + $0x78] sm:$0xff]
    %v3507 = vld [vmem:[%s3490 + $0x80] sm:$0xff]
    %v3508 = vld [vmem:[%s3490 + $0x88] sm:$0xff]
    %v3509 = vld [vmem:[%s3490 + $0x90] sm:$0xff]
    %v3510 = vld [vmem:[%s3490 + $0x98] sm:$0xff]
    %v3511 = vld [vmem:[%s3490 + $0xa0] sm:$0xff]
    %v3512 = vld [vmem:[%s3490 + $0xa8] sm:$0xff]
    %v3513 = vld [vmem:[%s3490 + $0xb0] sm:$0xff]
    %v3514 = vld [vmem:[%s3490 + $0xb8] sm:$0xff]
    %v3515 = vld [vmem:[%s3490 + $0xc0] sm:$0xff]
    %v3516 = vld [vmem:[%s3490 + $0xc8] sm:$0xff]
    %v3517 = vld [vmem:[%s3490 + $0xd0] sm:$0xff]
    %v3518 = vld [vmem:[%s3490 + $0xd8] sm:$0xff]
    %v3519 = vld [vmem:[%s3490 + $0xe0] sm:$0xff]
    %v3520 = vld [vmem:[%s3490 + $0xe8] sm:$0xff]
    %v3521 = vld [vmem:[%s3490 + $0xf0] sm:$0xff]
    %v3522 = vld [vmem:[%s3490 + $0xf8] sm:$0xff]
    %3523 = vmatprep.subr.mxu0 0.0
    %3524 = vmatpush1.msra.mxu0 %v3491
    %3525 = vmatprep.subr.mxu0 0.0
    %3526 = vmatpush1.msra.mxu0 %v3492
    %3527 = vmatprep.subr.mxu0 0.0
    %3528 = vmatpush1.msra.mxu0 %v3493
    %3529 = vmatprep.subr.mxu0 0.0
    %3530 = vmatpush1.msra.mxu0 %v3494
    %3531 = vmatprep.subr.mxu0 0.0
    %3532 = vmatpush1.msra.mxu0 %v3495
    %3533 = vmatprep.subr.mxu0 0.0
    %3534 = vmatpush1.msra.mxu0 %v3496
    %3535 = vmatprep.subr.mxu0 0.0
    %3536 = vmatpush1.msra.mxu0 %v3497
    %3537 = vmatprep.subr.mxu0 0.0
    %3538 = vmatpush1.msra.mxu0 %v3498
    %3539 = vmatprep.subr.mxu0 0.0
    %3540 = vmatpush1.msra.mxu0 %v3499
    %3541 = vmatprep.subr.mxu0 0.0
    %3542 = vmatpush1.msra.mxu0 %v3500
    %3543 = vmatprep.subr.mxu0 0.0
    %3544 = vmatpush1.msra.mxu0 %v3501
    %3545 = vmatprep.subr.mxu0 0.0
    %3546 = vmatpush1.msra.mxu0 %v3502
    %3547 = vmatprep.subr.mxu0 0.0
    %3548 = vmatpush1.msra.mxu0 %v3503
    %3549 = vmatprep.subr.mxu0 0.0
    %3550 = vmatpush1.msra.mxu0 %v3504
    %3551 = vmatprep.subr.mxu0 0.0
    %3552 = vmatpush1.msra.mxu0 %v3505
    %3553 = vmatprep.subr.mxu0 0.0
    %3554 = vmatpush1.msra.mxu0 %v3506
    %3555 = vmatprep.subr.mxu0 0.0
    %3556 = vmatpush1.msra.mxu0 %v3507
    %3557 = vmatprep.subr.mxu0 0.0
    %3558 = vmatpush1.msra.mxu0 %v3508
    %3559 = vmatprep.subr.mxu0 0.0
    %3560 = vmatpush1.msra.mxu0 %v3509
    %3561 = vmatprep.subr.mxu0 0.0
    %3562 = vmatpush1.msra.mxu0 %v3510
    %3563 = vmatprep.subr.mxu0 0.0
    %3564 = vmatpush1.msra.mxu0 %v3511
    %3565 = vmatprep.subr.mxu0 0.0
    %3566 = vmatpush1.msra.mxu0 %v3512
    %3567 = vmatprep.subr.mxu0 0.0
    %3568 = vmatpush1.msra.mxu0 %v3513
    %3569 = vmatprep.subr.mxu0 0.0
    %3570 = vmatpush1.msra.mxu0 %v3514
    %3571 = vmatprep.subr.mxu0 0.0
    %3572 = vmatpush1.msra.mxu0 %v3515
    %3573 = vmatprep.subr.mxu0 0.0
    %3574 = vmatpush1.msra.mxu0 %v3516
    %3575 = vmatprep.subr.mxu0 0.0
    %3576 = vmatpush1.msra.mxu0 %v3517
    %3577 = vmatprep.subr.mxu0 0.0
    %3578 = vmatpush1.msra.mxu0 %v3518
    %3579 = vmatprep.subr.mxu0 0.0
    %3580 = vmatpush1.msra.mxu0 %v3519
    %3581 = vmatprep.subr.mxu0 0.0
    %3582 = vmatpush1.msra.mxu0 %v3520
    %3583 = vmatprep.subr.mxu0 0.0
    %3584 = vmatpush1.msra.mxu0 %v3521
    %3585 = vmatprep.subr.mxu0 0.0
    %3586 = vmatpush1.msra.mxu0 %v3522
    %3587 = vmatprep.mubr.f32.mxu0 %v3487
    %3588 = vmatmul.mubr.f32.gmra.mrb[0].mxu0 %v3486
    %v3589 = vpop.f32.mrb[0].mxu0
    %v3590 = vadd.f32 0.0, %v3589
    %v3591 = vpop.f32.mrb[0].mxu0
    %3592 = vmatprep.mubr.f32.mxu0 %v3489
    %3593 = vmatmul.mubr.f32.gmra.mrb[0].mxu0 %v3488
    %v3594 = vpop.f32.mrb[0].mxu0
    %v3595 = vadd.f32 0.0, %v3594
    %v3596 = vpop.f32.mrb[0].mxu0
    %3597 = vdwg.mxu0
    %v3598 = vadd.f32 %v3483, %v3590
    %v3599 = vadd.f32 %v3484, %v3595
    %s3600 = scalar_lea.vmem %s3, 224
    %v3601 = vld [vmem:[%s3600] sm:$0xff]
    %v3602 = vld [vmem:[%s3600 + $0x8] sm:$0xff]
    %v3603 = vld [vmem:[%s3600 + $0x10] sm:$0xff]
    %v3604 = vld [vmem:[%s3600 + $0x18] sm:$0xff]
    %s3605 = scalar_lea.vmem [#allocation2], 1792
    %v3606 = vld [vmem:[%s3605] sm:$0xff]
    %v3607 = vld [vmem:[%s3605 + $0x8] sm:$0xff]
    %v3608 = vld [vmem:[%s3605 + $0x10] sm:$0xff]
    %v3609 = vld [vmem:[%s3605 + $0x18] sm:$0xff]
    %v3610 = vld [vmem:[%s3605 + $0x20] sm:$0xff]
    %v3611 = vld [vmem:[%s3605 + $0x28] sm:$0xff]
    %v3612 = vld [vmem:[%s3605 + $0x30] sm:$0xff]
    %v3613 = vld [vmem:[%s3605 + $0x38] sm:$0xff]
    %v3614 = vld [vmem:[%s3605 + $0x40] sm:$0xff]
    %v3615 = vld [vmem:[%s3605 + $0x48] sm:$0xff]
    %v3616 = vld [vmem:[%s3605 + $0x50] sm:$0xff]
    %v3617 = vld [vmem:[%s3605 + $0x58] sm:$0xff]
    %v3618 = vld [vmem:[%s3605 + $0x60] sm:$0xff]
    %v3619 = vld [vmem:[%s3605 + $0x68] sm:$0xff]
    %v3620 = vld [vmem:[%s3605 + $0x70] sm:$0xff]
    %v3621 = vld [vmem:[%s3605 + $0x78] sm:$0xff]
    %v3622 = vld [vmem:[%s3605 + $0x80] sm:$0xff]
    %v3623 = vld [vmem:[%s3605 + $0x88] sm:$0xff]
    %v3624 = vld [vmem:[%s3605 + $0x90] sm:$0xff]
    %v3625 = vld [vmem:[%s3605 + $0x98] sm:$0xff]
    %v3626 = vld [vmem:[%s3605 + $0xa0] sm:$0xff]
    %v3627 = vld [vmem:[%s3605 + $0xa8] sm:$0xff]
    %v3628 = vld [vmem:[%s3605 + $0xb0] sm:$0xff]
    %v3629 = vld [vmem:[%s3605 + $0xb8] sm:$0xff]
    %v3630 = vld [vmem:[%s3605 + $0xc0] sm:$0xff]
    %v3631 = vld [vmem:[%s3605 + $0xc8] sm:$0xff]
    %v3632 = vld [vmem:[%s3605 + $0xd0] sm:$0xff]
    %v3633 = vld [vmem:[%s3605 + $0xd8] sm:$0xff]
    %v3634 = vld [vmem:[%s3605 + $0xe0] sm:$0xff]
    %v3635 = vld [vmem:[%s3605 + $0xe8] sm:$0xff]
    %v3636 = vld [vmem:[%s3605 + $0xf0] sm:$0xff]
    %v3637 = vld [vmem:[%s3605 + $0xf8] sm:$0xff]
    %3638 = vmatprep.subr.mxu0 0.0
    %3639 = vmatpush1.msra.mxu0 %v3606
    %3640 = vmatprep.subr.mxu0 0.0
    %3641 = vmatpush1.msra.mxu0 %v3607
    %3642 = vmatprep.subr.mxu0 0.0
    %3643 = vmatpush1.msra.mxu0 %v3608
    %3644 = vmatprep.subr.mxu0 0.0
    %3645 = vmatpush1.msra.mxu0 %v3609
    %3646 = vmatprep.subr.mxu0 0.0
    %3647 = vmatpush1.msra.mxu0 %v3610
    %3648 = vmatprep.subr.mxu0 0.0
    %3649 = vmatpush1.msra.mxu0 %v3611
    %3650 = vmatprep.subr.mxu0 0.0
    %3651 = vmatpush1.msra.mxu0 %v3612
    %3652 = vmatprep.subr.mxu0 0.0
    %3653 = vmatpush1.msra.mxu0 %v3613
    %3654 = vmatprep.subr.mxu0 0.0
    %3655 = vmatpush1.msra.mxu0 %v3614
    %3656 = vmatprep.subr.mxu0 0.0
    %3657 = vmatpush1.msra.mxu0 %v3615
    %3658 = vmatprep.subr.mxu0 0.0
    %3659 = vmatpush1.msra.mxu0 %v3616
    %3660 = vmatprep.subr.mxu0 0.0
    %3661 = vmatpush1.msra.mxu0 %v3617
    %3662 = vmatprep.subr.mxu0 0.0
    %3663 = vmatpush1.msra.mxu0 %v3618
    %3664 = vmatprep.subr.mxu0 0.0
    %3665 = vmatpush1.msra.mxu0 %v3619
    %3666 = vmatprep.subr.mxu0 0.0
    %3667 = vmatpush1.msra.mxu0 %v3620
    %3668 = vmatprep.subr.mxu0 0.0
    %3669 = vmatpush1.msra.mxu0 %v3621
    %3670 = vmatprep.subr.mxu0 0.0
    %3671 = vmatpush1.msra.mxu0 %v3622
    %3672 = vmatprep.subr.mxu0 0.0
    %3673 = vmatpush1.msra.mxu0 %v3623
    %3674 = vmatprep.subr.mxu0 0.0
    %3675 = vmatpush1.msra.mxu0 %v3624
    %3676 = vmatprep.subr.mxu0 0.0
    %3677 = vmatpush1.msra.mxu0 %v3625
    %3678 = vmatprep.subr.mxu0 0.0
    %3679 = vmatpush1.msra.mxu0 %v3626
    %3680 = vmatprep.subr.mxu0 0.0
    %3681 = vmatpush1.msra.mxu0 %v3627
    %3682 = vmatprep.subr.mxu0 0.0
    %3683 = vmatpush1.msra.mxu0 %v3628
    %3684 = vmatprep.subr.mxu0 0.0
    %3685 = vmatpush1.msra.mxu0 %v3629
    %3686 = vmatprep.subr.mxu0 0.0
    %3687 = vmatpush1.msra.mxu0 %v3630
    %3688 = vmatprep.subr.mxu0 0.0
    %3689 = vmatpush1.msra.mxu0 %v3631
    %3690 = vmatprep.subr.mxu0 0.0
    %3691 = vmatpush1.msra.mxu0 %v3632
    %3692 = vmatprep.subr.mxu0 0.0
    %3693 = vmatpush1.msra.mxu0 %v3633
    %3694 = vmatprep.subr.mxu0 0.0
    %3695 = vmatpush1.msra.mxu0 %v3634
    %3696 = vmatprep.subr.mxu0 0.0
    %3697 = vmatpush1.msra.mxu0 %v3635
    %3698 = vmatprep.subr.mxu0 0.0
    %3699 = vmatpush1.msra.mxu0 %v3636
    %3700 = vmatprep.subr.mxu0 0.0
    %3701 = vmatpush1.msra.mxu0 %v3637
    %3702 = vmatprep.mubr.f32.mxu0 %v3602
    %3703 = vmatmul.mubr.f32.gmra.mrb[0].mxu0 %v3601
    %v3704 = vpop.f32.mrb[0].mxu0
    %v3705 = vadd.f32 0.0, %v3704
    %v3706 = vpop.f32.mrb[0].mxu0
    %3707 = vmatprep.mubr.f32.mxu0 %v3604
    %3708 = vmatmul.mubr.f32.gmra.mrb[0].mxu0 %v3603
    %v3709 = vpop.f32.mrb[0].mxu0
    %v3710 = vadd.f32 0.0, %v3709
    %v3711 = vpop.f32.mrb[0].mxu0
    %3712 = vdwg.mxu0
    %v3713 = vadd.f32 %v3598, %v3705
    %v3714 = vadd.f32 %v3599, %v3710
    %s3715 = scalar_lea.vmem %s3, 256
    %v3716 = vld [vmem:[%s3715] sm:$0xff]
    %v3717 = vld [vmem:[%s3715 + $0x8] sm:$0xff]
    %v3718 = vld [vmem:[%s3715 + $0x10] sm:$0xff]
    %v3719 = vld [vmem:[%s3715 + $0x18] sm:$0xff]
    %s3720 = scalar_lea.vmem [#allocation2], 2048
    %v3721 = vld [vmem:[%s3720] sm:$0xff]
    %v3722 = vld [vmem:[%s3720 + $0x8] sm:$0xff]
    %v3723 = vld [vmem:[%s3720 + $0x10] sm:$0xff]
    %v3724 = vld [vmem:[%s3720 + $0x18] sm:$0xff]
    %v3725 = vld [vmem:[%s3720 + $0x20] sm:$0xff]
    %v3726 = vld [vmem:[%s3720 + $0x28] sm:$0xff]
    %v3727 = vld [vmem:[%s3720 + $0x30] sm:$0xff]
    %v3728 = vld [vmem:[%s3720 + $0x38] sm:$0xff]
    %v3729 = vld [vmem:[%s3720 + $0x40] sm:$0xff]
    %v3730 = vld [vmem:[%s3720 + $0x48] sm:$0xff]
    %v3731 = vld [vmem:[%s3720 + $0x50] sm:$0xff]
    %v3732 = vld [vmem:[%s3720 + $0x58] sm:$0xff]
    %v3733 = vld [vmem:[%s3720 + $0x60] sm:$0xff]
    %v3734 = vld [vmem:[%s3720 + $0x68] sm:$0xff]
    %v3735 = vld [vmem:[%s3720 + $0x70] sm:$0xff]
    %v3736 = vld [vmem:[%s3720 + $0x78] sm:$0xff]
    %v3737 = vld [vmem:[%s3720 + $0x80] sm:$0xff]
    %v3738 = vld [vmem:[%s3720 + $0x88] sm:$0xff]
    %v3739 = vld [vmem:[%s3720 + $0x90] sm:$0xff]
    %v3740 = vld [vmem:[%s3720 + $0x98] sm:$0xff]
    %v3741 = vld [vmem:[%s3720 + $0xa0] sm:$0xff]
    %v3742 = vld [vmem:[%s3720 + $0xa8] sm:$0xff]
    %v3743 = vld [vmem:[%s3720 + $0xb0] sm:$0xff]
    %v3744 = vld [vmem:[%s3720 + $0xb8] sm:$0xff]
    %v3745 = vld [vmem:[%s3720 + $0xc0] sm:$0xff]
    %v3746 = vld [vmem:[%s3720 + $0xc8] sm:$0xff]
    %v3747 = vld [vmem:[%s3720 + $0xd0] sm:$0xff]
    %v3748 = vld [vmem:[%s3720 + $0xd8] sm:$0xff]
    %v3749 = vld [vmem:[%s3720 + $0xe0] sm:$0xff]
    %v3750 = vld [vmem:[%s3720 + $0xe8] sm:$0xff]
    %v3751 = vld [vmem:[%s3720 + $0xf0] sm:$0xff]
    %v3752 = vld [vmem:[%s3720 + $0xf8] sm:$0xff]
    %3753 = vmatprep.subr.mxu0 0.0
    %3754 = vmatpush1.msra.mxu0 %v3721
    %3755 = vmatprep.subr.mxu0 0.0
    %3756 = vmatpush1.msra.mxu0 %v3722
    %3757 = vmatprep.subr.mxu0 0.0
    %3758 = vmatpush1.msra.mxu0 %v3723
    %3759 = vmatprep.subr.mxu0 0.0
    %3760 = vmatpush1.msra.mxu0 %v3724
    %3761 = vmatprep.subr.mxu0 0.0
    %3762 = vmatpush1.msra.mxu0 %v3725
    %3763 = vmatprep.subr.mxu0 0.0
    %3764 = vmatpush1.msra.mxu0 %v3726
    %3765 = vmatprep.subr.mxu0 0.0
    %3766 = vmatpush1.msra.mxu0 %v3727
    %3767 = vmatprep.subr.mxu0 0.0
    %3768 = vmatpush1.msra.mxu0 %v3728
    %3769 = vmatprep.subr.mxu0 0.0
    %3770 = vmatpush1.msra.mxu0 %v3729
    %3771 = vmatprep.subr.mxu0 0.0
    %3772 = vmatpush1.msra.mxu0 %v3730
    %3773 = vmatprep.subr.mxu0 0.0
    %3774 = vmatpush1.msra.mxu0 %v3731
    %3775 = vmatprep.subr.mxu0 0.0
    %3776 = vmatpush1.msra.mxu0 %v3732
    %3777 = vmatprep.subr.mxu0 0.0
    %3778 = vmatpush1.msra.mxu0 %v3733
    %3779 = vmatprep.subr.mxu0 0.0
    %3780 = vmatpush1.msra.mxu0 %v3734
    %3781 = vmatprep.subr.mxu0 0.0
    %3782 = vmatpush1.msra.mxu0 %v3735
    %3783 = vmatprep.subr.mxu0 0.0
    %3784 = vmatpush1.msra.mxu0 %v3736
    %3785 = vmatprep.subr.mxu0 0.0
    %3786 = vmatpush1.msra.mxu0 %v3737
    %3787 = vmatprep.subr.mxu0 0.0
    %3788 = vmatpush1.msra.mxu0 %v3738
    %3789 = vmatprep.subr.mxu0 0.0
    %3790 = vmatpush1.msra.mxu0 %v3739
    %3791 = vmatprep.subr.mxu0 0.0
    %3792 = vmatpush1.msra.mxu0 %v3740
    %3793 = vmatprep.subr.mxu0 0.0
    %3794 = vmatpush1.msra.mxu0 %v3741
    %3795 = vmatprep.subr.mxu0 0.0
    %3796 = vmatpush1.msra.mxu0 %v3742
    %3797 = vmatprep.subr.mxu0 0.0
    %3798 = vmatpush1.msra.mxu0 %v3743
    %3799 = vmatprep.subr.mxu0 0.0
    %3800 = vmatpush1.msra.mxu0 %v3744
    %3801 = vmatprep.subr.mxu0 0.0
    %3802 = vmatpush1.msra.mxu0 %v3745
    %3803 = vmatprep.subr.mxu0 0.0
    %3804 = vmatpush1.msra.mxu0 %v3746
    %3805 = vmatprep.subr.mxu0 0.0
    %3806 = vmatpush1.msra.mxu0 %v3747
    %3807 = vmatprep.subr.mxu0 0.0
    %3808 = vmatpush1.msra.mxu0 %v3748
    %3809 = vmatprep.subr.mxu0 0.0
    %3810 = vmatpush1.msra.mxu0 %v3749
    %3811 = vmatprep.subr.mxu0 0.0
    %3812 = vmatpush1.msra.mxu0 %v3750
    %3813 = vmatprep.subr.mxu0 0.0
    %3814 = vmatpush1.msra.mxu0 %v3751
    %3815 = vmatprep.subr.mxu0 0.0
    %3816 = vmatpush1.msra.mxu0 %v3752
    %3817 = vmatprep.mubr.f32.mxu0 %v3717
    %3818 = vmatmul.mubr.f32.gmra.mrb[0].mxu0 %v3716
    %v3819 = vpop.f32.mrb[0].mxu0
    %v3820 = vadd.f32 0.0, %v3819
    %v3821 = vpop.f32.mrb[0].mxu0
    %3822 = vmatprep.mubr.f32.mxu0 %v3719
    %3823 = vmatmul.mubr.f32.gmra.mrb[0].mxu0 %v3718
    %v3824 = vpop.f32.mrb[0].mxu0
    %v3825 = vadd.f32 0.0, %v3824
    %v3826 = vpop.f32.mrb[0].mxu0
    %3827 = vdwg.mxu0
    %v3828 = vadd.f32 %v3713, %v3820
    %v3829 = vadd.f32 %v3714, %v3825
    %s3830 = scalar_lea.vmem %s3, 288
    %v3831 = vld [vmem:[%s3830] sm:$0xff]
    %v3832 = vld [vmem:[%s3830 + $0x8] sm:$0xff]
    %v3833 = vld [vmem:[%s3830 + $0x10] sm:$0xff]
    %v3834 = vld [vmem:[%s3830 + $0x18] sm:$0xff]
    %s3835 = scalar_lea.vmem [#allocation2], 2304
    %v3836 = vld [vmem:[%s3835] sm:$0xff]
    %v3837 = vld [vmem:[%s3835 + $0x8] sm:$0xff]
    %v3838 = vld [vmem:[%s3835 + $0x10] sm:$0xff]
    %v3839 = vld [vmem:[%s3835 + $0x18] sm:$0xff]
    %v3840 = vld [vmem:[%s3835 + $0x20] sm:$0xff]
    %v3841 = vld [vmem:[%s3835 + $0x28] sm:$0xff]
    %v3842 = vld [vmem:[%s3835 + $0x30] sm:$0xff]
    %v3843 = vld [vmem:[%s3835 + $0x38] sm:$0xff]
    %v3844 = vld [vmem:[%s3835 + $0x40] sm:$0xff]
    %v3845 = vld [vmem:[%s3835 + $0x48] sm:$0xff]
    %v3846 = vld [vmem:[%s3835 + $0x50] sm:$0xff]
    %v3847 = vld [vmem:[%s3835 + $0x58] sm:$0xff]
    %v3848 = vld [vmem:[%s3835 + $0x60] sm:$0xff]
    %v3849 = vld [vmem:[%s3835 + $0x68] sm:$0xff]
    %v3850 = vld [vmem:[%s3835 + $0x70] sm:$0xff]
    %v3851 = vld [vmem:[%s3835 + $0x78] sm:$0xff]
    %v3852 = vld [vmem:[%s3835 + $0x80] sm:$0xff]
    %v3853 = vld [vmem:[%s3835 + $0x88] sm:$0xff]
    %v3854 = vld [vmem:[%s3835 + $0x90] sm:$0xff]
    %v3855 = vld [vmem:[%s3835 + $0x98] sm:$0xff]
    %v3856 = vld [vmem:[%s3835 + $0xa0] sm:$0xff]
    %v3857 = vld [vmem:[%s3835 + $0xa8] sm:$0xff]
    %v3858 = vld [vmem:[%s3835 + $0xb0] sm:$0xff]
    %v3859 = vld [vmem:[%s3835 + $0xb8] sm:$0xff]
    %v3860 = vld [vmem:[%s3835 + $0xc0] sm:$0xff]
    %v3861 = vld [vmem:[%s3835 + $0xc8] sm:$0xff]
    %v3862 = vld [vmem:[%s3835 + $0xd0] sm:$0xff]
    %v3863 = vld [vmem:[%s3835 + $0xd8] sm:$0xff]
    %v3864 = vld [vmem:[%s3835 + $0xe0] sm:$0xff]
    %v3865 = vld [vmem:[%s3835 + $0xe8] sm:$0xff]
    %v3866 = vld [vmem:[%s3835 + $0xf0] sm:$0xff]
    %v3867 = vld [vmem:[%s3835 + $0xf8] sm:$0xff]
    %3868 = vmatprep.subr.mxu0 0.0
    %3869 = vmatpush1.msra.mxu0 %v3836
    %3870 = vmatprep.subr.mxu0 0.0
    %3871 = vmatpush1.msra.mxu0 %v3837
    %3872 = vmatprep.subr.mxu0 0.0
    %3873 = vmatpush1.msra.mxu0 %v3838
    %3874 = vmatprep.subr.mxu0 0.0
    %3875 = vmatpush1.msra.mxu0 %v3839
    %3876 = vmatprep.subr.mxu0 0.0
    %3877 = vmatpush1.msra.mxu0 %v3840
    %3878 = vmatprep.subr.mxu0 0.0
    %3879 = vmatpush1.msra.mxu0 %v3841
    %3880 = vmatprep.subr.mxu0 0.0
    %3881 = vmatpush1.msra.mxu0 %v3842
    %3882 = vmatprep.subr.mxu0 0.0
    %3883 = vmatpush1.msra.mxu0 %v3843
    %3884 = vmatprep.subr.mxu0 0.0
    %3885 = vmatpush1.msra.mxu0 %v3844
    %3886 = vmatprep.subr.mxu0 0.0
    %3887 = vmatpush1.msra.mxu0 %v3845
    %3888 = vmatprep.subr.mxu0 0.0
    %3889 = vmatpush1.msra.mxu0 %v3846
    %3890 = vmatprep.subr.mxu0 0.0
    %3891 = vmatpush1.msra.mxu0 %v3847
    %3892 = vmatprep.subr.mxu0 0.0
    %3893 = vmatpush1.msra.mxu0 %v3848
    %3894 = vmatprep.subr.mxu0 0.0
    %3895 = vmatpush1.msra.mxu0 %v3849
    %3896 = vmatprep.subr.mxu0 0.0
    %3897 = vmatpush1.msra.mxu0 %v3850
    %3898 = vmatprep.subr.mxu0 0.0
    %3899 = vmatpush1.msra.mxu0 %v3851
    %3900 = vmatprep.subr.mxu0 0.0
    %3901 = vmatpush1.msra.mxu0 %v3852
    %3902 = vmatprep.subr.mxu0 0.0
    %3903 = vmatpush1.msra.mxu0 %v3853
    %3904 = vmatprep.subr.mxu0 0.0
    %3905 = vmatpush1.msra.mxu0 %v3854
    %3906 = vmatprep.subr.mxu0 0.0
    %3907 = vmatpush1.msra.mxu0 %v3855
    %3908 = vmatprep.subr.mxu0 0.0
    %3909 = vmatpush1.msra.mxu0 %v3856
    %3910 = vmatprep.subr.mxu0 0.0
    %3911 = vmatpush1.msra.mxu0 %v3857
    %3912 = vmatprep.subr.mxu0 0.0
    %3913 = vmatpush1.msra.mxu0 %v3858
    %3914 = vmatprep.subr.mxu0 0.0
    %3915 = vmatpush1.msra.mxu0 %v3859
    %3916 = vmatprep.subr.mxu0 0.0
    %3917 = vmatpush1.msra.mxu0 %v3860
    %3918 = vmatprep.subr.mxu0 0.0
    %3919 = vmatpush1.msra.mxu0 %v3861
    %3920 = vmatprep.subr.mxu0 0.0
    %3921 = vmatpush1.msra.mxu0 %v3862
    %3922 = vmatprep.subr.mxu0 0.0
    %3923 = vmatpush1.msra.mxu0 %v3863
    %3924 = vmatprep.subr.mxu0 0.0
    %3925 = vmatpush1.msra.mxu0 %v3864
    %3926 = vmatprep.subr.mxu0 0.0
    %3927 = vmatpush1.msra.mxu0 %v3865
    %3928 = vmatprep.subr.mxu0 0.0
    %3929 = vmatpush1.msra.mxu0 %v3866
    %3930 = vmatprep.subr.mxu0 0.0
    %3931 = vmatpush1.msra.mxu0 %v3867
    %3932 = vmatprep.mubr.f32.mxu0 %v3832
    %3933 = vmatmul.mubr.f32.gmra.mrb[0].mxu0 %v3831
    %v3934 = vpop.f32.mrb[0].mxu0
    %v3935 = vadd.f32 0.0, %v3934
    %v3936 = vpop.f32.mrb[0].mxu0
    %3937 = vmatprep.mubr.f32.mxu0 %v3834
    %3938 = vmatmul.mubr.f32.gmra.mrb[0].mxu0 %v3833
    %v3939 = vpop.f32.mrb[0].mxu0
    %v3940 = vadd.f32 0.0, %v3939
    %v3941 = vpop.f32.mrb[0].mxu0
    %3942 = vdwg.mxu0
    %v3943 = vadd.f32 %v3828, %v3935
    %v3944 = vadd.f32 %v3829, %v3940
    %s3945 = scalar_lea.vmem %s3, 320
    %v3946 = vld [vmem:[%s3945] sm:$0xff]
    %v3947 = vld [vmem:[%s3945 + $0x8] sm:$0xff]
    %v3948 = vld [vmem:[%s3945 + $0x10] sm:$0xff]
    %v3949 = vld [vmem:[%s3945 + $0x18] sm:$0xff]
    %s3950 = scalar_lea.vmem [#allocation2], 2560
    %v3951 = vld [vmem:[%s3950] sm:$0xff]
    %v3952 = vld [vmem:[%s3950 + $0x8] sm:$0xff]
    %v3953 = vld [vmem:[%s3950 + $0x10] sm:$0xff]
    %v3954 = vld [vmem:[%s3950 + $0x18] sm:$0xff]
    %v3955 = vld [vmem:[%s3950 + $0x20] sm:$0xff]
    %v3956 = vld [vmem:[%s3950 + $0x28] sm:$0xff]
    %v3957 = vld [vmem:[%s3950 + $0x30] sm:$0xff]
    %v3958 = vld [vmem:[%s3950 + $0x38] sm:$0xff]
    %v3959 = vld [vmem:[%s3950 + $0x40] sm:$0xff]
    %v3960 = vld [vmem:[%s3950 + $0x48] sm:$0xff]
    %v3961 = vld [vmem:[%s3950 + $0x50] sm:$0xff]
    %v3962 = vld [vmem:[%s3950 + $0x58] sm:$0xff]
    %v3963 = vld [vmem:[%s3950 + $0x60] sm:$0xff]
    %v3964 = vld [vmem:[%s3950 + $0x68] sm:$0xff]
    %v3965 = vld [vmem:[%s3950 + $0x70] sm:$0xff]
    %v3966 = vld [vmem:[%s3950 + $0x78] sm:$0xff]
    %v3967 = vld [vmem:[%s3950 + $0x80] sm:$0xff]
    %v3968 = vld [vmem:[%s3950 + $0x88] sm:$0xff]
    %v3969 = vld [vmem:[%s3950 + $0x90] sm:$0xff]
    %v3970 = vld [vmem:[%s3950 + $0x98] sm:$0xff]
    %v3971 = vld [vmem:[%s3950 + $0xa0] sm:$0xff]
    %v3972 = vld [vmem:[%s3950 + $0xa8] sm:$0xff]
    %v3973 = vld [vmem:[%s3950 + $0xb0] sm:$0xff]
    %v3974 = vld [vmem:[%s3950 + $0xb8] sm:$0xff]
    %v3975 = vld [vmem:[%s3950 + $0xc0] sm:$0xff]
    %v3976 = vld [vmem:[%s3950 + $0xc8] sm:$0xff]
    %v3977 = vld [vmem:[%s3950 + $0xd0] sm:$0xff]
    %v3978 = vld [vmem:[%s3950 + $0xd8] sm:$0xff]
    %v3979 = vld [vmem:[%s3950 + $0xe0] sm:$0xff]
    %v3980 = vld [vmem:[%s3950 + $0xe8] sm:$0xff]
    %v3981 = vld [vmem:[%s3950 + $0xf0] sm:$0xff]
    %v3982 = vld [vmem:[%s3950 + $0xf8] sm:$0xff]
    %3983 = vmatprep.subr.mxu0 0.0
    %3984 = vmatpush1.msra.mxu0 %v3951
    %3985 = vmatprep.subr.mxu0 0.0
    %3986 = vmatpush1.msra.mxu0 %v3952
    %3987 = vmatprep.subr.mxu0 0.0
    %3988 = vmatpush1.msra.mxu0 %v3953
    %3989 = vmatprep.subr.mxu0 0.0
    %3990 = vmatpush1.msra.mxu0 %v3954
    %3991 = vmatprep.subr.mxu0 0.0
    %3992 = vmatpush1.msra.mxu0 %v3955
    %3993 = vmatprep.subr.mxu0 0.0
    %3994 = vmatpush1.msra.mxu0 %v3956
    %3995 = vmatprep.subr.mxu0 0.0
    %3996 = vmatpush1.msra.mxu0 %v3957
    %3997 = vmatprep.subr.mxu0 0.0
    %3998 = vmatpush1.msra.mxu0 %v3958
    %3999 = vmatprep.subr.mxu0 0.0
    %4000 = vmatpush1.msra.mxu0 %v3959
    %4001 = vmatprep.subr.mxu0 0.0
    %4002 = vmatpush1.msra.mxu0 %v3960
    %4003 = vmatprep.subr.mxu0 0.0
    %4004 = vmatpush1.msra.mxu0 %v3961
    %4005 = vmatprep.subr.mxu0 0.0
    %4006 = vmatpush1.msra.mxu0 %v3962
    %4007 = vmatprep.subr.mxu0 0.0
    %4008 = vmatpush1.msra.mxu0 %v3963
    %4009 = vmatprep.subr.mxu0 0.0
    %4010 = vmatpush1.msra.mxu0 %v3964
    %4011 = vmatprep.subr.mxu0 0.0
    %4012 = vmatpush1.msra.mxu0 %v3965
    %4013 = vmatprep.subr.mxu0 0.0
    %4014 = vmatpush1.msra.mxu0 %v3966
    %4015 = vmatprep.subr.mxu0 0.0
    %4016 = vmatpush1.msra.mxu0 %v3967
    %4017 = vmatprep.subr.mxu0 0.0
    %4018 = vmatpush1.msra.mxu0 %v3968
    %4019 = vmatprep.subr.mxu0 0.0
    %4020 = vmatpush1.msra.mxu0 %v3969
    %4021 = vmatprep.subr.mxu0 0.0
    %4022 = vmatpush1.msra.mxu0 %v3970
    %4023 = vmatprep.subr.mxu0 0.0
    %4024 = vmatpush1.msra.mxu0 %v3971
    %4025 = vmatprep.subr.mxu0 0.0
    %4026 = vmatpush1.msra.mxu0 %v3972
    %4027 = vmatprep.subr.mxu0 0.0
    %4028 = vmatpush1.msra.mxu0 %v3973
    %4029 = vmatprep.subr.mxu0 0.0
    %4030 = vmatpush1.msra.mxu0 %v3974
    %4031 = vmatprep.subr.mxu0 0.0
    %4032 = vmatpush1.msra.mxu0 %v3975
    %4033 = vmatprep.subr.mxu0 0.0
    %4034 = vmatpush1.msra.mxu0 %v3976
    %4035 = vmatprep.subr.mxu0 0.0
    %4036 = vmatpush1.msra.mxu0 %v3977
    %4037 = vmatprep.subr.mxu0 0.0
    %4038 = vmatpush1.msra.mxu0 %v3978
    %4039 = vmatprep.subr.mxu0 0.0
    %4040 = vmatpush1.msra.mxu0 %v3979
    %4041 = vmatprep.subr.mxu0 0.0
    %4042 = vmatpush1.msra.mxu0 %v3980
    %4043 = vmatprep.subr.mxu0 0.0
    %4044 = vmatpush1.msra.mxu0 %v3981
    %4045 = vmatprep.subr.mxu0 0.0
    %4046 = vmatpush1.msra.mxu0 %v3982
    %4047 = vmatprep.mubr.f32.mxu0 %v3947
    %4048 = vmatmul.mubr.f32.gmra.mrb[0].mxu0 %v3946
    %v4049 = vpop.f32.mrb[0].mxu0
    %v4050 = vadd.f32 0.0, %v4049
    %v4051 = vpop.f32.mrb[0].mxu0
    %4052 = vmatprep.mubr.f32.mxu0 %v3949
    %4053 = vmatmul.mubr.f32.gmra.mrb[0].mxu0 %v3948
    %v4054 = vpop.f32.mrb[0].mxu0
    %v4055 = vadd.f32 0.0, %v4054
    %v4056 = vpop.f32.mrb[0].mxu0
    %4057 = vdwg.mxu0
    %v4058 = vadd.f32 %v3943, %v4050
    %v4059 = vadd.f32 %v3944, %v4055
    %s4060 = scalar_lea.vmem %s3, 352
    %v4061 = vld [vmem:[%s4060] sm:$0xff]
    %v4062 = vld [vmem:[%s4060 + $0x8] sm:$0xff]
    %v4063 = vld [vmem:[%s4060 + $0x10] sm:$0xff]
    %v4064 = vld [vmem:[%s4060 + $0x18] sm:$0xff]
    %s4065 = scalar_lea.vmem [#allocation2], 2816
    %v4066 = vld [vmem:[%s4065] sm:$0xff]
    %v4067 = vld [vmem:[%s4065 + $0x8] sm:$0xff]
    %v4068 = vld [vmem:[%s4065 + $0x10] sm:$0xff]
    %v4069 = vld [vmem:[%s4065 + $0x18] sm:$0xff]
    %v4070 = vld [vmem:[%s4065 + $0x20] sm:$0xff]
    %v4071 = vld [vmem:[%s4065 + $0x28] sm:$0xff]
    %v4072 = vld [vmem:[%s4065 + $0x30] sm:$0xff]
    %v4073 = vld [vmem:[%s4065 + $0x38] sm:$0xff]
    %v4074 = vld [vmem:[%s4065 + $0x40] sm:$0xff]
    %v4075 = vld [vmem:[%s4065 + $0x48] sm:$0xff]
    %v4076 = vld [vmem:[%s4065 + $0x50] sm:$0xff]
    %v4077 = vld [vmem:[%s4065 + $0x58] sm:$0xff]
    %v4078 = vld [vmem:[%s4065 + $0x60] sm:$0xff]
    %v4079 = vld [vmem:[%s4065 + $0x68] sm:$0xff]
    %v4080 = vld [vmem:[%s4065 + $0x70] sm:$0xff]
    %v4081 = vld [vmem:[%s4065 + $0x78] sm:$0xff]
    %v4082 = vld [vmem:[%s4065 + $0x80] sm:$0xff]
    %v4083 = vld [vmem:[%s4065 + $0x88] sm:$0xff]
    %v4084 = vld [vmem:[%s4065 + $0x90] sm:$0xff]
    %v4085 = vld [vmem:[%s4065 + $0x98] sm:$0xff]
    %v4086 = vld [vmem:[%s4065 + $0xa0] sm:$0xff]
    %v4087 = vld [vmem:[%s4065 + $0xa8] sm:$0xff]
    %v4088 = vld [vmem:[%s4065 + $0xb0] sm:$0xff]
    %v4089 = vld [vmem:[%s4065 + $0xb8] sm:$0xff]
    %v4090 = vld [vmem:[%s4065 + $0xc0] sm:$0xff]
    %v4091 = vld [vmem:[%s4065 + $0xc8] sm:$0xff]
    %v4092 = vld [vmem:[%s4065 + $0xd0] sm:$0xff]
    %v4093 = vld [vmem:[%s4065 + $0xd8] sm:$0xff]
    %v4094 = vld [vmem:[%s4065 + $0xe0] sm:$0xff]
    %v4095 = vld [vmem:[%s4065 + $0xe8] sm:$0xff]
    %v4096 = vld [vmem:[%s4065 + $0xf0] sm:$0xff]
    %v4097 = vld [vmem:[%s4065 + $0xf8] sm:$0xff]
    %4098 = vmatprep.subr.mxu0 0.0
    %4099 = vmatpush1.msra.mxu0 %v4066
    %4100 = vmatprep.subr.mxu0 0.0
    %4101 = vmatpush1.msra.mxu0 %v4067
    %4102 = vmatprep.subr.mxu0 0.0
    %4103 = vmatpush1.msra.mxu0 %v4068
    %4104 = vmatprep.subr.mxu0 0.0
    %4105 = vmatpush1.msra.mxu0 %v4069
    %4106 = vmatprep.subr.mxu0 0.0
    %4107 = vmatpush1.msra.mxu0 %v4070
    %4108 = vmatprep.subr.mxu0 0.0
    %4109 = vmatpush1.msra.mxu0 %v4071
    %4110 = vmatprep.subr.mxu0 0.0
    %4111 = vmatpush1.msra.mxu0 %v4072
    %4112 = vmatprep.subr.mxu0 0.0
    %4113 = vmatpush1.msra.mxu0 %v4073
    %4114 = vmatprep.subr.mxu0 0.0
    %4115 = vmatpush1.msra.mxu0 %v4074
    %4116 = vmatprep.subr.mxu0 0.0
    %4117 = vmatpush1.msra.mxu0 %v4075
    %4118 = vmatprep.subr.mxu0 0.0
    %4119 = vmatpush1.msra.mxu0 %v4076
    %4120 = vmatprep.subr.mxu0 0.0
    %4121 = vmatpush1.msra.mxu0 %v4077
    %4122 = vmatprep.subr.mxu0 0.0
    %4123 = vmatpush1.msra.mxu0 %v4078
    %4124 = vmatprep.subr.mxu0 0.0
    %4125 = vmatpush1.msra.mxu0 %v4079
    %4126 = vmatprep.subr.mxu0 0.0
    %4127 = vmatpush1.msra.mxu0 %v4080
    %4128 = vmatprep.subr.mxu0 0.0
    %4129 = vmatpush1.msra.mxu0 %v4081
    %4130 = vmatprep.subr.mxu0 0.0
    %4131 = vmatpush1.msra.mxu0 %v4082
    %4132 = vmatprep.subr.mxu0 0.0
    %4133 = vmatpush1.msra.mxu0 %v4083
    %4134 = vmatprep.subr.mxu0 0.0
    %4135 = vmatpush1.msra.mxu0 %v4084
    %4136 = vmatprep.subr.mxu0 0.0
    %4137 = vmatpush1.msra.mxu0 %v4085
    %4138 = vmatprep.subr.mxu0 0.0
    %4139 = vmatpush1.msra.mxu0 %v4086
    %4140 = vmatprep.subr.mxu0 0.0
    %4141 = vmatpush1.msra.mxu0 %v4087
    %4142 = vmatprep.subr.mxu0 0.0
    %4143 = vmatpush1.msra.mxu0 %v4088
    %4144 = vmatprep.subr.mxu0 0.0
    %4145 = vmatpush1.msra.mxu0 %v4089
    %4146 = vmatprep.subr.mxu0 0.0
    %4147 = vmatpush1.msra.mxu0 %v4090
    %4148 = vmatprep.subr.mxu0 0.0
    %4149 = vmatpush1.msra.mxu0 %v4091
    %4150 = vmatprep.subr.mxu0 0.0
    %4151 = vmatpush1.msra.mxu0 %v4092
    %4152 = vmatprep.subr.mxu0 0.0
    %4153 = vmatpush1.msra.mxu0 %v4093
    %4154 = vmatprep.subr.mxu0 0.0
    %4155 = vmatpush1.msra.mxu0 %v4094
    %4156 = vmatprep.subr.mxu0 0.0
    %4157 = vmatpush1.msra.mxu0 %v4095
    %4158 = vmatprep.subr.mxu0 0.0
    %4159 = vmatpush1.msra.mxu0 %v4096
    %4160 = vmatprep.subr.mxu0 0.0
    %4161 = vmatpush1.msra.mxu0 %v4097
    %4162 = vmatprep.mubr.f32.mxu0 %v4062
    %4163 = vmatmul.mubr.f32.gmra.mrb[0].mxu0 %v4061
    %v4164 = vpop.f32.mrb[0].mxu0
    %v4165 = vadd.f32 0.0, %v4164
    %v4166 = vpop.f32.mrb[0].mxu0
    %4167 = vmatprep.mubr.f32.mxu0 %v4064
    %4168 = vmatmul.mubr.f32.gmra.mrb[0].mxu0 %v4063
    %v4169 = vpop.f32.mrb[0].mxu0
    %v4170 = vadd.f32 0.0, %v4169
    %v4171 = vpop.f32.mrb[0].mxu0
    %4172 = vdwg.mxu0
    %v4173 = vadd.f32 %v4058, %v4165
    %v4174 = vadd.f32 %v4059, %v4170
    %s4175 = scalar_lea.vmem %s3, 384
    %v4176 = vld [vmem:[%s4175] sm:$0xff]
    %v4177 = vld [vmem:[%s4175 + $0x8] sm:$0xff]
    %v4178 = vld [vmem:[%s4175 + $0x10] sm:$0xff]
    %v4179 = vld [vmem:[%s4175 + $0x18] sm:$0xff]
    %s4180 = scalar_lea.vmem [#allocation2], 3072
    %v4181 = vld [vmem:[%s4180] sm:$0xff]
    %v4182 = vld [vmem:[%s4180 + $0x8] sm:$0xff]
    %v4183 = vld [vmem:[%s4180 + $0x10] sm:$0xff]
    %v4184 = vld [vmem:[%s4180 + $0x18] sm:$0xff]
    %v4185 = vld [vmem:[%s4180 + $0x20] sm:$0xff]
    %v4186 = vld [vmem:[%s4180 + $0x28] sm:$0xff]
    %v4187 = vld [vmem:[%s4180 + $0x30] sm:$0xff]
    %v4188 = vld [vmem:[%s4180 + $0x38] sm:$0xff]
    %v4189 = vld [vmem:[%s4180 + $0x40] sm:$0xff]
    %v4190 = vld [vmem:[%s4180 + $0x48] sm:$0xff]
    %v4191 = vld [vmem:[%s4180 + $0x50] sm:$0xff]
    %v4192 = vld [vmem:[%s4180 + $0x58] sm:$0xff]
    %v4193 = vld [vmem:[%s4180 + $0x60] sm:$0xff]
    %v4194 = vld [vmem:[%s4180 + $0x68] sm:$0xff]
    %v4195 = vld [vmem:[%s4180 + $0x70] sm:$0xff]
    %v4196 = vld [vmem:[%s4180 + $0x78] sm:$0xff]
    %v4197 = vld [vmem:[%s4180 + $0x80] sm:$0xff]
    %v4198 = vld [vmem:[%s4180 + $0x88] sm:$0xff]
    %v4199 = vld [vmem:[%s4180 + $0x90] sm:$0xff]
    %v4200 = vld [vmem:[%s4180 + $0x98] sm:$0xff]
    %v4201 = vld [vmem:[%s4180 + $0xa0] sm:$0xff]
    %v4202 = vld [vmem:[%s4180 + $0xa8] sm:$0xff]
    %v4203 = vld [vmem:[%s4180 + $0xb0] sm:$0xff]
    %v4204 = vld [vmem:[%s4180 + $0xb8] sm:$0xff]
    %v4205 = vld [vmem:[%s4180 + $0xc0] sm:$0xff]
    %v4206 = vld [vmem:[%s4180 + $0xc8] sm:$0xff]
    %v4207 = vld [vmem:[%s4180 + $0xd0] sm:$0xff]
    %v4208 = vld [vmem:[%s4180 + $0xd8] sm:$0xff]
    %v4209 = vld [vmem:[%s4180 + $0xe0] sm:$0xff]
    %v4210 = vld [vmem:[%s4180 + $0xe8] sm:$0xff]
    %v4211 = vld [vmem:[%s4180 + $0xf0] sm:$0xff]
    %v4212 = vld [vmem:[%s4180 + $0xf8] sm:$0xff]
    %4213 = vmatprep.subr.mxu0 0.0
    %4214 = vmatpush1.msra.mxu0 %v4181
    %4215 = vmatprep.subr.mxu0 0.0
    %4216 = vmatpush1.msra.mxu0 %v4182
    %4217 = vmatprep.subr.mxu0 0.0
    %4218 = vmatpush1.msra.mxu0 %v4183
    %4219 = vmatprep.subr.mxu0 0.0
    %4220 = vmatpush1.msra.mxu0 %v4184
    %4221 = vmatprep.subr.mxu0 0.0
    %4222 = vmatpush1.msra.mxu0 %v4185
    %4223 = vmatprep.subr.mxu0 0.0
    %4224 = vmatpush1.msra.mxu0 %v4186
    %4225 = vmatprep.subr.mxu0 0.0
    %4226 = vmatpush1.msra.mxu0 %v4187
    %4227 = vmatprep.subr.mxu0 0.0
    %4228 = vmatpush1.msra.mxu0 %v4188
    %4229 = vmatprep.subr.mxu0 0.0
    %4230 = vmatpush1.msra.mxu0 %v4189
    %4231 = vmatprep.subr.mxu0 0.0
    %4232 = vmatpush1.msra.mxu0 %v4190
    %4233 = vmatprep.subr.mxu0 0.0
    %4234 = vmatpush1.msra.mxu0 %v4191
    %4235 = vmatprep.subr.mxu0 0.0
    %4236 = vmatpush1.msra.mxu0 %v4192
    %4237 = vmatprep.subr.mxu0 0.0
    %4238 = vmatpush1.msra.mxu0 %v4193
    %4239 = vmatprep.subr.mxu0 0.0
    %4240 = vmatpush1.msra.mxu0 %v4194
    %4241 = vmatprep.subr.mxu0 0.0
    %4242 = vmatpush1.msra.mxu0 %v4195
    %4243 = vmatprep.subr.mxu0 0.0
    %4244 = vmatpush1.msra.mxu0 %v4196
    %4245 = vmatprep.subr.mxu0 0.0
    %4246 = vmatpush1.msra.mxu0 %v4197
    %4247 = vmatprep.subr.mxu0 0.0
    %4248 = vmatpush1.msra.mxu0 %v4198
    %4249 = vmatprep.subr.mxu0 0.0
    %4250 = vmatpush1.msra.mxu0 %v4199
    %4251 = vmatprep.subr.mxu0 0.0
    %4252 = vmatpush1.msra.mxu0 %v4200
    %4253 = vmatprep.subr.mxu0 0.0
    %4254 = vmatpush1.msra.mxu0 %v4201
    %4255 = vmatprep.subr.mxu0 0.0
    %4256 = vmatpush1.msra.mxu0 %v4202
    %4257 = vmatprep.subr.mxu0 0.0
    %4258 = vmatpush1.msra.mxu0 %v4203
    %4259 = vmatprep.subr.mxu0 0.0
    %4260 = vmatpush1.msra.mxu0 %v4204
    %4261 = vmatprep.subr.mxu0 0.0
    %4262 = vmatpush1.msra.mxu0 %v4205
    %4263 = vmatprep.subr.mxu0 0.0
    %4264 = vmatpush1.msra.mxu0 %v4206
    %4265 = vmatprep.subr.mxu0 0.0
    %4266 = vmatpush1.msra.mxu0 %v4207
    %4267 = vmatprep.subr.mxu0 0.0
    %4268 = vmatpush1.msra.mxu0 %v4208
    %4269 = vmatprep.subr.mxu0 0.0
    %4270 = vmatpush1.msra.mxu0 %v4209
    %4271 = vmatprep.subr.mxu0 0.0
    %4272 = vmatpush1.msra.mxu0 %v4210
    %4273 = vmatprep.subr.mxu0 0.0
    %4274 = vmatpush1.msra.mxu0 %v4211
    %4275 = vmatprep.subr.mxu0 0.0
    %4276 = vmatpush1.msra.mxu0 %v4212
    %4277 = vmatprep.mubr.f32.mxu0 %v4177
    %4278 = vmatmul.mubr.f32.gmra.mrb[0].mxu0 %v4176
    %v4279 = vpop.f32.mrb[0].mxu0
    %v4280 = vadd.f32 0.0, %v4279
    %v4281 = vpop.f32.mrb[0].mxu0
    %4282 = vmatprep.mubr.f32.mxu0 %v4179
    %4283 = vmatmul.mubr.f32.gmra.mrb[0].mxu0 %v4178
    %v4284 = vpop.f32.mrb[0].mxu0
    %v4285 = vadd.f32 0.0, %v4284
    %v4286 = vpop.f32.mrb[0].mxu0
    %4287 = vdwg.mxu0
    %v4288 = vadd.f32 %v4173, %v4280
    %v4289 = vadd.f32 %v4174, %v4285
    %v4290 = vmax.f32 %v4288, %v4289
    %v4291 = vrot.slane %v4290, 4
    %v4292 = vmax.f32 %v4290, %v4291
    %v4293 = vrot.slane %v4292, 2
    %v4294 = vmax.f32 %v4292, %v4293
    %v4295 = vrot.slane %v4294, 1
    %v4296 = vmax.f32 %v4294, %v4295
    %v4297 = vsub.f32 %v4288, %v4296
    %v4298 = vsub.f32 %v4289, %v4296
    %v4299 = vmul.f32 %v4297, 1.442695
    %v4300 = vpow.pop %v4299
    %v4301 = vmul.f32 %v4298, 1.442695
    %v4302 = vpow.pop %v4301
    %v4303 = vadd.f32 %v4300, %v4302
    %v4304 = vrot.slane %v4303, 4
    %v4305 = vadd.f32 %v4303, %v4304
    %v4306 = vrot.slane %v4305, 2
    %v4307 = vadd.f32 %v4305, %v4306
    %v4308 = vrot.slane %v4307, 1
    %v4309 = vadd.f32 %v4307, %v4308
    %v4310 = vlog2.pop %v4309
    %v4311 = vmul.f32 %v4310, 0.6931472
    %v4312 = vsub.f32 %v4297, %v4311
    %v4313 = vsub.f32 %v4298, %v4311
    %4314 = vst [vmem:[%s5] sm:$0xff] %v4312
    %4315 = vst [vmem:[%s5 + $0x8] sm:$0xff] %v4313
    // Predicated region
    $region37: #{net_forward.1} parent=1 // pred_check
      _
    $region38: #{net_forward.1} parent=1 // pred_check_branch
      %4317 = sbr.rel (0) target = $region40
    $region39: #{net_forward.1} parent=1 // pred_region
      _
    $region40: #{net_forward.1} parent=1 // pred_fallthru
      _
    // Predicated region
    $region41: #{net_forward.1} parent=1 // pred_check
      _
    $region42: #{net_forward.1} parent=1 // pred_check_branch
      %4319 = sbr.rel (0) target = $region44
    $region43: #{net_forward.1} parent=1 // pred_region
      _
    $region44: #{net_forward.1} parent=1 // pred_fallthru
      _
    %4320 = vsyncpa [#allocation4], 1
    %4321 = vsyncpa [#allocation6], 1

</llo_original>
